<compile_context>
chip_gen: v5e
topology: v5e:2x2
jax: 0.10.0
libtpu: 0.0.40
codegen_flags: <defaults>
</compile_context>

<pallas_src>
import functools
import math

import jax
import jax.numpy as jnp
from jax.experimental import pallas as pl
from jax.experimental.pallas import tpu as pltpu

# ----------------------------- config (synthetic, small) -----------------------------
ENC_DIM = 32
DEC_DIM = 32
FFN_DIM = 64
NUM_HEADS = 4
HEAD_DIM = ENC_DIM // NUM_HEADS
NUM_LAYERS = 2
NUM_QUERIES = 32
NUM_CLASSES = 4
LOSS_MODE = "focal"   # != 'ce'  ->  class_embed(output)[..., 0] without softmax
LN_EPS = 1e-5


# ----------------------------- in-kernel helpers -----------------------------
def _ln(x, g, b, eps):
    mean = jnp.mean(x, axis=-1, keepdims=True)
    xc = x - mean
    var = jnp.mean(xc * xc, axis=-1, keepdims=True)
    return xc * jax.lax.rsqrt(var + eps) * g + b


# ----------------------------- fused encoder stack + heads kernel ---------------------
def _encoder_stack_kernel(x_ref, pos_ref, bias_ref, keep_ref,
                          wqk_ref, bqk_ref, wv_ref, bv_ref, wo_ref, bo_ref,
                          ln1g_ref, ln1b_ref, w1_ref, b1_ref, w2_ref, b2_ref,
                          ln2g_ref, ln2b_ref,
                          hw0_ref, hb0_ref, hw1_ref, hb1_ref, hw2_ref, hb2_ref,
                          o_ref, heads_ref,
                          act_ref,
                          *, num_heads, head_dim, eps, num_layers, blk_b, num_classes):
    # grid = (batch_blocks, layer); output block indices depend only on the batch axis,
    # so o_ref / heads_ref stay resident in VMEM across layers.  The running activation
    # is carried in the f32 VMEM scratch `act_ref` and only written to HBM on the last
    # layer (with masked_fill + detector heads fused into that epilogue).
    layer = pl.program_id(1)
    D = num_heads * head_dim
    bf16 = jnp.bfloat16

    @pl.when(layer == 0)
    def _():
        act_ref[...] = x_ref[...].astype(jnp.float32)

    # ---- per-layer weights (matmul weights are bf16; biases / LN params f32) ----
    wqk = wqk_ref[0]; bqk = bqk_ref[0]        # (D, 2D) bf16, (1, 2D) f32 (scale folded)
    wv = wv_ref[0];   bv = bv_ref[0]          # (D, D)  bf16, (1, D)
    wo = wo_ref[0];   bo = bo_ref[0]          # (D, D)  bf16, (1, D)
    ln1g = ln1g_ref[0]; ln1b = ln1b_ref[0]
    w1 = w1_ref[0]; b1 = b1_ref[0]            # (D, F) bf16, (1, F)
    w2 = w2_ref[0]; b2 = b2_ref[0]            # (F, D) bf16, (1, D)
    ln2g = ln2g_ref[0]; ln2b = ln2b_ref[0]

    # TODO(synk): reference layer uses BoxAttention (multi-scale deformable sampling via
    # grid_sample over src_shape/src_start_index/src_valid_ratios); approximated here by
    # dense global multi-head self-attention with additive key-padding bias.
    for b in range(blk_b):                                  # static, blk_b in {1, B}
        h = act_ref[b]                                      # (L, D) f32 running act
        pos = pos_ref[b].astype(jnp.float32)                # (L, D)
        bias_row = bias_ref[b]                              # (1, L) additive key bias
        L = h.shape[0]

        qk_in = (h + pos).astype(bf16)
        qk = jnp.dot(qk_in, wqk, preferred_element_type=jnp.float32) + bqk  # (L, 2D) f32
        v = jnp.dot(h.astype(bf16), wv, preferred_element_type=jnp.float32) + bv

        qk_b = qk.astype(bf16)
        kT = jnp.transpose(qk[:, D:]).astype(bf16)          # one (D, L) lane-dense xpose
        v_b = v.astype(bf16)

        attn = jnp.zeros((L, D), jnp.float32)
        for hh in range(num_heads):
            lo = hh * head_dim
            qh = qk_b[:, lo:lo + head_dim]                  # (L, dh)  (scale pre-folded)
            kh_t = kT[lo:lo + head_dim, :]                  # (dh, L)  lane-dense
            s = jnp.dot(qh, kh_t, preferred_element_type=jnp.float32)       # (L, L)
            s = s + bias_row
            s = s - jnp.max(s, axis=-1, keepdims=True)
            p = jnp.exp(s)
            p = p * pl.reciprocal(jnp.sum(p, axis=-1, keepdims=True), approx=True)
            oh = jnp.dot(p.astype(bf16), v_b[:, lo:lo + head_dim],
                         preferred_element_type=jnp.float32)                # (L, dh)
            # fold the output projection per head: concat_h(oh) @ Wo == sum_h oh @ Wo[h]
            attn = attn + jnp.dot(oh.astype(bf16), wo[lo:lo + head_dim, :],
                                  preferred_element_type=jnp.float32)
        attn = attn + bo

        y = _ln(h + attn, ln1g, ln1b, eps)
        f = jnp.maximum(jnp.dot(y.astype(bf16), w1,
                                preferred_element_type=jnp.float32) + b1, 0.0)
        f = jnp.dot(f.astype(bf16), w2, preferred_element_type=jnp.float32) + b2
        z = _ln(y + f, ln2g, ln2b, eps)
        act_ref[b] = z

    # ---- last-layer epilogue: masked_fill + single HBM store + fused detector heads ----
    @pl.when(layer == num_layers - 1)
    def _():
        hw0 = hw0_ref[...]; hb0 = hb0_ref[...]   # (D+C, D) bf16, (D+C, 1) f32  ([W0|Wc]^T)
        hw1 = hw1_ref[...]; hb1 = hb1_ref[...]   # (D, D)  bf16, (D, 1)
        hw2 = hw2_ref[...]; hb2 = hb2_ref[...]   # (4, D)  bf16, (4, 1)
        for b in range(blk_b):
            keep = keep_ref[b]                                  # (L, 1) 0/1 f32
            z_m = act_ref[b] * keep                             # masked_fill(…, 0.0)
            o_ref[b] = z_m.astype(o_ref.dtype)

            # heads in transposed (rows, L) orientation -> lane-dense intermediates/stores
            xT = jnp.transpose(z_m).astype(bf16)                # (D, L)
            r = jnp.dot(hw0, xT, preferred_element_type=jnp.float32) + hb0   # (D+C, L)
            h0 = jnp.maximum(r[:ENC_DIM], 0.0)                  # bbox hidden 0
            logits_t = r[ENC_DIM:]                              # (C, L), no relu
            h1 = jnp.maximum(
                jnp.dot(hw1, h0.astype(bf16), preferred_element_type=jnp.float32) + hb1,
                0.0)                                            # (D, L)
            delta_t = jnp.dot(hw2, h1.astype(bf16),
                              preferred_element_type=jnp.float32) + hb2      # (4, L)
            heads_t = jnp.concatenate([logits_t, delta_t], axis=0)           # (C+4, L)
            heads_ref[b] = heads_t.astype(heads_ref.dtype)


def encoder_stack_forward(stack, det, src, pos, attn_bias, keep_mask, *, batch_in_grid):
    B, L, D = src.shape
    NL = stack["wqk"].shape[0]
    C4 = NUM_CLASSES + 4

    blk_b = 1 if (batch_in_grid and B > 1) else B
    grid_b = B // blk_b

    bmap = lambda b, l: (b, 0, 0)
    spec_x = pl.BlockSpec((blk_b, L, D), bmap)
    spec_bias = pl.BlockSpec((blk_b, 1, L), bmap)
    spec_keep = pl.BlockSpec((blk_b, L, 1), bmap)
    spec_heads = pl.BlockSpec((blk_b, C4, L), bmap)

    layer_keys = ("wqk", "bqk", "wv", "bv", "wo", "bo", "ln1_g", "ln1_b",
                  "w1", "b1", "w2", "b2", "ln2_g", "ln2_b")
    layer_ws = [stack[k] for k in layer_keys]
    layer_specs = [pl.BlockSpec((1,) + w.shape[1:], lambda b, l: (l, 0, 0))
                   for w in layer_ws]

    det_keys = ("hw0c", "hb0c", "hw1t", "hb1", "hw2t", "hb2")
    det_ws = [det[k] for k in det_keys]
    det_specs = [pl.BlockSpec(w.shape, lambda b, l: (0, 0)) for w in det_ws]

    return pl.pallas_call(
        functools.partial(_encoder_stack_kernel, num_heads=NUM_HEADS, head_dim=HEAD_DIM,
                          eps=LN_EPS, num_layers=NL, blk_b=blk_b,
                          num_classes=NUM_CLASSES),
        out_shape=(jax.ShapeDtypeStruct((B, L, D), src.dtype),
                   jax.ShapeDtypeStruct((B, C4, L), src.dtype)),
        grid=(grid_b, NL),
        in_specs=[spec_x, spec_x, spec_bias, spec_keep] + layer_specs + det_specs,
        out_specs=(spec_x, spec_heads),
        scratch_shapes=[pltpu.VMEM((blk_b, L, D), jnp.float32)],
        compiler_params=pltpu.CompilerParams(
            dimension_semantics=("parallel", "arbitrary")),
    )(src, pos, attn_bias, keep_mask, *layer_ws, *det_ws)


# ----------------------------- proposal embedding kernel (enc_linear + LN) -------------
def _proposal_embed_kernel(x_ref, w_ref, b_ref, g_ref, beta_ref, o_ref, *, eps):
    x = x_ref[0].astype(jnp.bfloat16)
    e = jnp.dot(x, w_ref[...], preferred_element_type=jnp.float32) + b_ref[...]
    o_ref[0] = _ln(e, g_ref[...], beta_ref[...], eps).astype(o_ref.dtype)


def pallas_proposal_embed(x, enc_lin):
    B, nq, D = x.shape
    N = enc_lin["w"].shape[1]
    args = (x, enc_lin["w"], enc_lin["b"], enc_lin["ln_g"], enc_lin["ln_b"])
    in_specs = [pl.BlockSpec((1, nq, D), lambda b: (b, 0, 0))] + \
               [pl.BlockSpec(a.shape, lambda b: (0, 0)) for a in args[1:]]
    return pl.pallas_call(
        functools.partial(_proposal_embed_kernel, eps=LN_EPS),
        out_shape=jax.ShapeDtypeStruct((B, nq, N), x.dtype),
        grid=(B,),
        in_specs=in_specs,
        out_specs=pl.BlockSpec((1, nq, N), lambda b: (b, 0, 0)),
        compiler_params=pltpu.CompilerParams(dimension_semantics=("parallel",)),
    )(*args)


# ----------------------------- helpers (glue, plain JAX) -----------------------------
def inverse_sigmoid(x, eps=1e-5):
    x = jnp.clip(x, 0.0, 1.0)
    x1 = jnp.clip(x, eps, 1.0)
    x2 = jnp.clip(1.0 - x, eps, 1.0)
    return jnp.log(x1) - jnp.log(x2)


def get_proposal_pos_embed(coords, hidden_dim):
    """coords: (B, N, 2) in [0,1] -> sinusoidal embedding (B, N, hidden_dim)."""
    num_pos_feats = hidden_dim // 2
    temperature = 10000.0
    scale = 2.0 * math.pi
    dim_t = jnp.arange(num_pos_feats, dtype=jnp.float32)
    dim_t = temperature ** (2.0 * jnp.floor(dim_t / 2.0) / num_pos_feats)
    pos = coords * scale
    pos = pos[..., None] / dim_t                                    # (B, N, 2, F)
    pos = jnp.stack((jnp.sin(pos[..., 0::2]), jnp.cos(pos[..., 1::2])), axis=-1)
    return pos.reshape(pos.shape[0], pos.shape[1], -1)              # (B, N, hidden_dim)


def _tensorcores_per_chip():
    # v7x has 2 TensorCores per chip; v5e/v6e have 1.  Best-effort probe; any failure
    # falls back to the single-TC (merged-batch) layout, which is correct everywhere.
    try:
        kind = jax.devices()[0].device_kind.lower()
    except Exception:
        return 1
    return 2 if "7" in kind else 1


# ----------------------------- module forward -----------------------------
def box_transformer_encoder_forward(params, src, pos, src_shape, src_mask,
                                    src_start_index, src_valid_ratios, ref_windows,
                                    *, batch_in_grid=False):
    B, L, D = src.shape
    attn_bias = jnp.where(src_mask, -1e9, 0.0).astype(jnp.float32).reshape(B, 1, L)
    keep_mask = jnp.where(src_mask, 0.0, 1.0).astype(jnp.float32).reshape(B, L, 1)

    # ---- encoder stack + detector heads: ONE pallas_call (prenorm=False -> Identity
    #      norm; masked_fill(0) and the cls/bbox heads are fused into the last step). ----
    output, heads_t = encoder_stack_forward(params["enc_stack"], params["detector"],
                                            src, pos, attn_bias, keep_mask,
                                            batch_in_grid=batch_in_grid)
    logits = jnp.transpose(heads_t[:, :NUM_CLASSES, :], (0, 2, 1))   # (B, L, C)
    delta = jnp.transpose(heads_t[:, NUM_CLASSES:, :], (0, 2, 1))    # (B, L, 4)

    boxes = jax.nn.sigmoid(delta + inverse_sigmoid(ref_windows))
    enc_out = (logits, boxes)   # TODO(synk): detector internals approximated by cls+bbox heads

    # ---- proposal selection (top-k + gather has no clean tiled Pallas form; plain JAX) ----
    output_embed = jax.lax.stop_gradient(output)
    out_logits = logits[..., 0]                         # loss_mode != 'ce'
    if src_mask is not None:
        out_logits = jnp.where(src_mask, -65504.0, out_logits)
    nq = min(NUM_QUERIES, L)
    _, indexes = jax.lax.top_k(out_logits, nq)          # (B, nq)
    idx = indexes[..., None]
    embed_g = jnp.take_along_axis(output_embed, jnp.broadcast_to(idx, (B, nq, D)), axis=1)
    ref_g = jnp.take_along_axis(ref_windows, jnp.broadcast_to(idx, (B, nq, 4)), axis=1)
    # bbox MLP is pointwise per position, so gathering the full-L delta equals running
    # the MLP on the gathered embeddings (avoids recomputation).
    delta_g = jnp.take_along_axis(jax.lax.stop_gradient(delta),
                                  jnp.broadcast_to(idx, (B, nq, 4)), axis=1)

    out_ref_windows = jax.lax.stop_gradient(
        jax.nn.sigmoid(delta_g + inverse_sigmoid(ref_g)))

    out_embed = pallas_proposal_embed(embed_g, params["enc_linear"])   # (B, nq, DEC_DIM)

    pos_e = get_proposal_pos_embed(out_ref_windows[..., :2], DEC_DIM)
    size_e = get_proposal_pos_embed(out_ref_windows[..., 2:], DEC_DIM)
    out_pos = pos_e + size_e

    return output, out_embed, out_ref_windows, out_pos, enc_out


# ----------------------------- parameters -----------------------------
def init_params(key):
    keys = iter(jax.random.split(key, 64))

    def dense(shape, scale=0.02):
        return scale * jax.random.normal(next(keys), shape, jnp.float32)

    D, F, NL, C = ENC_DIM, FFN_DIM, NUM_LAYERS, NUM_CLASSES
    layers = dict(
        wq=dense((NL, D, D)), bq=jnp.zeros((NL, D), jnp.float32),
        wk=dense((NL, D, D)), bk=jnp.zeros((NL, D), jnp.float32),
        wv=dense((NL, D, D)), bv=jnp.zeros((NL, D), jnp.float32),
        wo=dense((NL, D, D)), bo=jnp.zeros((NL, D), jnp.float32),
        ln1_g=jnp.ones((NL, D), jnp.float32), ln1_b=jnp.zeros((NL, D), jnp.float32),
        w1=dense((NL, D, F)), b1=jnp.zeros((NL, F), jnp.float32),
        w2=dense((NL, F, D)), b2=jnp.zeros((NL, D), jnp.float32),
        ln2_g=jnp.ones((NL, D), jnp.float32), ln2_b=jnp.zeros((NL, D), jnp.float32),
    )
    detector = dict(
        cls_w=dense((D, C)), cls_b=jnp.zeros((C,), jnp.float32),
        w0=dense((D, D)), b0=jnp.zeros((D,), jnp.float32),
        w1=dense((D, D)), b1=jnp.zeros((D,), jnp.float32),
        w2=dense((D, 4)), b2=jnp.zeros((4,), jnp.float32),
    )
    enc_linear = dict(
        w=dense((D, DEC_DIM)), b=jnp.zeros((DEC_DIM,), jnp.float32),
        ln_g=jnp.ones((DEC_DIM,), jnp.float32), ln_b=jnp.zeros((DEC_DIM,), jnp.float32),
    )
    return dict(layers=layers, detector=detector, enc_linear=enc_linear)


def prepare_params(raw):
    """Kernel-ready params: fold softmax scale into Wq/bq, fuse Q|K, merge [W0|Wcls],
    pre-transpose head weights for lane-dense math, cast matmul weights to bf16."""
    D, C, NL = ENC_DIM, NUM_CLASSES, NUM_LAYERS
    bf = jnp.bfloat16
    scale = 1.0 / math.sqrt(HEAD_DIM)
    lay = raw["layers"]
    enc_stack = dict(
        wqk=jnp.concatenate([lay["wq"] * scale, lay["wk"]], axis=-1).astype(bf),
        bqk=jnp.concatenate([lay["bq"] * scale, lay["bk"]], axis=-1).reshape(NL, 1, 2 * D),
        wv=lay["wv"].astype(bf), bv=lay["bv"].reshape(NL, 1, D),
        wo=lay["wo"].astype(bf), bo=lay["bo"].reshape(NL, 1, D),
        ln1_g=lay["ln1_g"].reshape(NL, 1, D), ln1_b=lay["ln1_b"].reshape(NL, 1, D),
        w1=lay["w1"].astype(bf), b1=lay["b1"].reshape(NL, 1, FFN_DIM),
        w2=lay["w2"].astype(bf), b2=lay["b2"].reshape(NL, 1, D),
        ln2_g=lay["ln2_g"].reshape(NL, 1, D), ln2_b=lay["ln2_b"].reshape(NL, 1, D),
    )
    det = raw["detector"]
    w0c = jnp.concatenate([det["w0"], det["cls_w"]], axis=-1)      # (D, D+C): [W0 | Wcls]
    b0c = jnp.concatenate([det["b0"], det["cls_b"]], axis=0)       # (D+C,)
    detector = dict(
        hw0c=jnp.transpose(w0c).astype(bf),                        # (D+C, D)
        hb0c=b0c.reshape(D + C, 1),
        hw1t=jnp.transpose(det["w1"]).astype(bf),                  # (D, D)
        hb1=det["b1"].reshape(D, 1),
        hw2t=jnp.transpose(det["w2"]).astype(bf),                  # (4, D)
        hb2=det["b2"].reshape(4, 1),
    )
    el = raw["enc_linear"]
    enc_linear = dict(w=el["w"].astype(bf), b=el["b"].reshape(1, DEC_DIM),
                      ln_g=el["ln_g"].reshape(1, DEC_DIM), ln_b=el["ln_b"].reshape(1, DEC_DIM))
    return dict(enc_stack=enc_stack, detector=detector, enc_linear=enc_linear)


# ----------------------------- main -----------------------------
if __name__ == "__main__":
    key = jax.random.PRNGKey(0)
    k_param, k_src, k_pos, k_ref = jax.random.split(key, 4)

    B, L = 2, 128                     # L = flattened spatial extent (e.g. one 8x16 level)
    params = prepare_params(init_params(k_param))

    src = 0.1 * jax.random.normal(k_src, (B, L, ENC_DIM), jnp.float32)
    pos = 0.1 * jax.random.normal(k_pos, (B, L, ENC_DIM), jnp.float32)
    ref_windows = jax.random.uniform(k_ref, (B, L, 4), jnp.float32, 0.05, 0.95)
    src_mask = jnp.zeros((B, L), jnp.bool_).at[1, L - 16:].set(True)
    src_shape = jnp.array([[8, 16]], jnp.int32)
    src_start_index = jnp.array([0], jnp.int32)
    src_valid_ratios = jnp.ones((B, 1, 2), jnp.float32)

    # 2-TC chips (v7x): one batch per TensorCore.  1-TC chips (v5e/v6e): merge the
    # batch into the block -> half the grid steps, weights DMA'd once per layer.
    batch_in_grid = _tensorcores_per_chip() >= 2 and B > 1

    fwd = jax.jit(functools.partial(box_transformer_encoder_forward,
                                    batch_in_grid=batch_in_grid))
    outs = fwd(params, src, pos, src_shape, src_mask,
               src_start_index, src_valid_ratios, ref_windows)
    jax.tree_util.tree_map(jax.block_until_ready, outs)

    output, out_embed, out_ref_windows, out_pos, enc_out = outs
    assert output.shape == (B, L, ENC_DIM)
    assert out_embed.shape == (B, NUM_QUERIES, DEC_DIM)
    assert out_ref_windows.shape == (B, NUM_QUERIES, 4)
    assert out_pos.shape == (B, NUM_QUERIES, DEC_DIM)
    assert enc_out[0].shape == (B, L, NUM_CLASSES) and enc_out[1].shape == (B, L, 4)
    assert all(bool(jnp.all(jnp.isfinite(o))) for o in
               (output, out_embed, out_ref_windows, out_pos, enc_out[0], enc_out[1]))
    # padded positions of the final output must be exactly zero (masked_fill semantics)
    assert bool(jnp.all(output[1, L - 16:] == 0.0))
    print("KERNEL_OK")
</pallas_src>

<mosaic_0001>
module attributes {stable_mosaic.version = 11 : i64} {
  func.func @_encoder_stack_kernel(%arg0: i32, %arg1: i32, %arg2: memref<2x128x32xf32, #tpu.memory_space<vmem>>, %arg3: memref<2x128x32xf32, #tpu.memory_space<vmem>>, %arg4: memref<2x1x128xf32, #tpu.memory_space<vmem>>, %arg5: memref<2x128x1xf32, #tpu.memory_space<vmem>>, %arg6: memref<1x32x64xbf16, #tpu.memory_space<vmem>>, %arg7: memref<1x1x64xf32, #tpu.memory_space<vmem>>, %arg8: memref<1x32x32xbf16, #tpu.memory_space<vmem>>, %arg9: memref<1x1x32xf32, #tpu.memory_space<vmem>>, %arg10: memref<1x32x32xbf16, #tpu.memory_space<vmem>>, %arg11: memref<1x1x32xf32, #tpu.memory_space<vmem>>, %arg12: memref<1x1x32xf32, #tpu.memory_space<vmem>>, %arg13: memref<1x1x32xf32, #tpu.memory_space<vmem>>, %arg14: memref<1x32x64xbf16, #tpu.memory_space<vmem>>, %arg15: memref<1x1x64xf32, #tpu.memory_space<vmem>>, %arg16: memref<1x64x32xbf16, #tpu.memory_space<vmem>>, %arg17: memref<1x1x32xf32, #tpu.memory_space<vmem>>, %arg18: memref<1x1x32xf32, #tpu.memory_space<vmem>>, %arg19: memref<1x1x32xf32, #tpu.memory_space<vmem>>, %arg20: memref<36x32xbf16, #tpu.memory_space<vmem>>, %arg21: memref<36x1xf32, #tpu.memory_space<vmem>>, %arg22: memref<32x32xbf16, #tpu.memory_space<vmem>>, %arg23: memref<32x1xf32, #tpu.memory_space<vmem>>, %arg24: memref<4x32xbf16, #tpu.memory_space<vmem>>, %arg25: memref<4x1xf32, #tpu.memory_space<vmem>>, %arg26: memref<2x128x32xf32, #tpu.memory_space<vmem>>, %arg27: memref<2x8x128xf32, #tpu.memory_space<vmem>>, %arg28: memref<2x128x32xf32, #tpu.memory_space<vmem>>) attributes {dimension_semantics = [#tpu.dimension_semantics<parallel>, #tpu.dimension_semantics<arbitrary>], iteration_bounds = array<i64: 1, 2>, scalar_prefetch = 0 : i64, scratch_operands = 1 : i64, tpu.core_type = #tpu.core_type<tc>, window_params = [{transform_indices = @transform_0, window_bounds = array<i64: 2, 128, 32>}, {transform_indices = @transform_1, window_bounds = array<i64: 2, 128, 32>}, {transform_indices = @transform_2, window_bounds = array<i64: 2, 1, 128>}, {transform_indices = @transform_3, window_bounds = array<i64: 2, 128, 1>}, {transform_indices = @transform_4, window_bounds = array<i64: 1, 32, 64>}, {transform_indices = @transform_5, window_bounds = array<i64: 1, 1, 64>}, {transform_indices = @transform_6, window_bounds = array<i64: 1, 32, 32>}, {transform_indices = @transform_7, window_bounds = array<i64: 1, 1, 32>}, {transform_indices = @transform_8, window_bounds = array<i64: 1, 32, 32>}, {transform_indices = @transform_9, window_bounds = array<i64: 1, 1, 32>}, {transform_indices = @transform_10, window_bounds = array<i64: 1, 1, 32>}, {transform_indices = @transform_11, window_bounds = array<i64: 1, 1, 32>}, {transform_indices = @transform_12, window_bounds = array<i64: 1, 32, 64>}, {transform_indices = @transform_13, window_bounds = array<i64: 1, 1, 64>}, {transform_indices = @transform_14, window_bounds = array<i64: 1, 64, 32>}, {transform_indices = @transform_15, window_bounds = array<i64: 1, 1, 32>}, {transform_indices = @transform_16, window_bounds = array<i64: 1, 1, 32>}, {transform_indices = @transform_17, window_bounds = array<i64: 1, 1, 32>}, {pipeline_mode = #tpu.pipeline_mode<synchronous>, transform_indices = @transform_18, window_bounds = array<i64: 36, 32>}, {pipeline_mode = #tpu.pipeline_mode<synchronous>, transform_indices = @transform_19, window_bounds = array<i64: 36, 1>}, {pipeline_mode = #tpu.pipeline_mode<synchronous>, transform_indices = @transform_20, window_bounds = array<i64: 32, 32>}, {pipeline_mode = #tpu.pipeline_mode<synchronous>, transform_indices = @transform_21, window_bounds = array<i64: 32, 1>}, {pipeline_mode = #tpu.pipeline_mode<synchronous>, transform_indices = @transform_22, window_bounds = array<i64: 4, 32>}, {pipeline_mode = #tpu.pipeline_mode<synchronous>, transform_indices = @transform_23, window_bounds = array<i64: 4, 1>}, {transform_indices = @transform_24, window_bounds = array<i64: 2, 128, 32>}, {transform_indices = @transform_25, window_bounds = array<i64: 2, 8, 128>}]} {
    %c0_i32 = arith.constant 0 : i32
    %0 = arith.cmpi eq, %arg1, %c0_i32 : i32
    %1 = arith.extui %0 : i1 to i32
    %c0_i32_0 = arith.constant 0 : i32
    %2 = arith.cmpi ne, %1, %c0_i32_0 : i32
    scf.if %2 {
      %c0_137 = arith.constant 0 : index
      %c0_138 = arith.constant 0 : index
      %c0_139 = arith.constant 0 : index
      %366 = vector.load %arg2[%c0_137, %c0_138, %c0_139] : memref<2x128x32xf32, #tpu.memory_space<vmem>>, vector<2x128x32xf32>
      %c0_140 = arith.constant 0 : index
      %c0_141 = arith.constant 0 : index
      %c0_142 = arith.constant 0 : index
      %367 = vector.load %arg28[%c0_140, %c0_141, %c0_142] : memref<2x128x32xf32, #tpu.memory_space<vmem>>, vector<2x128x32xf32>
      tpu.vector_store %arg28[%c0_140, %c0_141, %c0_142], %366 {strides = array<i32>} : memref<2x128x32xf32, #tpu.memory_space<vmem>>, vector<2x128x32xf32>,
    } else {
    }
    %c0 = arith.constant 0 : index
    %c0_1 = arith.constant 0 : index
    %c0_2 = arith.constant 0 : index
    %3 = vector.load %arg6[%c0, %c0_1, %c0_2] : memref<1x32x64xbf16, #tpu.memory_space<vmem>>, vector<1x32x64xbf16>
    %4 = vector.shape_cast %3 : vector<1x32x64xbf16> to vector<32x64xbf16>
    %c0_3 = arith.constant 0 : index
    %c0_4 = arith.constant 0 : index
    %c0_5 = arith.constant 0 : index
    %5 = vector.load %arg7[%c0_3, %c0_4, %c0_5] : memref<1x1x64xf32, #tpu.memory_space<vmem>>, vector<1x1x64xf32>
    %6 = vector.shape_cast %5 : vector<1x1x64xf32> to vector<1x64xf32>
    %c0_6 = arith.constant 0 : index
    %c0_7 = arith.constant 0 : index
    %c0_8 = arith.constant 0 : index
    %7 = vector.load %arg8[%c0_6, %c0_7, %c0_8] : memref<1x32x32xbf16, #tpu.memory_space<vmem>>, vector<1x32x32xbf16>
    %8 = vector.shape_cast %7 : vector<1x32x32xbf16> to vector<32x32xbf16>
    %c0_9 = arith.constant 0 : index
    %c0_10 = arith.constant 0 : index
    %c0_11 = arith.constant 0 : index
    %9 = vector.load %arg9[%c0_9, %c0_10, %c0_11] : memref<1x1x32xf32, #tpu.memory_space<vmem>>, vector<1x1x32xf32>
    %10 = vector.shape_cast %9 : vector<1x1x32xf32> to vector<1x32xf32>
    %c0_12 = arith.constant 0 : index
    %c0_13 = arith.constant 0 : index
    %c0_14 = arith.constant 0 : index
    %11 = vector.load %arg10[%c0_12, %c0_13, %c0_14] : memref<1x32x32xbf16, #tpu.memory_space<vmem>>, vector<1x32x32xbf16>
    %12 = vector.shape_cast %11 : vector<1x32x32xbf16> to vector<32x32xbf16>
    %c0_15 = arith.constant 0 : index
    %c0_16 = arith.constant 0 : index
    %c0_17 = arith.constant 0 : index
    %13 = vector.load %arg11[%c0_15, %c0_16, %c0_17] : memref<1x1x32xf32, #tpu.memory_space<vmem>>, vector<1x1x32xf32>
    %14 = vector.shape_cast %13 : vector<1x1x32xf32> to vector<1x32xf32>
    %c0_18 = arith.constant 0 : index
    %c0_19 = arith.constant 0 : index
    %c0_20 = arith.constant 0 : index
    %15 = vector.load %arg12[%c0_18, %c0_19, %c0_20] : memref<1x1x32xf32, #tpu.memory_space<vmem>>, vector<1x1x32xf32>
    %16 = vector.shape_cast %15 : vector<1x1x32xf32> to vector<1x32xf32>
    %c0_21 = arith.constant 0 : index
    %c0_22 = arith.constant 0 : index
    %c0_23 = arith.constant 0 : index
    %17 = vector.load %arg13[%c0_21, %c0_22, %c0_23] : memref<1x1x32xf32, #tpu.memory_space<vmem>>, vector<1x1x32xf32>
    %18 = vector.shape_cast %17 : vector<1x1x32xf32> to vector<1x32xf32>
    %c0_24 = arith.constant 0 : index
    %c0_25 = arith.constant 0 : index
    %c0_26 = arith.constant 0 : index
    %19 = vector.load %arg14[%c0_24, %c0_25, %c0_26] : memref<1x32x64xbf16, #tpu.memory_space<vmem>>, vector<1x32x64xbf16>
    %20 = vector.shape_cast %19 : vector<1x32x64xbf16> to vector<32x64xbf16>
    %c0_27 = arith.constant 0 : index
    %c0_28 = arith.constant 0 : index
    %c0_29 = arith.constant 0 : index
    %21 = vector.load %arg15[%c0_27, %c0_28, %c0_29] : memref<1x1x64xf32, #tpu.memory_space<vmem>>, vector<1x1x64xf32>
    %22 = vector.shape_cast %21 : vector<1x1x64xf32> to vector<1x64xf32>
    %c0_30 = arith.constant 0 : index
    %c0_31 = arith.constant 0 : index
    %c0_32 = arith.constant 0 : index
    %23 = vector.load %arg16[%c0_30, %c0_31, %c0_32] : memref<1x64x32xbf16, #tpu.memory_space<vmem>>, vector<1x64x32xbf16>
    %24 = vector.shape_cast %23 : vector<1x64x32xbf16> to vector<64x32xbf16>
    %c0_33 = arith.constant 0 : index
    %c0_34 = arith.constant 0 : index
    %c0_35 = arith.constant 0 : index
    %25 = vector.load %arg17[%c0_33, %c0_34, %c0_35] : memref<1x1x32xf32, #tpu.memory_space<vmem>>, vector<1x1x32xf32>
    %26 = vector.shape_cast %25 : vector<1x1x32xf32> to vector<1x32xf32>
    %c0_36 = arith.constant 0 : index
    %c0_37 = arith.constant 0 : index
    %c0_38 = arith.constant 0 : index
    %27 = vector.load %arg18[%c0_36, %c0_37, %c0_38] : memref<1x1x32xf32, #tpu.memory_space<vmem>>, vector<1x1x32xf32>
    %28 = vector.shape_cast %27 : vector<1x1x32xf32> to vector<1x32xf32>
    %c0_39 = arith.constant 0 : index
    %c0_40 = arith.constant 0 : index
    %c0_41 = arith.constant 0 : index
    %29 = vector.load %arg19[%c0_39, %c0_40, %c0_41] : memref<1x1x32xf32, #tpu.memory_space<vmem>>, vector<1x1x32xf32>
    %30 = vector.shape_cast %29 : vector<1x1x32xf32> to vector<1x32xf32>
    %c0_42 = arith.constant 0 : index
    %c0_43 = arith.constant 0 : index
    %c0_44 = arith.constant 0 : index
    %31 = vector.load %arg28[%c0_42, %c0_43, %c0_44] : memref<2x128x32xf32, #tpu.memory_space<vmem>>, vector<1x128x32xf32>
    %32 = vector.shape_cast %31 : vector<1x128x32xf32> to vector<128x32xf32>
    %c0_45 = arith.constant 0 : index
    %c0_46 = arith.constant 0 : index
    %c0_47 = arith.constant 0 : index
    %33 = vector.load %arg3[%c0_45, %c0_46, %c0_47] : memref<2x128x32xf32, #tpu.memory_space<vmem>>, vector<1x128x32xf32>
    %34 = vector.shape_cast %33 : vector<1x128x32xf32> to vector<128x32xf32>
    %c0_48 = arith.constant 0 : index
    %c0_49 = arith.constant 0 : index
    %c0_50 = arith.constant 0 : index
    %35 = vector.load %arg4[%c0_48, %c0_49, %c0_50] : memref<2x1x128xf32, #tpu.memory_space<vmem>>, vector<1x1x128xf32>
    %36 = vector.shape_cast %35 : vector<1x1x128xf32> to vector<1x128xf32>
    %37 = arith.addf %32, %34 : vector<128x32xf32>
    %38 = arith.truncf %37 : vector<128x32xf32> to vector<128x32xbf16>
    %cst = arith.constant dense<0.000000e+00> : vector<128x64xf32>
    %39 = tpu.matmul %38, %4, %cst {dimension_numbers = #tpu.dot_dimension_numbers<[1], [0], [0], [1], [0, 0, 1, 1], [], []>} : vector<128x32xbf16>, vector<32x64xbf16>, vector<128x64xf32> -> vector<128x64xf32>
    %40 = vector.broadcast %6 : vector<1x64xf32> to vector<128x64xf32>
    %41 = arith.addf %39, %40 : vector<128x64xf32>
    %42 = arith.truncf %32 : vector<128x32xf32> to vector<128x32xbf16>
    %cst_51 = arith.constant dense<0.000000e+00> : vector<128x32xf32>
    %43 = tpu.matmul %42, %8, %cst_51 {dimension_numbers = #tpu.dot_dimension_numbers<[1], [0], [0], [1], [0, 0, 1, 1], [], []>} : vector<128x32xbf16>, vector<32x32xbf16>, vector<128x32xf32> -> vector<128x32xf32>
    %44 = vector.broadcast %10 : vector<1x32xf32> to vector<128x32xf32>
    %45 = arith.addf %43, %44 : vector<128x32xf32>
    %46 = arith.truncf %41 : vector<128x64xf32> to vector<128x64xbf16>
    %47 = vector.extract_strided_slice %41 {offsets = [0, 32], sizes = [128, 32], strides = [1, 1]} : vector<128x64xf32> to vector<128x32xf32>
    %48 = tpu.transpose %47, [1, 0] : vector<128x32xf32> -> vector<32x128xf32>
    %49 = arith.truncf %48 : vector<32x128xf32> to vector<32x128xbf16>
    %50 = arith.truncf %45 : vector<128x32xf32> to vector<128x32xbf16>
    %cst_52 = arith.constant 0.000000e+00 : f32
    %51 = vector.broadcast %cst_52 : f32 to vector<128x32xf32>
    %52 = vector.extract_strided_slice %46 {offsets = [0, 0], sizes = [128, 8], strides = [1, 1]} : vector<128x64xbf16> to vector<128x8xbf16>
    %53 = vector.extract_strided_slice %49 {offsets = [0, 0], sizes = [8, 128], strides = [1, 1]} : vector<32x128xbf16> to vector<8x128xbf16>
    %cst_53 = arith.constant dense<0.000000e+00> : vector<128x128xf32>
    %54 = tpu.matmul %52, %53, %cst_53 {dimension_numbers = #tpu.dot_dimension_numbers<[1], [0], [0], [1], [0, 0, 1, 1], [], []>} : vector<128x8xbf16>, vector<8x128xbf16>, vector<128x128xf32> -> vector<128x128xf32>
    %55 = vector.broadcast %36 : vector<1x128xf32> to vector<128x128xf32>
    %56 = arith.addf %54, %55 : vector<128x128xf32>
    %cst_54 = arith.constant dense<0xFF800000> : vector<128xf32>
    %57 = vector.multi_reduction <maximumf>, %56, %cst_54 [1] : vector<128x128xf32> to vector<128xf32>
    %58 = vector.shape_cast %57 : vector<128xf32> to vector<128x1xf32>
    %59 = vector.broadcast %58 : vector<128x1xf32> to vector<128x128xf32>
    %60 = arith.subf %56, %59 : vector<128x128xf32>
    %61 = math.exp %60 : vector<128x128xf32>
    %cst_55 = arith.constant dense<0.000000e+00> : vector<128xf32>
    %62 = vector.multi_reduction <add>, %61, %cst_55 [1] : vector<128x128xf32> to vector<128xf32>
    %63 = vector.shape_cast %62 : vector<128xf32> to vector<128x1xf32>
    %64 = tpu.reciprocal %63 {approx = true} : vector<128x1xf32> -> vector<128x1xf32>
    %65 = vector.broadcast %64 : vector<128x1xf32> to vector<128x128xf32>
    %66 = arith.mulf %61, %65 : vector<128x128xf32>
    %67 = arith.truncf %66 : vector<128x128xf32> to vector<128x128xbf16>
    %68 = vector.extract_strided_slice %50 {offsets = [0, 0], sizes = [128, 8], strides = [1, 1]} : vector<128x32xbf16> to vector<128x8xbf16>
    %cst_56 = arith.constant dense<0.000000e+00> : vector<128x8xf32>
    %69 = tpu.matmul %67, %68, %cst_56 {dimension_numbers = #tpu.dot_dimension_numbers<[1], [0], [0], [1], [0, 0, 1, 1], [], []>} : vector<128x128xbf16>, vector<128x8xbf16>, vector<128x8xf32> -> vector<128x8xf32>
    %70 = arith.truncf %69 : vector<128x8xf32> to vector<128x8xbf16>
    %71 = vector.extract_strided_slice %12 {offsets = [0, 0], sizes = [8, 32], strides = [1, 1]} : vector<32x32xbf16> to vector<8x32xbf16>
    %cst_57 = arith.constant dense<0.000000e+00> : vector<128x32xf32>
    %72 = tpu.matmul %70, %71, %cst_57 {dimension_numbers = #tpu.dot_dimension_numbers<[1], [0], [0], [1], [0, 0, 1, 1], [], []>} : vector<128x8xbf16>, vector<8x32xbf16>, vector<128x32xf32> -> vector<128x32xf32>
    %73 = arith.addf %51, %72 : vector<128x32xf32>
    %74 = vector.extract_strided_slice %46 {offsets = [0, 8], sizes = [128, 8], strides = [1, 1]} : vector<128x64xbf16> to vector<128x8xbf16>
    %75 = vector.extract_strided_slice %49 {offsets = [8, 0], sizes = [8, 128], strides = [1, 1]} : vector<32x128xbf16> to vector<8x128xbf16>
    %cst_58 = arith.constant dense<0.000000e+00> : vector<128x128xf32>
    %76 = tpu.matmul %74, %75, %cst_58 {dimension_numbers = #tpu.dot_dimension_numbers<[1], [0], [0], [1], [0, 0, 1, 1], [], []>} : vector<128x8xbf16>, vector<8x128xbf16>, vector<128x128xf32> -> vector<128x128xf32>
    %77 = vector.broadcast %36 : vector<1x128xf32> to vector<128x128xf32>
    %78 = arith.addf %76, %77 : vector<128x128xf32>
    %cst_59 = arith.constant dense<0xFF800000> : vector<128xf32>
    %79 = vector.multi_reduction <maximumf>, %78, %cst_59 [1] : vector<128x128xf32> to vector<128xf32>
    %80 = vector.shape_cast %79 : vector<128xf32> to vector<128x1xf32>
    %81 = vector.broadcast %80 : vector<128x1xf32> to vector<128x128xf32>
    %82 = arith.subf %78, %81 : vector<128x128xf32>
    %83 = math.exp %82 : vector<128x128xf32>
    %cst_60 = arith.constant dense<0.000000e+00> : vector<128xf32>
    %84 = vector.multi_reduction <add>, %83, %cst_60 [1] : vector<128x128xf32> to vector<128xf32>
    %85 = vector.shape_cast %84 : vector<128xf32> to vector<128x1xf32>
    %86 = tpu.reciprocal %85 {approx = true} : vector<128x1xf32> -> vector<128x1xf32>
    %87 = vector.broadcast %86 : vector<128x1xf32> to vector<128x128xf32>
    %88 = arith.mulf %83, %87 : vector<128x128xf32>
    %89 = arith.truncf %88 : vector<128x128xf32> to vector<128x128xbf16>
    %90 = vector.extract_strided_slice %50 {offsets = [0, 8], sizes = [128, 8], strides = [1, 1]} : vector<128x32xbf16> to vector<128x8xbf16>
    %cst_61 = arith.constant dense<0.000000e+00> : vector<128x8xf32>
    %91 = tpu.matmul %89, %90, %cst_61 {dimension_numbers = #tpu.dot_dimension_numbers<[1], [0], [0], [1], [0, 0, 1, 1], [], []>} : vector<128x128xbf16>, vector<128x8xbf16>, vector<128x8xf32> -> vector<128x8xf32>
    %92 = arith.truncf %91 : vector<128x8xf32> to vector<128x8xbf16>
    %93 = vector.extract_strided_slice %12 {offsets = [8, 0], sizes = [8, 32], strides = [1, 1]} : vector<32x32xbf16> to vector<8x32xbf16>
    %cst_62 = arith.constant dense<0.000000e+00> : vector<128x32xf32>
    %94 = tpu.matmul %92, %93, %cst_62 {dimension_numbers = #tpu.dot_dimension_numbers<[1], [0], [0], [1], [0, 0, 1, 1], [], []>} : vector<128x8xbf16>, vector<8x32xbf16>, vector<128x32xf32> -> vector<128x32xf32>
    %95 = arith.addf %73, %94 : vector<128x32xf32>
    %96 = vector.extract_strided_slice %46 {offsets = [0, 16], sizes = [128, 8], strides = [1, 1]} : vector<128x64xbf16> to vector<128x8xbf16>
    %97 = vector.extract_strided_slice %49 {offsets = [16, 0], sizes = [8, 128], strides = [1, 1]} : vector<32x128xbf16> to vector<8x128xbf16>
    %cst_63 = arith.constant dense<0.000000e+00> : vector<128x128xf32>
    %98 = tpu.matmul %96, %97, %cst_63 {dimension_numbers = #tpu.dot_dimension_numbers<[1], [0], [0], [1], [0, 0, 1, 1], [], []>} : vector<128x8xbf16>, vector<8x128xbf16>, vector<128x128xf32> -> vector<128x128xf32>
    %99 = vector.broadcast %36 : vector<1x128xf32> to vector<128x128xf32>
    %100 = arith.addf %98, %99 : vector<128x128xf32>
    %cst_64 = arith.constant dense<0xFF800000> : vector<128xf32>
    %101 = vector.multi_reduction <maximumf>, %100, %cst_64 [1] : vector<128x128xf32> to vector<128xf32>
    %102 = vector.shape_cast %101 : vector<128xf32> to vector<128x1xf32>
    %103 = vector.broadcast %102 : vector<128x1xf32> to vector<128x128xf32>
    %104 = arith.subf %100, %103 : vector<128x128xf32>
    %105 = math.exp %104 : vector<128x128xf32>
    %cst_65 = arith.constant dense<0.000000e+00> : vector<128xf32>
    %106 = vector.multi_reduction <add>, %105, %cst_65 [1] : vector<128x128xf32> to vector<128xf32>
    %107 = vector.shape_cast %106 : vector<128xf32> to vector<128x1xf32>
    %108 = tpu.reciprocal %107 {approx = true} : vector<128x1xf32> -> vector<128x1xf32>
    %109 = vector.broadcast %108 : vector<128x1xf32> to vector<128x128xf32>
    %110 = arith.mulf %105, %109 : vector<128x128xf32>
    %111 = arith.truncf %110 : vector<128x128xf32> to vector<128x128xbf16>
    %112 = vector.extract_strided_slice %50 {offsets = [0, 16], sizes = [128, 8], strides = [1, 1]} : vector<128x32xbf16> to vector<128x8xbf16>
    %cst_66 = arith.constant dense<0.000000e+00> : vector<128x8xf32>
    %113 = tpu.matmul %111, %112, %cst_66 {dimension_numbers = #tpu.dot_dimension_numbers<[1], [0], [0], [1], [0, 0, 1, 1], [], []>} : vector<128x128xbf16>, vector<128x8xbf16>, vector<128x8xf32> -> vector<128x8xf32>
    %114 = arith.truncf %113 : vector<128x8xf32> to vector<128x8xbf16>
    %115 = vector.extract_strided_slice %12 {offsets = [16, 0], sizes = [8, 32], strides = [1, 1]} : vector<32x32xbf16> to vector<8x32xbf16>
    %cst_67 = arith.constant dense<0.000000e+00> : vector<128x32xf32>
    %116 = tpu.matmul %114, %115, %cst_67 {dimension_numbers = #tpu.dot_dimension_numbers<[1], [0], [0], [1], [0, 0, 1, 1], [], []>} : vector<128x8xbf16>, vector<8x32xbf16>, vector<128x32xf32> -> vector<128x32xf32>
    %117 = arith.addf %95, %116 : vector<128x32xf32>
    %118 = vector.extract_strided_slice %46 {offsets = [0, 24], sizes = [128, 8], strides = [1, 1]} : vector<128x64xbf16> to vector<128x8xbf16>
    %119 = vector.extract_strided_slice %49 {offsets = [24, 0], sizes = [8, 128], strides = [1, 1]} : vector<32x128xbf16> to vector<8x128xbf16>
    %cst_68 = arith.constant dense<0.000000e+00> : vector<128x128xf32>
    %120 = tpu.matmul %118, %119, %cst_68 {dimension_numbers = #tpu.dot_dimension_numbers<[1], [0], [0], [1], [0, 0, 1, 1], [], []>} : vector<128x8xbf16>, vector<8x128xbf16>, vector<128x128xf32> -> vector<128x128xf32>
    %121 = vector.broadcast %36 : vector<1x128xf32> to vector<128x128xf32>
    %122 = arith.addf %120, %121 : vector<128x128xf32>
    %cst_69 = arith.constant dense<0xFF800000> : vector<128xf32>
    %123 = vector.multi_reduction <maximumf>, %122, %cst_69 [1] : vector<128x128xf32> to vector<128xf32>
    %124 = vector.shape_cast %123 : vector<128xf32> to vector<128x1xf32>
    %125 = vector.broadcast %124 : vector<128x1xf32> to vector<128x128xf32>
    %126 = arith.subf %122, %125 : vector<128x128xf32>
    %127 = math.exp %126 : vector<128x128xf32>
    %cst_70 = arith.constant dense<0.000000e+00> : vector<128xf32>
    %128 = vector.multi_reduction <add>, %127, %cst_70 [1] : vector<128x128xf32> to vector<128xf32>
    %129 = vector.shape_cast %128 : vector<128xf32> to vector<128x1xf32>
    %130 = tpu.reciprocal %129 {approx = true} : vector<128x1xf32> -> vector<128x1xf32>
    %131 = vector.broadcast %130 : vector<128x1xf32> to vector<128x128xf32>
    %132 = arith.mulf %127, %131 : vector<128x128xf32>
    %133 = arith.truncf %132 : vector<128x128xf32> to vector<128x128xbf16>
    %134 = vector.extract_strided_slice %50 {offsets = [0, 24], sizes = [128, 8], strides = [1, 1]} : vector<128x32xbf16> to vector<128x8xbf16>
    %cst_71 = arith.constant dense<0.000000e+00> : vector<128x8xf32>
    %135 = tpu.matmul %133, %134, %cst_71 {dimension_numbers = #tpu.dot_dimension_numbers<[1], [0], [0], [1], [0, 0, 1, 1], [], []>} : vector<128x128xbf16>, vector<128x8xbf16>, vector<128x8xf32> -> vector<128x8xf32>
    %136 = arith.truncf %135 : vector<128x8xf32> to vector<128x8xbf16>
    %137 = vector.extract_strided_slice %12 {offsets = [24, 0], sizes = [8, 32], strides = [1, 1]} : vector<32x32xbf16> to vector<8x32xbf16>
    %cst_72 = arith.constant dense<0.000000e+00> : vector<128x32xf32>
    %138 = tpu.matmul %136, %137, %cst_72 {dimension_numbers = #tpu.dot_dimension_numbers<[1], [0], [0], [1], [0, 0, 1, 1], [], []>} : vector<128x8xbf16>, vector<8x32xbf16>, vector<128x32xf32> -> vector<128x32xf32>
    %139 = arith.addf %117, %138 : vector<128x32xf32>
    %140 = vector.broadcast %14 : vector<1x32xf32> to vector<128x32xf32>
    %141 = arith.addf %139, %140 : vector<128x32xf32>
    %142 = arith.addf %32, %141 : vector<128x32xf32>
    %cst_73 = arith.constant dense<0.000000e+00> : vector<128xf32>
    %143 = vector.multi_reduction <add>, %142, %cst_73 [1] : vector<128x32xf32> to vector<128xf32>
    %144 = vector.shape_cast %143 : vector<128xf32> to vector<128x1xf32>
    %cst_74 = arith.constant 3.200000e+01 : f32
    %145 = vector.broadcast %cst_74 : f32 to vector<128x1xf32>
    %146 = arith.divf %144, %145 : vector<128x1xf32>
    %147 = vector.broadcast %146 : vector<128x1xf32> to vector<128x32xf32>
    %148 = arith.subf %142, %147 : vector<128x32xf32>
    %149 = arith.mulf %148, %148 : vector<128x32xf32>
    %cst_75 = arith.constant dense<0.000000e+00> : vector<128xf32>
    %150 = vector.multi_reduction <add>, %149, %cst_75 [1] : vector<128x32xf32> to vector<128xf32>
    %151 = vector.shape_cast %150 : vector<128xf32> to vector<128x1xf32>
    %cst_76 = arith.constant 3.200000e+01 : f32
    %152 = vector.broadcast %cst_76 : f32 to vector<128x1xf32>
    %153 = arith.divf %151, %152 : vector<128x1xf32>
    %cst_77 = arith.constant 9.99999974E-6 : f32
    %154 = vector.broadcast %cst_77 : f32 to vector<128x1xf32>
    %155 = arith.addf %153, %154 : vector<128x1xf32>
    %156 = math.rsqrt %155 : vector<128x1xf32>
    %157 = vector.broadcast %156 : vector<128x1xf32> to vector<128x32xf32>
    %158 = arith.mulf %148, %157 : vector<128x32xf32>
    %159 = vector.broadcast %16 : vector<1x32xf32> to vector<128x32xf32>
    %160 = arith.mulf %158, %159 : vector<128x32xf32>
    %161 = vector.broadcast %18 : vector<1x32xf32> to vector<128x32xf32>
    %162 = arith.addf %160, %161 : vector<128x32xf32>
    %163 = arith.truncf %162 : vector<128x32xf32> to vector<128x32xbf16>
    %cst_78 = arith.constant dense<0.000000e+00> : vector<128x64xf32>
    %164 = tpu.matmul %163, %20, %cst_78 {dimension_numbers = #tpu.dot_dimension_numbers<[1], [0], [0], [1], [0, 0, 1, 1], [], []>} : vector<128x32xbf16>, vector<32x64xbf16>, vector<128x64xf32> -> vector<128x64xf32>
    %165 = vector.broadcast %22 : vector<1x64xf32> to vector<128x64xf32>
    %166 = arith.addf %164, %165 : vector<128x64xf32>
    %cst_79 = arith.constant 0.000000e+00 : f32
    %167 = vector.broadcast %cst_79 : f32 to vector<128x64xf32>
    %168 = arith.maximumf %166, %167 : vector<128x64xf32>
    %169 = arith.truncf %168 : vector<128x64xf32> to vector<128x64xbf16>
    %cst_80 = arith.constant dense<0.000000e+00> : vector<128x32xf32>
    %170 = tpu.matmul %169, %24, %cst_80 {dimension_numbers = #tpu.dot_dimension_numbers<[1], [0], [0], [1], [0, 0, 1, 1], [], []>} : vector<128x64xbf16>, vector<64x32xbf16>, vector<128x32xf32> -> vector<128x32xf32>
    %171 = vector.broadcast %26 : vector<1x32xf32> to vector<128x32xf32>
    %172 = arith.addf %170, %171 : vector<128x32xf32>
    %173 = arith.addf %162, %172 : vector<128x32xf32>
    %cst_81 = arith.constant dense<0.000000e+00> : vector<128xf32>
    %174 = vector.multi_reduction <add>, %173, %cst_81 [1] : vector<128x32xf32> to vector<128xf32>
    %175 = vector.shape_cast %174 : vector<128xf32> to vector<128x1xf32>
    %cst_82 = arith.constant 3.200000e+01 : f32
    %176 = vector.broadcast %cst_82 : f32 to vector<128x1xf32>
    %177 = arith.divf %175, %176 : vector<128x1xf32>
    %178 = vector.broadcast %177 : vector<128x1xf32> to vector<128x32xf32>
    %179 = arith.subf %173, %178 : vector<128x32xf32>
    %180 = arith.mulf %179, %179 : vector<128x32xf32>
    %cst_83 = arith.constant dense<0.000000e+00> : vector<128xf32>
    %181 = vector.multi_reduction <add>, %180, %cst_83 [1] : vector<128x32xf32> to vector<128xf32>
    %182 = vector.shape_cast %181 : vector<128xf32> to vector<128x1xf32>
    %cst_84 = arith.constant 3.200000e+01 : f32
    %183 = vector.broadcast %cst_84 : f32 to vector<128x1xf32>
    %184 = arith.divf %182, %183 : vector<128x1xf32>
    %cst_85 = arith.constant 9.99999974E-6 : f32
    %185 = vector.broadcast %cst_85 : f32 to vector<128x1xf32>
    %186 = arith.addf %184, %185 : vector<128x1xf32>
    %187 = math.rsqrt %186 : vector<128x1xf32>
    %188 = vector.broadcast %187 : vector<128x1xf32> to vector<128x32xf32>
    %189 = arith.mulf %179, %188 : vector<128x32xf32>
    %190 = vector.broadcast %28 : vector<1x32xf32> to vector<128x32xf32>
    %191 = arith.mulf %189, %190 : vector<128x32xf32>
    %192 = vector.broadcast %30 : vector<1x32xf32> to vector<128x32xf32>
    %193 = arith.addf %191, %192 : vector<128x32xf32>
    %c0_86 = arith.constant 0 : index
    %c0_87 = arith.constant 0 : index
    %c0_88 = arith.constant 0 : index
    %194 = vector.load %arg28[%c0_86, %c0_87, %c0_88] : memref<2x128x32xf32, #tpu.memory_space<vmem>>, vector<1x128x32xf32>
    %195 = vector.shape_cast %194 : vector<1x128x32xf32> to vector<128x32xf32>
    %196 = vector.shape_cast %193 : vector<128x32xf32> to vector<1x128x32xf32>
    tpu.vector_store %arg28[%c0_86, %c0_87, %c0_88], %196 {strides = array<i32>} : memref<2x128x32xf32, #tpu.memory_space<vmem>>, vector<1x128x32xf32>,
    %c1 = arith.constant 1 : index
    %c0_89 = arith.constant 0 : index
    %c0_90 = arith.constant 0 : index
    %197 = vector.load %arg28[%c1, %c0_89, %c0_90] : memref<2x128x32xf32, #tpu.memory_space<vmem>>, vector<1x128x32xf32>
    %198 = vector.shape_cast %197 : vector<1x128x32xf32> to vector<128x32xf32>
    %c1_91 = arith.constant 1 : index
    %c0_92 = arith.constant 0 : index
    %c0_93 = arith.constant 0 : index
    %199 = vector.load %arg3[%c1_91, %c0_92, %c0_93] : memref<2x128x32xf32, #tpu.memory_space<vmem>>, vector<1x128x32xf32>
    %200 = vector.shape_cast %199 : vector<1x128x32xf32> to vector<128x32xf32>
    %c1_94 = arith.constant 1 : index
    %c0_95 = arith.constant 0 : index
    %c0_96 = arith.constant 0 : index
    %201 = vector.load %arg4[%c1_94, %c0_95, %c0_96] : memref<2x1x128xf32, #tpu.memory_space<vmem>>, vector<1x1x128xf32>
    %202 = vector.shape_cast %201 : vector<1x1x128xf32> to vector<1x128xf32>
    %203 = arith.addf %198, %200 : vector<128x32xf32>
    %204 = arith.truncf %203 : vector<128x32xf32> to vector<128x32xbf16>
    %cst_97 = arith.constant dense<0.000000e+00> : vector<128x64xf32>
    %205 = tpu.matmul %204, %4, %cst_97 {dimension_numbers = #tpu.dot_dimension_numbers<[1], [0], [0], [1], [0, 0, 1, 1], [], []>} : vector<128x32xbf16>, vector<32x64xbf16>, vector<128x64xf32> -> vector<128x64xf32>
    %206 = vector.broadcast %6 : vector<1x64xf32> to vector<128x64xf32>
    %207 = arith.addf %205, %206 : vector<128x64xf32>
    %208 = arith.truncf %198 : vector<128x32xf32> to vector<128x32xbf16>
    %cst_98 = arith.constant dense<0.000000e+00> : vector<128x32xf32>
    %209 = tpu.matmul %208, %8, %cst_98 {dimension_numbers = #tpu.dot_dimension_numbers<[1], [0], [0], [1], [0, 0, 1, 1], [], []>} : vector<128x32xbf16>, vector<32x32xbf16>, vector<128x32xf32> -> vector<128x32xf32>
    %210 = vector.broadcast %10 : vector<1x32xf32> to vector<128x32xf32>
    %211 = arith.addf %209, %210 : vector<128x32xf32>
    %212 = arith.truncf %207 : vector<128x64xf32> to vector<128x64xbf16>
    %213 = vector.extract_strided_slice %207 {offsets = [0, 32], sizes = [128, 32], strides = [1, 1]} : vector<128x64xf32> to vector<128x32xf32>
    %214 = tpu.transpose %213, [1, 0] : vector<128x32xf32> -> vector<32x128xf32>
    %215 = arith.truncf %214 : vector<32x128xf32> to vector<32x128xbf16>
    %216 = arith.truncf %211 : vector<128x32xf32> to vector<128x32xbf16>
    %cst_99 = arith.constant 0.000000e+00 : f32
    %217 = vector.broadcast %cst_99 : f32 to vector<128x32xf32>
    %218 = vector.extract_strided_slice %212 {offsets = [0, 0], sizes = [128, 8], strides = [1, 1]} : vector<128x64xbf16> to vector<128x8xbf16>
    %219 = vector.extract_strided_slice %215 {offsets = [0, 0], sizes = [8, 128], strides = [1, 1]} : vector<32x128xbf16> to vector<8x128xbf16>
    %cst_100 = arith.constant dense<0.000000e+00> : vector<128x128xf32>
    %220 = tpu.matmul %218, %219, %cst_100 {dimension_numbers = #tpu.dot_dimension_numbers<[1], [0], [0], [1], [0, 0, 1, 1], [], []>} : vector<128x8xbf16>, vector<8x128xbf16>, vector<128x128xf32> -> vector<128x128xf32>
    %221 = vector.broadcast %202 : vector<1x128xf32> to vector<128x128xf32>
    %222 = arith.addf %220, %221 : vector<128x128xf32>
    %cst_101 = arith.constant dense<0xFF800000> : vector<128xf32>
    %223 = vector.multi_reduction <maximumf>, %222, %cst_101 [1] : vector<128x128xf32> to vector<128xf32>
    %224 = vector.shape_cast %223 : vector<128xf32> to vector<128x1xf32>
    %225 = vector.broadcast %224 : vector<128x1xf32> to vector<128x128xf32>
    %226 = arith.subf %222, %225 : vector<128x128xf32>
    %227 = math.exp %226 : vector<128x128xf32>
    %cst_102 = arith.constant dense<0.000000e+00> : vector<128xf32>
    %228 = vector.multi_reduction <add>, %227, %cst_102 [1] : vector<128x128xf32> to vector<128xf32>
    %229 = vector.shape_cast %228 : vector<128xf32> to vector<128x1xf32>
    %230 = tpu.reciprocal %229 {approx = true} : vector<128x1xf32> -> vector<128x1xf32>
    %231 = vector.broadcast %230 : vector<128x1xf32> to vector<128x128xf32>
    %232 = arith.mulf %227, %231 : vector<128x128xf32>
    %233 = arith.truncf %232 : vector<128x128xf32> to vector<128x128xbf16>
    %234 = vector.extract_strided_slice %216 {offsets = [0, 0], sizes = [128, 8], strides = [1, 1]} : vector<128x32xbf16> to vector<128x8xbf16>
    %cst_103 = arith.constant dense<0.000000e+00> : vector<128x8xf32>
    %235 = tpu.matmul %233, %234, %cst_103 {dimension_numbers = #tpu.dot_dimension_numbers<[1], [0], [0], [1], [0, 0, 1, 1], [], []>} : vector<128x128xbf16>, vector<128x8xbf16>, vector<128x8xf32> -> vector<128x8xf32>
    %236 = arith.truncf %235 : vector<128x8xf32> to vector<128x8xbf16>
    %237 = vector.extract_strided_slice %12 {offsets = [0, 0], sizes = [8, 32], strides = [1, 1]} : vector<32x32xbf16> to vector<8x32xbf16>
    %cst_104 = arith.constant dense<0.000000e+00> : vector<128x32xf32>
    %238 = tpu.matmul %236, %237, %cst_104 {dimension_numbers = #tpu.dot_dimension_numbers<[1], [0], [0], [1], [0, 0, 1, 1], [], []>} : vector<128x8xbf16>, vector<8x32xbf16>, vector<128x32xf32> -> vector<128x32xf32>
    %239 = arith.addf %217, %238 : vector<128x32xf32>
    %240 = vector.extract_strided_slice %212 {offsets = [0, 8], sizes = [128, 8], strides = [1, 1]} : vector<128x64xbf16> to vector<128x8xbf16>
    %241 = vector.extract_strided_slice %215 {offsets = [8, 0], sizes = [8, 128], strides = [1, 1]} : vector<32x128xbf16> to vector<8x128xbf16>
    %cst_105 = arith.constant dense<0.000000e+00> : vector<128x128xf32>
    %242 = tpu.matmul %240, %241, %cst_105 {dimension_numbers = #tpu.dot_dimension_numbers<[1], [0], [0], [1], [0, 0, 1, 1], [], []>} : vector<128x8xbf16>, vector<8x128xbf16>, vector<128x128xf32> -> vector<128x128xf32>
    %243 = vector.broadcast %202 : vector<1x128xf32> to vector<128x128xf32>
    %244 = arith.addf %242, %243 : vector<128x128xf32>
    %cst_106 = arith.constant dense<0xFF800000> : vector<128xf32>
    %245 = vector.multi_reduction <maximumf>, %244, %cst_106 [1] : vector<128x128xf32> to vector<128xf32>
    %246 = vector.shape_cast %245 : vector<128xf32> to vector<128x1xf32>
    %247 = vector.broadcast %246 : vector<128x1xf32> to vector<128x128xf32>
    %248 = arith.subf %244, %247 : vector<128x128xf32>
    %249 = math.exp %248 : vector<128x128xf32>
    %cst_107 = arith.constant dense<0.000000e+00> : vector<128xf32>
    %250 = vector.multi_reduction <add>, %249, %cst_107 [1] : vector<128x128xf32> to vector<128xf32>
    %251 = vector.shape_cast %250 : vector<128xf32> to vector<128x1xf32>
    %252 = tpu.reciprocal %251 {approx = true} : vector<128x1xf32> -> vector<128x1xf32>
    %253 = vector.broadcast %252 : vector<128x1xf32> to vector<128x128xf32>
    %254 = arith.mulf %249, %253 : vector<128x128xf32>
    %255 = arith.truncf %254 : vector<128x128xf32> to vector<128x128xbf16>
    %256 = vector.extract_strided_slice %216 {offsets = [0, 8], sizes = [128, 8], strides = [1, 1]} : vector<128x32xbf16> to vector<128x8xbf16>
    %cst_108 = arith.constant dense<0.000000e+00> : vector<128x8xf32>
    %257 = tpu.matmul %255, %256, %cst_108 {dimension_numbers = #tpu.dot_dimension_numbers<[1], [0], [0], [1], [0, 0, 1, 1], [], []>} : vector<128x128xbf16>, vector<128x8xbf16>, vector<128x8xf32> -> vector<128x8xf32>
    %258 = arith.truncf %257 : vector<128x8xf32> to vector<128x8xbf16>
    %259 = vector.extract_strided_slice %12 {offsets = [8, 0], sizes = [8, 32], strides = [1, 1]} : vector<32x32xbf16> to vector<8x32xbf16>
    %cst_109 = arith.constant dense<0.000000e+00> : vector<128x32xf32>
    %260 = tpu.matmul %258, %259, %cst_109 {dimension_numbers = #tpu.dot_dimension_numbers<[1], [0], [0], [1], [0, 0, 1, 1], [], []>} : vector<128x8xbf16>, vector<8x32xbf16>, vector<128x32xf32> -> vector<128x32xf32>
    %261 = arith.addf %239, %260 : vector<128x32xf32>
    %262 = vector.extract_strided_slice %212 {offsets = [0, 16], sizes = [128, 8], strides = [1, 1]} : vector<128x64xbf16> to vector<128x8xbf16>
    %263 = vector.extract_strided_slice %215 {offsets = [16, 0], sizes = [8, 128], strides = [1, 1]} : vector<32x128xbf16> to vector<8x128xbf16>
    %cst_110 = arith.constant dense<0.000000e+00> : vector<128x128xf32>
    %264 = tpu.matmul %262, %263, %cst_110 {dimension_numbers = #tpu.dot_dimension_numbers<[1], [0], [0], [1], [0, 0, 1, 1], [], []>} : vector<128x8xbf16>, vector<8x128xbf16>, vector<128x128xf32> -> vector<128x128xf32>
    %265 = vector.broadcast %202 : vector<1x128xf32> to vector<128x128xf32>
    %266 = arith.addf %264, %265 : vector<128x128xf32>
    %cst_111 = arith.constant dense<0xFF800000> : vector<128xf32>
    %267 = vector.multi_reduction <maximumf>, %266, %cst_111 [1] : vector<128x128xf32> to vector<128xf32>
    %268 = vector.shape_cast %267 : vector<128xf32> to vector<128x1xf32>
    %269 = vector.broadcast %268 : vector<128x1xf32> to vector<128x128xf32>
    %270 = arith.subf %266, %269 : vector<128x128xf32>
    %271 = math.exp %270 : vector<128x128xf32>
    %cst_112 = arith.constant dense<0.000000e+00> : vector<128xf32>
    %272 = vector.multi_reduction <add>, %271, %cst_112 [1] : vector<128x128xf32> to vector<128xf32>
    %273 = vector.shape_cast %272 : vector<128xf32> to vector<128x1xf32>
    %274 = tpu.reciprocal %273 {approx = true} : vector<128x1xf32> -> vector<128x1xf32>
    %275 = vector.broadcast %274 : vector<128x1xf32> to vector<128x128xf32>
    %276 = arith.mulf %271, %275 : vector<128x128xf32>
    %277 = arith.truncf %276 : vector<128x128xf32> to vector<128x128xbf16>
    %278 = vector.extract_strided_slice %216 {offsets = [0, 16], sizes = [128, 8], strides = [1, 1]} : vector<128x32xbf16> to vector<128x8xbf16>
    %cst_113 = arith.constant dense<0.000000e+00> : vector<128x8xf32>
    %279 = tpu.matmul %277, %278, %cst_113 {dimension_numbers = #tpu.dot_dimension_numbers<[1], [0], [0], [1], [0, 0, 1, 1], [], []>} : vector<128x128xbf16>, vector<128x8xbf16>, vector<128x8xf32> -> vector<128x8xf32>
    %280 = arith.truncf %279 : vector<128x8xf32> to vector<128x8xbf16>
    %281 = vector.extract_strided_slice %12 {offsets = [16, 0], sizes = [8, 32], strides = [1, 1]} : vector<32x32xbf16> to vector<8x32xbf16>
    %cst_114 = arith.constant dense<0.000000e+00> : vector<128x32xf32>
    %282 = tpu.matmul %280, %281, %cst_114 {dimension_numbers = #tpu.dot_dimension_numbers<[1], [0], [0], [1], [0, 0, 1, 1], [], []>} : vector<128x8xbf16>, vector<8x32xbf16>, vector<128x32xf32> -> vector<128x32xf32>
    %283 = arith.addf %261, %282 : vector<128x32xf32>
    %284 = vector.extract_strided_slice %212 {offsets = [0, 24], sizes = [128, 8], strides = [1, 1]} : vector<128x64xbf16> to vector<128x8xbf16>
    %285 = vector.extract_strided_slice %215 {offsets = [24, 0], sizes = [8, 128], strides = [1, 1]} : vector<32x128xbf16> to vector<8x128xbf16>
    %cst_115 = arith.constant dense<0.000000e+00> : vector<128x128xf32>
    %286 = tpu.matmul %284, %285, %cst_115 {dimension_numbers = #tpu.dot_dimension_numbers<[1], [0], [0], [1], [0, 0, 1, 1], [], []>} : vector<128x8xbf16>, vector<8x128xbf16>, vector<128x128xf32> -> vector<128x128xf32>
    %287 = vector.broadcast %202 : vector<1x128xf32> to vector<128x128xf32>
    %288 = arith.addf %286, %287 : vector<128x128xf32>
    %cst_116 = arith.constant dense<0xFF800000> : vector<128xf32>
    %289 = vector.multi_reduction <maximumf>, %288, %cst_116 [1] : vector<128x128xf32> to vector<128xf32>
    %290 = vector.shape_cast %289 : vector<128xf32> to vector<128x1xf32>
    %291 = vector.broadcast %290 : vector<128x1xf32> to vector<128x128xf32>
    %292 = arith.subf %288, %291 : vector<128x128xf32>
    %293 = math.exp %292 : vector<128x128xf32>
    %cst_117 = arith.constant dense<0.000000e+00> : vector<128xf32>
    %294 = vector.multi_reduction <add>, %293, %cst_117 [1] : vector<128x128xf32> to vector<128xf32>
    %295 = vector.shape_cast %294 : vector<128xf32> to vector<128x1xf32>
    %296 = tpu.reciprocal %295 {approx = true} : vector<128x1xf32> -> vector<128x1xf32>
    %297 = vector.broadcast %296 : vector<128x1xf32> to vector<128x128xf32>
    %298 = arith.mulf %293, %297 : vector<128x128xf32>
    %299 = arith.truncf %298 : vector<128x128xf32> to vector<128x128xbf16>
    %300 = vector.extract_strided_slice %216 {offsets = [0, 24], sizes = [128, 8], strides = [1, 1]} : vector<128x32xbf16> to vector<128x8xbf16>
    %cst_118 = arith.constant dense<0.000000e+00> : vector<128x8xf32>
    %301 = tpu.matmul %299, %300, %cst_118 {dimension_numbers = #tpu.dot_dimension_numbers<[1], [0], [0], [1], [0, 0, 1, 1], [], []>} : vector<128x128xbf16>, vector<128x8xbf16>, vector<128x8xf32> -> vector<128x8xf32>
    %302 = arith.truncf %301 : vector<128x8xf32> to vector<128x8xbf16>
    %303 = vector.extract_strided_slice %12 {offsets = [24, 0], sizes = [8, 32], strides = [1, 1]} : vector<32x32xbf16> to vector<8x32xbf16>
    %cst_119 = arith.constant dense<0.000000e+00> : vector<128x32xf32>
    %304 = tpu.matmul %302, %303, %cst_119 {dimension_numbers = #tpu.dot_dimension_numbers<[1], [0], [0], [1], [0, 0, 1, 1], [], []>} : vector<128x8xbf16>, vector<8x32xbf16>, vector<128x32xf32> -> vector<128x32xf32>
    %305 = arith.addf %283, %304 : vector<128x32xf32>
    %306 = vector.broadcast %14 : vector<1x32xf32> to vector<128x32xf32>
    %307 = arith.addf %305, %306 : vector<128x32xf32>
    %308 = arith.addf %198, %307 : vector<128x32xf32>
    %cst_120 = arith.constant dense<0.000000e+00> : vector<128xf32>
    %309 = vector.multi_reduction <add>, %308, %cst_120 [1] : vector<128x32xf32> to vector<128xf32>
    %310 = vector.shape_cast %309 : vector<128xf32> to vector<128x1xf32>
    %cst_121 = arith.constant 3.200000e+01 : f32
    %311 = vector.broadcast %cst_121 : f32 to vector<128x1xf32>
    %312 = arith.divf %310, %311 : vector<128x1xf32>
    %313 = vector.broadcast %312 : vector<128x1xf32> to vector<128x32xf32>
    %314 = arith.subf %308, %313 : vector<128x32xf32>
    %315 = arith.mulf %314, %314 : vector<128x32xf32>
    %cst_122 = arith.constant dense<0.000000e+00> : vector<128xf32>
    %316 = vector.multi_reduction <add>, %315, %cst_122 [1] : vector<128x32xf32> to vector<128xf32>
    %317 = vector.shape_cast %316 : vector<128xf32> to vector<128x1xf32>
    %cst_123 = arith.constant 3.200000e+01 : f32
    %318 = vector.broadcast %cst_123 : f32 to vector<128x1xf32>
    %319 = arith.divf %317, %318 : vector<128x1xf32>
    %cst_124 = arith.constant 9.99999974E-6 : f32
    %320 = vector.broadcast %cst_124 : f32 to vector<128x1xf32>
    %321 = arith.addf %319, %320 : vector<128x1xf32>
    %322 = math.rsqrt %321 : vector<128x1xf32>
    %323 = vector.broadcast %322 : vector<128x1xf32> to vector<128x32xf32>
    %324 = arith.mulf %314, %323 : vector<128x32xf32>
    %325 = vector.broadcast %16 : vector<1x32xf32> to vector<128x32xf32>
    %326 = arith.mulf %324, %325 : vector<128x32xf32>
    %327 = vector.broadcast %18 : vector<1x32xf32> to vector<128x32xf32>
    %328 = arith.addf %326, %327 : vector<128x32xf32>
    %329 = arith.truncf %328 : vector<128x32xf32> to vector<128x32xbf16>
    %cst_125 = arith.constant dense<0.000000e+00> : vector<128x64xf32>
    %330 = tpu.matmul %329, %20, %cst_125 {dimension_numbers = #tpu.dot_dimension_numbers<[1], [0], [0], [1], [0, 0, 1, 1], [], []>} : vector<128x32xbf16>, vector<32x64xbf16>, vector<128x64xf32> -> vector<128x64xf32>
    %331 = vector.broadcast %22 : vector<1x64xf32> to vector<128x64xf32>
    %332 = arith.addf %330, %331 : vector<128x64xf32>
    %cst_126 = arith.constant 0.000000e+00 : f32
    %333 = vector.broadcast %cst_126 : f32 to vector<128x64xf32>
    %334 = arith.maximumf %332, %333 : vector<128x64xf32>
    %335 = arith.truncf %334 : vector<128x64xf32> to vector<128x64xbf16>
    %cst_127 = arith.constant dense<0.000000e+00> : vector<128x32xf32>
    %336 = tpu.matmul %335, %24, %cst_127 {dimension_numbers = #tpu.dot_dimension_numbers<[1], [0], [0], [1], [0, 0, 1, 1], [], []>} : vector<128x64xbf16>, vector<64x32xbf16>, vector<128x32xf32> -> vector<128x32xf32>
    %337 = vector.broadcast %26 : vector<1x32xf32> to vector<128x32xf32>
    %338 = arith.addf %336, %337 : vector<128x32xf32>
    %339 = arith.addf %328, %338 : vector<128x32xf32>
    %cst_128 = arith.constant dense<0.000000e+00> : vector<128xf32>
    %340 = vector.multi_reduction <add>, %339, %cst_128 [1] : vector<128x32xf32> to vector<128xf32>
    %341 = vector.shape_cast %340 : vector<128xf32> to vector<128x1xf32>
    %cst_129 = arith.constant 3.200000e+01 : f32
    %342 = vector.broadcast %cst_129 : f32 to vector<128x1xf32>
    %343 = arith.divf %341, %342 : vector<128x1xf32>
    %344 = vector.broadcast %343 : vector<128x1xf32> to vector<128x32xf32>
    %345 = arith.subf %339, %344 : vector<128x32xf32>
    %346 = arith.mulf %345, %345 : vector<128x32xf32>
    %cst_130 = arith.constant dense<0.000000e+00> : vector<128xf32>
    %347 = vector.multi_reduction <add>, %346, %cst_130 [1] : vector<128x32xf32> to vector<128xf32>
    %348 = vector.shape_cast %347 : vector<128xf32> to vector<128x1xf32>
    %cst_131 = arith.constant 3.200000e+01 : f32
    %349 = vector.broadcast %cst_131 : f32 to vector<128x1xf32>
    %350 = arith.divf %348, %349 : vector<128x1xf32>
    %cst_132 = arith.constant 9.99999974E-6 : f32
    %351 = vector.broadcast %cst_132 : f32 to vector<128x1xf32>
    %352 = arith.addf %350, %351 : vector<128x1xf32>
    %353 = math.rsqrt %352 : vector<128x1xf32>
    %354 = vector.broadcast %353 : vector<128x1xf32> to vector<128x32xf32>
    %355 = arith.mulf %345, %354 : vector<128x32xf32>
    %356 = vector.broadcast %28 : vector<1x32xf32> to vector<128x32xf32>
    %357 = arith.mulf %355, %356 : vector<128x32xf32>
    %358 = vector.broadcast %30 : vector<1x32xf32> to vector<128x32xf32>
    %359 = arith.addf %357, %358 : vector<128x32xf32>
    %c1_133 = arith.constant 1 : index
    %c0_134 = arith.constant 0 : index
    %c0_135 = arith.constant 0 : index
    %360 = vector.load %arg28[%c1_133, %c0_134, %c0_135] : memref<2x128x32xf32, #tpu.memory_space<vmem>>, vector<1x128x32xf32>
    %361 = vector.shape_cast %360 : vector<1x128x32xf32> to vector<128x32xf32>
    %362 = vector.shape_cast %359 : vector<128x32xf32> to vector<1x128x32xf32>
    tpu.vector_store %arg28[%c1_133, %c0_134, %c0_135], %362 {strides = array<i32>} : memref<2x128x32xf32, #tpu.memory_space<vmem>>, vector<1x128x32xf32>,
    %c1_i32 = arith.constant 1 : i32
    %363 = arith.cmpi eq, %arg1, %c1_i32 : i32
    %364 = arith.extui %363 : i1 to i32
    %c0_i32_136 = arith.constant 0 : i32
    %365 = arith.cmpi ne, %364, %c0_i32_136 : i32
    scf.if %365 {
      %c0_137 = arith.constant 0 : index
      %c0_138 = arith.constant 0 : index
      %366 = vector.load %arg20[%c0_137, %c0_138] : memref<36x32xbf16, #tpu.memory_space<vmem>>, vector<36x32xbf16>
      %c0_139 = arith.constant 0 : index
      %c0_140 = arith.constant 0 : index
      %367 = vector.load %arg21[%c0_139, %c0_140] : memref<36x1xf32, #tpu.memory_space<vmem>>, vector<36x1xf32>
      %c0_141 = arith.constant 0 : index
      %c0_142 = arith.constant 0 : index
      %368 = vector.load %arg22[%c0_141, %c0_142] : memref<32x32xbf16, #tpu.memory_space<vmem>>, vector<32x32xbf16>
      %c0_143 = arith.constant 0 : index
      %c0_144 = arith.constant 0 : index
      %369 = vector.load %arg23[%c0_143, %c0_144] : memref<32x1xf32, #tpu.memory_space<vmem>>, vector<32x1xf32>
      %c0_145 = arith.constant 0 : index
      %c0_146 = arith.constant 0 : index
      %370 = vector.load %arg24[%c0_145, %c0_146] : memref<4x32xbf16, #tpu.memory_space<vmem>>, vector<4x32xbf16>
      %c0_147 = arith.constant 0 : index
      %c0_148 = arith.constant 0 : index
      %371 = vector.load %arg25[%c0_147, %c0_148] : memref<4x1xf32, #tpu.memory_space<vmem>>, vector<4x1xf32>
      %c0_149 = arith.constant 0 : index
      %c0_150 = arith.constant 0 : index
      %c0_151 = arith.constant 0 : index
      %372 = vector.load %arg5[%c0_149, %c0_150, %c0_151] : memref<2x128x1xf32, #tpu.memory_space<vmem>>, vector<1x128x1xf32>
      %373 = vector.shape_cast %372 : vector<1x128x1xf32> to vector<128x1xf32>
      %c0_152 = arith.constant 0 : index
      %c0_153 = arith.constant 0 : index
      %c0_154 = arith.constant 0 : index
      %374 = vector.load %arg28[%c0_152, %c0_153, %c0_154] : memref<2x128x32xf32, #tpu.memory_space<vmem>>, vector<1x128x32xf32>
      %375 = vector.shape_cast %374 : vector<1x128x32xf32> to vector<128x32xf32>
      %376 = vector.broadcast %373 : vector<128x1xf32> to vector<128x32xf32>
      %377 = arith.mulf %375, %376 : vector<128x32xf32>
      %c0_155 = arith.constant 0 : index
      %c0_156 = arith.constant 0 : index
      %c0_157 = arith.constant 0 : index
      %378 = vector.load %arg26[%c0_155, %c0_156, %c0_157] : memref<2x128x32xf32, #tpu.memory_space<vmem>>, vector<1x128x32xf32>
      %379 = vector.shape_cast %378 : vector<1x128x32xf32> to vector<128x32xf32>
      %380 = vector.shape_cast %377 : vector<128x32xf32> to vector<1x128x32xf32>
      tpu.vector_store %arg26[%c0_155, %c0_156, %c0_157], %380 {strides = array<i32>} : memref<2x128x32xf32, #tpu.memory_space<vmem>>, vector<1x128x32xf32>,
      %381 = tpu.transpose %377, [1, 0] : vector<128x32xf32> -> vector<32x128xf32>
      %382 = arith.truncf %381 : vector<32x128xf32> to vector<32x128xbf16>
      %cst_158 = arith.constant dense<0.000000e+00> : vector<36x128xf32>
      %383 = tpu.matmul %366, %382, %cst_158 {dimension_numbers = #tpu.dot_dimension_numbers<[1], [0], [0], [1], [0, 0, 1, 1], [], []>} : vector<36x32xbf16>, vector<32x128xbf16>, vector<36x128xf32> -> vector<36x128xf32>
      %384 = vector.broadcast %367 : vector<36x1xf32> to vector<36x128xf32>
      %385 = arith.addf %383, %384 : vector<36x128xf32>
      %386 = vector.extract_strided_slice %385 {offsets = [0, 0], sizes = [32, 128], strides = [1, 1]} : vector<36x128xf32> to vector<32x128xf32>
      %cst_159 = arith.constant 0.000000e+00 : f32
      %387 = vector.broadcast %cst_159 : f32 to vector<32x128xf32>
      %388 = arith.maximumf %386, %387 : vector<32x128xf32>
      %389 = vector.extract_strided_slice %385 {offsets = [32, 0], sizes = [4, 128], strides = [1, 1]} : vector<36x128xf32> to vector<4x128xf32>
      %390 = arith.truncf %388 : vector<32x128xf32> to vector<32x128xbf16>
      %cst_160 = arith.constant dense<0.000000e+00> : vector<32x128xf32>
      %391 = tpu.matmul %368, %390, %cst_160 {dimension_numbers = #tpu.dot_dimension_numbers<[1], [0], [0], [1], [0, 0, 1, 1], [], []>} : vector<32x32xbf16>, vector<32x128xbf16>, vector<32x128xf32> -> vector<32x128xf32>
      %392 = vector.broadcast %369 : vector<32x1xf32> to vector<32x128xf32>
      %393 = arith.addf %391, %392 : vector<32x128xf32>
      %cst_161 = arith.constant 0.000000e+00 : f32
      %394 = vector.broadcast %cst_161 : f32 to vector<32x128xf32>
      %395 = arith.maximumf %393, %394 : vector<32x128xf32>
      %396 = arith.truncf %395 : vector<32x128xf32> to vector<32x128xbf16>
      %cst_162 = arith.constant dense<0.000000e+00> : vector<4x128xf32>
      %397 = tpu.matmul %370, %396, %cst_162 {dimension_numbers = #tpu.dot_dimension_numbers<[1], [0], [0], [1], [0, 0, 1, 1], [], []>} : vector<4x32xbf16>, vector<32x128xbf16>, vector<4x128xf32> -> vector<4x128xf32>
      %398 = vector.broadcast %371 : vector<4x1xf32> to vector<4x128xf32>
      %399 = arith.addf %397, %398 : vector<4x128xf32>
      %400 = tpu.concatenate %389, %399 in 0 : vector<4x128xf32>, vector<4x128xf32> -> vector<8x128xf32>
      %c0_163 = arith.constant 0 : index
      %c0_164 = arith.constant 0 : index
      %c0_165 = arith.constant 0 : index
      %401 = vector.load %arg27[%c0_163, %c0_164, %c0_165] : memref<2x8x128xf32, #tpu.memory_space<vmem>>, vector<1x8x128xf32>
      %402 = vector.shape_cast %401 : vector<1x8x128xf32> to vector<8x128xf32>
      %403 = vector.shape_cast %400 : vector<8x128xf32> to vector<1x8x128xf32>
      tpu.vector_store %arg27[%c0_163, %c0_164, %c0_165], %403 {strides = array<i32>} : memref<2x8x128xf32, #tpu.memory_space<vmem>>, vector<1x8x128xf32>,
      %c1_166 = arith.constant 1 : index
      %c0_167 = arith.constant 0 : index
      %c0_168 = arith.constant 0 : index
      %404 = vector.load %arg5[%c1_166, %c0_167, %c0_168] : memref<2x128x1xf32, #tpu.memory_space<vmem>>, vector<1x128x1xf32>
      %405 = vector.shape_cast %404 : vector<1x128x1xf32> to vector<128x1xf32>
      %c1_169 = arith.constant 1 : index
      %c0_170 = arith.constant 0 : index
      %c0_171 = arith.constant 0 : index
      %406 = vector.load %arg28[%c1_169, %c0_170, %c0_171] : memref<2x128x32xf32, #tpu.memory_space<vmem>>, vector<1x128x32xf32>
      %407 = vector.shape_cast %406 : vector<1x128x32xf32> to vector<128x32xf32>
      %408 = vector.broadcast %405 : vector<128x1xf32> to vector<128x32xf32>
      %409 = arith.mulf %407, %408 : vector<128x32xf32>
      %c1_172 = arith.constant 1 : index
      %c0_173 = arith.constant 0 : index
      %c0_174 = arith.constant 0 : index
      %410 = vector.load %arg26[%c1_172, %c0_173, %c0_174] : memref<2x128x32xf32, #tpu.memory_space<vmem>>, vector<1x128x32xf32>
      %411 = vector.shape_cast %410 : vector<1x128x32xf32> to vector<128x32xf32>
      %412 = vector.shape_cast %409 : vector<128x32xf32> to vector<1x128x32xf32>
      tpu.vector_store %arg26[%c1_172, %c0_173, %c0_174], %412 {strides = array<i32>} : memref<2x128x32xf32, #tpu.memory_space<vmem>>, vector<1x128x32xf32>,
      %413 = tpu.transpose %409, [1, 0] : vector<128x32xf32> -> vector<32x128xf32>
      %414 = arith.truncf %413 : vector<32x128xf32> to vector<32x128xbf16>
      %cst_175 = arith.constant dense<0.000000e+00> : vector<36x128xf32>
      %415 = tpu.matmul %366, %414, %cst_175 {dimension_numbers = #tpu.dot_dimension_numbers<[1], [0], [0], [1], [0, 0, 1, 1], [], []>} : vector<36x32xbf16>, vector<32x128xbf16>, vector<36x128xf32> -> vector<36x128xf32>
      %416 = vector.broadcast %367 : vector<36x1xf32> to vector<36x128xf32>
      %417 = arith.addf %415, %416 : vector<36x128xf32>
      %418 = vector.extract_strided_slice %417 {offsets = [0, 0], sizes = [32, 128], strides = [1, 1]} : vector<36x128xf32> to vector<32x128xf32>
      %cst_176 = arith.constant 0.000000e+00 : f32
      %419 = vector.broadcast %cst_176 : f32 to vector<32x128xf32>
      %420 = arith.maximumf %418, %419 : vector<32x128xf32>
      %421 = vector.extract_strided_slice %417 {offsets = [32, 0], sizes = [4, 128], strides = [1, 1]} : vector<36x128xf32> to vector<4x128xf32>
      %422 = arith.truncf %420 : vector<32x128xf32> to vector<32x128xbf16>
      %cst_177 = arith.constant dense<0.000000e+00> : vector<32x128xf32>
      %423 = tpu.matmul %368, %422, %cst_177 {dimension_numbers = #tpu.dot_dimension_numbers<[1], [0], [0], [1], [0, 0, 1, 1], [], []>} : vector<32x32xbf16>, vector<32x128xbf16>, vector<32x128xf32> -> vector<32x128xf32>
      %424 = vector.broadcast %369 : vector<32x1xf32> to vector<32x128xf32>
      %425 = arith.addf %423, %424 : vector<32x128xf32>
      %cst_178 = arith.constant 0.000000e+00 : f32
      %426 = vector.broadcast %cst_178 : f32 to vector<32x128xf32>
      %427 = arith.maximumf %425, %426 : vector<32x128xf32>
      %428 = arith.truncf %427 : vector<32x128xf32> to vector<32x128xbf16>
      %cst_179 = arith.constant dense<0.000000e+00> : vector<4x128xf32>
      %429 = tpu.matmul %370, %428, %cst_179 {dimension_numbers = #tpu.dot_dimension_numbers<[1], [0], [0], [1], [0, 0, 1, 1], [], []>} : vector<4x32xbf16>, vector<32x128xbf16>, vector<4x128xf32> -> vector<4x128xf32>
      %430 = vector.broadcast %371 : vector<4x1xf32> to vector<4x128xf32>
      %431 = arith.addf %429, %430 : vector<4x128xf32>
      %432 = tpu.concatenate %421, %431 in 0 : vector<4x128xf32>, vector<4x128xf32> -> vector<8x128xf32>
      %c1_180 = arith.constant 1 : index
      %c0_181 = arith.constant 0 : index
      %c0_182 = arith.constant 0 : index
      %433 = vector.load %arg27[%c1_180, %c0_181, %c0_182] : memref<2x8x128xf32, #tpu.memory_space<vmem>>, vector<1x8x128xf32>
      %434 = vector.shape_cast %433 : vector<1x8x128xf32> to vector<8x128xf32>
      %435 = vector.shape_cast %432 : vector<8x128xf32> to vector<1x8x128xf32>
      tpu.vector_store %arg27[%c1_180, %c0_181, %c0_182], %435 {strides = array<i32>} : memref<2x8x128xf32, #tpu.memory_space<vmem>>, vector<1x8x128xf32>,
    } else {
    }
    return
  }
  func.func @transform_0(%arg0: i32, %arg1: i32) -> (i32, i32, i32) {
    %c0_i32 = arith.constant 0 : i32
    %c0_i32_0 = arith.constant 0 : i32
    %c0_i32_1 = arith.constant 0 : i32
    return %arg0, %c0_i32, %c0_i32_0 : i32, i32, i32
  }
  func.func @transform_1(%arg0: i32, %arg1: i32) -> (i32, i32, i32) {
    %c0_i32 = arith.constant 0 : i32
    %c0_i32_0 = arith.constant 0 : i32
    %c0_i32_1 = arith.constant 0 : i32
    return %arg0, %c0_i32, %c0_i32_0 : i32, i32, i32
  }
  func.func @transform_2(%arg0: i32, %arg1: i32) -> (i32, i32, i32) {
    %c0_i32 = arith.constant 0 : i32
    %c0_i32_0 = arith.constant 0 : i32
    %c0_i32_1 = arith.constant 0 : i32
    return %arg0, %c0_i32, %c0_i32_0 : i32, i32, i32
  }
  func.func @transform_3(%arg0: i32, %arg1: i32) -> (i32, i32, i32) {
    %c0_i32 = arith.constant 0 : i32
    %c0_i32_0 = arith.constant 0 : i32
    %c0_i32_1 = arith.constant 0 : i32
    return %arg0, %c0_i32, %c0_i32_0 : i32, i32, i32
  }
  func.func @transform_4(%arg0: i32, %arg1: i32) -> (i32, i32, i32) {
    %c0_i32 = arith.constant 0 : i32
    %c0_i32_0 = arith.constant 0 : i32
    %c0_i32_1 = arith.constant 0 : i32
    return %arg1, %c0_i32, %c0_i32_0 : i32, i32, i32
  }
  func.func @transform_5(%arg0: i32, %arg1: i32) -> (i32, i32, i32) {
    %c0_i32 = arith.constant 0 : i32
    %c0_i32_0 = arith.constant 0 : i32
    %c0_i32_1 = arith.constant 0 : i32
    return %arg1, %c0_i32, %c0_i32_0 : i32, i32, i32
  }
  func.func @transform_6(%arg0: i32, %arg1: i32) -> (i32, i32, i32) {
    %c0_i32 = arith.constant 0 : i32
    %c0_i32_0 = arith.constant 0 : i32
    %c0_i32_1 = arith.constant 0 : i32
    return %arg1, %c0_i32, %c0_i32_0 : i32, i32, i32
  }
  func.func @transform_7(%arg0: i32, %arg1: i32) -> (i32, i32, i32) {
    %c0_i32 = arith.constant 0 : i32
    %c0_i32_0 = arith.constant 0 : i32
    %c0_i32_1 = arith.constant 0 : i32
    return %arg1, %c0_i32, %c0_i32_0 : i32, i32, i32
  }
  func.func @transform_8(%arg0: i32, %arg1: i32) -> (i32, i32, i32) {
    %c0_i32 = arith.constant 0 : i32
    %c0_i32_0 = arith.constant 0 : i32
    %c0_i32_1 = arith.constant 0 : i32
    return %arg1, %c0_i32, %c0_i32_0 : i32, i32, i32
  }
  func.func @transform_9(%arg0: i32, %arg1: i32) -> (i32, i32, i32) {
    %c0_i32 = arith.constant 0 : i32
    %c0_i32_0 = arith.constant 0 : i32
    %c0_i32_1 = arith.constant 0 : i32
    return %arg1, %c0_i32, %c0_i32_0 : i32, i32, i32
  }
  func.func @transform_10(%arg0: i32, %arg1: i32) -> (i32, i32, i32) {
    %c0_i32 = arith.constant 0 : i32
    %c0_i32_0 = arith.constant 0 : i32
    %c0_i32_1 = arith.constant 0 : i32
    return %arg1, %c0_i32, %c0_i32_0 : i32, i32, i32
  }
  func.func @transform_11(%arg0: i32, %arg1: i32) -> (i32, i32, i32) {
    %c0_i32 = arith.constant 0 : i32
    %c0_i32_0 = arith.constant 0 : i32
    %c0_i32_1 = arith.constant 0 : i32
    return %arg1, %c0_i32, %c0_i32_0 : i32, i32, i32
  }
  func.func @transform_12(%arg0: i32, %arg1: i32) -> (i32, i32, i32) {
    %c0_i32 = arith.constant 0 : i32
    %c0_i32_0 = arith.constant 0 : i32
    %c0_i32_1 = arith.constant 0 : i32
    return %arg1, %c0_i32, %c0_i32_0 : i32, i32, i32
  }
  func.func @transform_13(%arg0: i32, %arg1: i32) -> (i32, i32, i32) {
    %c0_i32 = arith.constant 0 : i32
    %c0_i32_0 = arith.constant 0 : i32
    %c0_i32_1 = arith.constant 0 : i32
    return %arg1, %c0_i32, %c0_i32_0 : i32, i32, i32
  }
  func.func @transform_14(%arg0: i32, %arg1: i32) -> (i32, i32, i32) {
    %c0_i32 = arith.constant 0 : i32
    %c0_i32_0 = arith.constant 0 : i32
    %c0_i32_1 = arith.constant 0 : i32
    return %arg1, %c0_i32, %c0_i32_0 : i32, i32, i32
  }
  func.func @transform_15(%arg0: i32, %arg1: i32) -> (i32, i32, i32) {
    %c0_i32 = arith.constant 0 : i32
    %c0_i32_0 = arith.constant 0 : i32
    %c0_i32_1 = arith.constant 0 : i32
    return %arg1, %c0_i32, %c0_i32_0 : i32, i32, i32
  }
  func.func @transform_16(%arg0: i32, %arg1: i32) -> (i32, i32, i32) {
    %c0_i32 = arith.constant 0 : i32
    %c0_i32_0 = arith.constant 0 : i32
    %c0_i32_1 = arith.constant 0 : i32
    return %arg1, %c0_i32, %c0_i32_0 : i32, i32, i32
  }
  func.func @transform_17(%arg0: i32, %arg1: i32) -> (i32, i32, i32) {
    %c0_i32 = arith.constant 0 : i32
    %c0_i32_0 = arith.constant 0 : i32
    %c0_i32_1 = arith.constant 0 : i32
    return %arg1, %c0_i32, %c0_i32_0 : i32, i32, i32
  }
  func.func @transform_18(%arg0: i32, %arg1: i32) -> (i32, i32) {
    %c0_i32 = arith.constant 0 : i32
    %c0_i32_0 = arith.constant 0 : i32
    %c0_i32_1 = arith.constant 0 : i32
    return %c0_i32, %c0_i32_0 : i32, i32
  }
  func.func @transform_19(%arg0: i32, %arg1: i32) -> (i32, i32) {
    %c0_i32 = arith.constant 0 : i32
    %c0_i32_0 = arith.constant 0 : i32
    %c0_i32_1 = arith.constant 0 : i32
    return %c0_i32, %c0_i32_0 : i32, i32
  }
  func.func @transform_20(%arg0: i32, %arg1: i32) -> (i32, i32) {
    %c0_i32 = arith.constant 0 : i32
    %c0_i32_0 = arith.constant 0 : i32
    %c0_i32_1 = arith.constant 0 : i32
    return %c0_i32, %c0_i32_0 : i32, i32
  }
  func.func @transform_21(%arg0: i32, %arg1: i32) -> (i32, i32) {
    %c0_i32 = arith.constant 0 : i32
    %c0_i32_0 = arith.constant 0 : i32
    %c0_i32_1 = arith.constant 0 : i32
    return %c0_i32, %c0_i32_0 : i32, i32
  }
  func.func @transform_22(%arg0: i32, %arg1: i32) -> (i32, i32) {
    %c0_i32 = arith.constant 0 : i32
    %c0_i32_0 = arith.constant 0 : i32
    %c0_i32_1 = arith.constant 0 : i32
    return %c0_i32, %c0_i32_0 : i32, i32
  }
  func.func @transform_23(%arg0: i32, %arg1: i32) -> (i32, i32) {
    %c0_i32 = arith.constant 0 : i32
    %c0_i32_0 = arith.constant 0 : i32
    %c0_i32_1 = arith.constant 0 : i32
    return %c0_i32, %c0_i32_0 : i32, i32
  }
  func.func @transform_24(%arg0: i32, %arg1: i32) -> (i32, i32, i32) {
    %c0_i32 = arith.constant 0 : i32
    %c0_i32_0 = arith.constant 0 : i32
    %c0_i32_1 = arith.constant 0 : i32
    return %arg0, %c0_i32, %c0_i32_0 : i32, i32, i32
  }
  func.func @transform_25(%arg0: i32, %arg1: i32) -> (i32, i32, i32) {
    %c0_i32 = arith.constant 0 : i32
    %c0_i32_0 = arith.constant 0 : i32
    %c0_i32_1 = arith.constant 0 : i32
    return %arg0, %c0_i32, %c0_i32_0 : i32, i32, i32
  }
}

module attributes {stable_mosaic.version = 11 : i64} {
  func.func @_proposal_embed_kernel(%arg0: i32, %arg1: memref<1x32x32xf32, #tpu.memory_space<vmem>>, %arg2: memref<32x32xbf16, #tpu.memory_space<vmem>>, %arg3: memref<1x32xf32, #tpu.memory_space<vmem>>, %arg4: memref<1x32xf32, #tpu.memory_space<vmem>>, %arg5: memref<1x32xf32, #tpu.memory_space<vmem>>, %arg6: memref<1x32x32xf32, #tpu.memory_space<vmem>>) attributes {dimension_semantics = [#tpu.dimension_semantics<parallel>], iteration_bounds = array<i64: 2>, scalar_prefetch = 0 : i64, scratch_operands = 0 : i64, tpu.core_type = #tpu.core_type<tc>, window_params = [{transform_indices = @transform_0, window_bounds = array<i64: 1, 32, 32>}, {pipeline_mode = #tpu.pipeline_mode<synchronous>, transform_indices = @transform_1, window_bounds = array<i64: 32, 32>}, {pipeline_mode = #tpu.pipeline_mode<synchronous>, transform_indices = @transform_2, window_bounds = array<i64: 1, 32>}, {pipeline_mode = #tpu.pipeline_mode<synchronous>, transform_indices = @transform_3, window_bounds = array<i64: 1, 32>}, {pipeline_mode = #tpu.pipeline_mode<synchronous>, transform_indices = @transform_4, window_bounds = array<i64: 1, 32>}, {transform_indices = @transform_5, window_bounds = array<i64: 1, 32, 32>}]} {
    %c0 = arith.constant 0 : index
    %c0_0 = arith.constant 0 : index
    %c0_1 = arith.constant 0 : index
    %0 = vector.load %arg1[%c0, %c0_0, %c0_1] : memref<1x32x32xf32, #tpu.memory_space<vmem>>, vector<1x32x32xf32>
    %1 = vector.shape_cast %0 : vector<1x32x32xf32> to vector<32x32xf32>
    %2 = arith.truncf %1 : vector<32x32xf32> to vector<32x32xbf16>
    %c0_2 = arith.constant 0 : index
    %c0_3 = arith.constant 0 : index
    %3 = vector.load %arg2[%c0_2, %c0_3] : memref<32x32xbf16, #tpu.memory_space<vmem>>, vector<32x32xbf16>
    %cst = arith.constant dense<0.000000e+00> : vector<32x32xf32>
    %4 = tpu.matmul %2, %3, %cst {dimension_numbers = #tpu.dot_dimension_numbers<[1], [0], [0], [1], [0, 0, 1, 1], [], []>} : vector<32x32xbf16>, vector<32x32xbf16>, vector<32x32xf32> -> vector<32x32xf32>
    %c0_4 = arith.constant 0 : index
    %c0_5 = arith.constant 0 : index
    %5 = vector.load %arg3[%c0_4, %c0_5] : memref<1x32xf32, #tpu.memory_space<vmem>>, vector<1x32xf32>
    %6 = vector.broadcast %5 : vector<1x32xf32> to vector<32x32xf32>
    %7 = arith.addf %4, %6 : vector<32x32xf32>
    %c0_6 = arith.constant 0 : index
    %c0_7 = arith.constant 0 : index
    %8 = vector.load %arg4[%c0_6, %c0_7] : memref<1x32xf32, #tpu.memory_space<vmem>>, vector<1x32xf32>
    %c0_8 = arith.constant 0 : index
    %c0_9 = arith.constant 0 : index
    %9 = vector.load %arg5[%c0_8, %c0_9] : memref<1x32xf32, #tpu.memory_space<vmem>>, vector<1x32xf32>
    %cst_10 = arith.constant dense<0.000000e+00> : vector<32xf32>
    %10 = vector.multi_reduction <add>, %7, %cst_10 [1] : vector<32x32xf32> to vector<32xf32>
    %11 = vector.shape_cast %10 : vector<32xf32> to vector<32x1xf32>
    %cst_11 = arith.constant 3.200000e+01 : f32
    %12 = vector.broadcast %cst_11 : f32 to vector<32x1xf32>
    %13 = arith.divf %11, %12 : vector<32x1xf32>
    %14 = vector.broadcast %13 : vector<32x1xf32> to vector<32x32xf32>
    %15 = arith.subf %7, %14 : vector<32x32xf32>
    %16 = arith.mulf %15, %15 : vector<32x32xf32>
    %cst_12 = arith.constant dense<0.000000e+00> : vector<32xf32>
    %17 = vector.multi_reduction <add>, %16, %cst_12 [1] : vector<32x32xf32> to vector<32xf32>
    %18 = vector.shape_cast %17 : vector<32xf32> to vector<32x1xf32>
    %cst_13 = arith.constant 3.200000e+01 : f32
    %19 = vector.broadcast %cst_13 : f32 to vector<32x1xf32>
    %20 = arith.divf %18, %19 : vector<32x1xf32>
    %cst_14 = arith.constant 9.99999974E-6 : f32
    %21 = vector.broadcast %cst_14 : f32 to vector<32x1xf32>
    %22 = arith.addf %20, %21 : vector<32x1xf32>
    %23 = math.rsqrt %22 : vector<32x1xf32>
    %24 = vector.broadcast %23 : vector<32x1xf32> to vector<32x32xf32>
    %25 = arith.mulf %15, %24 : vector<32x32xf32>
    %26 = vector.broadcast %8 : vector<1x32xf32> to vector<32x32xf32>
    %27 = arith.mulf %25, %26 : vector<32x32xf32>
    %28 = vector.broadcast %9 : vector<1x32xf32> to vector<32x32xf32>
    %29 = arith.addf %27, %28 : vector<32x32xf32>
    %c0_15 = arith.constant 0 : index
    %c0_16 = arith.constant 0 : index
    %c0_17 = arith.constant 0 : index
    %30 = vector.load %arg6[%c0_15, %c0_16, %c0_17] : memref<1x32x32xf32, #tpu.memory_space<vmem>>, vector<1x32x32xf32>
    %31 = vector.shape_cast %30 : vector<1x32x32xf32> to vector<32x32xf32>
    %32 = vector.shape_cast %29 : vector<32x32xf32> to vector<1x32x32xf32>
    tpu.vector_store %arg6[%c0_15, %c0_16, %c0_17], %32 {strides = array<i32>} : memref<1x32x32xf32, #tpu.memory_space<vmem>>, vector<1x32x32xf32>,
    return
  }
  func.func @transform_0(%arg0: i32) -> (i32, i32, i32) {
    %c0_i32 = arith.constant 0 : i32
    %c0_i32_0 = arith.constant 0 : i32
    %c0_i32_1 = arith.constant 0 : i32
    return %arg0, %c0_i32, %c0_i32_0 : i32, i32, i32
  }
  func.func @transform_1(%arg0: i32) -> (i32, i32) {
    %c0_i32 = arith.constant 0 : i32
    %c0_i32_0 = arith.constant 0 : i32
    %c0_i32_1 = arith.constant 0 : i32
    return %c0_i32, %c0_i32_0 : i32, i32
  }
  func.func @transform_2(%arg0: i32) -> (i32, i32) {
    %c0_i32 = arith.constant 0 : i32
    %c0_i32_0 = arith.constant 0 : i32
    %c0_i32_1 = arith.constant 0 : i32
    return %c0_i32, %c0_i32_0 : i32, i32
  }
  func.func @transform_3(%arg0: i32) -> (i32, i32) {
    %c0_i32 = arith.constant 0 : i32
    %c0_i32_0 = arith.constant 0 : i32
    %c0_i32_1 = arith.constant 0 : i32
    return %c0_i32, %c0_i32_0 : i32, i32
  }
  func.func @transform_4(%arg0: i32) -> (i32, i32) {
    %c0_i32 = arith.constant 0 : i32
    %c0_i32_0 = arith.constant 0 : i32
    %c0_i32_1 = arith.constant 0 : i32
    return %c0_i32, %c0_i32_0 : i32, i32
  }
  func.func @transform_5(%arg0: i32) -> (i32, i32, i32) {
    %c0_i32 = arith.constant 0 : i32
    %c0_i32_0 = arith.constant 0 : i32
    %c0_i32_1 = arith.constant 0 : i32
    return %arg0, %c0_i32, %c0_i32_0 : i32, i32, i32
  }
}

</mosaic_0001>

<llo_original>
// kernel: box_transformer_encoder_forward.3
$region0: #{box_transformer_encoder_forward.3}
  #allocation0 [shape = 'u32[]', space=smem, size = 0x4, offset = 0x4, fixed_abs, tag = 'smem constant byte address 0x4 - core index']
  #allocation1 [shape = 'u32[72,128]{1,0:T(1,128)}', space=vmem, size = 0x9000, scoped, tag = 'internal scratch']
  %s0 = inlined_call_operand.vmem [shape: f32[2,32,32], index: 0, kind: input, shape index: {}]
  %s1 = inlined_call_operand.vmem [shape: bf16[32,32], index: 1, kind: input, shape index: {}]
  %s2 = inlined_call_operand.vmem [shape: f32[1,32], index: 2, kind: input, shape index: {}]
  %s3 = inlined_call_operand.vmem [shape: f32[1,32], index: 3, kind: input, shape index: {}]
  %s4 = inlined_call_operand.vmem [shape: f32[1,32], index: 4, kind: input, shape index: {}]
  %s5 = inlined_call_operand.hbm [shape: f32[2,32,32], index: 5, kind: output, shape index: {}]
  %s6 = sld [smem:[#allocation0]]
  $region53: #{box_transformer_encoder_forward.3} parent=0
    _
  %s8 = ssub.s32 1, %s6
  %s9 = scalar_select 0, %s8, %s6
  $region1: #{box_transformer_encoder_forward.3} parent=0
    #allocation2 [shape = 'u8[32768]{0}', space=vmem, size = 0x8000, scoped, tag = 'output window, operand 0']
    #allocation3 [shape = 's32[2]{0}', space=sflag, size = 0x8, scoped, tag = 'scoped memory for box_transformer_encoder_forward.3']
    %10 = vsyncpa [#allocation3], 0
    %s11 = scalar_lea.sflag [#allocation3], 1
    %12 = vsyncpa %s11, 0
    loop: start=0, step=1, limit=4
    $region2: #{box_transformer_encoder_forward.3} parent=1 // loop_pre_header
      _
    $region3: #{box_transformer_encoder_forward.3} parent=1 // loop_header
      %s14 = sphi 0, %s18
      %p15 = scmp.ge.s32.totalorder %s14, 4
      %s24 = sphi 0, %s26
      %s27 = sphi 0, %s24
      %s28 = sphi 0, %s27
      %s44 = sphi 0, %s28
      %s48 = sphi 0, %s48
      %s50 = sphi 0, %s48
      %s51 = sphi 0, %s50
      %s65 = sphi 0, %s51
      %s69 = sphi 0, %s69
      %s71 = sphi 0, %s69
      %s72 = sphi 0, %s71
      %s86 = sphi 0, %s72
      %s90 = sphi 0, %s90
      %s92 = sphi 0, %s90
      %s93 = sphi 0, %s92
      %s107 = sphi 0, %s93
      %s111 = sphi 0, %s111
      %s113 = sphi 0, %s111
      %s114 = sphi 0, %s113
      %s128 = sphi 0, %s114
      %s134 = sphi 0, %s136
      %s137 = sphi 0, %s134
      %s138 = sphi 0, %s137
      %s154 = sphi 0, %s138
    $region4: #{box_transformer_encoder_forward.3} parent=1 // loop_header_branch
      %17 = sbr.rel (%p15) target = $region8
    $region5: #{box_transformer_encoder_forward.3} parent=1 // loop_body
      %s19 = ssub.s32 %s14, 1
      %s20 = ssub.s32 %s14, 2
      %s21 = sadd.s32 %s14, 1
      %s22 = ssub.s32 %s14, %s21
      %p23 = scmp.eq.s32.totalorder %s22, 0
      %s25 = sadd.s32 %s24, 1
      %s26 = scalar_select %p23, %s24, %s25
      %p29 = pneg %p23
      %p30 = scmp.eq.s32.totalorder %s14, 1
      %p31 = por %p29, %p30
      %p32 = scmp.ne.s32.totalorder %s24, %s27
      %p33 = scmp.eq.s32.totalorder %s14, 0
      %p34 = por %p32, %p33
      %p35 = scmp.ne.s32.totalorder %s24, %s27
      %p36 = scmp.eq.s32.totalorder %s19, 1
      %p37 = por %p35, %p36
      %p38 = scmp.ne.s32.totalorder %s27, %s28
      %p39 = scmp.eq.s32.totalorder %s19, 0
      %p40 = por %p38, %p39
      %p41 = scmp.ne.s32.totalorder %s27, %s28
      %p42 = scmp.eq.s32.totalorder %s20, 1
      %p43 = por %p41, %p42
      %p45 = scmp.ne.s32.totalorder %s28, %s44
      %p46 = scmp.eq.s32.totalorder %s20, 0
      %p47 = por %p45, %p46
      %s49 = sadd.s32 %s48, 1
      %p52 = scmp.eq.s32.totalorder %s14, 1
      %p53 = scmp.ne.s32.totalorder %s48, %s50
      %p54 = scmp.eq.s32.totalorder %s14, 0
      %p55 = por %p53, %p54
      %p56 = scmp.ne.s32.totalorder %s48, %s50
      %p57 = scmp.eq.s32.totalorder %s19, 1
      %p58 = por %p56, %p57
      %p59 = scmp.ne.s32.totalorder %s50, %s51
      %p60 = scmp.eq.s32.totalorder %s19, 0
      %p61 = por %p59, %p60
      %p62 = scmp.ne.s32.totalorder %s50, %s51
      %p63 = scmp.eq.s32.totalorder %s20, 1
      %p64 = por %p62, %p63
      %p66 = scmp.ne.s32.totalorder %s51, %s65
      %p67 = scmp.eq.s32.totalorder %s20, 0
      %p68 = por %p66, %p67
      %s70 = sadd.s32 %s69, 1
      %p73 = scmp.eq.s32.totalorder %s14, 1
      %p74 = scmp.ne.s32.totalorder %s69, %s71
      %p75 = scmp.eq.s32.totalorder %s14, 0
      %p76 = por %p74, %p75
      %p77 = scmp.ne.s32.totalorder %s69, %s71
      %p78 = scmp.eq.s32.totalorder %s19, 1
      %p79 = por %p77, %p78
      %p80 = scmp.ne.s32.totalorder %s71, %s72
      %p81 = scmp.eq.s32.totalorder %s19, 0
      %p82 = por %p80, %p81
      %p83 = scmp.ne.s32.totalorder %s71, %s72
      %p84 = scmp.eq.s32.totalorder %s20, 1
      %p85 = por %p83, %p84
      %p87 = scmp.ne.s32.totalorder %s72, %s86
      %p88 = scmp.eq.s32.totalorder %s20, 0
      %p89 = por %p87, %p88
      %s91 = sadd.s32 %s90, 1
      %p94 = scmp.eq.s32.totalorder %s14, 1
      %p95 = scmp.ne.s32.totalorder %s90, %s92
      %p96 = scmp.eq.s32.totalorder %s14, 0
      %p97 = por %p95, %p96
      %p98 = scmp.ne.s32.totalorder %s90, %s92
      %p99 = scmp.eq.s32.totalorder %s19, 1
      %p100 = por %p98, %p99
      %p101 = scmp.ne.s32.totalorder %s92, %s93
      %p102 = scmp.eq.s32.totalorder %s19, 0
      %p103 = por %p101, %p102
      %p104 = scmp.ne.s32.totalorder %s92, %s93
      %p105 = scmp.eq.s32.totalorder %s20, 1
      %p106 = por %p104, %p105
      %p108 = scmp.ne.s32.totalorder %s93, %s107
      %p109 = scmp.eq.s32.totalorder %s20, 0
      %p110 = por %p108, %p109
      %s112 = sadd.s32 %s111, 1
      %p115 = scmp.eq.s32.totalorder %s14, 1
      %p116 = scmp.ne.s32.totalorder %s111, %s113
      %p117 = scmp.eq.s32.totalorder %s14, 0
      %p118 = por %p116, %p117
      %p119 = scmp.ne.s32.totalorder %s111, %s113
      %p120 = scmp.eq.s32.totalorder %s19, 1
      %p121 = por %p119, %p120
      %p122 = scmp.ne.s32.totalorder %s113, %s114
      %p123 = scmp.eq.s32.totalorder %s19, 0
      %p124 = por %p122, %p123
      %p125 = scmp.ne.s32.totalorder %s113, %s114
      %p126 = scmp.eq.s32.totalorder %s20, 1
      %p127 = por %p125, %p126
      %p129 = scmp.ne.s32.totalorder %s114, %s128
      %p130 = scmp.eq.s32.totalorder %s20, 0
      %p131 = por %p129, %p130
      %s132 = ssub.s32 %s14, %s21
      %p133 = scmp.eq.s32.totalorder %s132, 0
      %s135 = sadd.s32 %s134, 1
      %s136 = scalar_select %p133, %s134, %s135
      %p139 = pneg %p133
      %p140 = scmp.eq.s32.totalorder %s14, 1
      %p141 = por %p139, %p140
      %p142 = scmp.ne.s32.totalorder %s134, %s137
      %p143 = scmp.eq.s32.totalorder %s14, 0
      %p144 = por %p142, %p143
      %p145 = scmp.ne.s32.totalorder %s134, %s137
      %p146 = scmp.eq.s32.totalorder %s19, 1
      %p147 = por %p145, %p146
      %p148 = scmp.ne.s32.totalorder %s137, %s138
      %p149 = scmp.eq.s32.totalorder %s19, 0
      %p150 = por %p148, %p149
      %p151 = scmp.ne.s32.totalorder %s137, %s138
      %p152 = scmp.eq.s32.totalorder %s20, 1
      %p153 = por %p151, %p152
      %p155 = scmp.ne.s32.totalorder %s138, %s154
      %p156 = scmp.eq.s32.totalorder %s20, 0
      %p157 = por %p155, %p156
      %p158 = scmp.le.s32.totalorder 1, %s14
      %p159 = scmp.lt.s32.totalorder %s14, 3
      %p160 = pnand %p158, %p159
      %p161 = pneg %p160
      // Predicated region
      $region9: #{box_transformer_encoder_forward.3} parent=5 // pred_check
        _
      $region10: #{box_transformer_encoder_forward.3} parent=5 // pred_check_branch
        %163 = sbr.rel (%p160) target = $region12
      $region11: #{box_transformer_encoder_forward.3} parent=5 // pred_region
        %s164 = ssub.s32 %s14, 1
        // Predicated region
        $region13: #{box_transformer_encoder_forward.3} parent=11 // pred_check
          %p165 = pneg %p61
        $region14: #{box_transformer_encoder_forward.3} parent=11 // pred_check_branch
          %167 = sbr.rel (%p165) target = $region16
        $region15: #{box_transformer_encoder_forward.3} parent=11 // pred_region
          _
        $region16: #{box_transformer_encoder_forward.3} parent=11 // pred_fallthru
          _
        // Predicated region
        $region17: #{box_transformer_encoder_forward.3} parent=11 // pred_check
          %p168 = pneg %p82
        $region18: #{box_transformer_encoder_forward.3} parent=11 // pred_check_branch
          %170 = sbr.rel (%p168) target = $region20
        $region19: #{box_transformer_encoder_forward.3} parent=11 // pred_region
          _
        $region20: #{box_transformer_encoder_forward.3} parent=11 // pred_fallthru
          _
        // Predicated region
        $region21: #{box_transformer_encoder_forward.3} parent=11 // pred_check
          %p171 = pneg %p103
        $region22: #{box_transformer_encoder_forward.3} parent=11 // pred_check_branch
          %173 = sbr.rel (%p171) target = $region24
        $region23: #{box_transformer_encoder_forward.3} parent=11 // pred_region
          _
        $region24: #{box_transformer_encoder_forward.3} parent=11 // pred_fallthru
          _
        // Predicated region
        $region25: #{box_transformer_encoder_forward.3} parent=11 // pred_check
          %p174 = pneg %p124
        $region26: #{box_transformer_encoder_forward.3} parent=11 // pred_check_branch
          %176 = sbr.rel (%p174) target = $region28
        $region27: #{box_transformer_encoder_forward.3} parent=11 // pred_region
          _
        $region28: #{box_transformer_encoder_forward.3} parent=11 // pred_fallthru
          _
      $region12: #{box_transformer_encoder_forward.3} parent=5 // pred_fallthru
        _
      %p177 = scmp.lt.s32.totalorder %s14, 2
      // Predicated region
      $region29: #{box_transformer_encoder_forward.3} parent=5 // pred_check
        %p178 = pneg %p177
      $region30: #{box_transformer_encoder_forward.3} parent=5 // pred_check_branch
        %180 = sbr.rel (%p178) target = $region32
      $region31: #{box_transformer_encoder_forward.3} parent=5 // pred_region
        // Predicated region
        $region33: #{box_transformer_encoder_forward.3} parent=31 // pred_check
          %p181 = pneg %p34
        $region34: #{box_transformer_encoder_forward.3} parent=31 // pred_check_branch
          %183 = sbr.rel (%p181) target = $region36
        $region35: #{box_transformer_encoder_forward.3} parent=31 // pred_region
          %p184 = scmp.lt.s32.totalorder %s14, 1
          %s185 = scalar_select %p184, %s14, 1
          %s186 = smul.addr %s185, 4
          %s187 = smul.addr %s186, 8
          %s188 = scalar_lea.vmem %s0, %s187
        $region36: #{box_transformer_encoder_forward.3} parent=31 // pred_fallthru
          _
      $region32: #{box_transformer_encoder_forward.3} parent=5 // pred_fallthru
        _
      %p189 = scmp.le.s32.totalorder 1, %s14
      %p190 = scmp.lt.s32.totalorder %s14, 3
      %p191 = pnand %p189, %p190
      %p192 = pneg %p191
      // Predicated region
      $region37: #{box_transformer_encoder_forward.3} parent=5 // pred_check
        _
      $region38: #{box_transformer_encoder_forward.3} parent=5 // pred_check_branch
        %194 = sbr.rel (%p191) target = $region40
      $region39: #{box_transformer_encoder_forward.3} parent=5 // pred_region
        %s195 = ssub.s32 %s14, 1
        %p196 = scmp.lt.s32.totalorder %s19, 1
        %s197 = scalar_select %p196, %s19, 1
        %s198 = smul.addr %s197, 4
        %s199 = smul.addr %s198, 8
        %s200 = scalar_lea.vmem %s0, %s199
        %p201 = pneg %p40
        %p202 = pneg %p37
        %p203 = pneg %p61
        %p204 = pneg %p58
        %p205 = pneg %p82
        %p206 = pneg %p79
        %p207 = pneg %p103
        %p208 = pneg %p100
        %p209 = pneg %p124
        %p210 = pneg %p121
        %p211 = pneg %p150
        %p212 = pneg %p147
        %s213 = sand.u32 %s137, 1
        %s214 = scalar_lea.sflag [#allocation3], %s213
        %s215 = sand.u32 %s137, 1
        %s216 = smul.addr %s215, 32
        %s217 = scalar_lea.vmem [#allocation2], %s216
        %p218 = scmp.lt.s32.totalorder %s19, 1
        %s219 = scalar_select %p218, %s19, 1
        %s220 = smul.addr %s219, 4
        %s221 = smul.addr %s220, 8
        %s222 = scalar_lea.vmem %s0, %s221
        %v224 = vld [vmem:[%s222] sm:$0xff]
        %v225 = vld [vmem:[%s222 + $0x8] sm:$0xff]
        %v226 = vld [vmem:[%s222 + $0x10] sm:$0xff]
        %v227 = vld [vmem:[%s222 + $0x18] sm:$0xff]
        %v228 = vpack.c.bf16 %v225, %v224
        %v229 = vpack.c.bf16 %v227, %v226
        %v230 = vld [vmem:[%s1] sm:$0xf]
        %v231 = vld [vmem:[%s1 + $0x4] sm:$0xf]
        %v232 = vld [vmem:[%s1 + $0x8] sm:$0xf]
        %v233 = vld [vmem:[%s1 + $0xc] sm:$0xf]
        %v234 = vld [vmem:[%s2] sm:$0x1]
        %v236 = vperm.slane %v234, 0
        %v242 = vunpack.c.l.b16 %v230
        %v243 = vunpack.c.l.b16 %v231
        %v244 = vunpack.c.l.b16 %v232
        %v245 = vunpack.c.l.b16 %v233
        %v246 = vpack.c.b16 %v243, %v242
        %v247 = vpack.c.b16 %v245, %v244
        %vm250 = vcmask 261120
        %v252 = vsel %vm250, %v228, 0
        %v255 = vsel %vm250, %v229, 0
        %257 = vmatpush.bf16.msra.mxu0 0
        %258 = vmatpush.bf16.msra.mxu0 0
        %259 = vmatpush.bf16.msra.mxu0 0
        %260 = vmatpush.bf16.msra.mxu0 0
        %261 = vmatpush.bf16.msra.mxu0 0
        %262 = vmatpush.bf16.msra.mxu0 0
        %263 = vmatpush.bf16.msra.mxu0 %v247
        %264 = vmatpush.bf16.msra.mxu0 %v246
        %265 = vmatmul.bf16.gmra.mxu0 %v252
        %v266 = vpop.f32.mrf.mxu0
        %v267 = vadd.f32 %v236, %v266
        %v268 = vpop.f32.mrf.mxu0
        %v269 = vadd.f32 %v236, %v268
        %270 = vmatmul.bf16.gmra.mxu0 %v255
        %v271 = vpop.f32.mrf.mxu0
        %v272 = vadd.f32 %v236, %v271
        %v273 = vpop.f32.mrf.mxu0
        %v274 = vadd.f32 %v236, %v273
        %275 = vdwg.mxu0
        %v276 = vld [vmem:[%s3] sm:$0x1]
        %v277 = vld [vmem:[%s4] sm:$0x1]
        %v278 = vsel %vm250, %v267, 0.0
        %279 = vadd.xlane.f32.xlu0 %v278
        %v280 = vpop.xlane.xlu0 %279
        %v281 = vsel %vm250, %v269, 0.0
        %282 = vadd.xlane.f32.xlu0 %v281
        %v283 = vpop.xlane.xlu0 %282
        %v284 = vsel %vm250, %v272, 0.0
        %285 = vadd.xlane.f32.xlu0 %v284
        %v286 = vpop.xlane.xlu0 %285
        %v287 = vsel %vm250, %v274, 0.0
        %288 = vadd.xlane.f32.xlu0 %v287
        %v289 = vpop.xlane.xlu0 %288
        %v290 = vrcp.pop 32.0
        %v291 = vmul.f32 32.0, %v290
        %v292 = vsub.f32 1.0, %v291
        %v293 = vmul.f32 %v290, %v292
        %v294 = vadd.f32 %v290, %v293
        %vm295 = vweird.f32 %v290
        %v296 = vsel %vm295, %v290, %v294
        %v297 = vmul.f32 %v280, %v296
        %v298 = vmul.f32 %v283, %v296
        %v299 = vmul.f32 %v286, %v296
        %v300 = vmul.f32 %v289, %v296
        %v301 = vsub.f32 %v267, %v297
        %v302 = vsub.f32 %v269, %v298
        %v303 = vsub.f32 %v272, %v299
        %v304 = vsub.f32 %v274, %v300
        %v305 = vmul.f32 %v301, %v301
        %v306 = vmul.f32 %v302, %v302
        %v307 = vmul.f32 %v303, %v303
        %v308 = vmul.f32 %v304, %v304
        %v309 = vsel %vm250, %v305, 0.0
        %310 = vadd.xlane.f32.xlu0 %v309
        %v311 = vpop.xlane.xlu0 %310
        %v312 = vsel %vm250, %v306, 0.0
        %313 = vadd.xlane.f32.xlu0 %v312
        %v314 = vpop.xlane.xlu0 %313
        %v315 = vsel %vm250, %v307, 0.0
        %316 = vadd.xlane.f32.xlu0 %v315
        %v317 = vpop.xlane.xlu0 %316
        %v318 = vsel %vm250, %v308, 0.0
        %319 = vadd.xlane.f32.xlu0 %v318
        %v320 = vpop.xlane.xlu0 %319
        %v321 = vmul.f32 %v311, %v296
        %v322 = vmul.f32 %v314, %v296
        %v323 = vmul.f32 %v317, %v296
        %v324 = vmul.f32 %v320, %v296
        %v325 = vadd.f32 %v321, 1e-05
        %v326 = vadd.f32 %v322, 1e-05
        %v327 = vadd.f32 %v323, 1e-05
        %v328 = vadd.f32 %v324, 1e-05
        %v329 = vrsqrt.pop %v325
        %v330 = vmul.f32 %v329, %v325
        %v331 = vmul.f32 %v330, %v329
        %v332 = vmul.f32 0.5, %v331
        %v333 = vsub.f32 1.5, %v332
        %v334 = vmul.f32 %v329, %v333
        %vm335 = vweird.f32 %v325
        %vm336 = vweird.f32 %v329
        %vm337 = vmor %vm335, %vm336
        %v338 = vsel %vm337, %v329, %v334
        %v339 = vrsqrt.pop %v326
        %v340 = vmul.f32 %v339, %v326
        %v341 = vmul.f32 %v340, %v339
        %v342 = vmul.f32 0.5, %v341
        %v343 = vsub.f32 1.5, %v342
        %v344 = vmul.f32 %v339, %v343
        %vm345 = vweird.f32 %v326
        %vm346 = vweird.f32 %v339
        %vm347 = vmor %vm345, %vm346
        %v348 = vsel %vm347, %v339, %v344
        %v349 = vrsqrt.pop %v327
        %v350 = vmul.f32 %v349, %v327
        %v351 = vmul.f32 %v350, %v349
        %v352 = vmul.f32 0.5, %v351
        %v353 = vsub.f32 1.5, %v352
        %v354 = vmul.f32 %v349, %v353
        %vm355 = vweird.f32 %v327
        %vm356 = vweird.f32 %v349
        %vm357 = vmor %vm355, %vm356
        %v358 = vsel %vm357, %v349, %v354
        %v359 = vrsqrt.pop %v328
        %v360 = vmul.f32 %v359, %v328
        %v361 = vmul.f32 %v360, %v359
        %v362 = vmul.f32 0.5, %v361
        %v363 = vsub.f32 1.5, %v362
        %v364 = vmul.f32 %v359, %v363
        %vm365 = vweird.f32 %v328
        %vm366 = vweird.f32 %v359
        %vm367 = vmor %vm365, %vm366
        %v368 = vsel %vm367, %v359, %v364
        %v369 = vmul.f32 %v301, %v338
        %v370 = vmul.f32 %v302, %v348
        %v371 = vmul.f32 %v303, %v358
        %v372 = vmul.f32 %v304, %v368
        %v374 = vperm.slane %v276, 0
        %v376 = vmul.f32 %v369, %v374
        %v377 = vmul.f32 %v370, %v374
        %v378 = vmul.f32 %v371, %v374
        %v379 = vmul.f32 %v372, %v374
        %v381 = vperm.slane %v277, 0
        %v383 = vadd.f32 %v376, %v381
        %v384 = vadd.f32 %v377, %v381
        %v385 = vadd.f32 %v378, %v381
        %v386 = vadd.f32 %v379, %v381
        %387 = vst.msk [vmem:[%s217] sm:$0xff] %vm250, %v383
        %388 = vst.msk [vmem:[%s217 + $0x8] sm:$0xff] %vm250, %v384
        %389 = vst.msk [vmem:[%s217 + $0x10] sm:$0xff] %vm250, %v385
        %390 = vst.msk [vmem:[%s217 + $0x18] sm:$0xff] %vm250, %v386
        %s391 = sand.u32 %s137, 1
        %s392 = scalar_lea.sflag [#allocation3], %s391
        %s393 = sand.u32 %s137, 1
        %s394 = smul.addr %s393, 32
        %s395 = scalar_lea.vmem [#allocation2], %s394
        // Predicated region
        $region41: #{box_transformer_encoder_forward.3} parent=39 // pred_check
          %p396 = pneg %p147
        $region42: #{box_transformer_encoder_forward.3} parent=39 // pred_check_branch
          %398 = sbr.rel (%p396) target = $region44
        $region43: #{box_transformer_encoder_forward.3} parent=39 // pred_region
          %400 = vsyncadd %s392, 0
          %s401 = smul.addr %s19, 4
          %s402 = smul.addr %s401, 8
          %s403 = scalar_lea.hbm %s5, %s402
          %s404 = sshll.u32 %s395, 4
          %s405 = int_to_ptr.vmem [resolvable:$true] %s404
          %s406 = sshll.u32 %s403, 4
          %s407 = int_to_ptr.hbm [resolvable:$true] %s406
          %412 = dma.vmem_to_hbm [thread:$0]  %s405, 512, %s407, %s392, 128, 128, 8
        $region44: #{box_transformer_encoder_forward.3} parent=39 // pred_fallthru
          _
      $region40: #{box_transformer_encoder_forward.3} parent=5 // pred_fallthru
        _
      %p413 = scmp.le.s32.totalorder 2, %s14
      // Predicated region
      $region45: #{box_transformer_encoder_forward.3} parent=5 // pred_check
        %p414 = pneg %p413
      $region46: #{box_transformer_encoder_forward.3} parent=5 // pred_check_branch
        %416 = sbr.rel (%p414) target = $region48
      $region47: #{box_transformer_encoder_forward.3} parent=5 // pred_region
        %s417 = ssub.s32 %s14, 2
        // Predicated region
        $region49: #{box_transformer_encoder_forward.3} parent=47 // pred_check
          %p418 = pneg %p153
        $region50: #{box_transformer_encoder_forward.3} parent=47 // pred_check_branch
          %420 = sbr.rel (%p418) target = $region52
        $region51: #{box_transformer_encoder_forward.3} parent=47 // pred_region
          %s421 = sand.u32 %s138, 1
          %s422 = scalar_lea.sflag [#allocation3], %s421
          %s423 = sand.u32 %s138, 1
          %s424 = smul.addr %s423, 32
          %s425 = scalar_lea.vmem [#allocation2], %s424
          %427 = dma.done %s422, 512
        $region52: #{box_transformer_encoder_forward.3} parent=47 // pred_fallthru
          _
      $region48: #{box_transformer_encoder_forward.3} parent=5 // pred_fallthru
        _
    $region6: #{box_transformer_encoder_forward.3} parent=1 // loop_footer
      %s18 = sadd.s32 1, %s14
    $region7: #{box_transformer_encoder_forward.3} parent=1 // loop_footer_branch
      %13 = sbr.rel target = $region3
    $region8: #{box_transformer_encoder_forward.3} parent=1 // loop_exit
      _
    %428 = vsyncpa [#allocation3], 1
    %s429 = scalar_lea.sflag [#allocation3], 1
    %430 = vsyncpa %s429, 1

// kernel: box_transformer_encoder_forward.2
$region0: #{box_transformer_encoder_forward.2}
  #allocation0 [shape = 'u32[]', space=smem, size = 0x4, offset = 0x4, fixed_abs, tag = 'smem constant byte address 0x4 - core index']
  #allocation1 [shape = 'u32[72,128]{1,0:T(1,128)}', space=vmem, size = 0x9000, scoped, tag = 'internal scratch']
  #allocation2 [shape = 'f32[2,128,32]{2,1,0:T(8,128)}', space=vmem, size = 0x20000, scoped, tag = 'scratch operand']
  %s0 = inlined_call_operand.vmem [shape: f32[2,128,32], index: 0, kind: input, shape index: {}]
  %s1 = inlined_call_operand.vmem [shape: f32[2,128,32], index: 1, kind: input, shape index: {}]
  %s2 = inlined_call_operand.vmem [shape: f32[2,1,128], index: 2, kind: input, shape index: {}]
  %s3 = inlined_call_operand.vmem [shape: f32[2,128,1], index: 3, kind: input, shape index: {}]
  %s4 = inlined_call_operand.vmem [shape: bf16[2,32,64], index: 4, kind: input, shape index: {}]
  %s5 = inlined_call_operand.vmem [shape: f32[2,1,64], index: 5, kind: input, shape index: {}]
  %s6 = inlined_call_operand.vmem [shape: bf16[2,32,32], index: 6, kind: input, shape index: {}]
  %s7 = inlined_call_operand.vmem [shape: f32[2,1,32], index: 7, kind: input, shape index: {}]
  %s8 = inlined_call_operand.vmem [shape: bf16[2,32,32], index: 8, kind: input, shape index: {}]
  %s9 = inlined_call_operand.vmem [shape: f32[2,1,32], index: 9, kind: input, shape index: {}]
  %s10 = inlined_call_operand.vmem [shape: f32[2,1,32], index: 10, kind: input, shape index: {}]
  %s11 = inlined_call_operand.vmem [shape: f32[2,1,32], index: 11, kind: input, shape index: {}]
  %s12 = inlined_call_operand.vmem [shape: bf16[2,32,64], index: 12, kind: input, shape index: {}]
  %s13 = inlined_call_operand.vmem [shape: f32[2,1,64], index: 13, kind: input, shape index: {}]
  %s14 = inlined_call_operand.vmem [shape: bf16[2,64,32], index: 14, kind: input, shape index: {}]
  %s15 = inlined_call_operand.vmem [shape: f32[2,1,32], index: 15, kind: input, shape index: {}]
  %s16 = inlined_call_operand.vmem [shape: f32[2,1,32], index: 16, kind: input, shape index: {}]
  %s17 = inlined_call_operand.vmem [shape: f32[2,1,32], index: 17, kind: input, shape index: {}]
  %s18 = inlined_call_operand.vmem [shape: bf16[36,32], index: 18, kind: input, shape index: {}]
  %s19 = inlined_call_operand.vmem [shape: f32[36,1], index: 19, kind: input, shape index: {}]
  %s20 = inlined_call_operand.vmem [shape: bf16[32,32], index: 20, kind: input, shape index: {}]
  %s21 = inlined_call_operand.vmem [shape: f32[32,1], index: 21, kind: input, shape index: {}]
  %s22 = inlined_call_operand.vmem [shape: bf16[4,32], index: 22, kind: input, shape index: {}]
  %s23 = inlined_call_operand.vmem [shape: f32[4,1], index: 23, kind: input, shape index: {}]
  %s24 = inlined_call_operand.vmem [shape: f32[2,128,32], index: 24, kind: output, shape index: {0}]
  %s25 = inlined_call_operand.vmem [shape: f32[2,8,128], index: 25, kind: output, shape index: {1}]
  %26 = xla_tuple %s24, %s25
  %s27 = sld [smem:[#allocation0]]
  $region145: #{box_transformer_encoder_forward.2} parent=0
    _
  %s29 = ssub.s32 1, %s27
  %s30 = scalar_select 0, %s29, %s27
  loop: start=0, step=1, limit=4
  $region2: #{box_transformer_encoder_forward.2} parent=0 // loop_pre_header
    _
  $region3: #{box_transformer_encoder_forward.2} parent=0 // loop_header
    %s32 = sphi 0, %s36
    %p33 = scmp.ge.s32.totalorder %s32, 4
    %s39 = sphi 0, %s51
    %s40 = sphi 0, %s47
    %s41 = sphi 0, %s39
    %s42 = sphi 0, %s40
    %s43 = sphi 0, %s41
    %s44 = sphi 0, %s42
    %s54 = sphi 0, %s56
    %s57 = sphi 0, %s54
    %s58 = sphi 0, %s57
    %s74 = sphi 0, %s58
    %s80 = sphi 0, %s82
    %s83 = sphi 0, %s80
    %s84 = sphi 0, %s83
    %s100 = sphi 0, %s84
    %s106 = sphi 0, %s108
    %s109 = sphi 0, %s106
    %s110 = sphi 0, %s109
    %s126 = sphi 0, %s110
    %s132 = sphi 0, %s134
    %s135 = sphi 0, %s132
    %s136 = sphi 0, %s135
    %s152 = sphi 0, %s136
    %s158 = sphi 0, %s160
    %s161 = sphi 0, %s158
    %s162 = sphi 0, %s161
    %s178 = sphi 0, %s162
    %s184 = sphi 0, %s186
    %s187 = sphi 0, %s184
    %s188 = sphi 0, %s187
    %s204 = sphi 0, %s188
    %s210 = sphi 0, %s212
    %s213 = sphi 0, %s210
    %s214 = sphi 0, %s213
    %s230 = sphi 0, %s214
    %s236 = sphi 0, %s238
    %s239 = sphi 0, %s236
    %s240 = sphi 0, %s239
    %s256 = sphi 0, %s240
    %s262 = sphi 0, %s264
    %s265 = sphi 0, %s262
    %s266 = sphi 0, %s265
    %s282 = sphi 0, %s266
    %s288 = sphi 0, %s290
    %s291 = sphi 0, %s288
    %s292 = sphi 0, %s291
    %s308 = sphi 0, %s292
    %s314 = sphi 0, %s316
    %s317 = sphi 0, %s314
    %s318 = sphi 0, %s317
    %s334 = sphi 0, %s318
    %s340 = sphi 0, %s342
    %s343 = sphi 0, %s340
    %s344 = sphi 0, %s343
    %s360 = sphi 0, %s344
    %s366 = sphi 0, %s368
    %s369 = sphi 0, %s366
    %s370 = sphi 0, %s369
    %s386 = sphi 0, %s370
    %s392 = sphi 0, %s394
    %s395 = sphi 0, %s392
    %s396 = sphi 0, %s395
    %s412 = sphi 0, %s396
    %s418 = sphi 0, %s420
    %s421 = sphi 0, %s418
    %s422 = sphi 0, %s421
    %s438 = sphi 0, %s422
    %s444 = sphi 0, %s446
    %s447 = sphi 0, %s444
    %s448 = sphi 0, %s447
    %s464 = sphi 0, %s448
    %s470 = sphi 0, %s472
    %s473 = sphi 0, %s470
    %s474 = sphi 0, %s473
    %s490 = sphi 0, %s474
    %s496 = sphi 0, %s498
    %s499 = sphi 0, %s496
    %s500 = sphi 0, %s499
    %s516 = sphi 0, %s500
    %s520 = sphi 0, %s520
    %s522 = sphi 0, %s520
    %s523 = sphi 0, %s522
    %s537 = sphi 0, %s523
    %s541 = sphi 0, %s541
    %s543 = sphi 0, %s541
    %s544 = sphi 0, %s543
    %s558 = sphi 0, %s544
    %s562 = sphi 0, %s562
    %s564 = sphi 0, %s562
    %s565 = sphi 0, %s564
    %s579 = sphi 0, %s565
    %s583 = sphi 0, %s583
    %s585 = sphi 0, %s583
    %s586 = sphi 0, %s585
    %s600 = sphi 0, %s586
    %s604 = sphi 0, %s604
    %s606 = sphi 0, %s604
    %s607 = sphi 0, %s606
    %s621 = sphi 0, %s607
    %s625 = sphi 0, %s625
    %s627 = sphi 0, %s625
    %s628 = sphi 0, %s627
    %s642 = sphi 0, %s628
    %s648 = sphi 0, %s650
    %s651 = sphi 0, %s648
    %s652 = sphi 0, %s651
    %s668 = sphi 0, %s652
    %s674 = sphi 0, %s676
    %s677 = sphi 0, %s674
    %s678 = sphi 0, %s677
    %s694 = sphi 0, %s678
  $region4: #{box_transformer_encoder_forward.2} parent=0 // loop_header_branch
    %35 = sbr.rel (%p33) target = $region8
  $region5: #{box_transformer_encoder_forward.2} parent=0 // loop_body
    %s37 = ssub.s32 %s32, 1
    %s38 = ssub.s32 %s32, 2
    %s45 = sadd.s32 1, %s40
    %p46 = scmp.ge.s32.totalorder %s45, 2
    %s47 = scalar_select %p46, 0, %s45
    %s48 = sadd.s32 1, %s39
    %s49 = scalar_select %p46, %s48, %s39
    %p50 = scmp.ge.s32.totalorder %s49, 1
    %s51 = scalar_select %p50, 0, %s49
    %s52 = ssub.s32 %s39, %s51
    %p53 = scmp.eq.s32.totalorder %s52, 0
    %s55 = sadd.s32 %s54, 1
    %s56 = scalar_select %p53, %s54, %s55
    %p59 = pneg %p53
    %p60 = scmp.eq.s32.totalorder %s32, 1
    %p61 = por %p59, %p60
    %p62 = scmp.ne.s32.totalorder %s54, %s57
    %p63 = scmp.eq.s32.totalorder %s32, 0
    %p64 = por %p62, %p63
    %p65 = scmp.ne.s32.totalorder %s54, %s57
    %p66 = scmp.eq.s32.totalorder %s37, 1
    %p67 = por %p65, %p66
    %p68 = scmp.ne.s32.totalorder %s57, %s58
    %p69 = scmp.eq.s32.totalorder %s37, 0
    %p70 = por %p68, %p69
    %p71 = scmp.ne.s32.totalorder %s57, %s58
    %p72 = scmp.eq.s32.totalorder %s38, 1
    %p73 = por %p71, %p72
    %p75 = scmp.ne.s32.totalorder %s58, %s74
    %p76 = scmp.eq.s32.totalorder %s38, 0
    %p77 = por %p75, %p76
    %s78 = ssub.s32 %s39, %s51
    %p79 = scmp.eq.s32.totalorder %s78, 0
    %s81 = sadd.s32 %s80, 1
    %s82 = scalar_select %p79, %s80, %s81
    %p85 = pneg %p79
    %p86 = scmp.eq.s32.totalorder %s32, 1
    %p87 = por %p85, %p86
    %p88 = scmp.ne.s32.totalorder %s80, %s83
    %p89 = scmp.eq.s32.totalorder %s32, 0
    %p90 = por %p88, %p89
    %p91 = scmp.ne.s32.totalorder %s80, %s83
    %p92 = scmp.eq.s32.totalorder %s37, 1
    %p93 = por %p91, %p92
    %p94 = scmp.ne.s32.totalorder %s83, %s84
    %p95 = scmp.eq.s32.totalorder %s37, 0
    %p96 = por %p94, %p95
    %p97 = scmp.ne.s32.totalorder %s83, %s84
    %p98 = scmp.eq.s32.totalorder %s38, 1
    %p99 = por %p97, %p98
    %p101 = scmp.ne.s32.totalorder %s84, %s100
    %p102 = scmp.eq.s32.totalorder %s38, 0
    %p103 = por %p101, %p102
    %s104 = ssub.s32 %s39, %s51
    %p105 = scmp.eq.s32.totalorder %s104, 0
    %s107 = sadd.s32 %s106, 1
    %s108 = scalar_select %p105, %s106, %s107
    %p111 = pneg %p105
    %p112 = scmp.eq.s32.totalorder %s32, 1
    %p113 = por %p111, %p112
    %p114 = scmp.ne.s32.totalorder %s106, %s109
    %p115 = scmp.eq.s32.totalorder %s32, 0
    %p116 = por %p114, %p115
    %p117 = scmp.ne.s32.totalorder %s106, %s109
    %p118 = scmp.eq.s32.totalorder %s37, 1
    %p119 = por %p117, %p118
    %p120 = scmp.ne.s32.totalorder %s109, %s110
    %p121 = scmp.eq.s32.totalorder %s37, 0
    %p122 = por %p120, %p121
    %p123 = scmp.ne.s32.totalorder %s109, %s110
    %p124 = scmp.eq.s32.totalorder %s38, 1
    %p125 = por %p123, %p124
    %p127 = scmp.ne.s32.totalorder %s110, %s126
    %p128 = scmp.eq.s32.totalorder %s38, 0
    %p129 = por %p127, %p128
    %s130 = ssub.s32 %s39, %s51
    %p131 = scmp.eq.s32.totalorder %s130, 0
    %s133 = sadd.s32 %s132, 1
    %s134 = scalar_select %p131, %s132, %s133
    %p137 = pneg %p131
    %p138 = scmp.eq.s32.totalorder %s32, 1
    %p139 = por %p137, %p138
    %p140 = scmp.ne.s32.totalorder %s132, %s135
    %p141 = scmp.eq.s32.totalorder %s32, 0
    %p142 = por %p140, %p141
    %p143 = scmp.ne.s32.totalorder %s132, %s135
    %p144 = scmp.eq.s32.totalorder %s37, 1
    %p145 = por %p143, %p144
    %p146 = scmp.ne.s32.totalorder %s135, %s136
    %p147 = scmp.eq.s32.totalorder %s37, 0
    %p148 = por %p146, %p147
    %p149 = scmp.ne.s32.totalorder %s135, %s136
    %p150 = scmp.eq.s32.totalorder %s38, 1
    %p151 = por %p149, %p150
    %p153 = scmp.ne.s32.totalorder %s136, %s152
    %p154 = scmp.eq.s32.totalorder %s38, 0
    %p155 = por %p153, %p154
    %s156 = ssub.s32 %s40, %s47
    %p157 = scmp.eq.s32.totalorder %s156, 0
    %s159 = sadd.s32 %s158, 1
    %s160 = scalar_select %p157, %s158, %s159
    %p163 = pneg %p157
    %p164 = scmp.eq.s32.totalorder %s32, 1
    %p165 = por %p163, %p164
    %p166 = scmp.ne.s32.totalorder %s158, %s161
    %p167 = scmp.eq.s32.totalorder %s32, 0
    %p168 = por %p166, %p167
    %p169 = scmp.ne.s32.totalorder %s158, %s161
    %p170 = scmp.eq.s32.totalorder %s37, 1
    %p171 = por %p169, %p170
    %p172 = scmp.ne.s32.totalorder %s161, %s162
    %p173 = scmp.eq.s32.totalorder %s37, 0
    %p174 = por %p172, %p173
    %p175 = scmp.ne.s32.totalorder %s161, %s162
    %p176 = scmp.eq.s32.totalorder %s38, 1
    %p177 = por %p175, %p176
    %p179 = scmp.ne.s32.totalorder %s162, %s178
    %p180 = scmp.eq.s32.totalorder %s38, 0
    %p181 = por %p179, %p180
    %s182 = ssub.s32 %s40, %s47
    %p183 = scmp.eq.s32.totalorder %s182, 0
    %s185 = sadd.s32 %s184, 1
    %s186 = scalar_select %p183, %s184, %s185
    %p189 = pneg %p183
    %p190 = scmp.eq.s32.totalorder %s32, 1
    %p191 = por %p189, %p190
    %p192 = scmp.ne.s32.totalorder %s184, %s187
    %p193 = scmp.eq.s32.totalorder %s32, 0
    %p194 = por %p192, %p193
    %p195 = scmp.ne.s32.totalorder %s184, %s187
    %p196 = scmp.eq.s32.totalorder %s37, 1
    %p197 = por %p195, %p196
    %p198 = scmp.ne.s32.totalorder %s187, %s188
    %p199 = scmp.eq.s32.totalorder %s37, 0
    %p200 = por %p198, %p199
    %p201 = scmp.ne.s32.totalorder %s187, %s188
    %p202 = scmp.eq.s32.totalorder %s38, 1
    %p203 = por %p201, %p202
    %p205 = scmp.ne.s32.totalorder %s188, %s204
    %p206 = scmp.eq.s32.totalorder %s38, 0
    %p207 = por %p205, %p206
    %s208 = ssub.s32 %s40, %s47
    %p209 = scmp.eq.s32.totalorder %s208, 0
    %s211 = sadd.s32 %s210, 1
    %s212 = scalar_select %p209, %s210, %s211
    %p215 = pneg %p209
    %p216 = scmp.eq.s32.totalorder %s32, 1
    %p217 = por %p215, %p216
    %p218 = scmp.ne.s32.totalorder %s210, %s213
    %p219 = scmp.eq.s32.totalorder %s32, 0
    %p220 = por %p218, %p219
    %p221 = scmp.ne.s32.totalorder %s210, %s213
    %p222 = scmp.eq.s32.totalorder %s37, 1
    %p223 = por %p221, %p222
    %p224 = scmp.ne.s32.totalorder %s213, %s214
    %p225 = scmp.eq.s32.totalorder %s37, 0
    %p226 = por %p224, %p225
    %p227 = scmp.ne.s32.totalorder %s213, %s214
    %p228 = scmp.eq.s32.totalorder %s38, 1
    %p229 = por %p227, %p228
    %p231 = scmp.ne.s32.totalorder %s214, %s230
    %p232 = scmp.eq.s32.totalorder %s38, 0
    %p233 = por %p231, %p232
    %s234 = ssub.s32 %s40, %s47
    %p235 = scmp.eq.s32.totalorder %s234, 0
    %s237 = sadd.s32 %s236, 1
    %s238 = scalar_select %p235, %s236, %s237
    %p241 = pneg %p235
    %p242 = scmp.eq.s32.totalorder %s32, 1
    %p243 = por %p241, %p242
    %p244 = scmp.ne.s32.totalorder %s236, %s239
    %p245 = scmp.eq.s32.totalorder %s32, 0
    %p246 = por %p244, %p245
    %p247 = scmp.ne.s32.totalorder %s236, %s239
    %p248 = scmp.eq.s32.totalorder %s37, 1
    %p249 = por %p247, %p248
    %p250 = scmp.ne.s32.totalorder %s239, %s240
    %p251 = scmp.eq.s32.totalorder %s37, 0
    %p252 = por %p250, %p251
    %p253 = scmp.ne.s32.totalorder %s239, %s240
    %p254 = scmp.eq.s32.totalorder %s38, 1
    %p255 = por %p253, %p254
    %p257 = scmp.ne.s32.totalorder %s240, %s256
    %p258 = scmp.eq.s32.totalorder %s38, 0
    %p259 = por %p257, %p258
    %s260 = ssub.s32 %s40, %s47
    %p261 = scmp.eq.s32.totalorder %s260, 0
    %s263 = sadd.s32 %s262, 1
    %s264 = scalar_select %p261, %s262, %s263
    %p267 = pneg %p261
    %p268 = scmp.eq.s32.totalorder %s32, 1
    %p269 = por %p267, %p268
    %p270 = scmp.ne.s32.totalorder %s262, %s265
    %p271 = scmp.eq.s32.totalorder %s32, 0
    %p272 = por %p270, %p271
    %p273 = scmp.ne.s32.totalorder %s262, %s265
    %p274 = scmp.eq.s32.totalorder %s37, 1
    %p275 = por %p273, %p274
    %p276 = scmp.ne.s32.totalorder %s265, %s266
    %p277 = scmp.eq.s32.totalorder %s37, 0
    %p278 = por %p276, %p277
    %p279 = scmp.ne.s32.totalorder %s265, %s266
    %p280 = scmp.eq.s32.totalorder %s38, 1
    %p281 = por %p279, %p280
    %p283 = scmp.ne.s32.totalorder %s266, %s282
    %p284 = scmp.eq.s32.totalorder %s38, 0
    %p285 = por %p283, %p284
    %s286 = ssub.s32 %s40, %s47
    %p287 = scmp.eq.s32.totalorder %s286, 0
    %s289 = sadd.s32 %s288, 1
    %s290 = scalar_select %p287, %s288, %s289
    %p293 = pneg %p287
    %p294 = scmp.eq.s32.totalorder %s32, 1
    %p295 = por %p293, %p294
    %p296 = scmp.ne.s32.totalorder %s288, %s291
    %p297 = scmp.eq.s32.totalorder %s32, 0
    %p298 = por %p296, %p297
    %p299 = scmp.ne.s32.totalorder %s288, %s291
    %p300 = scmp.eq.s32.totalorder %s37, 1
    %p301 = por %p299, %p300
    %p302 = scmp.ne.s32.totalorder %s291, %s292
    %p303 = scmp.eq.s32.totalorder %s37, 0
    %p304 = por %p302, %p303
    %p305 = scmp.ne.s32.totalorder %s291, %s292
    %p306 = scmp.eq.s32.totalorder %s38, 1
    %p307 = por %p305, %p306
    %p309 = scmp.ne.s32.totalorder %s292, %s308
    %p310 = scmp.eq.s32.totalorder %s38, 0
    %p311 = por %p309, %p310
    %s312 = ssub.s32 %s40, %s47
    %p313 = scmp.eq.s32.totalorder %s312, 0
    %s315 = sadd.s32 %s314, 1
    %s316 = scalar_select %p313, %s314, %s315
    %p319 = pneg %p313
    %p320 = scmp.eq.s32.totalorder %s32, 1
    %p321 = por %p319, %p320
    %p322 = scmp.ne.s32.totalorder %s314, %s317
    %p323 = scmp.eq.s32.totalorder %s32, 0
    %p324 = por %p322, %p323
    %p325 = scmp.ne.s32.totalorder %s314, %s317
    %p326 = scmp.eq.s32.totalorder %s37, 1
    %p327 = por %p325, %p326
    %p328 = scmp.ne.s32.totalorder %s317, %s318
    %p329 = scmp.eq.s32.totalorder %s37, 0
    %p330 = por %p328, %p329
    %p331 = scmp.ne.s32.totalorder %s317, %s318
    %p332 = scmp.eq.s32.totalorder %s38, 1
    %p333 = por %p331, %p332
    %p335 = scmp.ne.s32.totalorder %s318, %s334
    %p336 = scmp.eq.s32.totalorder %s38, 0
    %p337 = por %p335, %p336
    %s338 = ssub.s32 %s40, %s47
    %p339 = scmp.eq.s32.totalorder %s338, 0
    %s341 = sadd.s32 %s340, 1
    %s342 = scalar_select %p339, %s340, %s341
    %p345 = pneg %p339
    %p346 = scmp.eq.s32.totalorder %s32, 1
    %p347 = por %p345, %p346
    %p348 = scmp.ne.s32.totalorder %s340, %s343
    %p349 = scmp.eq.s32.totalorder %s32, 0
    %p350 = por %p348, %p349
    %p351 = scmp.ne.s32.totalorder %s340, %s343
    %p352 = scmp.eq.s32.totalorder %s37, 1
    %p353 = por %p351, %p352
    %p354 = scmp.ne.s32.totalorder %s343, %s344
    %p355 = scmp.eq.s32.totalorder %s37, 0
    %p356 = por %p354, %p355
    %p357 = scmp.ne.s32.totalorder %s343, %s344
    %p358 = scmp.eq.s32.totalorder %s38, 1
    %p359 = por %p357, %p358
    %p361 = scmp.ne.s32.totalorder %s344, %s360
    %p362 = scmp.eq.s32.totalorder %s38, 0
    %p363 = por %p361, %p362
    %s364 = ssub.s32 %s40, %s47
    %p365 = scmp.eq.s32.totalorder %s364, 0
    %s367 = sadd.s32 %s366, 1
    %s368 = scalar_select %p365, %s366, %s367
    %p371 = pneg %p365
    %p372 = scmp.eq.s32.totalorder %s32, 1
    %p373 = por %p371, %p372
    %p374 = scmp.ne.s32.totalorder %s366, %s369
    %p375 = scmp.eq.s32.totalorder %s32, 0
    %p376 = por %p374, %p375
    %p377 = scmp.ne.s32.totalorder %s366, %s369
    %p378 = scmp.eq.s32.totalorder %s37, 1
    %p379 = por %p377, %p378
    %p380 = scmp.ne.s32.totalorder %s369, %s370
    %p381 = scmp.eq.s32.totalorder %s37, 0
    %p382 = por %p380, %p381
    %p383 = scmp.ne.s32.totalorder %s369, %s370
    %p384 = scmp.eq.s32.totalorder %s38, 1
    %p385 = por %p383, %p384
    %p387 = scmp.ne.s32.totalorder %s370, %s386
    %p388 = scmp.eq.s32.totalorder %s38, 0
    %p389 = por %p387, %p388
    %s390 = ssub.s32 %s40, %s47
    %p391 = scmp.eq.s32.totalorder %s390, 0
    %s393 = sadd.s32 %s392, 1
    %s394 = scalar_select %p391, %s392, %s393
    %p397 = pneg %p391
    %p398 = scmp.eq.s32.totalorder %s32, 1
    %p399 = por %p397, %p398
    %p400 = scmp.ne.s32.totalorder %s392, %s395
    %p401 = scmp.eq.s32.totalorder %s32, 0
    %p402 = por %p400, %p401
    %p403 = scmp.ne.s32.totalorder %s392, %s395
    %p404 = scmp.eq.s32.totalorder %s37, 1
    %p405 = por %p403, %p404
    %p406 = scmp.ne.s32.totalorder %s395, %s396
    %p407 = scmp.eq.s32.totalorder %s37, 0
    %p408 = por %p406, %p407
    %p409 = scmp.ne.s32.totalorder %s395, %s396
    %p410 = scmp.eq.s32.totalorder %s38, 1
    %p411 = por %p409, %p410
    %p413 = scmp.ne.s32.totalorder %s396, %s412
    %p414 = scmp.eq.s32.totalorder %s38, 0
    %p415 = por %p413, %p414
    %s416 = ssub.s32 %s40, %s47
    %p417 = scmp.eq.s32.totalorder %s416, 0
    %s419 = sadd.s32 %s418, 1
    %s420 = scalar_select %p417, %s418, %s419
    %p423 = pneg %p417
    %p424 = scmp.eq.s32.totalorder %s32, 1
    %p425 = por %p423, %p424
    %p426 = scmp.ne.s32.totalorder %s418, %s421
    %p427 = scmp.eq.s32.totalorder %s32, 0
    %p428 = por %p426, %p427
    %p429 = scmp.ne.s32.totalorder %s418, %s421
    %p430 = scmp.eq.s32.totalorder %s37, 1
    %p431 = por %p429, %p430
    %p432 = scmp.ne.s32.totalorder %s421, %s422
    %p433 = scmp.eq.s32.totalorder %s37, 0
    %p434 = por %p432, %p433
    %p435 = scmp.ne.s32.totalorder %s421, %s422
    %p436 = scmp.eq.s32.totalorder %s38, 1
    %p437 = por %p435, %p436
    %p439 = scmp.ne.s32.totalorder %s422, %s438
    %p440 = scmp.eq.s32.totalorder %s38, 0
    %p441 = por %p439, %p440
    %s442 = ssub.s32 %s40, %s47
    %p443 = scmp.eq.s32.totalorder %s442, 0
    %s445 = sadd.s32 %s444, 1
    %s446 = scalar_select %p443, %s444, %s445
    %p449 = pneg %p443
    %p450 = scmp.eq.s32.totalorder %s32, 1
    %p451 = por %p449, %p450
    %p452 = scmp.ne.s32.totalorder %s444, %s447
    %p453 = scmp.eq.s32.totalorder %s32, 0
    %p454 = por %p452, %p453
    %p455 = scmp.ne.s32.totalorder %s444, %s447
    %p456 = scmp.eq.s32.totalorder %s37, 1
    %p457 = por %p455, %p456
    %p458 = scmp.ne.s32.totalorder %s447, %s448
    %p459 = scmp.eq.s32.totalorder %s37, 0
    %p460 = por %p458, %p459
    %p461 = scmp.ne.s32.totalorder %s447, %s448
    %p462 = scmp.eq.s32.totalorder %s38, 1
    %p463 = por %p461, %p462
    %p465 = scmp.ne.s32.totalorder %s448, %s464
    %p466 = scmp.eq.s32.totalorder %s38, 0
    %p467 = por %p465, %p466
    %s468 = ssub.s32 %s40, %s47
    %p469 = scmp.eq.s32.totalorder %s468, 0
    %s471 = sadd.s32 %s470, 1
    %s472 = scalar_select %p469, %s470, %s471
    %p475 = pneg %p469
    %p476 = scmp.eq.s32.totalorder %s32, 1
    %p477 = por %p475, %p476
    %p478 = scmp.ne.s32.totalorder %s470, %s473
    %p479 = scmp.eq.s32.totalorder %s32, 0
    %p480 = por %p478, %p479
    %p481 = scmp.ne.s32.totalorder %s470, %s473
    %p482 = scmp.eq.s32.totalorder %s37, 1
    %p483 = por %p481, %p482
    %p484 = scmp.ne.s32.totalorder %s473, %s474
    %p485 = scmp.eq.s32.totalorder %s37, 0
    %p486 = por %p484, %p485
    %p487 = scmp.ne.s32.totalorder %s473, %s474
    %p488 = scmp.eq.s32.totalorder %s38, 1
    %p489 = por %p487, %p488
    %p491 = scmp.ne.s32.totalorder %s474, %s490
    %p492 = scmp.eq.s32.totalorder %s38, 0
    %p493 = por %p491, %p492
    %s494 = ssub.s32 %s40, %s47
    %p495 = scmp.eq.s32.totalorder %s494, 0
    %s497 = sadd.s32 %s496, 1
    %s498 = scalar_select %p495, %s496, %s497
    %p501 = pneg %p495
    %p502 = scmp.eq.s32.totalorder %s32, 1
    %p503 = por %p501, %p502
    %p504 = scmp.ne.s32.totalorder %s496, %s499
    %p505 = scmp.eq.s32.totalorder %s32, 0
    %p506 = por %p504, %p505
    %p507 = scmp.ne.s32.totalorder %s496, %s499
    %p508 = scmp.eq.s32.totalorder %s37, 1
    %p509 = por %p507, %p508
    %p510 = scmp.ne.s32.totalorder %s499, %s500
    %p511 = scmp.eq.s32.totalorder %s37, 0
    %p512 = por %p510, %p511
    %p513 = scmp.ne.s32.totalorder %s499, %s500
    %p514 = scmp.eq.s32.totalorder %s38, 1
    %p515 = por %p513, %p514
    %p517 = scmp.ne.s32.totalorder %s500, %s516
    %p518 = scmp.eq.s32.totalorder %s38, 0
    %p519 = por %p517, %p518
    %s521 = sadd.s32 %s520, 1
    %p524 = scmp.eq.s32.totalorder %s32, 1
    %p525 = scmp.ne.s32.totalorder %s520, %s522
    %p526 = scmp.eq.s32.totalorder %s32, 0
    %p527 = por %p525, %p526
    %p528 = scmp.ne.s32.totalorder %s520, %s522
    %p529 = scmp.eq.s32.totalorder %s37, 1
    %p530 = por %p528, %p529
    %p531 = scmp.ne.s32.totalorder %s522, %s523
    %p532 = scmp.eq.s32.totalorder %s37, 0
    %p533 = por %p531, %p532
    %p534 = scmp.ne.s32.totalorder %s522, %s523
    %p535 = scmp.eq.s32.totalorder %s38, 1
    %p536 = por %p534, %p535
    %p538 = scmp.ne.s32.totalorder %s523, %s537
    %p539 = scmp.eq.s32.totalorder %s38, 0
    %p540 = por %p538, %p539
    %s542 = sadd.s32 %s541, 1
    %p545 = scmp.eq.s32.totalorder %s32, 1
    %p546 = scmp.ne.s32.totalorder %s541, %s543
    %p547 = scmp.eq.s32.totalorder %s32, 0
    %p548 = por %p546, %p547
    %p549 = scmp.ne.s32.totalorder %s541, %s543
    %p550 = scmp.eq.s32.totalorder %s37, 1
    %p551 = por %p549, %p550
    %p552 = scmp.ne.s32.totalorder %s543, %s544
    %p553 = scmp.eq.s32.totalorder %s37, 0
    %p554 = por %p552, %p553
    %p555 = scmp.ne.s32.totalorder %s543, %s544
    %p556 = scmp.eq.s32.totalorder %s38, 1
    %p557 = por %p555, %p556
    %p559 = scmp.ne.s32.totalorder %s544, %s558
    %p560 = scmp.eq.s32.totalorder %s38, 0
    %p561 = por %p559, %p560
    %s563 = sadd.s32 %s562, 1
    %p566 = scmp.eq.s32.totalorder %s32, 1
    %p567 = scmp.ne.s32.totalorder %s562, %s564
    %p568 = scmp.eq.s32.totalorder %s32, 0
    %p569 = por %p567, %p568
    %p570 = scmp.ne.s32.totalorder %s562, %s564
    %p571 = scmp.eq.s32.totalorder %s37, 1
    %p572 = por %p570, %p571
    %p573 = scmp.ne.s32.totalorder %s564, %s565
    %p574 = scmp.eq.s32.totalorder %s37, 0
    %p575 = por %p573, %p574
    %p576 = scmp.ne.s32.totalorder %s564, %s565
    %p577 = scmp.eq.s32.totalorder %s38, 1
    %p578 = por %p576, %p577
    %p580 = scmp.ne.s32.totalorder %s565, %s579
    %p581 = scmp.eq.s32.totalorder %s38, 0
    %p582 = por %p580, %p581
    %s584 = sadd.s32 %s583, 1
    %p587 = scmp.eq.s32.totalorder %s32, 1
    %p588 = scmp.ne.s32.totalorder %s583, %s585
    %p589 = scmp.eq.s32.totalorder %s32, 0
    %p590 = por %p588, %p589
    %p591 = scmp.ne.s32.totalorder %s583, %s585
    %p592 = scmp.eq.s32.totalorder %s37, 1
    %p593 = por %p591, %p592
    %p594 = scmp.ne.s32.totalorder %s585, %s586
    %p595 = scmp.eq.s32.totalorder %s37, 0
    %p596 = por %p594, %p595
    %p597 = scmp.ne.s32.totalorder %s585, %s586
    %p598 = scmp.eq.s32.totalorder %s38, 1
    %p599 = por %p597, %p598
    %p601 = scmp.ne.s32.totalorder %s586, %s600
    %p602 = scmp.eq.s32.totalorder %s38, 0
    %p603 = por %p601, %p602
    %s605 = sadd.s32 %s604, 1
    %p608 = scmp.eq.s32.totalorder %s32, 1
    %p609 = scmp.ne.s32.totalorder %s604, %s606
    %p610 = scmp.eq.s32.totalorder %s32, 0
    %p611 = por %p609, %p610
    %p612 = scmp.ne.s32.totalorder %s604, %s606
    %p613 = scmp.eq.s32.totalorder %s37, 1
    %p614 = por %p612, %p613
    %p615 = scmp.ne.s32.totalorder %s606, %s607
    %p616 = scmp.eq.s32.totalorder %s37, 0
    %p617 = por %p615, %p616
    %p618 = scmp.ne.s32.totalorder %s606, %s607
    %p619 = scmp.eq.s32.totalorder %s38, 1
    %p620 = por %p618, %p619
    %p622 = scmp.ne.s32.totalorder %s607, %s621
    %p623 = scmp.eq.s32.totalorder %s38, 0
    %p624 = por %p622, %p623
    %s626 = sadd.s32 %s625, 1
    %p629 = scmp.eq.s32.totalorder %s32, 1
    %p630 = scmp.ne.s32.totalorder %s625, %s627
    %p631 = scmp.eq.s32.totalorder %s32, 0
    %p632 = por %p630, %p631
    %p633 = scmp.ne.s32.totalorder %s625, %s627
    %p634 = scmp.eq.s32.totalorder %s37, 1
    %p635 = por %p633, %p634
    %p636 = scmp.ne.s32.totalorder %s627, %s628
    %p637 = scmp.eq.s32.totalorder %s37, 0
    %p638 = por %p636, %p637
    %p639 = scmp.ne.s32.totalorder %s627, %s628
    %p640 = scmp.eq.s32.totalorder %s38, 1
    %p641 = por %p639, %p640
    %p643 = scmp.ne.s32.totalorder %s628, %s642
    %p644 = scmp.eq.s32.totalorder %s38, 0
    %p645 = por %p643, %p644
    %s646 = ssub.s32 %s39, %s51
    %p647 = scmp.eq.s32.totalorder %s646, 0
    %s649 = sadd.s32 %s648, 1
    %s650 = scalar_select %p647, %s648, %s649
    %p653 = pneg %p647
    %p654 = scmp.eq.s32.totalorder %s32, 1
    %p655 = por %p653, %p654
    %p656 = scmp.ne.s32.totalorder %s648, %s651
    %p657 = scmp.eq.s32.totalorder %s32, 0
    %p658 = por %p656, %p657
    %p659 = scmp.ne.s32.totalorder %s648, %s651
    %p660 = scmp.eq.s32.totalorder %s37, 1
    %p661 = por %p659, %p660
    %p662 = scmp.ne.s32.totalorder %s651, %s652
    %p663 = scmp.eq.s32.totalorder %s37, 0
    %p664 = por %p662, %p663
    %p665 = scmp.ne.s32.totalorder %s651, %s652
    %p666 = scmp.eq.s32.totalorder %s38, 1
    %p667 = por %p665, %p666
    %p669 = scmp.ne.s32.totalorder %s652, %s668
    %p670 = scmp.eq.s32.totalorder %s38, 0
    %p671 = por %p669, %p670
    %s672 = ssub.s32 %s39, %s51
    %p673 = scmp.eq.s32.totalorder %s672, 0
    %s675 = sadd.s32 %s674, 1
    %s676 = scalar_select %p673, %s674, %s675
    %p679 = pneg %p673
    %p680 = scmp.eq.s32.totalorder %s32, 1
    %p681 = por %p679, %p680
    %p682 = scmp.ne.s32.totalorder %s674, %s677
    %p683 = scmp.eq.s32.totalorder %s32, 0
    %p684 = por %p682, %p683
    %p685 = scmp.ne.s32.totalorder %s674, %s677
    %p686 = scmp.eq.s32.totalorder %s37, 1
    %p687 = por %p685, %p686
    %p688 = scmp.ne.s32.totalorder %s677, %s678
    %p689 = scmp.eq.s32.totalorder %s37, 0
    %p690 = por %p688, %p689
    %p691 = scmp.ne.s32.totalorder %s677, %s678
    %p692 = scmp.eq.s32.totalorder %s38, 1
    %p693 = por %p691, %p692
    %p695 = scmp.ne.s32.totalorder %s678, %s694
    %p696 = scmp.eq.s32.totalorder %s38, 0
    %p697 = por %p695, %p696
    %p698 = scmp.le.s32.totalorder 1, %s32
    %p699 = scmp.lt.s32.totalorder %s32, 3
    %p700 = pnand %p698, %p699
    %p701 = pneg %p700
    // Predicated region
    $region9: #{box_transformer_encoder_forward.2} parent=5 // pred_check
      _
    $region10: #{box_transformer_encoder_forward.2} parent=5 // pred_check_branch
      %703 = sbr.rel (%p700) target = $region12
    $region11: #{box_transformer_encoder_forward.2} parent=5 // pred_region
      %s704 = ssub.s32 %s32, 1
      // Predicated region
      $region13: #{box_transformer_encoder_forward.2} parent=11 // pred_check
        %p705 = pneg %p70
      $region14: #{box_transformer_encoder_forward.2} parent=11 // pred_check_branch
        %707 = sbr.rel (%p705) target = $region16
      $region15: #{box_transformer_encoder_forward.2} parent=11 // pred_region
        %s708 = smul.u32 2, %s41
        %p709 = scmp.lt.s32.totalorder %s708, 1
        %s710 = scalar_select %p709, %s708, 1
        %s711 = smul.addr %s710, 16
        %s712 = smul.addr %s711, 8
        %s713 = scalar_lea.vmem %s0, %s712
        %s714 = smul.u32 2, %s41
      $region16: #{box_transformer_encoder_forward.2} parent=11 // pred_fallthru
        _
      // Predicated region
      $region17: #{box_transformer_encoder_forward.2} parent=11 // pred_check
        %p715 = pneg %p96
      $region18: #{box_transformer_encoder_forward.2} parent=11 // pred_check_branch
        %717 = sbr.rel (%p715) target = $region20
      $region19: #{box_transformer_encoder_forward.2} parent=11 // pred_region
        %s718 = smul.u32 2, %s41
        %p719 = scmp.lt.s32.totalorder %s718, 1
        %s720 = scalar_select %p719, %s718, 1
        %s721 = smul.addr %s720, 16
        %s722 = smul.addr %s721, 8
        %s723 = scalar_lea.vmem %s1, %s722
        %s724 = smul.u32 2, %s41
      $region20: #{box_transformer_encoder_forward.2} parent=11 // pred_fallthru
        _
      // Predicated region
      $region21: #{box_transformer_encoder_forward.2} parent=11 // pred_check
        %p725 = pneg %p122
      $region22: #{box_transformer_encoder_forward.2} parent=11 // pred_check_branch
        %727 = sbr.rel (%p725) target = $region24
      $region23: #{box_transformer_encoder_forward.2} parent=11 // pred_region
        %s728 = smul.u32 2, %s41
        %p729 = scmp.lt.s32.totalorder %s728, 1
        %s730 = scalar_select %p729, %s728, 1
        %s731 = scalar_lea.vmem %s2, %s730
        %s732 = smul.u32 2, %s41
      $region24: #{box_transformer_encoder_forward.2} parent=11 // pred_fallthru
        _
      // Predicated region
      $region25: #{box_transformer_encoder_forward.2} parent=11 // pred_check
        %p733 = pneg %p148
      $region26: #{box_transformer_encoder_forward.2} parent=11 // pred_check_branch
        %735 = sbr.rel (%p733) target = $region28
      $region27: #{box_transformer_encoder_forward.2} parent=11 // pred_region
        %s736 = smul.u32 2, %s41
        %p737 = scmp.lt.s32.totalorder %s736, 1
        %s738 = scalar_select %p737, %s736, 1
        %s739 = smul.addr %s738, 16
        %s740 = smul.addr %s739, 8
        %s741 = scalar_lea.vmem %s3, %s740
        %s742 = smul.u32 2, %s41
      $region28: #{box_transformer_encoder_forward.2} parent=11 // pred_fallthru
        _
      // Predicated region
      $region29: #{box_transformer_encoder_forward.2} parent=11 // pred_check
        %p743 = pneg %p533
      $region30: #{box_transformer_encoder_forward.2} parent=11 // pred_check_branch
        %745 = sbr.rel (%p743) target = $region32
      $region31: #{box_transformer_encoder_forward.2} parent=11 // pred_region
        _
      $region32: #{box_transformer_encoder_forward.2} parent=11 // pred_fallthru
        _
      // Predicated region
      $region33: #{box_transformer_encoder_forward.2} parent=11 // pred_check
        %p746 = pneg %p554
      $region34: #{box_transformer_encoder_forward.2} parent=11 // pred_check_branch
        %748 = sbr.rel (%p746) target = $region36
      $region35: #{box_transformer_encoder_forward.2} parent=11 // pred_region
        _
      $region36: #{box_transformer_encoder_forward.2} parent=11 // pred_fallthru
        _
      // Predicated region
      $region37: #{box_transformer_encoder_forward.2} parent=11 // pred_check
        %p749 = pneg %p575
      $region38: #{box_transformer_encoder_forward.2} parent=11 // pred_check_branch
        %751 = sbr.rel (%p749) target = $region40
      $region39: #{box_transformer_encoder_forward.2} parent=11 // pred_region
        _
      $region40: #{box_transformer_encoder_forward.2} parent=11 // pred_fallthru
        _
      // Predicated region
      $region41: #{box_transformer_encoder_forward.2} parent=11 // pred_check
        %p752 = pneg %p596
      $region42: #{box_transformer_encoder_forward.2} parent=11 // pred_check_branch
        %754 = sbr.rel (%p752) target = $region44
      $region43: #{box_transformer_encoder_forward.2} parent=11 // pred_region
        _
      $region44: #{box_transformer_encoder_forward.2} parent=11 // pred_fallthru
        _
      // Predicated region
      $region45: #{box_transformer_encoder_forward.2} parent=11 // pred_check
        %p755 = pneg %p617
      $region46: #{box_transformer_encoder_forward.2} parent=11 // pred_check_branch
        %757 = sbr.rel (%p755) target = $region48
      $region47: #{box_transformer_encoder_forward.2} parent=11 // pred_region
        _
      $region48: #{box_transformer_encoder_forward.2} parent=11 // pred_fallthru
        _
      // Predicated region
      $region49: #{box_transformer_encoder_forward.2} parent=11 // pred_check
        %p758 = pneg %p638
      $region50: #{box_transformer_encoder_forward.2} parent=11 // pred_check_branch
        %760 = sbr.rel (%p758) target = $region52
      $region51: #{box_transformer_encoder_forward.2} parent=11 // pred_region
        _
      $region52: #{box_transformer_encoder_forward.2} parent=11 // pred_fallthru
        _
    $region12: #{box_transformer_encoder_forward.2} parent=5 // pred_fallthru
      _
    %p761 = scmp.lt.s32.totalorder %s32, 2
    // Predicated region
    $region53: #{box_transformer_encoder_forward.2} parent=5 // pred_check
      %p762 = pneg %p761
    $region54: #{box_transformer_encoder_forward.2} parent=5 // pred_check_branch
      %764 = sbr.rel (%p762) target = $region56
    $region55: #{box_transformer_encoder_forward.2} parent=5 // pred_region
      // Predicated region
      $region57: #{box_transformer_encoder_forward.2} parent=55 // pred_check
        %p765 = pneg %p168
      $region58: #{box_transformer_encoder_forward.2} parent=55 // pred_check_branch
        %767 = sbr.rel (%p765) target = $region60
      $region59: #{box_transformer_encoder_forward.2} parent=55 // pred_region
        %p768 = scmp.lt.s32.totalorder %s40, 1
        %s769 = scalar_select %p768, %s40, 1
        %s770 = smul.addr %s769, 4
        %s771 = smul.addr %s770, 4
        %s772 = scalar_lea.vmem %s4, %s771
      $region60: #{box_transformer_encoder_forward.2} parent=55 // pred_fallthru
        _
      // Predicated region
      $region61: #{box_transformer_encoder_forward.2} parent=55 // pred_check
        %p773 = pneg %p194
      $region62: #{box_transformer_encoder_forward.2} parent=55 // pred_check_branch
        %775 = sbr.rel (%p773) target = $region64
      $region63: #{box_transformer_encoder_forward.2} parent=55 // pred_region
        %p776 = scmp.lt.s32.totalorder %s40, 1
        %s777 = scalar_select %p776, %s40, 1
        %s778 = scalar_lea.vmem %s5, %s777
      $region64: #{box_transformer_encoder_forward.2} parent=55 // pred_fallthru
        _
      // Predicated region
      $region65: #{box_transformer_encoder_forward.2} parent=55 // pred_check
        %p779 = pneg %p220
      $region66: #{box_transformer_encoder_forward.2} parent=55 // pred_check_branch
        %781 = sbr.rel (%p779) target = $region68
      $region67: #{box_transformer_encoder_forward.2} parent=55 // pred_region
        %p782 = scmp.lt.s32.totalorder %s40, 1
        %s783 = scalar_select %p782, %s40, 1
        %s784 = smul.addr %s783, 4
        %s785 = smul.addr %s784, 4
        %s786 = scalar_lea.vmem %s6, %s785
      $region68: #{box_transformer_encoder_forward.2} parent=55 // pred_fallthru
        _
      // Predicated region
      $region69: #{box_transformer_encoder_forward.2} parent=55 // pred_check
        %p787 = pneg %p246
      $region70: #{box_transformer_encoder_forward.2} parent=55 // pred_check_branch
        %789 = sbr.rel (%p787) target = $region72
      $region71: #{box_transformer_encoder_forward.2} parent=55 // pred_region
        %p790 = scmp.lt.s32.totalorder %s40, 1
        %s791 = scalar_select %p790, %s40, 1
        %s792 = scalar_lea.vmem %s7, %s791
      $region72: #{box_transformer_encoder_forward.2} parent=55 // pred_fallthru
        _
      // Predicated region
      $region73: #{box_transformer_encoder_forward.2} parent=55 // pred_check
        %p793 = pneg %p272
      $region74: #{box_transformer_encoder_forward.2} parent=55 // pred_check_branch
        %795 = sbr.rel (%p793) target = $region76
      $region75: #{box_transformer_encoder_forward.2} parent=55 // pred_region
        %p796 = scmp.lt.s32.totalorder %s40, 1
        %s797 = scalar_select %p796, %s40, 1
        %s798 = smul.addr %s797, 4
        %s799 = smul.addr %s798, 4
        %s800 = scalar_lea.vmem %s8, %s799
      $region76: #{box_transformer_encoder_forward.2} parent=55 // pred_fallthru
        _
      // Predicated region
      $region77: #{box_transformer_encoder_forward.2} parent=55 // pred_check
        %p801 = pneg %p298
      $region78: #{box_transformer_encoder_forward.2} parent=55 // pred_check_branch
        %803 = sbr.rel (%p801) target = $region80
      $region79: #{box_transformer_encoder_forward.2} parent=55 // pred_region
        %p804 = scmp.lt.s32.totalorder %s40, 1
        %s805 = scalar_select %p804, %s40, 1
        %s806 = scalar_lea.vmem %s9, %s805
      $region80: #{box_transformer_encoder_forward.2} parent=55 // pred_fallthru
        _
      // Predicated region
      $region81: #{box_transformer_encoder_forward.2} parent=55 // pred_check
        %p807 = pneg %p324
      $region82: #{box_transformer_encoder_forward.2} parent=55 // pred_check_branch
        %809 = sbr.rel (%p807) target = $region84
      $region83: #{box_transformer_encoder_forward.2} parent=55 // pred_region
        %p810 = scmp.lt.s32.totalorder %s40, 1
        %s811 = scalar_select %p810, %s40, 1
        %s812 = scalar_lea.vmem %s10, %s811
      $region84: #{box_transformer_encoder_forward.2} parent=55 // pred_fallthru
        _
      // Predicated region
      $region85: #{box_transformer_encoder_forward.2} parent=55 // pred_check
        %p813 = pneg %p350
      $region86: #{box_transformer_encoder_forward.2} parent=55 // pred_check_branch
        %815 = sbr.rel (%p813) target = $region88
      $region87: #{box_transformer_encoder_forward.2} parent=55 // pred_region
        %p816 = scmp.lt.s32.totalorder %s40, 1
        %s817 = scalar_select %p816, %s40, 1
        %s818 = scalar_lea.vmem %s11, %s817
      $region88: #{box_transformer_encoder_forward.2} parent=55 // pred_fallthru
        _
      // Predicated region
      $region89: #{box_transformer_encoder_forward.2} parent=55 // pred_check
        %p819 = pneg %p376
      $region90: #{box_transformer_encoder_forward.2} parent=55 // pred_check_branch
        %821 = sbr.rel (%p819) target = $region92
      $region91: #{box_transformer_encoder_forward.2} parent=55 // pred_region
        %p822 = scmp.lt.s32.totalorder %s40, 1
        %s823 = scalar_select %p822, %s40, 1
        %s824 = smul.addr %s823, 4
        %s825 = smul.addr %s824, 4
        %s826 = scalar_lea.vmem %s12, %s825
      $region92: #{box_transformer_encoder_forward.2} parent=55 // pred_fallthru
        _
      // Predicated region
      $region93: #{box_transformer_encoder_forward.2} parent=55 // pred_check
        %p827 = pneg %p402
      $region94: #{box_transformer_encoder_forward.2} parent=55 // pred_check_branch
        %829 = sbr.rel (%p827) target = $region96
      $region95: #{box_transformer_encoder_forward.2} parent=55 // pred_region
        %p830 = scmp.lt.s32.totalorder %s40, 1
        %s831 = scalar_select %p830, %s40, 1
        %s832 = scalar_lea.vmem %s13, %s831
      $region96: #{box_transformer_encoder_forward.2} parent=55 // pred_fallthru
        _
      // Predicated region
      $region97: #{box_transformer_encoder_forward.2} parent=55 // pred_check
        %p833 = pneg %p428
      $region98: #{box_transformer_encoder_forward.2} parent=55 // pred_check_branch
        %835 = sbr.rel (%p833) target = $region100
      $region99: #{box_transformer_encoder_forward.2} parent=55 // pred_region
        %p836 = scmp.lt.s32.totalorder %s40, 1
        %s837 = scalar_select %p836, %s40, 1
        %s838 = smul.addr %s837, 8
        %s839 = smul.addr %s838, 4
        %s840 = scalar_lea.vmem %s14, %s839
      $region100: #{box_transformer_encoder_forward.2} parent=55 // pred_fallthru
        _
      // Predicated region
      $region101: #{box_transformer_encoder_forward.2} parent=55 // pred_check
        %p841 = pneg %p454
      $region102: #{box_transformer_encoder_forward.2} parent=55 // pred_check_branch
        %843 = sbr.rel (%p841) target = $region104
      $region103: #{box_transformer_encoder_forward.2} parent=55 // pred_region
        %p844 = scmp.lt.s32.totalorder %s40, 1
        %s845 = scalar_select %p844, %s40, 1
        %s846 = scalar_lea.vmem %s15, %s845
      $region104: #{box_transformer_encoder_forward.2} parent=55 // pred_fallthru
        _
      // Predicated region
      $region105: #{box_transformer_encoder_forward.2} parent=55 // pred_check
        %p847 = pneg %p480
      $region106: #{box_transformer_encoder_forward.2} parent=55 // pred_check_branch
        %849 = sbr.rel (%p847) target = $region108
      $region107: #{box_transformer_encoder_forward.2} parent=55 // pred_region
        %p850 = scmp.lt.s32.totalorder %s40, 1
        %s851 = scalar_select %p850, %s40, 1
        %s852 = scalar_lea.vmem %s16, %s851
      $region108: #{box_transformer_encoder_forward.2} parent=55 // pred_fallthru
        _
      // Predicated region
      $region109: #{box_transformer_encoder_forward.2} parent=55 // pred_check
        %p853 = pneg %p506
      $region110: #{box_transformer_encoder_forward.2} parent=55 // pred_check_branch
        %855 = sbr.rel (%p853) target = $region112
      $region111: #{box_transformer_encoder_forward.2} parent=55 // pred_region
        %p856 = scmp.lt.s32.totalorder %s40, 1
        %s857 = scalar_select %p856, %s40, 1
        %s858 = scalar_lea.vmem %s17, %s857
      $region112: #{box_transformer_encoder_forward.2} parent=55 // pred_fallthru
        _
    $region56: #{box_transformer_encoder_forward.2} parent=5 // pred_fallthru
      _
    %p859 = scmp.le.s32.totalorder 1, %s32
    %p860 = scmp.lt.s32.totalorder %s32, 3
    %p861 = pnand %p859, %p860
    %p862 = pneg %p861
    // Predicated region
    $region113: #{box_transformer_encoder_forward.2} parent=5 // pred_check
      _
    $region114: #{box_transformer_encoder_forward.2} parent=5 // pred_check_branch
      %864 = sbr.rel (%p861) target = $region116
    $region115: #{box_transformer_encoder_forward.2} parent=5 // pred_region
      %s865 = ssub.s32 %s32, 1
      %s866 = smul.u32 2, %s41
      %p867 = scmp.lt.s32.totalorder %s866, 1
      %s868 = scalar_select %p867, %s866, 1
      %s869 = smul.addr %s868, 16
      %s870 = smul.addr %s869, 8
      %s871 = scalar_lea.vmem %s0, %s870
      %p872 = pneg %p70
      %p873 = pneg %p67
      %s874 = smul.u32 2, %s41
      %p875 = scmp.lt.s32.totalorder %s874, 1
      %s876 = scalar_select %p875, %s874, 1
      %s877 = smul.addr %s876, 16
      %s878 = smul.addr %s877, 8
      %s879 = scalar_lea.vmem %s1, %s878
      %p880 = pneg %p96
      %p881 = pneg %p93
      %s882 = smul.u32 2, %s41
      %p883 = scmp.lt.s32.totalorder %s882, 1
      %s884 = scalar_select %p883, %s882, 1
      %s885 = scalar_lea.vmem %s2, %s884
      %p886 = pneg %p122
      %p887 = pneg %p119
      %s888 = smul.u32 2, %s41
      %p889 = scmp.lt.s32.totalorder %s888, 1
      %s890 = scalar_select %p889, %s888, 1
      %s891 = smul.addr %s890, 16
      %s892 = smul.addr %s891, 8
      %s893 = scalar_lea.vmem %s3, %s892
      %p894 = pneg %p148
      %p895 = pneg %p145
      %p896 = scmp.lt.s32.totalorder %s42, 1
      %s897 = scalar_select %p896, %s42, 1
      %s898 = smul.addr %s897, 4
      %s899 = smul.addr %s898, 4
      %s900 = scalar_lea.vmem %s4, %s899
      %p901 = pneg %p174
      %p902 = pneg %p171
      %p903 = scmp.lt.s32.totalorder %s42, 1
      %s904 = scalar_select %p903, %s42, 1
      %s905 = scalar_lea.vmem %s5, %s904
      %p906 = pneg %p200
      %p907 = pneg %p197
      %p908 = scmp.lt.s32.totalorder %s42, 1
      %s909 = scalar_select %p908, %s42, 1
      %s910 = smul.addr %s909, 4
      %s911 = smul.addr %s910, 4
      %s912 = scalar_lea.vmem %s6, %s911
      %p913 = pneg %p226
      %p914 = pneg %p223
      %p915 = scmp.lt.s32.totalorder %s42, 1
      %s916 = scalar_select %p915, %s42, 1
      %s917 = scalar_lea.vmem %s7, %s916
      %p918 = pneg %p252
      %p919 = pneg %p249
      %p920 = scmp.lt.s32.totalorder %s42, 1
      %s921 = scalar_select %p920, %s42, 1
      %s922 = smul.addr %s921, 4
      %s923 = smul.addr %s922, 4
      %s924 = scalar_lea.vmem %s8, %s923
      %p925 = pneg %p278
      %p926 = pneg %p275
      %p927 = scmp.lt.s32.totalorder %s42, 1
      %s928 = scalar_select %p927, %s42, 1
      %s929 = scalar_lea.vmem %s9, %s928
      %p930 = pneg %p304
      %p931 = pneg %p301
      %p932 = scmp.lt.s32.totalorder %s42, 1
      %s933 = scalar_select %p932, %s42, 1
      %s934 = scalar_lea.vmem %s10, %s933
      %p935 = pneg %p330
      %p936 = pneg %p327
      %p937 = scmp.lt.s32.totalorder %s42, 1
      %s938 = scalar_select %p937, %s42, 1
      %s939 = scalar_lea.vmem %s11, %s938
      %p940 = pneg %p356
      %p941 = pneg %p353
      %p942 = scmp.lt.s32.totalorder %s42, 1
      %s943 = scalar_select %p942, %s42, 1
      %s944 = smul.addr %s943, 4
      %s945 = smul.addr %s944, 4
      %s946 = scalar_lea.vmem %s12, %s945
      %p947 = pneg %p382
      %p948 = pneg %p379
      %p949 = scmp.lt.s32.totalorder %s42, 1
      %s950 = scalar_select %p949, %s42, 1
      %s951 = scalar_lea.vmem %s13, %s950
      %p952 = pneg %p408
      %p953 = pneg %p405
      %p954 = scmp.lt.s32.totalorder %s42, 1
      %s955 = scalar_select %p954, %s42, 1
      %s956 = smul.addr %s955, 8
      %s957 = smul.addr %s956, 4
      %s958 = scalar_lea.vmem %s14, %s957
      %p959 = pneg %p434
      %p960 = pneg %p431
      %p961 = scmp.lt.s32.totalorder %s42, 1
      %s962 = scalar_select %p961, %s42, 1
      %s963 = scalar_lea.vmem %s15, %s962
      %p964 = pneg %p460
      %p965 = pneg %p457
      %p966 = scmp.lt.s32.totalorder %s42, 1
      %s967 = scalar_select %p966, %s42, 1
      %s968 = scalar_lea.vmem %s16, %s967
      %p969 = pneg %p486
      %p970 = pneg %p483
      %p971 = scmp.lt.s32.totalorder %s42, 1
      %s972 = scalar_select %p971, %s42, 1
      %s973 = scalar_lea.vmem %s17, %s972
      %p974 = pneg %p512
      %p975 = pneg %p509
      %p976 = pneg %p533
      %p977 = pneg %p530
      %p978 = pneg %p554
      %p979 = pneg %p551
      %p980 = pneg %p575
      %p981 = pneg %p572
      %p982 = pneg %p596
      %p983 = pneg %p593
      %p984 = pneg %p617
      %p985 = pneg %p614
      %p986 = pneg %p638
      %p987 = pneg %p635
      %p988 = pneg %p664
      %p989 = pneg %p661
      %s990 = smul.u32 2, %s41
      %p991 = scmp.lt.s32.totalorder %s990, 1
      %s992 = scalar_select %p991, %s990, 1
      %s993 = smul.addr %s992, 16
      %s994 = smul.addr %s993, 8
      %s995 = scalar_lea.vmem %s24, %s994
      %p996 = pneg %p690
      %p997 = pneg %p687
      %s998 = smul.u32 2, %s41
      %p999 = scmp.lt.s32.totalorder %s998, 1
      %s1000 = scalar_select %p999, %s998, 1
      %s1001 = smul.addr %s1000, 8
      %s1002 = scalar_lea.vmem %s25, %s1001
      %s1003 = smul.u32 2, %s41
      %p1004 = scmp.lt.s32.totalorder %s1003, 1
      %s1005 = scalar_select %p1004, %s1003, 1
      %s1006 = smul.addr %s1005, 16
      %s1007 = smul.addr %s1006, 8
      %s1008 = scalar_lea.vmem %s0, %s1007
      %s1009 = smul.u32 2, %s41
      %s1010 = smul.u32 2, %s41
      %p1011 = scmp.lt.s32.totalorder %s1010, 1
      %s1012 = scalar_select %p1011, %s1010, 1
      %s1013 = smul.addr %s1012, 16
      %s1014 = smul.addr %s1013, 8
      %s1015 = scalar_lea.vmem %s1, %s1014
      %s1016 = smul.u32 2, %s41
      %s1017 = smul.u32 2, %s41
      %p1018 = scmp.lt.s32.totalorder %s1017, 1
      %s1019 = scalar_select %p1018, %s1017, 1
      %s1020 = scalar_lea.vmem %s2, %s1019
      %s1021 = smul.u32 2, %s41
      %s1022 = smul.u32 2, %s41
      %p1023 = scmp.lt.s32.totalorder %s1022, 1
      %s1024 = scalar_select %p1023, %s1022, 1
      %s1025 = smul.addr %s1024, 16
      %s1026 = smul.addr %s1025, 8
      %s1027 = scalar_lea.vmem %s3, %s1026
      %s1028 = smul.u32 2, %s41
      %p1029 = scmp.lt.s32.totalorder %s42, 1
      %s1030 = scalar_select %p1029, %s42, 1
      %s1031 = smul.addr %s1030, 4
      %s1032 = smul.addr %s1031, 4
      %s1033 = scalar_lea.vmem %s4, %s1032
      %p1034 = scmp.lt.s32.totalorder %s42, 1
      %s1035 = scalar_select %p1034, %s42, 1
      %s1036 = scalar_lea.vmem %s5, %s1035
      %p1037 = scmp.lt.s32.totalorder %s42, 1
      %s1038 = scalar_select %p1037, %s42, 1
      %s1039 = smul.addr %s1038, 4
      %s1040 = smul.addr %s1039, 4
      %s1041 = scalar_lea.vmem %s6, %s1040
      %p1042 = scmp.lt.s32.totalorder %s42, 1
      %s1043 = scalar_select %p1042, %s42, 1
      %s1044 = scalar_lea.vmem %s7, %s1043
      %p1045 = scmp.lt.s32.totalorder %s42, 1
      %s1046 = scalar_select %p1045, %s42, 1
      %s1047 = smul.addr %s1046, 4
      %s1048 = smul.addr %s1047, 4
      %s1049 = scalar_lea.vmem %s8, %s1048
      %p1050 = scmp.lt.s32.totalorder %s42, 1
      %s1051 = scalar_select %p1050, %s42, 1
      %s1052 = scalar_lea.vmem %s9, %s1051
      %p1053 = scmp.lt.s32.totalorder %s42, 1
      %s1054 = scalar_select %p1053, %s42, 1
      %s1055 = scalar_lea.vmem %s10, %s1054
      %p1056 = scmp.lt.s32.totalorder %s42, 1
      %s1057 = scalar_select %p1056, %s42, 1
      %s1058 = scalar_lea.vmem %s11, %s1057
      %p1059 = scmp.lt.s32.totalorder %s42, 1
      %s1060 = scalar_select %p1059, %s42, 1
      %s1061 = smul.addr %s1060, 4
      %s1062 = smul.addr %s1061, 4
      %s1063 = scalar_lea.vmem %s12, %s1062
      %p1064 = scmp.lt.s32.totalorder %s42, 1
      %s1065 = scalar_select %p1064, %s42, 1
      %s1066 = scalar_lea.vmem %s13, %s1065
      %p1067 = scmp.lt.s32.totalorder %s42, 1
      %s1068 = scalar_select %p1067, %s42, 1
      %s1069 = smul.addr %s1068, 8
      %s1070 = smul.addr %s1069, 4
      %s1071 = scalar_lea.vmem %s14, %s1070
      %p1072 = scmp.lt.s32.totalorder %s42, 1
      %s1073 = scalar_select %p1072, %s42, 1
      %s1074 = scalar_lea.vmem %s15, %s1073
      %p1075 = scmp.lt.s32.totalorder %s42, 1
      %s1076 = scalar_select %p1075, %s42, 1
      %s1077 = scalar_lea.vmem %s16, %s1076
      %p1078 = scmp.lt.s32.totalorder %s42, 1
      %s1079 = scalar_select %p1078, %s42, 1
      %s1080 = scalar_lea.vmem %s17, %s1079
      %s1081 = smul.u32 2, %s41
      %p1082 = scmp.lt.s32.totalorder %s1081, 1
      %s1083 = scalar_select %p1082, %s1081, 1
      %s1084 = smul.addr %s1083, 16
      %s1085 = smul.addr %s1084, 8
      %s1086 = scalar_lea.vmem %s24, %s1085
      %s1087 = smul.u32 2, %s41
      %s1088 = smul.u32 2, %s41
      %p1089 = scmp.lt.s32.totalorder %s1088, 1
      %s1090 = scalar_select %p1089, %s1088, 1
      %s1091 = smul.addr %s1090, 8
      %s1092 = scalar_lea.vmem %s25, %s1091
      %s1093 = smul.u32 2, %s41
      %p1095 = scmp.eq.s32.totalorder %s42, 0
      // Predicated region
      $region117: #{box_transformer_encoder_forward.2} parent=115 // pred_check
        %p1096 = pneg %p1095
      $region118: #{box_transformer_encoder_forward.2} parent=115 // pred_check_branch
        %1098 = sbr.rel (%p1096) target = $region120
      $region119: #{box_transformer_encoder_forward.2} parent=115 // pred_region
        %v1099 = vld [vmem:[%s1008] sm:$0xff]
        %v1100 = vld [vmem:[%s1008 + $0x8] sm:$0xff]
        %v1101 = vld [vmem:[%s1008 + $0x10] sm:$0xff]
        %v1102 = vld [vmem:[%s1008 + $0x18] sm:$0xff]
        %v1103 = vld [vmem:[%s1008 + $0x20] sm:$0xff]
        %v1104 = vld [vmem:[%s1008 + $0x28] sm:$0xff]
        %v1105 = vld [vmem:[%s1008 + $0x30] sm:$0xff]
        %v1106 = vld [vmem:[%s1008 + $0x38] sm:$0xff]
        %v1107 = vld [vmem:[%s1008 + $0x40] sm:$0xff]
        %v1108 = vld [vmem:[%s1008 + $0x48] sm:$0xff]
        %v1109 = vld [vmem:[%s1008 + $0x50] sm:$0xff]
        %v1110 = vld [vmem:[%s1008 + $0x58] sm:$0xff]
        %v1111 = vld [vmem:[%s1008 + $0x60] sm:$0xff]
        %v1112 = vld [vmem:[%s1008 + $0x68] sm:$0xff]
        %v1113 = vld [vmem:[%s1008 + $0x70] sm:$0xff]
        %v1114 = vld [vmem:[%s1008 + $0x78] sm:$0xff]
        %v1115 = vld [vmem:[%s1008 + $0x80] sm:$0xff]
        %v1116 = vld [vmem:[%s1008 + $0x88] sm:$0xff]
        %v1117 = vld [vmem:[%s1008 + $0x90] sm:$0xff]
        %v1118 = vld [vmem:[%s1008 + $0x98] sm:$0xff]
        %v1119 = vld [vmem:[%s1008 + $0xa0] sm:$0xff]
        %v1120 = vld [vmem:[%s1008 + $0xa8] sm:$0xff]
        %v1121 = vld [vmem:[%s1008 + $0xb0] sm:$0xff]
        %v1122 = vld [vmem:[%s1008 + $0xb8] sm:$0xff]
        %v1123 = vld [vmem:[%s1008 + $0xc0] sm:$0xff]
        %v1124 = vld [vmem:[%s1008 + $0xc8] sm:$0xff]
        %v1125 = vld [vmem:[%s1008 + $0xd0] sm:$0xff]
        %v1126 = vld [vmem:[%s1008 + $0xd8] sm:$0xff]
        %v1127 = vld [vmem:[%s1008 + $0xe0] sm:$0xff]
        %v1128 = vld [vmem:[%s1008 + $0xe8] sm:$0xff]
        %v1129 = vld [vmem:[%s1008 + $0xf0] sm:$0xff]
        %v1130 = vld [vmem:[%s1008 + $0xf8] sm:$0xff]
        %vm1131 = vcmask 261120
        %1132 = vst.msk [vmem:[#allocation2] sm:$0xff] %vm1131, %v1099
        %1133 = vst.msk [vmem:[#allocation2 + $0x8] sm:$0xff] %vm1131, %v1100
        %1134 = vst.msk [vmem:[#allocation2 + $0x10] sm:$0xff] %vm1131, %v1101
        %1135 = vst.msk [vmem:[#allocation2 + $0x18] sm:$0xff] %vm1131, %v1102
        %1136 = vst.msk [vmem:[#allocation2 + $0x20] sm:$0xff] %vm1131, %v1103
        %1137 = vst.msk [vmem:[#allocation2 + $0x28] sm:$0xff] %vm1131, %v1104
        %1138 = vst.msk [vmem:[#allocation2 + $0x30] sm:$0xff] %vm1131, %v1105
        %1139 = vst.msk [vmem:[#allocation2 + $0x38] sm:$0xff] %vm1131, %v1106
        %1140 = vst.msk [vmem:[#allocation2 + $0x40] sm:$0xff] %vm1131, %v1107
        %1141 = vst.msk [vmem:[#allocation2 + $0x48] sm:$0xff] %vm1131, %v1108
        %1142 = vst.msk [vmem:[#allocation2 + $0x50] sm:$0xff] %vm1131, %v1109
        %1143 = vst.msk [vmem:[#allocation2 + $0x58] sm:$0xff] %vm1131, %v1110
        %1144 = vst.msk [vmem:[#allocation2 + $0x60] sm:$0xff] %vm1131, %v1111
        %1145 = vst.msk [vmem:[#allocation2 + $0x68] sm:$0xff] %vm1131, %v1112
        %1146 = vst.msk [vmem:[#allocation2 + $0x70] sm:$0xff] %vm1131, %v1113
        %1147 = vst.msk [vmem:[#allocation2 + $0x78] sm:$0xff] %vm1131, %v1114
        %1148 = vst.msk [vmem:[#allocation2 + $0x80] sm:$0xff] %vm1131, %v1115
        %1149 = vst.msk [vmem:[#allocation2 + $0x88] sm:$0xff] %vm1131, %v1116
        %1150 = vst.msk [vmem:[#allocation2 + $0x90] sm:$0xff] %vm1131, %v1117
        %1151 = vst.msk [vmem:[#allocation2 + $0x98] sm:$0xff] %vm1131, %v1118
        %1152 = vst.msk [vmem:[#allocation2 + $0xa0] sm:$0xff] %vm1131, %v1119
        %1153 = vst.msk [vmem:[#allocation2 + $0xa8] sm:$0xff] %vm1131, %v1120
        %1154 = vst.msk [vmem:[#allocation2 + $0xb0] sm:$0xff] %vm1131, %v1121
        %1155 = vst.msk [vmem:[#allocation2 + $0xb8] sm:$0xff] %vm1131, %v1122
        %1156 = vst.msk [vmem:[#allocation2 + $0xc0] sm:$0xff] %vm1131, %v1123
        %1157 = vst.msk [vmem:[#allocation2 + $0xc8] sm:$0xff] %vm1131, %v1124
        %1158 = vst.msk [vmem:[#allocation2 + $0xd0] sm:$0xff] %vm1131, %v1125
        %1159 = vst.msk [vmem:[#allocation2 + $0xd8] sm:$0xff] %vm1131, %v1126
        %1160 = vst.msk [vmem:[#allocation2 + $0xe0] sm:$0xff] %vm1131, %v1127
        %1161 = vst.msk [vmem:[#allocation2 + $0xe8] sm:$0xff] %vm1131, %v1128
        %1162 = vst.msk [vmem:[#allocation2 + $0xf0] sm:$0xff] %vm1131, %v1129
        %1163 = vst.msk [vmem:[#allocation2 + $0xf8] sm:$0xff] %vm1131, %v1130
      $region120: #{box_transformer_encoder_forward.2} parent=115 // pred_fallthru
        _
      %v1164 = vld [vmem:[%s1033] sm:$0xf]
      %v1165 = vld [vmem:[%s1033 + $0x4] sm:$0xf]
      %v1166 = vld [vmem:[%s1033 + $0x8] sm:$0xf]
      %v1167 = vld [vmem:[%s1033 + $0xc] sm:$0xf]
      %v1168 = vld [vmem:[%s1036] sm:$0x1]
      %v1169 = vld [vmem:[%s1041] sm:$0xf]
      %v1170 = vld [vmem:[%s1041 + $0x4] sm:$0xf]
      %v1171 = vld [vmem:[%s1041 + $0x8] sm:$0xf]
      %v1172 = vld [vmem:[%s1041 + $0xc] sm:$0xf]
      %v1173 = vld [vmem:[%s1044] sm:$0x1]
      %v1174 = vld [vmem:[%s1049] sm:$0xf]
      %v1175 = vld [vmem:[%s1049 + $0x4] sm:$0xf]
      %v1176 = vld [vmem:[%s1049 + $0x8] sm:$0xf]
      %v1177 = vld [vmem:[%s1049 + $0xc] sm:$0xf]
      %v1178 = vld [vmem:[%s1052] sm:$0x1]
      %v1179 = vld [vmem:[%s1055] sm:$0x1]
      %v1180 = vld [vmem:[%s1058] sm:$0x1]
      %v1181 = vld [vmem:[%s1063] sm:$0xf]
      %v1182 = vld [vmem:[%s1063 + $0x4] sm:$0xf]
      %v1183 = vld [vmem:[%s1063 + $0x8] sm:$0xf]
      %v1184 = vld [vmem:[%s1063 + $0xc] sm:$0xf]
      %v1185 = vld [vmem:[%s1066] sm:$0x1]
      %v1186 = vld [vmem:[%s1071] sm:$0xf]
      %v1187 = vld [vmem:[%s1071 + $0x4] sm:$0xf]
      %v1188 = vld [vmem:[%s1071 + $0x8] sm:$0xf]
      %v1189 = vld [vmem:[%s1071 + $0xc] sm:$0xf]
      %v1190 = vld [vmem:[%s1071 + $0x10] sm:$0xf]
      %v1191 = vld [vmem:[%s1071 + $0x14] sm:$0xf]
      %v1192 = vld [vmem:[%s1071 + $0x18] sm:$0xf]
      %v1193 = vld [vmem:[%s1071 + $0x1c] sm:$0xf]
      %v1194 = vld [vmem:[%s1074] sm:$0x1]
      %v1195 = vld [vmem:[%s1077] sm:$0x1]
      %v1196 = vld [vmem:[%s1080] sm:$0x1]
      %v1197 = vld [vmem:[#allocation2] sm:$0xff]
      %v1198 = vld [vmem:[#allocation2 + $0x8] sm:$0xff]
      %v1199 = vld [vmem:[#allocation2 + $0x10] sm:$0xff]
      %v1200 = vld [vmem:[#allocation2 + $0x18] sm:$0xff]
      %v1201 = vld [vmem:[#allocation2 + $0x20] sm:$0xff]
      %v1202 = vld [vmem:[#allocation2 + $0x28] sm:$0xff]
      %v1203 = vld [vmem:[#allocation2 + $0x30] sm:$0xff]
      %v1204 = vld [vmem:[#allocation2 + $0x38] sm:$0xff]
      %v1205 = vld [vmem:[#allocation2 + $0x40] sm:$0xff]
      %v1206 = vld [vmem:[#allocation2 + $0x48] sm:$0xff]
      %v1207 = vld [vmem:[#allocation2 + $0x50] sm:$0xff]
      %v1208 = vld [vmem:[#allocation2 + $0x58] sm:$0xff]
      %v1209 = vld [vmem:[#allocation2 + $0x60] sm:$0xff]
      %v1210 = vld [vmem:[#allocation2 + $0x68] sm:$0xff]
      %v1211 = vld [vmem:[#allocation2 + $0x70] sm:$0xff]
      %v1212 = vld [vmem:[#allocation2 + $0x78] sm:$0xff]
      %v1213 = vld [vmem:[%s1015] sm:$0xff]
      %v1214 = vld [vmem:[%s1015 + $0x8] sm:$0xff]
      %v1215 = vld [vmem:[%s1015 + $0x10] sm:$0xff]
      %v1216 = vld [vmem:[%s1015 + $0x18] sm:$0xff]
      %v1217 = vld [vmem:[%s1015 + $0x20] sm:$0xff]
      %v1218 = vld [vmem:[%s1015 + $0x28] sm:$0xff]
      %v1219 = vld [vmem:[%s1015 + $0x30] sm:$0xff]
      %v1220 = vld [vmem:[%s1015 + $0x38] sm:$0xff]
      %v1221 = vld [vmem:[%s1015 + $0x40] sm:$0xff]
      %v1222 = vld [vmem:[%s1015 + $0x48] sm:$0xff]
      %v1223 = vld [vmem:[%s1015 + $0x50] sm:$0xff]
      %v1224 = vld [vmem:[%s1015 + $0x58] sm:$0xff]
      %v1225 = vld [vmem:[%s1015 + $0x60] sm:$0xff]
      %v1226 = vld [vmem:[%s1015 + $0x68] sm:$0xff]
      %v1227 = vld [vmem:[%s1015 + $0x70] sm:$0xff]
      %v1228 = vld [vmem:[%s1015 + $0x78] sm:$0xff]
      %v1229 = vld [vmem:[%s1020] sm:$0x1]
      %v1230 = vadd.f32 %v1197, %v1213
      %v1231 = vadd.f32 %v1198, %v1214
      %v1232 = vadd.f32 %v1199, %v1215
      %v1233 = vadd.f32 %v1200, %v1216
      %v1234 = vadd.f32 %v1201, %v1217
      %v1235 = vadd.f32 %v1202, %v1218
      %v1236 = vadd.f32 %v1203, %v1219
      %v1237 = vadd.f32 %v1204, %v1220
      %v1238 = vadd.f32 %v1205, %v1221
      %v1239 = vadd.f32 %v1206, %v1222
      %v1240 = vadd.f32 %v1207, %v1223
      %v1241 = vadd.f32 %v1208, %v1224
      %v1242 = vadd.f32 %v1209, %v1225
      %v1243 = vadd.f32 %v1210, %v1226
      %v1244 = vadd.f32 %v1211, %v1227
      %v1245 = vadd.f32 %v1212, %v1228
      %v1246 = vpack.c.bf16 %v1231, %v1230
      %v1247 = vpack.c.bf16 %v1233, %v1232
      %v1248 = vpack.c.bf16 %v1235, %v1234
      %v1249 = vpack.c.bf16 %v1237, %v1236
      %v1250 = vpack.c.bf16 %v1239, %v1238
      %v1251 = vpack.c.bf16 %v1241, %v1240
      %v1252 = vpack.c.bf16 %v1243, %v1242
      %v1253 = vpack.c.bf16 %v1245, %v1244
      %v1255 = vperm.slane %v1168, 0
      %v1261 = vunpack.c.l.b16 %v1164
      %v1262 = vunpack.c.l.b16 %v1165
      %v1263 = vunpack.c.l.b16 %v1166
      %v1264 = vunpack.c.l.b16 %v1167
      %v1265 = vpack.c.b16 %v1262, %v1261
      %v1266 = vpack.c.b16 %v1264, %v1263
      %vm1269 = vcmask 261120
      %v1271 = vsel %vm1269, %v1246, 0
      %v1274 = vsel %vm1269, %v1247, 0
      %v1277 = vsel %vm1269, %v1248, 0
      %v1280 = vsel %vm1269, %v1249, 0
      %v1283 = vsel %vm1269, %v1250, 0
      %v1286 = vsel %vm1269, %v1251, 0
      %v1289 = vsel %vm1269, %v1252, 0
      %v1292 = vsel %vm1269, %v1253, 0
      %1294 = vmatpush.bf16.msra.mxu0 0
      %1295 = vmatpush.bf16.msra.mxu0 0
      %1296 = vmatpush.bf16.msra.mxu0 0
      %1297 = vmatpush.bf16.msra.mxu0 0
      %1298 = vmatpush.bf16.msra.mxu0 0
      %1299 = vmatpush.bf16.msra.mxu0 0
      %1300 = vmatpush.bf16.msra.mxu0 %v1266
      %1301 = vmatpush.bf16.msra.mxu0 %v1265
      %1302 = vmatmul.bf16.gmra.mxu0 %v1271
      %v1303 = vpop.f32.mrf.mxu0
      %v1304 = vadd.f32 %v1255, %v1303
      %v1305 = vpop.f32.mrf.mxu0
      %v1306 = vadd.f32 %v1255, %v1305
      %1307 = vmatmul.bf16.gmra.mxu0 %v1274
      %v1308 = vpop.f32.mrf.mxu0
      %v1309 = vadd.f32 %v1255, %v1308
      %v1310 = vpop.f32.mrf.mxu0
      %v1311 = vadd.f32 %v1255, %v1310
      %1312 = vmatmul.bf16.gmra.mxu0 %v1277
      %v1313 = vpop.f32.mrf.mxu0
      %v1314 = vadd.f32 %v1255, %v1313
      %v1315 = vpop.f32.mrf.mxu0
      %v1316 = vadd.f32 %v1255, %v1315
      %1317 = vmatmul.bf16.gmra.mxu0 %v1280
      %v1318 = vpop.f32.mrf.mxu0
      %v1319 = vadd.f32 %v1255, %v1318
      %v1320 = vpop.f32.mrf.mxu0
      %v1321 = vadd.f32 %v1255, %v1320
      %1322 = vmatmul.bf16.gmra.mxu0 %v1283
      %v1323 = vpop.f32.mrf.mxu0
      %v1324 = vadd.f32 %v1255, %v1323
      %v1325 = vpop.f32.mrf.mxu0
      %v1326 = vadd.f32 %v1255, %v1325
      %1327 = vmatmul.bf16.gmra.mxu0 %v1286
      %v1328 = vpop.f32.mrf.mxu0
      %v1329 = vadd.f32 %v1255, %v1328
      %v1330 = vpop.f32.mrf.mxu0
      %v1331 = vadd.f32 %v1255, %v1330
      %1332 = vmatmul.bf16.gmra.mxu0 %v1289
      %v1333 = vpop.f32.mrf.mxu0
      %v1334 = vadd.f32 %v1255, %v1333
      %v1335 = vpop.f32.mrf.mxu0
      %v1336 = vadd.f32 %v1255, %v1335
      %1337 = vmatmul.bf16.gmra.mxu0 %v1292
      %v1338 = vpop.f32.mrf.mxu0
      %v1339 = vadd.f32 %v1255, %v1338
      %v1340 = vpop.f32.mrf.mxu0
      %v1341 = vadd.f32 %v1255, %v1340
      %1342 = vdwg.mxu0
      %v1343 = vpack.c.bf16 %v1198, %v1197
      %v1344 = vpack.c.bf16 %v1200, %v1199
      %v1345 = vpack.c.bf16 %v1202, %v1201
      %v1346 = vpack.c.bf16 %v1204, %v1203
      %v1347 = vpack.c.bf16 %v1206, %v1205
      %v1348 = vpack.c.bf16 %v1208, %v1207
      %v1349 = vpack.c.bf16 %v1210, %v1209
      %v1350 = vpack.c.bf16 %v1212, %v1211
      %v1352 = vperm.slane %v1173, 0
      %v1358 = vunpack.c.l.b16 %v1169
      %v1359 = vunpack.c.l.b16 %v1170
      %v1360 = vunpack.c.l.b16 %v1171
      %v1361 = vunpack.c.l.b16 %v1172
      %v1362 = vpack.c.b16 %v1359, %v1358
      %v1363 = vpack.c.b16 %v1361, %v1360
      %v1367 = vsel %vm1269, %v1343, 0
      %v1370 = vsel %vm1269, %v1344, 0
      %v1373 = vsel %vm1269, %v1345, 0
      %v1376 = vsel %vm1269, %v1346, 0
      %v1379 = vsel %vm1269, %v1347, 0
      %v1382 = vsel %vm1269, %v1348, 0
      %v1385 = vsel %vm1269, %v1349, 0
      %v1388 = vsel %vm1269, %v1350, 0
      %1390 = vmatpush.bf16.msra.mxu0 0
      %1391 = vmatpush.bf16.msra.mxu0 0
      %1392 = vmatpush.bf16.msra.mxu0 0
      %1393 = vmatpush.bf16.msra.mxu0 0
      %1394 = vmatpush.bf16.msra.mxu0 0
      %1395 = vmatpush.bf16.msra.mxu0 0
      %1396 = vmatpush.bf16.msra.mxu0 %v1363
      %1397 = vmatpush.bf16.msra.mxu0 %v1362
      %1398 = vmatmul.bf16.gmra.mxu0 %v1367
      %v1399 = vpop.f32.mrf.mxu0
      %v1400 = vadd.f32 %v1352, %v1399
      %v1401 = vpop.f32.mrf.mxu0
      %v1402 = vadd.f32 %v1352, %v1401
      %1403 = vmatmul.bf16.gmra.mxu0 %v1370
      %v1404 = vpop.f32.mrf.mxu0
      %v1405 = vadd.f32 %v1352, %v1404
      %v1406 = vpop.f32.mrf.mxu0
      %v1407 = vadd.f32 %v1352, %v1406
      %1408 = vmatmul.bf16.gmra.mxu0 %v1373
      %v1409 = vpop.f32.mrf.mxu0
      %v1410 = vadd.f32 %v1352, %v1409
      %v1411 = vpop.f32.mrf.mxu0
      %v1412 = vadd.f32 %v1352, %v1411
      %1413 = vmatmul.bf16.gmra.mxu0 %v1376
      %v1414 = vpop.f32.mrf.mxu0
      %v1415 = vadd.f32 %v1352, %v1414
      %v1416 = vpop.f32.mrf.mxu0
      %v1417 = vadd.f32 %v1352, %v1416
      %1418 = vmatmul.bf16.gmra.mxu0 %v1379
      %v1419 = vpop.f32.mrf.mxu0
      %v1420 = vadd.f32 %v1352, %v1419
      %v1421 = vpop.f32.mrf.mxu0
      %v1422 = vadd.f32 %v1352, %v1421
      %1423 = vmatmul.bf16.gmra.mxu0 %v1382
      %v1424 = vpop.f32.mrf.mxu0
      %v1425 = vadd.f32 %v1352, %v1424
      %v1426 = vpop.f32.mrf.mxu0
      %v1427 = vadd.f32 %v1352, %v1426
      %1428 = vmatmul.bf16.gmra.mxu0 %v1385
      %v1429 = vpop.f32.mrf.mxu0
      %v1430 = vadd.f32 %v1352, %v1429
      %v1431 = vpop.f32.mrf.mxu0
      %v1432 = vadd.f32 %v1352, %v1431
      %1433 = vmatmul.bf16.gmra.mxu0 %v1388
      %v1434 = vpop.f32.mrf.mxu0
      %v1435 = vadd.f32 %v1352, %v1434
      %v1436 = vpop.f32.mrf.mxu0
      %v1437 = vadd.f32 %v1352, %v1436
      %1438 = vdwg.mxu0
      %v1439 = vpack.c.bf16 %v1304, %v1304
      %v1440 = vpack.c.bf16 %v1306, %v1306
      %v1441 = vpack.c.bf16 %v1309, %v1309
      %v1442 = vpack.c.bf16 %v1311, %v1311
      %v1443 = vpack.c.bf16 %v1314, %v1314
      %v1444 = vpack.c.bf16 %v1316, %v1316
      %v1445 = vpack.c.bf16 %v1319, %v1319
      %v1446 = vpack.c.bf16 %v1321, %v1321
      %v1447 = vpack.c.bf16 %v1324, %v1324
      %v1448 = vpack.c.bf16 %v1326, %v1326
      %v1449 = vpack.c.bf16 %v1329, %v1329
      %v1450 = vpack.c.bf16 %v1331, %v1331
      %v1451 = vpack.c.bf16 %v1334, %v1334
      %v1452 = vpack.c.bf16 %v1336, %v1336
      %v1453 = vpack.c.bf16 %v1339, %v1339
      %v1454 = vpack.c.bf16 %v1341, %v1341
      %1471 = vrot.lane.b32.xlu0 %v1304, 96
      %v1472 = vpop.permute.xlu0 %1471
      %1473 = vrot.lane.b32.xlu0 %v1306, 96
      %v1474 = vpop.permute.xlu0 %1473
      %1475 = vrot.lane.b32.xlu0 %v1309, 96
      %v1476 = vpop.permute.xlu0 %1475
      %1477 = vrot.lane.b32.xlu0 %v1311, 96
      %v1478 = vpop.permute.xlu0 %1477
      %1479 = vrot.lane.b32.xlu0 %v1314, 96
      %v1480 = vpop.permute.xlu0 %1479
      %1481 = vrot.lane.b32.xlu0 %v1316, 96
      %v1482 = vpop.permute.xlu0 %1481
      %1483 = vrot.lane.b32.xlu0 %v1319, 96
      %v1484 = vpop.permute.xlu0 %1483
      %1485 = vrot.lane.b32.xlu0 %v1321, 96
      %v1486 = vpop.permute.xlu0 %1485
      %1487 = vrot.lane.b32.xlu0 %v1324, 96
      %v1488 = vpop.permute.xlu0 %1487
      %1489 = vrot.lane.b32.xlu0 %v1326, 96
      %v1490 = vpop.permute.xlu0 %1489
      %1491 = vrot.lane.b32.xlu0 %v1329, 96
      %v1492 = vpop.permute.xlu0 %1491
      %1493 = vrot.lane.b32.xlu0 %v1331, 96
      %v1494 = vpop.permute.xlu0 %1493
      %1495 = vrot.lane.b32.xlu0 %v1334, 96
      %v1496 = vpop.permute.xlu0 %1495
      %1497 = vrot.lane.b32.xlu0 %v1336, 96
      %v1498 = vpop.permute.xlu0 %1497
      %1499 = vrot.lane.b32.xlu0 %v1339, 96
      %v1500 = vpop.permute.xlu0 %1499
      %1501 = vrot.lane.b32.xlu0 %v1341, 96
      %v1502 = vpop.permute.xlu0 %1501
      %1519 = vxpose.xlu0.b32.start [1/16] %v1472, 128
      %1520 = vxpose.xlu0.b32.cont [2/16] %v1474, 128
      %1521 = vxpose.xlu0.b32.cont [3/16] %v1476, 128
      %1522 = vxpose.xlu0.b32.cont [4/16] %v1478, 128
      %1523 = vxpose.xlu0.b32.cont [5/16] %v1480, 128
      %1524 = vxpose.xlu0.b32.cont [6/16] %v1482, 128
      %1525 = vxpose.xlu0.b32.cont [7/16] %v1484, 128
      %1526 = vxpose.xlu0.b32.cont [8/16] %v1486, 128
      %1527 = vxpose.xlu0.b32.cont [9/16] %v1488, 128
      %1528 = vxpose.xlu0.b32.cont [10/16] %v1490, 128
      %1529 = vxpose.xlu0.b32.cont [11/16] %v1492, 128
      %1530 = vxpose.xlu0.b32.cont [12/16] %v1494, 128
      %1531 = vxpose.xlu0.b32.cont [13/16] %v1496, 128
      %1532 = vxpose.xlu0.b32.cont [14/16] %v1498, 128
      %1533 = vxpose.xlu0.b32.cont [15/16] %v1500, 128
      %1534 = vxpose.xlu0.b32.end [16/16] %v1502, 128
      %v1535 = vpop.trf.xlu0
      %v1536 = vpop.trf.xlu0
      %v1537 = vpop.trf.xlu0
      %v1538 = vpop.trf.xlu0
      %v1539 = vpop.trf.xlu0
      %v1540 = vpop.trf.xlu0
      %v1541 = vpop.trf.xlu0
      %v1542 = vpop.trf.xlu0
      %v1543 = vpop.trf.xlu0
      %v1544 = vpop.trf.xlu0
      %v1545 = vpop.trf.xlu0
      %v1546 = vpop.trf.xlu0
      %v1547 = vpop.trf.xlu0
      %v1548 = vpop.trf.xlu0
      %v1549 = vpop.trf.xlu0
      %v1550 = vpop.trf.xlu0
      %v1551 = vpack.c.bf16 %v1535, %v1535
      %v1552 = vpack.c.bf16 %v1536, %v1536
      %v1553 = vpack.c.bf16 %v1537, %v1537
      %v1554 = vpack.c.bf16 %v1538, %v1538
      %v1555 = vpack.c.bf16 %v1400, %v1400
      %v1556 = vpack.c.bf16 %v1402, %v1402
      %v1557 = vpack.c.bf16 %v1405, %v1405
      %v1558 = vpack.c.bf16 %v1407, %v1407
      %v1559 = vpack.c.bf16 %v1410, %v1410
      %v1560 = vpack.c.bf16 %v1412, %v1412
      %v1561 = vpack.c.bf16 %v1415, %v1415
      %v1562 = vpack.c.bf16 %v1417, %v1417
      %v1563 = vpack.c.bf16 %v1420, %v1420
      %v1564 = vpack.c.bf16 %v1422, %v1422
      %v1565 = vpack.c.bf16 %v1425, %v1425
      %v1566 = vpack.c.bf16 %v1427, %v1427
      %v1567 = vpack.c.bf16 %v1430, %v1430
      %v1568 = vpack.c.bf16 %v1432, %v1432
      %v1569 = vpack.c.bf16 %v1435, %v1435
      %v1570 = vpack.c.bf16 %v1437, %v1437
      %v1572 = vperm.slane %v1229, 0
      %v1590 = vunpack.c.l.b16 %v1439
      %v1591 = vunpack.c.l.b16 %v1440
      %v1592 = vunpack.c.l.b16 %v1441
      %v1593 = vunpack.c.l.b16 %v1442
      %v1594 = vunpack.c.l.b16 %v1443
      %v1595 = vunpack.c.l.b16 %v1444
      %v1596 = vunpack.c.l.b16 %v1445
      %v1597 = vunpack.c.l.b16 %v1446
      %v1598 = vunpack.c.l.b16 %v1447
      %v1599 = vunpack.c.l.b16 %v1448
      %v1600 = vunpack.c.l.b16 %v1449
      %v1601 = vunpack.c.l.b16 %v1450
      %v1602 = vunpack.c.l.b16 %v1451
      %v1603 = vunpack.c.l.b16 %v1452
      %v1604 = vunpack.c.l.b16 %v1453
      %v1605 = vunpack.c.l.b16 %v1454
      %v1606 = vpack.c.b16 %v1591, %v1590
      %v1607 = vpack.c.b16 %v1593, %v1592
      %v1608 = vpack.c.b16 %v1595, %v1594
      %v1609 = vpack.c.b16 %v1597, %v1596
      %v1610 = vpack.c.b16 %v1599, %v1598
      %v1611 = vpack.c.b16 %v1601, %v1600
      %v1612 = vpack.c.b16 %v1603, %v1602
      %v1613 = vpack.c.b16 %v1605, %v1604
      %vm1614 = vcmask 64512
      %v1616 = vsel %vm1614, %v1606, 0
      %v1619 = vsel %vm1614, %v1607, 0
      %v1622 = vsel %vm1614, %v1608, 0
      %v1625 = vsel %vm1614, %v1609, 0
      %v1628 = vsel %vm1614, %v1610, 0
      %v1631 = vsel %vm1614, %v1611, 0
      %v1634 = vsel %vm1614, %v1612, 0
      %v1637 = vsel %vm1614, %v1613, 0
      %vm1639 = vcmask 1043456
      %v1641 = vsel %vm1639, %v1551, 0
      %1643 = vmatpush.bf16.msra.mxu0 0
      %1644 = vmatpush.bf16.msra.mxu0 0
      %1645 = vmatpush.bf16.msra.mxu0 0
      %1646 = vmatpush.bf16.msra.mxu0 0
      %1647 = vmatpush.bf16.msra.mxu0 0
      %1648 = vmatpush.bf16.msra.mxu0 0
      %1649 = vmatpush.bf16.msra.mxu0 0
      %1650 = vmatpush.bf16.msra.mxu0 %v1641
      %1651 = vmatmul.bf16.gmra.mxu0 %v1616
      %v1652 = vpop.f32.mrf.mxu0
      %v1653 = vadd.f32 %v1572, %v1652
      %v1654 = vpop.f32.mrf.mxu0
      %v1655 = vadd.f32 %v1572, %v1654
      %1656 = vmatmul.bf16.gmra.mxu0 %v1619
      %v1657 = vpop.f32.mrf.mxu0
      %v1658 = vadd.f32 %v1572, %v1657
      %v1659 = vpop.f32.mrf.mxu0
      %v1660 = vadd.f32 %v1572, %v1659
      %1661 = vmatmul.bf16.gmra.mxu0 %v1622
      %v1662 = vpop.f32.mrf.mxu0
      %v1663 = vadd.f32 %v1572, %v1662
      %v1664 = vpop.f32.mrf.mxu0
      %v1665 = vadd.f32 %v1572, %v1664
      %1666 = vmatmul.bf16.gmra.mxu0 %v1625
      %v1667 = vpop.f32.mrf.mxu0
      %v1668 = vadd.f32 %v1572, %v1667
      %v1669 = vpop.f32.mrf.mxu0
      %v1670 = vadd.f32 %v1572, %v1669
      %1671 = vmatmul.bf16.gmra.mxu0 %v1628
      %v1672 = vpop.f32.mrf.mxu0
      %v1673 = vadd.f32 %v1572, %v1672
      %v1674 = vpop.f32.mrf.mxu0
      %v1675 = vadd.f32 %v1572, %v1674
      %1676 = vmatmul.bf16.gmra.mxu0 %v1631
      %v1677 = vpop.f32.mrf.mxu0
      %v1678 = vadd.f32 %v1572, %v1677
      %v1679 = vpop.f32.mrf.mxu0
      %v1680 = vadd.f32 %v1572, %v1679
      %1681 = vmatmul.bf16.gmra.mxu0 %v1634
      %v1682 = vpop.f32.mrf.mxu0
      %v1683 = vadd.f32 %v1572, %v1682
      %v1684 = vpop.f32.mrf.mxu0
      %v1685 = vadd.f32 %v1572, %v1684
      %1686 = vmatmul.bf16.gmra.mxu0 %v1637
      %v1687 = vpop.f32.mrf.mxu0
      %v1688 = vadd.f32 %v1572, %v1687
      %v1689 = vpop.f32.mrf.mxu0
      %v1690 = vadd.f32 %v1572, %v1689
      %1691 = vdwg.mxu0
      %1692 = vmax.xlane.f32.xlu0 %v1653
      %v1693 = vpop.xlane.xlu0 %1692
      %1694 = vmax.xlane.f32.xlu0 %v1655
      %v1695 = vpop.xlane.xlu0 %1694
      %1696 = vmax.xlane.f32.xlu0 %v1658
      %v1697 = vpop.xlane.xlu0 %1696
      %1698 = vmax.xlane.f32.xlu0 %v1660
      %v1699 = vpop.xlane.xlu0 %1698
      %1700 = vmax.xlane.f32.xlu0 %v1663
      %v1701 = vpop.xlane.xlu0 %1700
      %1702 = vmax.xlane.f32.xlu0 %v1665
      %v1703 = vpop.xlane.xlu0 %1702
      %1704 = vmax.xlane.f32.xlu0 %v1668
      %v1705 = vpop.xlane.xlu0 %1704
      %1706 = vmax.xlane.f32.xlu0 %v1670
      %v1707 = vpop.xlane.xlu0 %1706
      %1708 = vmax.xlane.f32.xlu0 %v1673
      %v1709 = vpop.xlane.xlu0 %1708
      %1710 = vmax.xlane.f32.xlu0 %v1675
      %v1711 = vpop.xlane.xlu0 %1710
      %1712 = vmax.xlane.f32.xlu0 %v1678
      %v1713 = vpop.xlane.xlu0 %1712
      %1714 = vmax.xlane.f32.xlu0 %v1680
      %v1715 = vpop.xlane.xlu0 %1714
      %1716 = vmax.xlane.f32.xlu0 %v1683
      %v1717 = vpop.xlane.xlu0 %1716
      %1718 = vmax.xlane.f32.xlu0 %v1685
      %v1719 = vpop.xlane.xlu0 %1718
      %1720 = vmax.xlane.f32.xlu0 %v1688
      %v1721 = vpop.xlane.xlu0 %1720
      %1722 = vmax.xlane.f32.xlu0 %v1690
      %v1723 = vpop.xlane.xlu0 %1722
      %v1724 = vsub.f32 %v1653, %v1693
      %v1725 = vsub.f32 %v1655, %v1695
      %v1726 = vsub.f32 %v1658, %v1697
      %v1727 = vsub.f32 %v1660, %v1699
      %v1728 = vsub.f32 %v1663, %v1701
      %v1729 = vsub.f32 %v1665, %v1703
      %v1730 = vsub.f32 %v1668, %v1705
      %v1731 = vsub.f32 %v1670, %v1707
      %v1732 = vsub.f32 %v1673, %v1709
      %v1733 = vsub.f32 %v1675, %v1711
      %v1734 = vsub.f32 %v1678, %v1713
      %v1735 = vsub.f32 %v1680, %v1715
      %v1736 = vsub.f32 %v1683, %v1717
      %v1737 = vsub.f32 %v1685, %v1719
      %v1738 = vsub.f32 %v1688, %v1721
      %v1739 = vsub.f32 %v1690, %v1723
      %v1740 = vmul.f32 %v1724, 1.442695
      %v1741 = vpow.pop %v1740
      %v1742 = vmul.f32 %v1725, 1.442695
      %v1743 = vpow.pop %v1742
      %v1744 = vmul.f32 %v1726, 1.442695
      %v1745 = vpow.pop %v1744
      %v1746 = vmul.f32 %v1727, 1.442695
      %v1747 = vpow.pop %v1746
      %v1748 = vmul.f32 %v1728, 1.442695
      %v1749 = vpow.pop %v1748
      %v1750 = vmul.f32 %v1729, 1.442695
      %v1751 = vpow.pop %v1750
      %v1752 = vmul.f32 %v1730, 1.442695
      %v1753 = vpow.pop %v1752
      %v1754 = vmul.f32 %v1731, 1.442695
      %v1755 = vpow.pop %v1754
      %v1756 = vmul.f32 %v1732, 1.442695
      %v1757 = vpow.pop %v1756
      %v1758 = vmul.f32 %v1733, 1.442695
      %v1759 = vpow.pop %v1758
      %v1760 = vmul.f32 %v1734, 1.442695
      %v1761 = vpow.pop %v1760
      %v1762 = vmul.f32 %v1735, 1.442695
      %v1763 = vpow.pop %v1762
      %v1764 = vmul.f32 %v1736, 1.442695
      %v1765 = vpow.pop %v1764
      %v1766 = vmul.f32 %v1737, 1.442695
      %v1767 = vpow.pop %v1766
      %v1768 = vmul.f32 %v1738, 1.442695
      %v1769 = vpow.pop %v1768
      %v1770 = vmul.f32 %v1739, 1.442695
      %v1771 = vpow.pop %v1770
      %1772 = vadd.xlane.f32.xlu0 %v1741
      %v1773 = vpop.xlane.xlu0 %1772
      %1774 = vadd.xlane.f32.xlu0 %v1743
      %v1775 = vpop.xlane.xlu0 %1774
      %1776 = vadd.xlane.f32.xlu0 %v1745
      %v1777 = vpop.xlane.xlu0 %1776
      %1778 = vadd.xlane.f32.xlu0 %v1747
      %v1779 = vpop.xlane.xlu0 %1778
      %1780 = vadd.xlane.f32.xlu0 %v1749
      %v1781 = vpop.xlane.xlu0 %1780
      %1782 = vadd.xlane.f32.xlu0 %v1751
      %v1783 = vpop.xlane.xlu0 %1782
      %1784 = vadd.xlane.f32.xlu0 %v1753
      %v1785 = vpop.xlane.xlu0 %1784
      %1786 = vadd.xlane.f32.xlu0 %v1755
      %v1787 = vpop.xlane.xlu0 %1786
      %1788 = vadd.xlane.f32.xlu0 %v1757
      %v1789 = vpop.xlane.xlu0 %1788
      %1790 = vadd.xlane.f32.xlu0 %v1759
      %v1791 = vpop.xlane.xlu0 %1790
      %1792 = vadd.xlane.f32.xlu0 %v1761
      %v1793 = vpop.xlane.xlu0 %1792
      %1794 = vadd.xlane.f32.xlu0 %v1763
      %v1795 = vpop.xlane.xlu0 %1794
      %1796 = vadd.xlane.f32.xlu0 %v1765
      %v1797 = vpop.xlane.xlu0 %1796
      %1798 = vadd.xlane.f32.xlu0 %v1767
      %v1799 = vpop.xlane.xlu0 %1798
      %1800 = vadd.xlane.f32.xlu0 %v1769
      %v1801 = vpop.xlane.xlu0 %1800
      %1802 = vadd.xlane.f32.xlu0 %v1771
      %v1803 = vpop.xlane.xlu0 %1802
      %v1804 = vrcp.pop %v1773
      %v1805 = vrcp.pop %v1775
      %v1806 = vrcp.pop %v1777
      %v1807 = vrcp.pop %v1779
      %v1808 = vrcp.pop %v1781
      %v1809 = vrcp.pop %v1783
      %v1810 = vrcp.pop %v1785
      %v1811 = vrcp.pop %v1787
      %v1812 = vrcp.pop %v1789
      %v1813 = vrcp.pop %v1791
      %v1814 = vrcp.pop %v1793
      %v1815 = vrcp.pop %v1795
      %v1816 = vrcp.pop %v1797
      %v1817 = vrcp.pop %v1799
      %v1818 = vrcp.pop %v1801
      %v1819 = vrcp.pop %v1803
      %v1820 = vmul.f32 %v1741, %v1804
      %v1821 = vmul.f32 %v1743, %v1805
      %v1822 = vmul.f32 %v1745, %v1806
      %v1823 = vmul.f32 %v1747, %v1807
      %v1824 = vmul.f32 %v1749, %v1808
      %v1825 = vmul.f32 %v1751, %v1809
      %v1826 = vmul.f32 %v1753, %v1810
      %v1827 = vmul.f32 %v1755, %v1811
      %v1828 = vmul.f32 %v1757, %v1812
      %v1829 = vmul.f32 %v1759, %v1813
      %v1830 = vmul.f32 %v1761, %v1814
      %v1831 = vmul.f32 %v1763, %v1815
      %v1832 = vmul.f32 %v1765, %v1816
      %v1833 = vmul.f32 %v1767, %v1817
      %v1834 = vmul.f32 %v1769, %v1818
      %v1835 = vmul.f32 %v1771, %v1819
      %v1836 = vpack.c.bf16 %v1821, %v1820
      %v1837 = vpack.c.bf16 %v1823, %v1822
      %v1838 = vpack.c.bf16 %v1825, %v1824
      %v1839 = vpack.c.bf16 %v1827, %v1826
      %v1840 = vpack.c.bf16 %v1829, %v1828
      %v1841 = vpack.c.bf16 %v1831, %v1830
      %v1842 = vpack.c.bf16 %v1833, %v1832
      %v1843 = vpack.c.bf16 %v1835, %v1834
      %v1860 = vunpack.c.l.b16 %v1555
      %v1861 = vunpack.c.l.b16 %v1556
      %v1862 = vunpack.c.l.b16 %v1557
      %v1863 = vunpack.c.l.b16 %v1558
      %v1864 = vunpack.c.l.b16 %v1559
      %v1865 = vunpack.c.l.b16 %v1560
      %v1866 = vunpack.c.l.b16 %v1561
      %v1867 = vunpack.c.l.b16 %v1562
      %v1868 = vunpack.c.l.b16 %v1563
      %v1869 = vunpack.c.l.b16 %v1564
      %v1870 = vunpack.c.l.b16 %v1565
      %v1871 = vunpack.c.l.b16 %v1566
      %v1872 = vunpack.c.l.b16 %v1567
      %v1873 = vunpack.c.l.b16 %v1568
      %v1874 = vunpack.c.l.b16 %v1569
      %v1875 = vunpack.c.l.b16 %v1570
      %v1876 = vpack.c.b16 %v1861, %v1860
      %v1877 = vpack.c.b16 %v1863, %v1862
      %v1878 = vpack.c.b16 %v1865, %v1864
      %v1879 = vpack.c.b16 %v1867, %v1866
      %v1880 = vpack.c.b16 %v1869, %v1868
      %v1881 = vpack.c.b16 %v1871, %v1870
      %v1882 = vpack.c.b16 %v1873, %v1872
      %v1883 = vpack.c.b16 %v1875, %v1874
      %1892 = vmatpush.bf16.msra.mxu0 %v1883
      %1893 = vmatpush.bf16.msra.mxu0 %v1882
      %1894 = vmatpush.bf16.msra.mxu0 %v1881
      %1895 = vmatpush.bf16.msra.mxu0 %v1880
      %1896 = vmatpush.bf16.msra.mxu0 %v1879
      %1897 = vmatpush.bf16.msra.mxu0 %v1878
      %1898 = vmatpush.bf16.msra.mxu0 %v1877
      %1899 = vmatpush.bf16.msra.mxu0 %v1876
      %1900 = vmatmul.bf16.gmra.mxu0 %v1836
      %v1901 = vpop.f32.mrf.mxu0
      %v1902 = vadd.f32 0.0, %v1901
      %v1903 = vpop.f32.mrf.mxu0
      %v1904 = vadd.f32 0.0, %v1903
      %1905 = vmatmul.bf16.gmra.mxu0 %v1837
      %v1906 = vpop.f32.mrf.mxu0
      %v1907 = vadd.f32 0.0, %v1906
      %v1908 = vpop.f32.mrf.mxu0
      %v1909 = vadd.f32 0.0, %v1908
      %1910 = vmatmul.bf16.gmra.mxu0 %v1838
      %v1911 = vpop.f32.mrf.mxu0
      %v1912 = vadd.f32 0.0, %v1911
      %v1913 = vpop.f32.mrf.mxu0
      %v1914 = vadd.f32 0.0, %v1913
      %1915 = vmatmul.bf16.gmra.mxu0 %v1839
      %v1916 = vpop.f32.mrf.mxu0
      %v1917 = vadd.f32 0.0, %v1916
      %v1918 = vpop.f32.mrf.mxu0
      %v1919 = vadd.f32 0.0, %v1918
      %1920 = vmatmul.bf16.gmra.mxu0 %v1840
      %v1921 = vpop.f32.mrf.mxu0
      %v1922 = vadd.f32 0.0, %v1921
      %v1923 = vpop.f32.mrf.mxu0
      %v1924 = vadd.f32 0.0, %v1923
      %1925 = vmatmul.bf16.gmra.mxu0 %v1841
      %v1926 = vpop.f32.mrf.mxu0
      %v1927 = vadd.f32 0.0, %v1926
      %v1928 = vpop.f32.mrf.mxu0
      %v1929 = vadd.f32 0.0, %v1928
      %1930 = vmatmul.bf16.gmra.mxu0 %v1842
      %v1931 = vpop.f32.mrf.mxu0
      %v1932 = vadd.f32 0.0, %v1931
      %v1933 = vpop.f32.mrf.mxu0
      %v1934 = vadd.f32 0.0, %v1933
      %1935 = vmatmul.bf16.gmra.mxu0 %v1843
      %v1936 = vpop.f32.mrf.mxu0
      %v1937 = vadd.f32 0.0, %v1936
      %v1938 = vpop.f32.mrf.mxu0
      %v1939 = vadd.f32 0.0, %v1938
      %1940 = vdwg.mxu0
      %v1941 = vpack.c.bf16 %v1904, %v1902
      %v1942 = vpack.c.bf16 %v1909, %v1907
      %v1943 = vpack.c.bf16 %v1914, %v1912
      %v1944 = vpack.c.bf16 %v1919, %v1917
      %v1945 = vpack.c.bf16 %v1924, %v1922
      %v1946 = vpack.c.bf16 %v1929, %v1927
      %v1947 = vpack.c.bf16 %v1934, %v1932
      %v1948 = vpack.c.bf16 %v1939, %v1937
      %1949 = vrot.lane.b32.xlu0 %v1606, 120
      %v1950 = vpop.permute.xlu0 %1949
      %1951 = vrot.lane.b32.xlu0 %v1607, 120
      %v1952 = vpop.permute.xlu0 %1951
      %1953 = vrot.lane.b32.xlu0 %v1608, 120
      %v1954 = vpop.permute.xlu0 %1953
      %1955 = vrot.lane.b32.xlu0 %v1609, 120
      %v1956 = vpop.permute.xlu0 %1955
      %1957 = vrot.lane.b32.xlu0 %v1610, 120
      %v1958 = vpop.permute.xlu0 %1957
      %1959 = vrot.lane.b32.xlu0 %v1611, 120
      %v1960 = vpop.permute.xlu0 %1959
      %1961 = vrot.lane.b32.xlu0 %v1612, 120
      %v1962 = vpop.permute.xlu0 %1961
      %1963 = vrot.lane.b32.xlu0 %v1613, 120
      %v1964 = vpop.permute.xlu0 %1963
      %v1966 = vsel %vm1614, %v1950, 0
      %v1969 = vsel %vm1614, %v1952, 0
      %v1972 = vsel %vm1614, %v1954, 0
      %v1975 = vsel %vm1614, %v1956, 0
      %v1978 = vsel %vm1614, %v1958, 0
      %v1981 = vsel %vm1614, %v1960, 0
      %v1984 = vsel %vm1614, %v1962, 0
      %v1987 = vsel %vm1614, %v1964, 0
      %v1990 = vsel %vm1639, %v1552, 0
      %1992 = vmatpush.bf16.msra.mxu0 0
      %1993 = vmatpush.bf16.msra.mxu0 0
      %1994 = vmatpush.bf16.msra.mxu0 0
      %1995 = vmatpush.bf16.msra.mxu0 0
      %1996 = vmatpush.bf16.msra.mxu0 0
      %1997 = vmatpush.bf16.msra.mxu0 0
      %1998 = vmatpush.bf16.msra.mxu0 0
      %1999 = vmatpush.bf16.msra.mxu0 %v1990
      %2000 = vmatmul.bf16.gmra.mxu0 %v1966
      %v2001 = vpop.f32.mrf.mxu0
      %v2002 = vadd.f32 %v1572, %v2001
      %v2003 = vpop.f32.mrf.mxu0
      %v2004 = vadd.f32 %v1572, %v2003
      %2005 = vmatmul.bf16.gmra.mxu0 %v1969
      %v2006 = vpop.f32.mrf.mxu0
      %v2007 = vadd.f32 %v1572, %v2006
      %v2008 = vpop.f32.mrf.mxu0
      %v2009 = vadd.f32 %v1572, %v2008
      %2010 = vmatmul.bf16.gmra.mxu0 %v1972
      %v2011 = vpop.f32.mrf.mxu0
      %v2012 = vadd.f32 %v1572, %v2011
      %v2013 = vpop.f32.mrf.mxu0
      %v2014 = vadd.f32 %v1572, %v2013
      %2015 = vmatmul.bf16.gmra.mxu0 %v1975
      %v2016 = vpop.f32.mrf.mxu0
      %v2017 = vadd.f32 %v1572, %v2016
      %v2018 = vpop.f32.mrf.mxu0
      %v2019 = vadd.f32 %v1572, %v2018
      %2020 = vmatmul.bf16.gmra.mxu0 %v1978
      %v2021 = vpop.f32.mrf.mxu0
      %v2022 = vadd.f32 %v1572, %v2021
      %v2023 = vpop.f32.mrf.mxu0
      %v2024 = vadd.f32 %v1572, %v2023
      %2025 = vmatmul.bf16.gmra.mxu0 %v1981
      %v2026 = vpop.f32.mrf.mxu0
      %v2027 = vadd.f32 %v1572, %v2026
      %v2028 = vpop.f32.mrf.mxu0
      %v2029 = vadd.f32 %v1572, %v2028
      %2030 = vmatmul.bf16.gmra.mxu0 %v1984
      %v2031 = vpop.f32.mrf.mxu0
      %v2032 = vadd.f32 %v1572, %v2031
      %v2033 = vpop.f32.mrf.mxu0
      %v2034 = vadd.f32 %v1572, %v2033
      %2035 = vmatmul.bf16.gmra.mxu0 %v1987
      %v2036 = vpop.f32.mrf.mxu0
      %v2037 = vadd.f32 %v1572, %v2036
      %v2038 = vpop.f32.mrf.mxu0
      %v2039 = vadd.f32 %v1572, %v2038
      %2040 = vdwg.mxu0
      %2041 = vmax.xlane.f32.xlu0 %v2002
      %v2042 = vpop.xlane.xlu0 %2041
      %2043 = vmax.xlane.f32.xlu0 %v2004
      %v2044 = vpop.xlane.xlu0 %2043
      %2045 = vmax.xlane.f32.xlu0 %v2007
      %v2046 = vpop.xlane.xlu0 %2045
      %2047 = vmax.xlane.f32.xlu0 %v2009
      %v2048 = vpop.xlane.xlu0 %2047
      %2049 = vmax.xlane.f32.xlu0 %v2012
      %v2050 = vpop.xlane.xlu0 %2049
      %2051 = vmax.xlane.f32.xlu0 %v2014
      %v2052 = vpop.xlane.xlu0 %2051
      %2053 = vmax.xlane.f32.xlu0 %v2017
      %v2054 = vpop.xlane.xlu0 %2053
      %2055 = vmax.xlane.f32.xlu0 %v2019
      %v2056 = vpop.xlane.xlu0 %2055
      %2057 = vmax.xlane.f32.xlu0 %v2022
      %v2058 = vpop.xlane.xlu0 %2057
      %2059 = vmax.xlane.f32.xlu0 %v2024
      %v2060 = vpop.xlane.xlu0 %2059
      %2061 = vmax.xlane.f32.xlu0 %v2027
      %v2062 = vpop.xlane.xlu0 %2061
      %2063 = vmax.xlane.f32.xlu0 %v2029
      %v2064 = vpop.xlane.xlu0 %2063
      %2065 = vmax.xlane.f32.xlu0 %v2032
      %v2066 = vpop.xlane.xlu0 %2065
      %2067 = vmax.xlane.f32.xlu0 %v2034
      %v2068 = vpop.xlane.xlu0 %2067
      %2069 = vmax.xlane.f32.xlu0 %v2037
      %v2070 = vpop.xlane.xlu0 %2069
      %2071 = vmax.xlane.f32.xlu0 %v2039
      %v2072 = vpop.xlane.xlu0 %2071
      %v2073 = vsub.f32 %v2002, %v2042
      %v2074 = vsub.f32 %v2004, %v2044
      %v2075 = vsub.f32 %v2007, %v2046
      %v2076 = vsub.f32 %v2009, %v2048
      %v2077 = vsub.f32 %v2012, %v2050
      %v2078 = vsub.f32 %v2014, %v2052
      %v2079 = vsub.f32 %v2017, %v2054
      %v2080 = vsub.f32 %v2019, %v2056
      %v2081 = vsub.f32 %v2022, %v2058
      %v2082 = vsub.f32 %v2024, %v2060
      %v2083 = vsub.f32 %v2027, %v2062
      %v2084 = vsub.f32 %v2029, %v2064
      %v2085 = vsub.f32 %v2032, %v2066
      %v2086 = vsub.f32 %v2034, %v2068
      %v2087 = vsub.f32 %v2037, %v2070
      %v2088 = vsub.f32 %v2039, %v2072
      %v2089 = vmul.f32 %v2073, 1.442695
      %v2090 = vpow.pop %v2089
      %v2091 = vmul.f32 %v2074, 1.442695
      %v2092 = vpow.pop %v2091
      %v2093 = vmul.f32 %v2075, 1.442695
      %v2094 = vpow.pop %v2093
      %v2095 = vmul.f32 %v2076, 1.442695
      %v2096 = vpow.pop %v2095
      %v2097 = vmul.f32 %v2077, 1.442695
      %v2098 = vpow.pop %v2097
      %v2099 = vmul.f32 %v2078, 1.442695
      %v2100 = vpow.pop %v2099
      %v2101 = vmul.f32 %v2079, 1.442695
      %v2102 = vpow.pop %v2101
      %v2103 = vmul.f32 %v2080, 1.442695
      %v2104 = vpow.pop %v2103
      %v2105 = vmul.f32 %v2081, 1.442695
      %v2106 = vpow.pop %v2105
      %v2107 = vmul.f32 %v2082, 1.442695
      %v2108 = vpow.pop %v2107
      %v2109 = vmul.f32 %v2083, 1.442695
      %v2110 = vpow.pop %v2109
      %v2111 = vmul.f32 %v2084, 1.442695
      %v2112 = vpow.pop %v2111
      %v2113 = vmul.f32 %v2085, 1.442695
      %v2114 = vpow.pop %v2113
      %v2115 = vmul.f32 %v2086, 1.442695
      %v2116 = vpow.pop %v2115
      %v2117 = vmul.f32 %v2087, 1.442695
      %v2118 = vpow.pop %v2117
      %v2119 = vmul.f32 %v2088, 1.442695
      %v2120 = vpow.pop %v2119
      %2121 = vadd.xlane.f32.xlu0 %v2090
      %v2122 = vpop.xlane.xlu0 %2121
      %2123 = vadd.xlane.f32.xlu0 %v2092
      %v2124 = vpop.xlane.xlu0 %2123
      %2125 = vadd.xlane.f32.xlu0 %v2094
      %v2126 = vpop.xlane.xlu0 %2125
      %2127 = vadd.xlane.f32.xlu0 %v2096
      %v2128 = vpop.xlane.xlu0 %2127
      %2129 = vadd.xlane.f32.xlu0 %v2098
      %v2130 = vpop.xlane.xlu0 %2129
      %2131 = vadd.xlane.f32.xlu0 %v2100
      %v2132 = vpop.xlane.xlu0 %2131
      %2133 = vadd.xlane.f32.xlu0 %v2102
      %v2134 = vpop.xlane.xlu0 %2133
      %2135 = vadd.xlane.f32.xlu0 %v2104
      %v2136 = vpop.xlane.xlu0 %2135
      %2137 = vadd.xlane.f32.xlu0 %v2106
      %v2138 = vpop.xlane.xlu0 %2137
      %2139 = vadd.xlane.f32.xlu0 %v2108
      %v2140 = vpop.xlane.xlu0 %2139
      %2141 = vadd.xlane.f32.xlu0 %v2110
      %v2142 = vpop.xlane.xlu0 %2141
      %2143 = vadd.xlane.f32.xlu0 %v2112
      %v2144 = vpop.xlane.xlu0 %2143
      %2145 = vadd.xlane.f32.xlu0 %v2114
      %v2146 = vpop.xlane.xlu0 %2145
      %2147 = vadd.xlane.f32.xlu0 %v2116
      %v2148 = vpop.xlane.xlu0 %2147
      %2149 = vadd.xlane.f32.xlu0 %v2118
      %v2150 = vpop.xlane.xlu0 %2149
      %2151 = vadd.xlane.f32.xlu0 %v2120
      %v2152 = vpop.xlane.xlu0 %2151
      %v2153 = vrcp.pop %v2122
      %v2154 = vrcp.pop %v2124
      %v2155 = vrcp.pop %v2126
      %v2156 = vrcp.pop %v2128
      %v2157 = vrcp.pop %v2130
      %v2158 = vrcp.pop %v2132
      %v2159 = vrcp.pop %v2134
      %v2160 = vrcp.pop %v2136
      %v2161 = vrcp.pop %v2138
      %v2162 = vrcp.pop %v2140
      %v2163 = vrcp.pop %v2142
      %v2164 = vrcp.pop %v2144
      %v2165 = vrcp.pop %v2146
      %v2166 = vrcp.pop %v2148
      %v2167 = vrcp.pop %v2150
      %v2168 = vrcp.pop %v2152
      %v2169 = vmul.f32 %v2090, %v2153
      %v2170 = vmul.f32 %v2092, %v2154
      %v2171 = vmul.f32 %v2094, %v2155
      %v2172 = vmul.f32 %v2096, %v2156
      %v2173 = vmul.f32 %v2098, %v2157
      %v2174 = vmul.f32 %v2100, %v2158
      %v2175 = vmul.f32 %v2102, %v2159
      %v2176 = vmul.f32 %v2104, %v2160
      %v2177 = vmul.f32 %v2106, %v2161
      %v2178 = vmul.f32 %v2108, %v2162
      %v2179 = vmul.f32 %v2110, %v2163
      %v2180 = vmul.f32 %v2112, %v2164
      %v2181 = vmul.f32 %v2114, %v2165
      %v2182 = vmul.f32 %v2116, %v2166
      %v2183 = vmul.f32 %v2118, %v2167
      %v2184 = vmul.f32 %v2120, %v2168
      %v2185 = vpack.c.bf16 %v2170, %v2169
      %v2186 = vpack.c.bf16 %v2172, %v2171
      %v2187 = vpack.c.bf16 %v2174, %v2173
      %v2188 = vpack.c.bf16 %v2176, %v2175
      %v2189 = vpack.c.bf16 %v2178, %v2177
      %v2190 = vpack.c.bf16 %v2180, %v2179
      %v2191 = vpack.c.bf16 %v2182, %v2181
      %v2192 = vpack.c.bf16 %v2184, %v2183
      %2193 = vrot.lane.b32.xlu0 %v1876, 120
      %v2194 = vpop.permute.xlu0 %2193
      %2195 = vrot.lane.b32.xlu0 %v1877, 120
      %v2196 = vpop.permute.xlu0 %2195
      %2197 = vrot.lane.b32.xlu0 %v1878, 120
      %v2198 = vpop.permute.xlu0 %2197
      %2199 = vrot.lane.b32.xlu0 %v1879, 120
      %v2200 = vpop.permute.xlu0 %2199
      %2201 = vrot.lane.b32.xlu0 %v1880, 120
      %v2202 = vpop.permute.xlu0 %2201
      %2203 = vrot.lane.b32.xlu0 %v1881, 120
      %v2204 = vpop.permute.xlu0 %2203
      %2205 = vrot.lane.b32.xlu0 %v1882, 120
      %v2206 = vpop.permute.xlu0 %2205
      %2207 = vrot.lane.b32.xlu0 %v1883, 120
      %v2208 = vpop.permute.xlu0 %2207
      %2217 = vmatpush.bf16.msra.mxu0 %v2208
      %2218 = vmatpush.bf16.msra.mxu0 %v2206
      %2219 = vmatpush.bf16.msra.mxu0 %v2204
      %2220 = vmatpush.bf16.msra.mxu0 %v2202
      %2221 = vmatpush.bf16.msra.mxu0 %v2200
      %2222 = vmatpush.bf16.msra.mxu0 %v2198
      %2223 = vmatpush.bf16.msra.mxu0 %v2196
      %2224 = vmatpush.bf16.msra.mxu0 %v2194
      %2225 = vmatmul.bf16.gmra.mxu0 %v2185
      %v2226 = vpop.f32.mrf.mxu0
      %v2227 = vadd.f32 0.0, %v2226
      %v2228 = vpop.f32.mrf.mxu0
      %v2229 = vadd.f32 0.0, %v2228
      %2230 = vmatmul.bf16.gmra.mxu0 %v2186
      %v2231 = vpop.f32.mrf.mxu0
      %v2232 = vadd.f32 0.0, %v2231
      %v2233 = vpop.f32.mrf.mxu0
      %v2234 = vadd.f32 0.0, %v2233
      %2235 = vmatmul.bf16.gmra.mxu0 %v2187
      %v2236 = vpop.f32.mrf.mxu0
      %v2237 = vadd.f32 0.0, %v2236
      %v2238 = vpop.f32.mrf.mxu0
      %v2239 = vadd.f32 0.0, %v2238
      %2240 = vmatmul.bf16.gmra.mxu0 %v2188
      %v2241 = vpop.f32.mrf.mxu0
      %v2242 = vadd.f32 0.0, %v2241
      %v2243 = vpop.f32.mrf.mxu0
      %v2244 = vadd.f32 0.0, %v2243
      %2245 = vmatmul.bf16.gmra.mxu0 %v2189
      %v2246 = vpop.f32.mrf.mxu0
      %v2247 = vadd.f32 0.0, %v2246
      %v2248 = vpop.f32.mrf.mxu0
      %v2249 = vadd.f32 0.0, %v2248
      %2250 = vmatmul.bf16.gmra.mxu0 %v2190
      %v2251 = vpop.f32.mrf.mxu0
      %v2252 = vadd.f32 0.0, %v2251
      %v2253 = vpop.f32.mrf.mxu0
      %v2254 = vadd.f32 0.0, %v2253
      %2255 = vmatmul.bf16.gmra.mxu0 %v2191
      %v2256 = vpop.f32.mrf.mxu0
      %v2257 = vadd.f32 0.0, %v2256
      %v2258 = vpop.f32.mrf.mxu0
      %v2259 = vadd.f32 0.0, %v2258
      %2260 = vmatmul.bf16.gmra.mxu0 %v2192
      %v2261 = vpop.f32.mrf.mxu0
      %v2262 = vadd.f32 0.0, %v2261
      %v2263 = vpop.f32.mrf.mxu0
      %v2264 = vadd.f32 0.0, %v2263
      %2265 = vdwg.mxu0
      %v2266 = vpack.c.bf16 %v2229, %v2227
      %v2267 = vpack.c.bf16 %v2234, %v2232
      %v2268 = vpack.c.bf16 %v2239, %v2237
      %v2269 = vpack.c.bf16 %v2244, %v2242
      %v2270 = vpack.c.bf16 %v2249, %v2247
      %v2271 = vpack.c.bf16 %v2254, %v2252
      %v2272 = vpack.c.bf16 %v2259, %v2257
      %v2273 = vpack.c.bf16 %v2264, %v2262
      %v2275 = vsel %vm1614, %v2266, 0
      %v2278 = vsel %vm1614, %v2267, 0
      %v2281 = vsel %vm1614, %v2268, 0
      %v2284 = vsel %vm1614, %v2269, 0
      %v2287 = vsel %vm1614, %v2270, 0
      %v2290 = vsel %vm1614, %v2271, 0
      %v2293 = vsel %vm1614, %v2272, 0
      %v2296 = vsel %vm1614, %v2273, 0
      %v2299 = vsel %vm1639, %v1175, 0
      %2301 = vmatpush.bf16.msra.mxu0 0
      %2302 = vmatpush.bf16.msra.mxu0 0
      %2303 = vmatpush.bf16.msra.mxu0 0
      %2304 = vmatpush.bf16.msra.mxu0 0
      %2305 = vmatpush.bf16.msra.mxu0 0
      %2306 = vmatpush.bf16.msra.mxu0 0
      %2307 = vmatpush.bf16.msra.mxu0 0
      %2308 = vmatpush.bf16.msra.mxu0 %v2299
      %2309 = vmatmul.bf16.gmra.mxu0 %v2275
      %v2310 = vpop.f32.mrf.mxu0
      %v2311 = vadd.f32 0.0, %v2310
      %v2312 = vpop.f32.mrf.mxu0
      %v2313 = vadd.f32 0.0, %v2312
      %2314 = vmatmul.bf16.gmra.mxu0 %v2278
      %v2315 = vpop.f32.mrf.mxu0
      %v2316 = vadd.f32 0.0, %v2315
      %v2317 = vpop.f32.mrf.mxu0
      %v2318 = vadd.f32 0.0, %v2317
      %2319 = vmatmul.bf16.gmra.mxu0 %v2281
      %v2320 = vpop.f32.mrf.mxu0
      %v2321 = vadd.f32 0.0, %v2320
      %v2322 = vpop.f32.mrf.mxu0
      %v2323 = vadd.f32 0.0, %v2322
      %2324 = vmatmul.bf16.gmra.mxu0 %v2284
      %v2325 = vpop.f32.mrf.mxu0
      %v2326 = vadd.f32 0.0, %v2325
      %v2327 = vpop.f32.mrf.mxu0
      %v2328 = vadd.f32 0.0, %v2327
      %2329 = vmatmul.bf16.gmra.mxu0 %v2287
      %v2330 = vpop.f32.mrf.mxu0
      %v2331 = vadd.f32 0.0, %v2330
      %v2332 = vpop.f32.mrf.mxu0
      %v2333 = vadd.f32 0.0, %v2332
      %2334 = vmatmul.bf16.gmra.mxu0 %v2290
      %v2335 = vpop.f32.mrf.mxu0
      %v2336 = vadd.f32 0.0, %v2335
      %v2337 = vpop.f32.mrf.mxu0
      %v2338 = vadd.f32 0.0, %v2337
      %2339 = vmatmul.bf16.gmra.mxu0 %v2293
      %v2340 = vpop.f32.mrf.mxu0
      %v2341 = vadd.f32 0.0, %v2340
      %v2342 = vpop.f32.mrf.mxu0
      %v2343 = vadd.f32 0.0, %v2342
      %2344 = vmatmul.bf16.gmra.mxu0 %v2296
      %v2345 = vpop.f32.mrf.mxu0
      %v2346 = vadd.f32 0.0, %v2345
      %v2347 = vpop.f32.mrf.mxu0
      %v2348 = vadd.f32 0.0, %v2347
      %2349 = vdwg.mxu0
      %v2351 = vsel %vm1614, %v1941, 0
      %v2354 = vsel %vm1614, %v1942, 0
      %v2357 = vsel %vm1614, %v1943, 0
      %v2360 = vsel %vm1614, %v1944, 0
      %v2363 = vsel %vm1614, %v1945, 0
      %v2366 = vsel %vm1614, %v1946, 0
      %v2369 = vsel %vm1614, %v1947, 0
      %v2372 = vsel %vm1614, %v1948, 0
      %v2375 = vsel %vm1639, %v1174, 0
      %2377 = vmatpush.bf16.msra.mxu0 0
      %2378 = vmatpush.bf16.msra.mxu0 0
      %2379 = vmatpush.bf16.msra.mxu0 0
      %2380 = vmatpush.bf16.msra.mxu0 0
      %2381 = vmatpush.bf16.msra.mxu0 0
      %2382 = vmatpush.bf16.msra.mxu0 0
      %2383 = vmatpush.bf16.msra.mxu0 0
      %2384 = vmatpush.bf16.msra.mxu0 %v2375
      %2385 = vmatmul.bf16.gmra.mxu0 %v2351
      %v2386 = vpop.f32.mrf.mxu0
      %v2387 = vadd.f32 %v2311, %v2386
      %v2388 = vpop.f32.mrf.mxu0
      %v2389 = vadd.f32 %v2313, %v2388
      %2390 = vmatmul.bf16.gmra.mxu0 %v2354
      %v2391 = vpop.f32.mrf.mxu0
      %v2392 = vadd.f32 %v2316, %v2391
      %v2393 = vpop.f32.mrf.mxu0
      %v2394 = vadd.f32 %v2318, %v2393
      %2395 = vmatmul.bf16.gmra.mxu0 %v2357
      %v2396 = vpop.f32.mrf.mxu0
      %v2397 = vadd.f32 %v2321, %v2396
      %v2398 = vpop.f32.mrf.mxu0
      %v2399 = vadd.f32 %v2323, %v2398
      %2400 = vmatmul.bf16.gmra.mxu0 %v2360
      %v2401 = vpop.f32.mrf.mxu0
      %v2402 = vadd.f32 %v2326, %v2401
      %v2403 = vpop.f32.mrf.mxu0
      %v2404 = vadd.f32 %v2328, %v2403
      %2405 = vmatmul.bf16.gmra.mxu0 %v2363
      %v2406 = vpop.f32.mrf.mxu0
      %v2407 = vadd.f32 %v2331, %v2406
      %v2408 = vpop.f32.mrf.mxu0
      %v2409 = vadd.f32 %v2333, %v2408
      %2410 = vmatmul.bf16.gmra.mxu0 %v2366
      %v2411 = vpop.f32.mrf.mxu0
      %v2412 = vadd.f32 %v2336, %v2411
      %v2413 = vpop.f32.mrf.mxu0
      %v2414 = vadd.f32 %v2338, %v2413
      %2415 = vmatmul.bf16.gmra.mxu0 %v2369
      %v2416 = vpop.f32.mrf.mxu0
      %v2417 = vadd.f32 %v2341, %v2416
      %v2418 = vpop.f32.mrf.mxu0
      %v2419 = vadd.f32 %v2343, %v2418
      %2420 = vmatmul.bf16.gmra.mxu0 %v2372
      %v2421 = vpop.f32.mrf.mxu0
      %v2422 = vadd.f32 %v2346, %v2421
      %v2423 = vpop.f32.mrf.mxu0
      %v2424 = vadd.f32 %v2348, %v2423
      %2425 = vdwg.mxu0
      %2426 = vrot.lane.b32.xlu0 %v1606, 112
      %v2427 = vpop.permute.xlu0 %2426
      %2428 = vrot.lane.b32.xlu0 %v1607, 112
      %v2429 = vpop.permute.xlu0 %2428
      %2430 = vrot.lane.b32.xlu0 %v1608, 112
      %v2431 = vpop.permute.xlu0 %2430
      %2432 = vrot.lane.b32.xlu0 %v1609, 112
      %v2433 = vpop.permute.xlu0 %2432
      %2434 = vrot.lane.b32.xlu0 %v1610, 112
      %v2435 = vpop.permute.xlu0 %2434
      %2436 = vrot.lane.b32.xlu0 %v1611, 112
      %v2437 = vpop.permute.xlu0 %2436
      %2438 = vrot.lane.b32.xlu0 %v1612, 112
      %v2439 = vpop.permute.xlu0 %2438
      %2440 = vrot.lane.b32.xlu0 %v1613, 112
      %v2441 = vpop.permute.xlu0 %2440
      %v2443 = vsel %vm1614, %v2427, 0
      %v2446 = vsel %vm1614, %v2429, 0
      %v2449 = vsel %vm1614, %v2431, 0
      %v2452 = vsel %vm1614, %v2433, 0
      %v2455 = vsel %vm1614, %v2435, 0
      %v2458 = vsel %vm1614, %v2437, 0
      %v2461 = vsel %vm1614, %v2439, 0
      %v2464 = vsel %vm1614, %v2441, 0
      %v2467 = vsel %vm1639, %v1553, 0
      %2469 = vmatpush.bf16.msra.mxu0 0
      %2470 = vmatpush.bf16.msra.mxu0 0
      %2471 = vmatpush.bf16.msra.mxu0 0
      %2472 = vmatpush.bf16.msra.mxu0 0
      %2473 = vmatpush.bf16.msra.mxu0 0
      %2474 = vmatpush.bf16.msra.mxu0 0
      %2475 = vmatpush.bf16.msra.mxu0 0
      %2476 = vmatpush.bf16.msra.mxu0 %v2467
      %2477 = vmatmul.bf16.gmra.mxu0 %v2443
      %v2478 = vpop.f32.mrf.mxu0
      %v2479 = vadd.f32 %v1572, %v2478
      %v2480 = vpop.f32.mrf.mxu0
      %v2481 = vadd.f32 %v1572, %v2480
      %2482 = vmatmul.bf16.gmra.mxu0 %v2446
      %v2483 = vpop.f32.mrf.mxu0
      %v2484 = vadd.f32 %v1572, %v2483
      %v2485 = vpop.f32.mrf.mxu0
      %v2486 = vadd.f32 %v1572, %v2485
      %2487 = vmatmul.bf16.gmra.mxu0 %v2449
      %v2488 = vpop.f32.mrf.mxu0
      %v2489 = vadd.f32 %v1572, %v2488
      %v2490 = vpop.f32.mrf.mxu0
      %v2491 = vadd.f32 %v1572, %v2490
      %2492 = vmatmul.bf16.gmra.mxu0 %v2452
      %v2493 = vpop.f32.mrf.mxu0
      %v2494 = vadd.f32 %v1572, %v2493
      %v2495 = vpop.f32.mrf.mxu0
      %v2496 = vadd.f32 %v1572, %v2495
      %2497 = vmatmul.bf16.gmra.mxu0 %v2455
      %v2498 = vpop.f32.mrf.mxu0
      %v2499 = vadd.f32 %v1572, %v2498
      %v2500 = vpop.f32.mrf.mxu0
      %v2501 = vadd.f32 %v1572, %v2500
      %2502 = vmatmul.bf16.gmra.mxu0 %v2458
      %v2503 = vpop.f32.mrf.mxu0
      %v2504 = vadd.f32 %v1572, %v2503
      %v2505 = vpop.f32.mrf.mxu0
      %v2506 = vadd.f32 %v1572, %v2505
      %2507 = vmatmul.bf16.gmra.mxu0 %v2461
      %v2508 = vpop.f32.mrf.mxu0
      %v2509 = vadd.f32 %v1572, %v2508
      %v2510 = vpop.f32.mrf.mxu0
      %v2511 = vadd.f32 %v1572, %v2510
      %2512 = vmatmul.bf16.gmra.mxu0 %v2464
      %v2513 = vpop.f32.mrf.mxu0
      %v2514 = vadd.f32 %v1572, %v2513
      %v2515 = vpop.f32.mrf.mxu0
      %v2516 = vadd.f32 %v1572, %v2515
      %2517 = vdwg.mxu0
      %2518 = vmax.xlane.f32.xlu0 %v2479
      %v2519 = vpop.xlane.xlu0 %2518
      %2520 = vmax.xlane.f32.xlu0 %v2481
      %v2521 = vpop.xlane.xlu0 %2520
      %2522 = vmax.xlane.f32.xlu0 %v2484
      %v2523 = vpop.xlane.xlu0 %2522
      %2524 = vmax.xlane.f32.xlu0 %v2486
      %v2525 = vpop.xlane.xlu0 %2524
      %2526 = vmax.xlane.f32.xlu0 %v2489
      %v2527 = vpop.xlane.xlu0 %2526
      %2528 = vmax.xlane.f32.xlu0 %v2491
      %v2529 = vpop.xlane.xlu0 %2528
      %2530 = vmax.xlane.f32.xlu0 %v2494
      %v2531 = vpop.xlane.xlu0 %2530
      %2532 = vmax.xlane.f32.xlu0 %v2496
      %v2533 = vpop.xlane.xlu0 %2532
      %2534 = vmax.xlane.f32.xlu0 %v2499
      %v2535 = vpop.xlane.xlu0 %2534
      %2536 = vmax.xlane.f32.xlu0 %v2501
      %v2537 = vpop.xlane.xlu0 %2536
      %2538 = vmax.xlane.f32.xlu0 %v2504
      %v2539 = vpop.xlane.xlu0 %2538
      %2540 = vmax.xlane.f32.xlu0 %v2506
      %v2541 = vpop.xlane.xlu0 %2540
      %2542 = vmax.xlane.f32.xlu0 %v2509
      %v2543 = vpop.xlane.xlu0 %2542
      %2544 = vmax.xlane.f32.xlu0 %v2511
      %v2545 = vpop.xlane.xlu0 %2544
      %2546 = vmax.xlane.f32.xlu0 %v2514
      %v2547 = vpop.xlane.xlu0 %2546
      %2548 = vmax.xlane.f32.xlu0 %v2516
      %v2549 = vpop.xlane.xlu0 %2548
      %v2550 = vsub.f32 %v2479, %v2519
      %v2551 = vsub.f32 %v2481, %v2521
      %v2552 = vsub.f32 %v2484, %v2523
      %v2553 = vsub.f32 %v2486, %v2525
      %v2554 = vsub.f32 %v2489, %v2527
      %v2555 = vsub.f32 %v2491, %v2529
      %v2556 = vsub.f32 %v2494, %v2531
      %v2557 = vsub.f32 %v2496, %v2533
      %v2558 = vsub.f32 %v2499, %v2535
      %v2559 = vsub.f32 %v2501, %v2537
      %v2560 = vsub.f32 %v2504, %v2539
      %v2561 = vsub.f32 %v2506, %v2541
      %v2562 = vsub.f32 %v2509, %v2543
      %v2563 = vsub.f32 %v2511, %v2545
      %v2564 = vsub.f32 %v2514, %v2547
      %v2565 = vsub.f32 %v2516, %v2549
      %v2566 = vmul.f32 %v2550, 1.442695
      %v2567 = vpow.pop %v2566
      %v2568 = vmul.f32 %v2551, 1.442695
      %v2569 = vpow.pop %v2568
      %v2570 = vmul.f32 %v2552, 1.442695
      %v2571 = vpow.pop %v2570
      %v2572 = vmul.f32 %v2553, 1.442695
      %v2573 = vpow.pop %v2572
      %v2574 = vmul.f32 %v2554, 1.442695
      %v2575 = vpow.pop %v2574
      %v2576 = vmul.f32 %v2555, 1.442695
      %v2577 = vpow.pop %v2576
      %v2578 = vmul.f32 %v2556, 1.442695
      %v2579 = vpow.pop %v2578
      %v2580 = vmul.f32 %v2557, 1.442695
      %v2581 = vpow.pop %v2580
      %v2582 = vmul.f32 %v2558, 1.442695
      %v2583 = vpow.pop %v2582
      %v2584 = vmul.f32 %v2559, 1.442695
      %v2585 = vpow.pop %v2584
      %v2586 = vmul.f32 %v2560, 1.442695
      %v2587 = vpow.pop %v2586
      %v2588 = vmul.f32 %v2561, 1.442695
      %v2589 = vpow.pop %v2588
      %v2590 = vmul.f32 %v2562, 1.442695
      %v2591 = vpow.pop %v2590
      %v2592 = vmul.f32 %v2563, 1.442695
      %v2593 = vpow.pop %v2592
      %v2594 = vmul.f32 %v2564, 1.442695
      %v2595 = vpow.pop %v2594
      %v2596 = vmul.f32 %v2565, 1.442695
      %v2597 = vpow.pop %v2596
      %2598 = vadd.xlane.f32.xlu0 %v2567
      %v2599 = vpop.xlane.xlu0 %2598
      %2600 = vadd.xlane.f32.xlu0 %v2569
      %v2601 = vpop.xlane.xlu0 %2600
      %2602 = vadd.xlane.f32.xlu0 %v2571
      %v2603 = vpop.xlane.xlu0 %2602
      %2604 = vadd.xlane.f32.xlu0 %v2573
      %v2605 = vpop.xlane.xlu0 %2604
      %2606 = vadd.xlane.f32.xlu0 %v2575
      %v2607 = vpop.xlane.xlu0 %2606
      %2608 = vadd.xlane.f32.xlu0 %v2577
      %v2609 = vpop.xlane.xlu0 %2608
      %2610 = vadd.xlane.f32.xlu0 %v2579
      %v2611 = vpop.xlane.xlu0 %2610
      %2612 = vadd.xlane.f32.xlu0 %v2581
      %v2613 = vpop.xlane.xlu0 %2612
      %2614 = vadd.xlane.f32.xlu0 %v2583
      %v2615 = vpop.xlane.xlu0 %2614
      %2616 = vadd.xlane.f32.xlu0 %v2585
      %v2617 = vpop.xlane.xlu0 %2616
      %2618 = vadd.xlane.f32.xlu0 %v2587
      %v2619 = vpop.xlane.xlu0 %2618
      %2620 = vadd.xlane.f32.xlu0 %v2589
      %v2621 = vpop.xlane.xlu0 %2620
      %2622 = vadd.xlane.f32.xlu0 %v2591
      %v2623 = vpop.xlane.xlu0 %2622
      %2624 = vadd.xlane.f32.xlu0 %v2593
      %v2625 = vpop.xlane.xlu0 %2624
      %2626 = vadd.xlane.f32.xlu0 %v2595
      %v2627 = vpop.xlane.xlu0 %2626
      %2628 = vadd.xlane.f32.xlu0 %v2597
      %v2629 = vpop.xlane.xlu0 %2628
      %v2630 = vrcp.pop %v2599
      %v2631 = vrcp.pop %v2601
      %v2632 = vrcp.pop %v2603
      %v2633 = vrcp.pop %v2605
      %v2634 = vrcp.pop %v2607
      %v2635 = vrcp.pop %v2609
      %v2636 = vrcp.pop %v2611
      %v2637 = vrcp.pop %v2613
      %v2638 = vrcp.pop %v2615
      %v2639 = vrcp.pop %v2617
      %v2640 = vrcp.pop %v2619
      %v2641 = vrcp.pop %v2621
      %v2642 = vrcp.pop %v2623
      %v2643 = vrcp.pop %v2625
      %v2644 = vrcp.pop %v2627
      %v2645 = vrcp.pop %v2629
      %v2646 = vmul.f32 %v2567, %v2630
      %v2647 = vmul.f32 %v2569, %v2631
      %v2648 = vmul.f32 %v2571, %v2632
      %v2649 = vmul.f32 %v2573, %v2633
      %v2650 = vmul.f32 %v2575, %v2634
      %v2651 = vmul.f32 %v2577, %v2635
      %v2652 = vmul.f32 %v2579, %v2636
      %v2653 = vmul.f32 %v2581, %v2637
      %v2654 = vmul.f32 %v2583, %v2638
      %v2655 = vmul.f32 %v2585, %v2639
      %v2656 = vmul.f32 %v2587, %v2640
      %v2657 = vmul.f32 %v2589, %v2641
      %v2658 = vmul.f32 %v2591, %v2642
      %v2659 = vmul.f32 %v2593, %v2643
      %v2660 = vmul.f32 %v2595, %v2644
      %v2661 = vmul.f32 %v2597, %v2645
      %v2662 = vpack.c.bf16 %v2647, %v2646
      %v2663 = vpack.c.bf16 %v2649, %v2648
      %v2664 = vpack.c.bf16 %v2651, %v2650
      %v2665 = vpack.c.bf16 %v2653, %v2652
      %v2666 = vpack.c.bf16 %v2655, %v2654
      %v2667 = vpack.c.bf16 %v2657, %v2656
      %v2668 = vpack.c.bf16 %v2659, %v2658
      %v2669 = vpack.c.bf16 %v2661, %v2660
      %2670 = vrot.lane.b32.xlu0 %v1876, 112
      %v2671 = vpop.permute.xlu0 %2670
      %2672 = vrot.lane.b32.xlu0 %v1877, 112
      %v2673 = vpop.permute.xlu0 %2672
      %2674 = vrot.lane.b32.xlu0 %v1878, 112
      %v2675 = vpop.permute.xlu0 %2674
      %2676 = vrot.lane.b32.xlu0 %v1879, 112
      %v2677 = vpop.permute.xlu0 %2676
      %2678 = vrot.lane.b32.xlu0 %v1880, 112
      %v2679 = vpop.permute.xlu0 %2678
      %2680 = vrot.lane.b32.xlu0 %v1881, 112
      %v2681 = vpop.permute.xlu0 %2680
      %2682 = vrot.lane.b32.xlu0 %v1882, 112
      %v2683 = vpop.permute.xlu0 %2682
      %2684 = vrot.lane.b32.xlu0 %v1883, 112
      %v2685 = vpop.permute.xlu0 %2684
      %2694 = vmatpush.bf16.msra.mxu0 %v2685
      %2695 = vmatpush.bf16.msra.mxu0 %v2683
      %2696 = vmatpush.bf16.msra.mxu0 %v2681
      %2697 = vmatpush.bf16.msra.mxu0 %v2679
      %2698 = vmatpush.bf16.msra.mxu0 %v2677
      %2699 = vmatpush.bf16.msra.mxu0 %v2675
      %2700 = vmatpush.bf16.msra.mxu0 %v2673
      %2701 = vmatpush.bf16.msra.mxu0 %v2671
      %2702 = vmatmul.bf16.gmra.mxu0 %v2662
      %v2703 = vpop.f32.mrf.mxu0
      %v2704 = vadd.f32 0.0, %v2703
      %v2705 = vpop.f32.mrf.mxu0
      %v2706 = vadd.f32 0.0, %v2705
      %2707 = vmatmul.bf16.gmra.mxu0 %v2663
      %v2708 = vpop.f32.mrf.mxu0
      %v2709 = vadd.f32 0.0, %v2708
      %v2710 = vpop.f32.mrf.mxu0
      %v2711 = vadd.f32 0.0, %v2710
      %2712 = vmatmul.bf16.gmra.mxu0 %v2664
      %v2713 = vpop.f32.mrf.mxu0
      %v2714 = vadd.f32 0.0, %v2713
      %v2715 = vpop.f32.mrf.mxu0
      %v2716 = vadd.f32 0.0, %v2715
      %2717 = vmatmul.bf16.gmra.mxu0 %v2665
      %v2718 = vpop.f32.mrf.mxu0
      %v2719 = vadd.f32 0.0, %v2718
      %v2720 = vpop.f32.mrf.mxu0
      %v2721 = vadd.f32 0.0, %v2720
      %2722 = vmatmul.bf16.gmra.mxu0 %v2666
      %v2723 = vpop.f32.mrf.mxu0
      %v2724 = vadd.f32 0.0, %v2723
      %v2725 = vpop.f32.mrf.mxu0
      %v2726 = vadd.f32 0.0, %v2725
      %2727 = vmatmul.bf16.gmra.mxu0 %v2667
      %v2728 = vpop.f32.mrf.mxu0
      %v2729 = vadd.f32 0.0, %v2728
      %v2730 = vpop.f32.mrf.mxu0
      %v2731 = vadd.f32 0.0, %v2730
      %2732 = vmatmul.bf16.gmra.mxu0 %v2668
      %v2733 = vpop.f32.mrf.mxu0
      %v2734 = vadd.f32 0.0, %v2733
      %v2735 = vpop.f32.mrf.mxu0
      %v2736 = vadd.f32 0.0, %v2735
      %2737 = vmatmul.bf16.gmra.mxu0 %v2669
      %v2738 = vpop.f32.mrf.mxu0
      %v2739 = vadd.f32 0.0, %v2738
      %v2740 = vpop.f32.mrf.mxu0
      %v2741 = vadd.f32 0.0, %v2740
      %2742 = vdwg.mxu0
      %v2743 = vpack.c.bf16 %v2706, %v2704
      %v2744 = vpack.c.bf16 %v2711, %v2709
      %v2745 = vpack.c.bf16 %v2716, %v2714
      %v2746 = vpack.c.bf16 %v2721, %v2719
      %v2747 = vpack.c.bf16 %v2726, %v2724
      %v2748 = vpack.c.bf16 %v2731, %v2729
      %v2749 = vpack.c.bf16 %v2736, %v2734
      %v2750 = vpack.c.bf16 %v2741, %v2739
      %v2752 = vsel %vm1614, %v2743, 0
      %v2755 = vsel %vm1614, %v2744, 0
      %v2758 = vsel %vm1614, %v2745, 0
      %v2761 = vsel %vm1614, %v2746, 0
      %v2764 = vsel %vm1614, %v2747, 0
      %v2767 = vsel %vm1614, %v2748, 0
      %v2770 = vsel %vm1614, %v2749, 0
      %v2773 = vsel %vm1614, %v2750, 0
      %v2776 = vsel %vm1639, %v1176, 0
      %2778 = vmatpush.bf16.msra.mxu0 0
      %2779 = vmatpush.bf16.msra.mxu0 0
      %2780 = vmatpush.bf16.msra.mxu0 0
      %2781 = vmatpush.bf16.msra.mxu0 0
      %2782 = vmatpush.bf16.msra.mxu0 0
      %2783 = vmatpush.bf16.msra.mxu0 0
      %2784 = vmatpush.bf16.msra.mxu0 0
      %2785 = vmatpush.bf16.msra.mxu0 %v2776
      %2786 = vmatmul.bf16.gmra.mxu0 %v2752
      %v2787 = vpop.f32.mrf.mxu0
      %v2788 = vadd.f32 0.0, %v2787
      %v2789 = vpop.f32.mrf.mxu0
      %v2790 = vadd.f32 0.0, %v2789
      %2791 = vmatmul.bf16.gmra.mxu0 %v2755
      %v2792 = vpop.f32.mrf.mxu0
      %v2793 = vadd.f32 0.0, %v2792
      %v2794 = vpop.f32.mrf.mxu0
      %v2795 = vadd.f32 0.0, %v2794
      %2796 = vmatmul.bf16.gmra.mxu0 %v2758
      %v2797 = vpop.f32.mrf.mxu0
      %v2798 = vadd.f32 0.0, %v2797
      %v2799 = vpop.f32.mrf.mxu0
      %v2800 = vadd.f32 0.0, %v2799
      %2801 = vmatmul.bf16.gmra.mxu0 %v2761
      %v2802 = vpop.f32.mrf.mxu0
      %v2803 = vadd.f32 0.0, %v2802
      %v2804 = vpop.f32.mrf.mxu0
      %v2805 = vadd.f32 0.0, %v2804
      %2806 = vmatmul.bf16.gmra.mxu0 %v2764
      %v2807 = vpop.f32.mrf.mxu0
      %v2808 = vadd.f32 0.0, %v2807
      %v2809 = vpop.f32.mrf.mxu0
      %v2810 = vadd.f32 0.0, %v2809
      %2811 = vmatmul.bf16.gmra.mxu0 %v2767
      %v2812 = vpop.f32.mrf.mxu0
      %v2813 = vadd.f32 0.0, %v2812
      %v2814 = vpop.f32.mrf.mxu0
      %v2815 = vadd.f32 0.0, %v2814
      %2816 = vmatmul.bf16.gmra.mxu0 %v2770
      %v2817 = vpop.f32.mrf.mxu0
      %v2818 = vadd.f32 0.0, %v2817
      %v2819 = vpop.f32.mrf.mxu0
      %v2820 = vadd.f32 0.0, %v2819
      %2821 = vmatmul.bf16.gmra.mxu0 %v2773
      %v2822 = vpop.f32.mrf.mxu0
      %v2823 = vadd.f32 0.0, %v2822
      %v2824 = vpop.f32.mrf.mxu0
      %v2825 = vadd.f32 0.0, %v2824
      %2826 = vdwg.mxu0
      %v2827 = vadd.f32 %v2387, %v2788
      %v2828 = vadd.f32 %v2389, %v2790
      %v2829 = vadd.f32 %v2392, %v2793
      %v2830 = vadd.f32 %v2394, %v2795
      %v2831 = vadd.f32 %v2397, %v2798
      %v2832 = vadd.f32 %v2399, %v2800
      %v2833 = vadd.f32 %v2402, %v2803
      %v2834 = vadd.f32 %v2404, %v2805
      %v2835 = vadd.f32 %v2407, %v2808
      %v2836 = vadd.f32 %v2409, %v2810
      %v2837 = vadd.f32 %v2412, %v2813
      %v2838 = vadd.f32 %v2414, %v2815
      %v2839 = vadd.f32 %v2417, %v2818
      %v2840 = vadd.f32 %v2419, %v2820
      %v2841 = vadd.f32 %v2422, %v2823
      %v2842 = vadd.f32 %v2424, %v2825
      %2843 = vrot.lane.b32.xlu0 %v1606, 104
      %v2844 = vpop.permute.xlu0 %2843
      %2845 = vrot.lane.b32.xlu0 %v1607, 104
      %v2846 = vpop.permute.xlu0 %2845
      %2847 = vrot.lane.b32.xlu0 %v1608, 104
      %v2848 = vpop.permute.xlu0 %2847
      %2849 = vrot.lane.b32.xlu0 %v1609, 104
      %v2850 = vpop.permute.xlu0 %2849
      %2851 = vrot.lane.b32.xlu0 %v1610, 104
      %v2852 = vpop.permute.xlu0 %2851
      %2853 = vrot.lane.b32.xlu0 %v1611, 104
      %v2854 = vpop.permute.xlu0 %2853
      %2855 = vrot.lane.b32.xlu0 %v1612, 104
      %v2856 = vpop.permute.xlu0 %2855
      %2857 = vrot.lane.b32.xlu0 %v1613, 104
      %v2858 = vpop.permute.xlu0 %2857
      %v2860 = vsel %vm1614, %v2844, 0
      %v2863 = vsel %vm1614, %v2846, 0
      %v2866 = vsel %vm1614, %v2848, 0
      %v2869 = vsel %vm1614, %v2850, 0
      %v2872 = vsel %vm1614, %v2852, 0
      %v2875 = vsel %vm1614, %v2854, 0
      %v2878 = vsel %vm1614, %v2856, 0
      %v2881 = vsel %vm1614, %v2858, 0
      %v2884 = vsel %vm1639, %v1554, 0
      %2886 = vmatpush.bf16.msra.mxu0 0
      %2887 = vmatpush.bf16.msra.mxu0 0
      %2888 = vmatpush.bf16.msra.mxu0 0
      %2889 = vmatpush.bf16.msra.mxu0 0
      %2890 = vmatpush.bf16.msra.mxu0 0
      %2891 = vmatpush.bf16.msra.mxu0 0
      %2892 = vmatpush.bf16.msra.mxu0 0
      %2893 = vmatpush.bf16.msra.mxu0 %v2884
      %2894 = vmatmul.bf16.gmra.mxu0 %v2860
      %v2895 = vpop.f32.mrf.mxu0
      %v2896 = vadd.f32 %v1572, %v2895
      %v2897 = vpop.f32.mrf.mxu0
      %v2898 = vadd.f32 %v1572, %v2897
      %2899 = vmatmul.bf16.gmra.mxu0 %v2863
      %v2900 = vpop.f32.mrf.mxu0
      %v2901 = vadd.f32 %v1572, %v2900
      %v2902 = vpop.f32.mrf.mxu0
      %v2903 = vadd.f32 %v1572, %v2902
      %2904 = vmatmul.bf16.gmra.mxu0 %v2866
      %v2905 = vpop.f32.mrf.mxu0
      %v2906 = vadd.f32 %v1572, %v2905
      %v2907 = vpop.f32.mrf.mxu0
      %v2908 = vadd.f32 %v1572, %v2907
      %2909 = vmatmul.bf16.gmra.mxu0 %v2869
      %v2910 = vpop.f32.mrf.mxu0
      %v2911 = vadd.f32 %v1572, %v2910
      %v2912 = vpop.f32.mrf.mxu0
      %v2913 = vadd.f32 %v1572, %v2912
      %2914 = vmatmul.bf16.gmra.mxu0 %v2872
      %v2915 = vpop.f32.mrf.mxu0
      %v2916 = vadd.f32 %v1572, %v2915
      %v2917 = vpop.f32.mrf.mxu0
      %v2918 = vadd.f32 %v1572, %v2917
      %2919 = vmatmul.bf16.gmra.mxu0 %v2875
      %v2920 = vpop.f32.mrf.mxu0
      %v2921 = vadd.f32 %v1572, %v2920
      %v2922 = vpop.f32.mrf.mxu0
      %v2923 = vadd.f32 %v1572, %v2922
      %2924 = vmatmul.bf16.gmra.mxu0 %v2878
      %v2925 = vpop.f32.mrf.mxu0
      %v2926 = vadd.f32 %v1572, %v2925
      %v2927 = vpop.f32.mrf.mxu0
      %v2928 = vadd.f32 %v1572, %v2927
      %2929 = vmatmul.bf16.gmra.mxu0 %v2881
      %v2930 = vpop.f32.mrf.mxu0
      %v2931 = vadd.f32 %v1572, %v2930
      %v2932 = vpop.f32.mrf.mxu0
      %v2933 = vadd.f32 %v1572, %v2932
      %2934 = vdwg.mxu0
      %2935 = vmax.xlane.f32.xlu0 %v2896
      %v2936 = vpop.xlane.xlu0 %2935
      %2937 = vmax.xlane.f32.xlu0 %v2898
      %v2938 = vpop.xlane.xlu0 %2937
      %2939 = vmax.xlane.f32.xlu0 %v2901
      %v2940 = vpop.xlane.xlu0 %2939
      %2941 = vmax.xlane.f32.xlu0 %v2903
      %v2942 = vpop.xlane.xlu0 %2941
      %2943 = vmax.xlane.f32.xlu0 %v2906
      %v2944 = vpop.xlane.xlu0 %2943
      %2945 = vmax.xlane.f32.xlu0 %v2908
      %v2946 = vpop.xlane.xlu0 %2945
      %2947 = vmax.xlane.f32.xlu0 %v2911
      %v2948 = vpop.xlane.xlu0 %2947
      %2949 = vmax.xlane.f32.xlu0 %v2913
      %v2950 = vpop.xlane.xlu0 %2949
      %2951 = vmax.xlane.f32.xlu0 %v2916
      %v2952 = vpop.xlane.xlu0 %2951
      %2953 = vmax.xlane.f32.xlu0 %v2918
      %v2954 = vpop.xlane.xlu0 %2953
      %2955 = vmax.xlane.f32.xlu0 %v2921
      %v2956 = vpop.xlane.xlu0 %2955
      %2957 = vmax.xlane.f32.xlu0 %v2923
      %v2958 = vpop.xlane.xlu0 %2957
      %2959 = vmax.xlane.f32.xlu0 %v2926
      %v2960 = vpop.xlane.xlu0 %2959
      %2961 = vmax.xlane.f32.xlu0 %v2928
      %v2962 = vpop.xlane.xlu0 %2961
      %2963 = vmax.xlane.f32.xlu0 %v2931
      %v2964 = vpop.xlane.xlu0 %2963
      %2965 = vmax.xlane.f32.xlu0 %v2933
      %v2966 = vpop.xlane.xlu0 %2965
      %v2967 = vsub.f32 %v2896, %v2936
      %v2968 = vsub.f32 %v2898, %v2938
      %v2969 = vsub.f32 %v2901, %v2940
      %v2970 = vsub.f32 %v2903, %v2942
      %v2971 = vsub.f32 %v2906, %v2944
      %v2972 = vsub.f32 %v2908, %v2946
      %v2973 = vsub.f32 %v2911, %v2948
      %v2974 = vsub.f32 %v2913, %v2950
      %v2975 = vsub.f32 %v2916, %v2952
      %v2976 = vsub.f32 %v2918, %v2954
      %v2977 = vsub.f32 %v2921, %v2956
      %v2978 = vsub.f32 %v2923, %v2958
      %v2979 = vsub.f32 %v2926, %v2960
      %v2980 = vsub.f32 %v2928, %v2962
      %v2981 = vsub.f32 %v2931, %v2964
      %v2982 = vsub.f32 %v2933, %v2966
      %v2983 = vmul.f32 %v2967, 1.442695
      %v2984 = vpow.pop %v2983
      %v2985 = vmul.f32 %v2968, 1.442695
      %v2986 = vpow.pop %v2985
      %v2987 = vmul.f32 %v2969, 1.442695
      %v2988 = vpow.pop %v2987
      %v2989 = vmul.f32 %v2970, 1.442695
      %v2990 = vpow.pop %v2989
      %v2991 = vmul.f32 %v2971, 1.442695
      %v2992 = vpow.pop %v2991
      %v2993 = vmul.f32 %v2972, 1.442695
      %v2994 = vpow.pop %v2993
      %v2995 = vmul.f32 %v2973, 1.442695
      %v2996 = vpow.pop %v2995
      %v2997 = vmul.f32 %v2974, 1.442695
      %v2998 = vpow.pop %v2997
      %v2999 = vmul.f32 %v2975, 1.442695
      %v3000 = vpow.pop %v2999
      %v3001 = vmul.f32 %v2976, 1.442695
      %v3002 = vpow.pop %v3001
      %v3003 = vmul.f32 %v2977, 1.442695
      %v3004 = vpow.pop %v3003
      %v3005 = vmul.f32 %v2978, 1.442695
      %v3006 = vpow.pop %v3005
      %v3007 = vmul.f32 %v2979, 1.442695
      %v3008 = vpow.pop %v3007
      %v3009 = vmul.f32 %v2980, 1.442695
      %v3010 = vpow.pop %v3009
      %v3011 = vmul.f32 %v2981, 1.442695
      %v3012 = vpow.pop %v3011
      %v3013 = vmul.f32 %v2982, 1.442695
      %v3014 = vpow.pop %v3013
      %3015 = vadd.xlane.f32.xlu0 %v2984
      %v3016 = vpop.xlane.xlu0 %3015
      %3017 = vadd.xlane.f32.xlu0 %v2986
      %v3018 = vpop.xlane.xlu0 %3017
      %3019 = vadd.xlane.f32.xlu0 %v2988
      %v3020 = vpop.xlane.xlu0 %3019
      %3021 = vadd.xlane.f32.xlu0 %v2990
      %v3022 = vpop.xlane.xlu0 %3021
      %3023 = vadd.xlane.f32.xlu0 %v2992
      %v3024 = vpop.xlane.xlu0 %3023
      %3025 = vadd.xlane.f32.xlu0 %v2994
      %v3026 = vpop.xlane.xlu0 %3025
      %3027 = vadd.xlane.f32.xlu0 %v2996
      %v3028 = vpop.xlane.xlu0 %3027
      %3029 = vadd.xlane.f32.xlu0 %v2998
      %v3030 = vpop.xlane.xlu0 %3029
      %3031 = vadd.xlane.f32.xlu0 %v3000
      %v3032 = vpop.xlane.xlu0 %3031
      %3033 = vadd.xlane.f32.xlu0 %v3002
      %v3034 = vpop.xlane.xlu0 %3033
      %3035 = vadd.xlane.f32.xlu0 %v3004
      %v3036 = vpop.xlane.xlu0 %3035
      %3037 = vadd.xlane.f32.xlu0 %v3006
      %v3038 = vpop.xlane.xlu0 %3037
      %3039 = vadd.xlane.f32.xlu0 %v3008
      %v3040 = vpop.xlane.xlu0 %3039
      %3041 = vadd.xlane.f32.xlu0 %v3010
      %v3042 = vpop.xlane.xlu0 %3041
      %3043 = vadd.xlane.f32.xlu0 %v3012
      %v3044 = vpop.xlane.xlu0 %3043
      %3045 = vadd.xlane.f32.xlu0 %v3014
      %v3046 = vpop.xlane.xlu0 %3045
      %v3047 = vrcp.pop %v3016
      %v3048 = vrcp.pop %v3018
      %v3049 = vrcp.pop %v3020
      %v3050 = vrcp.pop %v3022
      %v3051 = vrcp.pop %v3024
      %v3052 = vrcp.pop %v3026
      %v3053 = vrcp.pop %v3028
      %v3054 = vrcp.pop %v3030
      %v3055 = vrcp.pop %v3032
      %v3056 = vrcp.pop %v3034
      %v3057 = vrcp.pop %v3036
      %v3058 = vrcp.pop %v3038
      %v3059 = vrcp.pop %v3040
      %v3060 = vrcp.pop %v3042
      %v3061 = vrcp.pop %v3044
      %v3062 = vrcp.pop %v3046
      %v3063 = vmul.f32 %v2984, %v3047
      %v3064 = vmul.f32 %v2986, %v3048
      %v3065 = vmul.f32 %v2988, %v3049
      %v3066 = vmul.f32 %v2990, %v3050
      %v3067 = vmul.f32 %v2992, %v3051
      %v3068 = vmul.f32 %v2994, %v3052
      %v3069 = vmul.f32 %v2996, %v3053
      %v3070 = vmul.f32 %v2998, %v3054
      %v3071 = vmul.f32 %v3000, %v3055
      %v3072 = vmul.f32 %v3002, %v3056
      %v3073 = vmul.f32 %v3004, %v3057
      %v3074 = vmul.f32 %v3006, %v3058
      %v3075 = vmul.f32 %v3008, %v3059
      %v3076 = vmul.f32 %v3010, %v3060
      %v3077 = vmul.f32 %v3012, %v3061
      %v3078 = vmul.f32 %v3014, %v3062
      %v3079 = vpack.c.bf16 %v3064, %v3063
      %v3080 = vpack.c.bf16 %v3066, %v3065
      %v3081 = vpack.c.bf16 %v3068, %v3067
      %v3082 = vpack.c.bf16 %v3070, %v3069
      %v3083 = vpack.c.bf16 %v3072, %v3071
      %v3084 = vpack.c.bf16 %v3074, %v3073
      %v3085 = vpack.c.bf16 %v3076, %v3075
      %v3086 = vpack.c.bf16 %v3078, %v3077
      %3087 = vrot.lane.b32.xlu0 %v1876, 104
      %v3088 = vpop.permute.xlu0 %3087
      %3089 = vrot.lane.b32.xlu0 %v1877, 104
      %v3090 = vpop.permute.xlu0 %3089
      %3091 = vrot.lane.b32.xlu0 %v1878, 104
      %v3092 = vpop.permute.xlu0 %3091
      %3093 = vrot.lane.b32.xlu0 %v1879, 104
      %v3094 = vpop.permute.xlu0 %3093
      %3095 = vrot.lane.b32.xlu0 %v1880, 104
      %v3096 = vpop.permute.xlu0 %3095
      %3097 = vrot.lane.b32.xlu0 %v1881, 104
      %v3098 = vpop.permute.xlu0 %3097
      %3099 = vrot.lane.b32.xlu0 %v1882, 104
      %v3100 = vpop.permute.xlu0 %3099
      %3101 = vrot.lane.b32.xlu0 %v1883, 104
      %v3102 = vpop.permute.xlu0 %3101
      %3111 = vmatpush.bf16.msra.mxu0 %v3102
      %3112 = vmatpush.bf16.msra.mxu0 %v3100
      %3113 = vmatpush.bf16.msra.mxu0 %v3098
      %3114 = vmatpush.bf16.msra.mxu0 %v3096
      %3115 = vmatpush.bf16.msra.mxu0 %v3094
      %3116 = vmatpush.bf16.msra.mxu0 %v3092
      %3117 = vmatpush.bf16.msra.mxu0 %v3090
      %3118 = vmatpush.bf16.msra.mxu0 %v3088
      %3119 = vmatmul.bf16.gmra.mxu0 %v3079
      %v3120 = vpop.f32.mrf.mxu0
      %v3121 = vadd.f32 0.0, %v3120
      %v3122 = vpop.f32.mrf.mxu0
      %v3123 = vadd.f32 0.0, %v3122
      %3124 = vmatmul.bf16.gmra.mxu0 %v3080
      %v3125 = vpop.f32.mrf.mxu0
      %v3126 = vadd.f32 0.0, %v3125
      %v3127 = vpop.f32.mrf.mxu0
      %v3128 = vadd.f32 0.0, %v3127
      %3129 = vmatmul.bf16.gmra.mxu0 %v3081
      %v3130 = vpop.f32.mrf.mxu0
      %v3131 = vadd.f32 0.0, %v3130
      %v3132 = vpop.f32.mrf.mxu0
      %v3133 = vadd.f32 0.0, %v3132
      %3134 = vmatmul.bf16.gmra.mxu0 %v3082
      %v3135 = vpop.f32.mrf.mxu0
      %v3136 = vadd.f32 0.0, %v3135
      %v3137 = vpop.f32.mrf.mxu0
      %v3138 = vadd.f32 0.0, %v3137
      %3139 = vmatmul.bf16.gmra.mxu0 %v3083
      %v3140 = vpop.f32.mrf.mxu0
      %v3141 = vadd.f32 0.0, %v3140
      %v3142 = vpop.f32.mrf.mxu0
      %v3143 = vadd.f32 0.0, %v3142
      %3144 = vmatmul.bf16.gmra.mxu0 %v3084
      %v3145 = vpop.f32.mrf.mxu0
      %v3146 = vadd.f32 0.0, %v3145
      %v3147 = vpop.f32.mrf.mxu0
      %v3148 = vadd.f32 0.0, %v3147
      %3149 = vmatmul.bf16.gmra.mxu0 %v3085
      %v3150 = vpop.f32.mrf.mxu0
      %v3151 = vadd.f32 0.0, %v3150
      %v3152 = vpop.f32.mrf.mxu0
      %v3153 = vadd.f32 0.0, %v3152
      %3154 = vmatmul.bf16.gmra.mxu0 %v3086
      %v3155 = vpop.f32.mrf.mxu0
      %v3156 = vadd.f32 0.0, %v3155
      %v3157 = vpop.f32.mrf.mxu0
      %v3158 = vadd.f32 0.0, %v3157
      %3159 = vdwg.mxu0
      %v3160 = vpack.c.bf16 %v3123, %v3121
      %v3161 = vpack.c.bf16 %v3128, %v3126
      %v3162 = vpack.c.bf16 %v3133, %v3131
      %v3163 = vpack.c.bf16 %v3138, %v3136
      %v3164 = vpack.c.bf16 %v3143, %v3141
      %v3165 = vpack.c.bf16 %v3148, %v3146
      %v3166 = vpack.c.bf16 %v3153, %v3151
      %v3167 = vpack.c.bf16 %v3158, %v3156
      %v3169 = vsel %vm1614, %v3160, 0
      %v3172 = vsel %vm1614, %v3161, 0
      %v3175 = vsel %vm1614, %v3162, 0
      %v3178 = vsel %vm1614, %v3163, 0
      %v3181 = vsel %vm1614, %v3164, 0
      %v3184 = vsel %vm1614, %v3165, 0
      %v3187 = vsel %vm1614, %v3166, 0
      %v3190 = vsel %vm1614, %v3167, 0
      %v3193 = vsel %vm1639, %v1177, 0
      %3195 = vmatpush.bf16.msra.mxu0 0
      %3196 = vmatpush.bf16.msra.mxu0 0
      %3197 = vmatpush.bf16.msra.mxu0 0
      %3198 = vmatpush.bf16.msra.mxu0 0
      %3199 = vmatpush.bf16.msra.mxu0 0
      %3200 = vmatpush.bf16.msra.mxu0 0
      %3201 = vmatpush.bf16.msra.mxu0 0
      %3202 = vmatpush.bf16.msra.mxu0 %v3193
      %3203 = vmatmul.bf16.gmra.mxu0 %v3169
      %v3204 = vpop.f32.mrf.mxu0
      %v3205 = vadd.f32 0.0, %v3204
      %v3206 = vpop.f32.mrf.mxu0
      %v3207 = vadd.f32 0.0, %v3206
      %3208 = vmatmul.bf16.gmra.mxu0 %v3172
      %v3209 = vpop.f32.mrf.mxu0
      %v3210 = vadd.f32 0.0, %v3209
      %v3211 = vpop.f32.mrf.mxu0
      %v3212 = vadd.f32 0.0, %v3211
      %3213 = vmatmul.bf16.gmra.mxu0 %v3175
      %v3214 = vpop.f32.mrf.mxu0
      %v3215 = vadd.f32 0.0, %v3214
      %v3216 = vpop.f32.mrf.mxu0
      %v3217 = vadd.f32 0.0, %v3216
      %3218 = vmatmul.bf16.gmra.mxu0 %v3178
      %v3219 = vpop.f32.mrf.mxu0
      %v3220 = vadd.f32 0.0, %v3219
      %v3221 = vpop.f32.mrf.mxu0
      %v3222 = vadd.f32 0.0, %v3221
      %3223 = vmatmul.bf16.gmra.mxu0 %v3181
      %v3224 = vpop.f32.mrf.mxu0
      %v3225 = vadd.f32 0.0, %v3224
      %v3226 = vpop.f32.mrf.mxu0
      %v3227 = vadd.f32 0.0, %v3226
      %3228 = vmatmul.bf16.gmra.mxu0 %v3184
      %v3229 = vpop.f32.mrf.mxu0
      %v3230 = vadd.f32 0.0, %v3229
      %v3231 = vpop.f32.mrf.mxu0
      %v3232 = vadd.f32 0.0, %v3231
      %3233 = vmatmul.bf16.gmra.mxu0 %v3187
      %v3234 = vpop.f32.mrf.mxu0
      %v3235 = vadd.f32 0.0, %v3234
      %v3236 = vpop.f32.mrf.mxu0
      %v3237 = vadd.f32 0.0, %v3236
      %3238 = vmatmul.bf16.gmra.mxu0 %v3190
      %v3239 = vpop.f32.mrf.mxu0
      %v3240 = vadd.f32 0.0, %v3239
      %v3241 = vpop.f32.mrf.mxu0
      %v3242 = vadd.f32 0.0, %v3241
      %3243 = vdwg.mxu0
      %v3244 = vadd.f32 %v2827, %v3205
      %v3245 = vadd.f32 %v2828, %v3207
      %v3246 = vadd.f32 %v2829, %v3210
      %v3247 = vadd.f32 %v2830, %v3212
      %v3248 = vadd.f32 %v2831, %v3215
      %v3249 = vadd.f32 %v2832, %v3217
      %v3250 = vadd.f32 %v2833, %v3220
      %v3251 = vadd.f32 %v2834, %v3222
      %v3252 = vadd.f32 %v2835, %v3225
      %v3253 = vadd.f32 %v2836, %v3227
      %v3254 = vadd.f32 %v2837, %v3230
      %v3255 = vadd.f32 %v2838, %v3232
      %v3256 = vadd.f32 %v2839, %v3235
      %v3257 = vadd.f32 %v2840, %v3237
      %v3258 = vadd.f32 %v2841, %v3240
      %v3259 = vadd.f32 %v2842, %v3242
      %v3261 = vperm.slane %v1178, 0
      %v3263 = vadd.f32 %v3244, %v3261
      %v3264 = vadd.f32 %v3245, %v3261
      %v3265 = vadd.f32 %v3246, %v3261
      %v3266 = vadd.f32 %v3247, %v3261
      %v3267 = vadd.f32 %v3248, %v3261
      %v3268 = vadd.f32 %v3249, %v3261
      %v3269 = vadd.f32 %v3250, %v3261
      %v3270 = vadd.f32 %v3251, %v3261
      %v3271 = vadd.f32 %v3252, %v3261
      %v3272 = vadd.f32 %v3253, %v3261
      %v3273 = vadd.f32 %v3254, %v3261
      %v3274 = vadd.f32 %v3255, %v3261
      %v3275 = vadd.f32 %v3256, %v3261
      %v3276 = vadd.f32 %v3257, %v3261
      %v3277 = vadd.f32 %v3258, %v3261
      %v3278 = vadd.f32 %v3259, %v3261
      %v3279 = vadd.f32 %v1197, %v3263
      %v3280 = vadd.f32 %v1198, %v3264
      %v3281 = vadd.f32 %v1199, %v3265
      %v3282 = vadd.f32 %v1200, %v3266
      %v3283 = vadd.f32 %v1201, %v3267
      %v3284 = vadd.f32 %v1202, %v3268
      %v3285 = vadd.f32 %v1203, %v3269
      %v3286 = vadd.f32 %v1204, %v3270
      %v3287 = vadd.f32 %v1205, %v3271
      %v3288 = vadd.f32 %v1206, %v3272
      %v3289 = vadd.f32 %v1207, %v3273
      %v3290 = vadd.f32 %v1208, %v3274
      %v3291 = vadd.f32 %v1209, %v3275
      %v3292 = vadd.f32 %v1210, %v3276
      %v3293 = vadd.f32 %v1211, %v3277
      %v3294 = vadd.f32 %v1212, %v3278
      %v3295 = vsel %vm1269, %v3279, 0.0
      %3296 = vadd.xlane.f32.xlu0 %v3295
      %v3297 = vpop.xlane.xlu0 %3296
      %v3298 = vsel %vm1269, %v3280, 0.0
      %3299 = vadd.xlane.f32.xlu0 %v3298
      %v3300 = vpop.xlane.xlu0 %3299
      %v3301 = vsel %vm1269, %v3281, 0.0
      %3302 = vadd.xlane.f32.xlu0 %v3301
      %v3303 = vpop.xlane.xlu0 %3302
      %v3304 = vsel %vm1269, %v3282, 0.0
      %3305 = vadd.xlane.f32.xlu0 %v3304
      %v3306 = vpop.xlane.xlu0 %3305
      %v3307 = vsel %vm1269, %v3283, 0.0
      %3308 = vadd.xlane.f32.xlu0 %v3307
      %v3309 = vpop.xlane.xlu0 %3308
      %v3310 = vsel %vm1269, %v3284, 0.0
      %3311 = vadd.xlane.f32.xlu0 %v3310
      %v3312 = vpop.xlane.xlu0 %3311
      %v3313 = vsel %vm1269, %v3285, 0.0
      %3314 = vadd.xlane.f32.xlu0 %v3313
      %v3315 = vpop.xlane.xlu0 %3314
      %v3316 = vsel %vm1269, %v3286, 0.0
      %3317 = vadd.xlane.f32.xlu0 %v3316
      %v3318 = vpop.xlane.xlu0 %3317
      %v3319 = vsel %vm1269, %v3287, 0.0
      %3320 = vadd.xlane.f32.xlu0 %v3319
      %v3321 = vpop.xlane.xlu0 %3320
      %v3322 = vsel %vm1269, %v3288, 0.0
      %3323 = vadd.xlane.f32.xlu0 %v3322
      %v3324 = vpop.xlane.xlu0 %3323
      %v3325 = vsel %vm1269, %v3289, 0.0
      %3326 = vadd.xlane.f32.xlu0 %v3325
      %v3327 = vpop.xlane.xlu0 %3326
      %v3328 = vsel %vm1269, %v3290, 0.0
      %3329 = vadd.xlane.f32.xlu0 %v3328
      %v3330 = vpop.xlane.xlu0 %3329
      %v3331 = vsel %vm1269, %v3291, 0.0
      %3332 = vadd.xlane.f32.xlu0 %v3331
      %v3333 = vpop.xlane.xlu0 %3332
      %v3334 = vsel %vm1269, %v3292, 0.0
      %3335 = vadd.xlane.f32.xlu0 %v3334
      %v3336 = vpop.xlane.xlu0 %3335
      %v3337 = vsel %vm1269, %v3293, 0.0
      %3338 = vadd.xlane.f32.xlu0 %v3337
      %v3339 = vpop.xlane.xlu0 %3338
      %v3340 = vsel %vm1269, %v3294, 0.0
      %3341 = vadd.xlane.f32.xlu0 %v3340
      %v3342 = vpop.xlane.xlu0 %3341
      %v3343 = vrcp.pop 32.0
      %v3344 = vmul.f32 32.0, %v3343
      %v3345 = vsub.f32 1.0, %v3344
      %v3346 = vmul.f32 %v3343, %v3345
      %v3347 = vadd.f32 %v3343, %v3346
      %vm3348 = vweird.f32 %v3343
      %v3349 = vsel %vm3348, %v3343, %v3347
      %v3350 = vmul.f32 %v3297, %v3349
      %v3351 = vmul.f32 %v3300, %v3349
      %v3352 = vmul.f32 %v3303, %v3349
      %v3353 = vmul.f32 %v3306, %v3349
      %v3354 = vmul.f32 %v3309, %v3349
      %v3355 = vmul.f32 %v3312, %v3349
      %v3356 = vmul.f32 %v3315, %v3349
      %v3357 = vmul.f32 %v3318, %v3349
      %v3358 = vmul.f32 %v3321, %v3349
      %v3359 = vmul.f32 %v3324, %v3349
      %v3360 = vmul.f32 %v3327, %v3349
      %v3361 = vmul.f32 %v3330, %v3349
      %v3362 = vmul.f32 %v3333, %v3349
      %v3363 = vmul.f32 %v3336, %v3349
      %v3364 = vmul.f32 %v3339, %v3349
      %v3365 = vmul.f32 %v3342, %v3349
      %v3366 = vsub.f32 %v3279, %v3350
      %v3367 = vsub.f32 %v3280, %v3351
      %v3368 = vsub.f32 %v3281, %v3352
      %v3369 = vsub.f32 %v3282, %v3353
      %v3370 = vsub.f32 %v3283, %v3354
      %v3371 = vsub.f32 %v3284, %v3355
      %v3372 = vsub.f32 %v3285, %v3356
      %v3373 = vsub.f32 %v3286, %v3357
      %v3374 = vsub.f32 %v3287, %v3358
      %v3375 = vsub.f32 %v3288, %v3359
      %v3376 = vsub.f32 %v3289, %v3360
      %v3377 = vsub.f32 %v3290, %v3361
      %v3378 = vsub.f32 %v3291, %v3362
      %v3379 = vsub.f32 %v3292, %v3363
      %v3380 = vsub.f32 %v3293, %v3364
      %v3381 = vsub.f32 %v3294, %v3365
      %v3382 = vmul.f32 %v3366, %v3366
      %v3383 = vmul.f32 %v3367, %v3367
      %v3384 = vmul.f32 %v3368, %v3368
      %v3385 = vmul.f32 %v3369, %v3369
      %v3386 = vmul.f32 %v3370, %v3370
      %v3387 = vmul.f32 %v3371, %v3371
      %v3388 = vmul.f32 %v3372, %v3372
      %v3389 = vmul.f32 %v3373, %v3373
      %v3390 = vmul.f32 %v3374, %v3374
      %v3391 = vmul.f32 %v3375, %v3375
      %v3392 = vmul.f32 %v3376, %v3376
      %v3393 = vmul.f32 %v3377, %v3377
      %v3394 = vmul.f32 %v3378, %v3378
      %v3395 = vmul.f32 %v3379, %v3379
      %v3396 = vmul.f32 %v3380, %v3380
      %v3397 = vmul.f32 %v3381, %v3381
      %v3398 = vsel %vm1269, %v3382, 0.0
      %3399 = vadd.xlane.f32.xlu0 %v3398
      %v3400 = vpop.xlane.xlu0 %3399
      %v3401 = vsel %vm1269, %v3383, 0.0
      %3402 = vadd.xlane.f32.xlu0 %v3401
      %v3403 = vpop.xlane.xlu0 %3402
      %v3404 = vsel %vm1269, %v3384, 0.0
      %3405 = vadd.xlane.f32.xlu0 %v3404
      %v3406 = vpop.xlane.xlu0 %3405
      %v3407 = vsel %vm1269, %v3385, 0.0
      %3408 = vadd.xlane.f32.xlu0 %v3407
      %v3409 = vpop.xlane.xlu0 %3408
      %v3410 = vsel %vm1269, %v3386, 0.0
      %3411 = vadd.xlane.f32.xlu0 %v3410
      %v3412 = vpop.xlane.xlu0 %3411
      %v3413 = vsel %vm1269, %v3387, 0.0
      %3414 = vadd.xlane.f32.xlu0 %v3413
      %v3415 = vpop.xlane.xlu0 %3414
      %v3416 = vsel %vm1269, %v3388, 0.0
      %3417 = vadd.xlane.f32.xlu0 %v3416
      %v3418 = vpop.xlane.xlu0 %3417
      %v3419 = vsel %vm1269, %v3389, 0.0
      %3420 = vadd.xlane.f32.xlu0 %v3419
      %v3421 = vpop.xlane.xlu0 %3420
      %v3422 = vsel %vm1269, %v3390, 0.0
      %3423 = vadd.xlane.f32.xlu0 %v3422
      %v3424 = vpop.xlane.xlu0 %3423
      %v3425 = vsel %vm1269, %v3391, 0.0
      %3426 = vadd.xlane.f32.xlu0 %v3425
      %v3427 = vpop.xlane.xlu0 %3426
      %v3428 = vsel %vm1269, %v3392, 0.0
      %3429 = vadd.xlane.f32.xlu0 %v3428
      %v3430 = vpop.xlane.xlu0 %3429
      %v3431 = vsel %vm1269, %v3393, 0.0
      %3432 = vadd.xlane.f32.xlu0 %v3431
      %v3433 = vpop.xlane.xlu0 %3432
      %v3434 = vsel %vm1269, %v3394, 0.0
      %3435 = vadd.xlane.f32.xlu0 %v3434
      %v3436 = vpop.xlane.xlu0 %3435
      %v3437 = vsel %vm1269, %v3395, 0.0
      %3438 = vadd.xlane.f32.xlu0 %v3437
      %v3439 = vpop.xlane.xlu0 %3438
      %v3440 = vsel %vm1269, %v3396, 0.0
      %3441 = vadd.xlane.f32.xlu0 %v3440
      %v3442 = vpop.xlane.xlu0 %3441
      %v3443 = vsel %vm1269, %v3397, 0.0
      %3444 = vadd.xlane.f32.xlu0 %v3443
      %v3445 = vpop.xlane.xlu0 %3444
      %v3446 = vmul.f32 %v3400, %v3349
      %v3447 = vmul.f32 %v3403, %v3349
      %v3448 = vmul.f32 %v3406, %v3349
      %v3449 = vmul.f32 %v3409, %v3349
      %v3450 = vmul.f32 %v3412, %v3349
      %v3451 = vmul.f32 %v3415, %v3349
      %v3452 = vmul.f32 %v3418, %v3349
      %v3453 = vmul.f32 %v3421, %v3349
      %v3454 = vmul.f32 %v3424, %v3349
      %v3455 = vmul.f32 %v3427, %v3349
      %v3456 = vmul.f32 %v3430, %v3349
      %v3457 = vmul.f32 %v3433, %v3349
      %v3458 = vmul.f32 %v3436, %v3349
      %v3459 = vmul.f32 %v3439, %v3349
      %v3460 = vmul.f32 %v3442, %v3349
      %v3461 = vmul.f32 %v3445, %v3349
      %v3462 = vadd.f32 %v3446, 1e-05
      %v3463 = vadd.f32 %v3447, 1e-05
      %v3464 = vadd.f32 %v3448, 1e-05
      %v3465 = vadd.f32 %v3449, 1e-05
      %v3466 = vadd.f32 %v3450, 1e-05
      %v3467 = vadd.f32 %v3451, 1e-05
      %v3468 = vadd.f32 %v3452, 1e-05
      %v3469 = vadd.f32 %v3453, 1e-05
      %v3470 = vadd.f32 %v3454, 1e-05
      %v3471 = vadd.f32 %v3455, 1e-05
      %v3472 = vadd.f32 %v3456, 1e-05
      %v3473 = vadd.f32 %v3457, 1e-05
      %v3474 = vadd.f32 %v3458, 1e-05
      %v3475 = vadd.f32 %v3459, 1e-05
      %v3476 = vadd.f32 %v3460, 1e-05
      %v3477 = vadd.f32 %v3461, 1e-05
      %v3478 = vrsqrt.pop %v3462
      %v3479 = vmul.f32 %v3478, %v3462
      %v3480 = vmul.f32 %v3479, %v3478
      %v3481 = vmul.f32 0.5, %v3480
      %v3482 = vsub.f32 1.5, %v3481
      %v3483 = vmul.f32 %v3478, %v3482
      %vm3484 = vweird.f32 %v3462
      %vm3485 = vweird.f32 %v3478
      %vm3486 = vmor %vm3484, %vm3485
      %v3487 = vsel %vm3486, %v3478, %v3483
      %v3488 = vrsqrt.pop %v3463
      %v3489 = vmul.f32 %v3488, %v3463
      %v3490 = vmul.f32 %v3489, %v3488
      %v3491 = vmul.f32 0.5, %v3490
      %v3492 = vsub.f32 1.5, %v3491
      %v3493 = vmul.f32 %v3488, %v3492
      %vm3494 = vweird.f32 %v3463
      %vm3495 = vweird.f32 %v3488
      %vm3496 = vmor %vm3494, %vm3495
      %v3497 = vsel %vm3496, %v3488, %v3493
      %v3498 = vrsqrt.pop %v3464
      %v3499 = vmul.f32 %v3498, %v3464
      %v3500 = vmul.f32 %v3499, %v3498
      %v3501 = vmul.f32 0.5, %v3500
      %v3502 = vsub.f32 1.5, %v3501
      %v3503 = vmul.f32 %v3498, %v3502
      %vm3504 = vweird.f32 %v3464
      %vm3505 = vweird.f32 %v3498
      %vm3506 = vmor %vm3504, %vm3505
      %v3507 = vsel %vm3506, %v3498, %v3503
      %v3508 = vrsqrt.pop %v3465
      %v3509 = vmul.f32 %v3508, %v3465
      %v3510 = vmul.f32 %v3509, %v3508
      %v3511 = vmul.f32 0.5, %v3510
      %v3512 = vsub.f32 1.5, %v3511
      %v3513 = vmul.f32 %v3508, %v3512
      %vm3514 = vweird.f32 %v3465
      %vm3515 = vweird.f32 %v3508
      %vm3516 = vmor %vm3514, %vm3515
      %v3517 = vsel %vm3516, %v3508, %v3513
      %v3518 = vrsqrt.pop %v3466
      %v3519 = vmul.f32 %v3518, %v3466
      %v3520 = vmul.f32 %v3519, %v3518
      %v3521 = vmul.f32 0.5, %v3520
      %v3522 = vsub.f32 1.5, %v3521
      %v3523 = vmul.f32 %v3518, %v3522
      %vm3524 = vweird.f32 %v3466
      %vm3525 = vweird.f32 %v3518
      %vm3526 = vmor %vm3524, %vm3525
      %v3527 = vsel %vm3526, %v3518, %v3523
      %v3528 = vrsqrt.pop %v3467
      %v3529 = vmul.f32 %v3528, %v3467
      %v3530 = vmul.f32 %v3529, %v3528
      %v3531 = vmul.f32 0.5, %v3530
      %v3532 = vsub.f32 1.5, %v3531
      %v3533 = vmul.f32 %v3528, %v3532
      %vm3534 = vweird.f32 %v3467
      %vm3535 = vweird.f32 %v3528
      %vm3536 = vmor %vm3534, %vm3535
      %v3537 = vsel %vm3536, %v3528, %v3533
      %v3538 = vrsqrt.pop %v3468
      %v3539 = vmul.f32 %v3538, %v3468
      %v3540 = vmul.f32 %v3539, %v3538
      %v3541 = vmul.f32 0.5, %v3540
      %v3542 = vsub.f32 1.5, %v3541
      %v3543 = vmul.f32 %v3538, %v3542
      %vm3544 = vweird.f32 %v3468
      %vm3545 = vweird.f32 %v3538
      %vm3546 = vmor %vm3544, %vm3545
      %v3547 = vsel %vm3546, %v3538, %v3543
      %v3548 = vrsqrt.pop %v3469
      %v3549 = vmul.f32 %v3548, %v3469
      %v3550 = vmul.f32 %v3549, %v3548
      %v3551 = vmul.f32 0.5, %v3550
      %v3552 = vsub.f32 1.5, %v3551
      %v3553 = vmul.f32 %v3548, %v3552
      %vm3554 = vweird.f32 %v3469
      %vm3555 = vweird.f32 %v3548
      %vm3556 = vmor %vm3554, %vm3555
      %v3557 = vsel %vm3556, %v3548, %v3553
      %v3558 = vrsqrt.pop %v3470
      %v3559 = vmul.f32 %v3558, %v3470
      %v3560 = vmul.f32 %v3559, %v3558
      %v3561 = vmul.f32 0.5, %v3560
      %v3562 = vsub.f32 1.5, %v3561
      %v3563 = vmul.f32 %v3558, %v3562
      %vm3564 = vweird.f32 %v3470
      %vm3565 = vweird.f32 %v3558
      %vm3566 = vmor %vm3564, %vm3565
      %v3567 = vsel %vm3566, %v3558, %v3563
      %v3568 = vrsqrt.pop %v3471
      %v3569 = vmul.f32 %v3568, %v3471
      %v3570 = vmul.f32 %v3569, %v3568
      %v3571 = vmul.f32 0.5, %v3570
      %v3572 = vsub.f32 1.5, %v3571
      %v3573 = vmul.f32 %v3568, %v3572
      %vm3574 = vweird.f32 %v3471
      %vm3575 = vweird.f32 %v3568
      %vm3576 = vmor %vm3574, %vm3575
      %v3577 = vsel %vm3576, %v3568, %v3573
      %v3578 = vrsqrt.pop %v3472
      %v3579 = vmul.f32 %v3578, %v3472
      %v3580 = vmul.f32 %v3579, %v3578
      %v3581 = vmul.f32 0.5, %v3580
      %v3582 = vsub.f32 1.5, %v3581
      %v3583 = vmul.f32 %v3578, %v3582
      %vm3584 = vweird.f32 %v3472
      %vm3585 = vweird.f32 %v3578
      %vm3586 = vmor %vm3584, %vm3585
      %v3587 = vsel %vm3586, %v3578, %v3583
      %v3588 = vrsqrt.pop %v3473
      %v3589 = vmul.f32 %v3588, %v3473
      %v3590 = vmul.f32 %v3589, %v3588
      %v3591 = vmul.f32 0.5, %v3590
      %v3592 = vsub.f32 1.5, %v3591
      %v3593 = vmul.f32 %v3588, %v3592
      %vm3594 = vweird.f32 %v3473
      %vm3595 = vweird.f32 %v3588
      %vm3596 = vmor %vm3594, %vm3595
      %v3597 = vsel %vm3596, %v3588, %v3593
      %v3598 = vrsqrt.pop %v3474
      %v3599 = vmul.f32 %v3598, %v3474
      %v3600 = vmul.f32 %v3599, %v3598
      %v3601 = vmul.f32 0.5, %v3600
      %v3602 = vsub.f32 1.5, %v3601
      %v3603 = vmul.f32 %v3598, %v3602
      %vm3604 = vweird.f32 %v3474
      %vm3605 = vweird.f32 %v3598
      %vm3606 = vmor %vm3604, %vm3605
      %v3607 = vsel %vm3606, %v3598, %v3603
      %v3608 = vrsqrt.pop %v3475
      %v3609 = vmul.f32 %v3608, %v3475
      %v3610 = vmul.f32 %v3609, %v3608
      %v3611 = vmul.f32 0.5, %v3610
      %v3612 = vsub.f32 1.5, %v3611
      %v3613 = vmul.f32 %v3608, %v3612
      %vm3614 = vweird.f32 %v3475
      %vm3615 = vweird.f32 %v3608
      %vm3616 = vmor %vm3614, %vm3615
      %v3617 = vsel %vm3616, %v3608, %v3613
      %v3618 = vrsqrt.pop %v3476
      %v3619 = vmul.f32 %v3618, %v3476
      %v3620 = vmul.f32 %v3619, %v3618
      %v3621 = vmul.f32 0.5, %v3620
      %v3622 = vsub.f32 1.5, %v3621
      %v3623 = vmul.f32 %v3618, %v3622
      %vm3624 = vweird.f32 %v3476
      %vm3625 = vweird.f32 %v3618
      %vm3626 = vmor %vm3624, %vm3625
      %v3627 = vsel %vm3626, %v3618, %v3623
      %v3628 = vrsqrt.pop %v3477
      %v3629 = vmul.f32 %v3628, %v3477
      %v3630 = vmul.f32 %v3629, %v3628
      %v3631 = vmul.f32 0.5, %v3630
      %v3632 = vsub.f32 1.5, %v3631
      %v3633 = vmul.f32 %v3628, %v3632
      %vm3634 = vweird.f32 %v3477
      %vm3635 = vweird.f32 %v3628
      %vm3636 = vmor %vm3634, %vm3635
      %v3637 = vsel %vm3636, %v3628, %v3633
      %v3638 = vmul.f32 %v3366, %v3487
      %v3639 = vmul.f32 %v3367, %v3497
      %v3640 = vmul.f32 %v3368, %v3507
      %v3641 = vmul.f32 %v3369, %v3517
      %v3642 = vmul.f32 %v3370, %v3527
      %v3643 = vmul.f32 %v3371, %v3537
      %v3644 = vmul.f32 %v3372, %v3547
      %v3645 = vmul.f32 %v3373, %v3557
      %v3646 = vmul.f32 %v3374, %v3567
      %v3647 = vmul.f32 %v3375, %v3577
      %v3648 = vmul.f32 %v3376, %v3587
      %v3649 = vmul.f32 %v3377, %v3597
      %v3650 = vmul.f32 %v3378, %v3607
      %v3651 = vmul.f32 %v3379, %v3617
      %v3652 = vmul.f32 %v3380, %v3627
      %v3653 = vmul.f32 %v3381, %v3637
      %v3655 = vperm.slane %v1179, 0
      %v3657 = vmul.f32 %v3638, %v3655
      %v3658 = vmul.f32 %v3639, %v3655
      %v3659 = vmul.f32 %v3640, %v3655
      %v3660 = vmul.f32 %v3641, %v3655
      %v3661 = vmul.f32 %v3642, %v3655
      %v3662 = vmul.f32 %v3643, %v3655
      %v3663 = vmul.f32 %v3644, %v3655
      %v3664 = vmul.f32 %v3645, %v3655
      %v3665 = vmul.f32 %v3646, %v3655
      %v3666 = vmul.f32 %v3647, %v3655
      %v3667 = vmul.f32 %v3648, %v3655
      %v3668 = vmul.f32 %v3649, %v3655
      %v3669 = vmul.f32 %v3650, %v3655
      %v3670 = vmul.f32 %v3651, %v3655
      %v3671 = vmul.f32 %v3652, %v3655
      %v3672 = vmul.f32 %v3653, %v3655
      %v3674 = vperm.slane %v1180, 0
      %v3676 = vadd.f32 %v3657, %v3674
      %v3677 = vadd.f32 %v3658, %v3674
      %v3678 = vadd.f32 %v3659, %v3674
      %v3679 = vadd.f32 %v3660, %v3674
      %v3680 = vadd.f32 %v3661, %v3674
      %v3681 = vadd.f32 %v3662, %v3674
      %v3682 = vadd.f32 %v3663, %v3674
      %v3683 = vadd.f32 %v3664, %v3674
      %v3684 = vadd.f32 %v3665, %v3674
      %v3685 = vadd.f32 %v3666, %v3674
      %v3686 = vadd.f32 %v3667, %v3674
      %v3687 = vadd.f32 %v3668, %v3674
      %v3688 = vadd.f32 %v3669, %v3674
      %v3689 = vadd.f32 %v3670, %v3674
      %v3690 = vadd.f32 %v3671, %v3674
      %v3691 = vadd.f32 %v3672, %v3674
      %v3692 = vpack.c.bf16 %v3677, %v3676
      %v3693 = vpack.c.bf16 %v3679, %v3678
      %v3694 = vpack.c.bf16 %v3681, %v3680
      %v3695 = vpack.c.bf16 %v3683, %v3682
      %v3696 = vpack.c.bf16 %v3685, %v3684
      %v3697 = vpack.c.bf16 %v3687, %v3686
      %v3698 = vpack.c.bf16 %v3689, %v3688
      %v3699 = vpack.c.bf16 %v3691, %v3690
      %v3701 = vperm.slane %v1185, 0
      %v3707 = vunpack.c.l.b16 %v1181
      %v3708 = vunpack.c.l.b16 %v1182
      %v3709 = vunpack.c.l.b16 %v1183
      %v3710 = vunpack.c.l.b16 %v1184
      %v3711 = vpack.c.b16 %v3708, %v3707
      %v3712 = vpack.c.b16 %v3710, %v3709
      %v3716 = vsel %vm1269, %v3692, 0
      %v3719 = vsel %vm1269, %v3693, 0
      %v3722 = vsel %vm1269, %v3694, 0
      %v3725 = vsel %vm1269, %v3695, 0
      %v3728 = vsel %vm1269, %v3696, 0
      %v3731 = vsel %vm1269, %v3697, 0
      %v3734 = vsel %vm1269, %v3698, 0
      %v3737 = vsel %vm1269, %v3699, 0
      %3739 = vmatpush.bf16.msra.mxu0 0
      %3740 = vmatpush.bf16.msra.mxu0 0
      %3741 = vmatpush.bf16.msra.mxu0 0
      %3742 = vmatpush.bf16.msra.mxu0 0
      %3743 = vmatpush.bf16.msra.mxu0 0
      %3744 = vmatpush.bf16.msra.mxu0 0
      %3745 = vmatpush.bf16.msra.mxu0 %v3712
      %3746 = vmatpush.bf16.msra.mxu0 %v3711
      %3747 = vmatmul.bf16.gmra.mxu0 %v3716
      %v3748 = vpop.f32.mrf.mxu0
      %v3749 = vadd.f32 %v3701, %v3748
      %v3750 = vpop.f32.mrf.mxu0
      %v3751 = vadd.f32 %v3701, %v3750
      %3752 = vmatmul.bf16.gmra.mxu0 %v3719
      %v3753 = vpop.f32.mrf.mxu0
      %v3754 = vadd.f32 %v3701, %v3753
      %v3755 = vpop.f32.mrf.mxu0
      %v3756 = vadd.f32 %v3701, %v3755
      %3757 = vmatmul.bf16.gmra.mxu0 %v3722
      %v3758 = vpop.f32.mrf.mxu0
      %v3759 = vadd.f32 %v3701, %v3758
      %v3760 = vpop.f32.mrf.mxu0
      %v3761 = vadd.f32 %v3701, %v3760
      %3762 = vmatmul.bf16.gmra.mxu0 %v3725
      %v3763 = vpop.f32.mrf.mxu0
      %v3764 = vadd.f32 %v3701, %v3763
      %v3765 = vpop.f32.mrf.mxu0
      %v3766 = vadd.f32 %v3701, %v3765
      %3767 = vmatmul.bf16.gmra.mxu0 %v3728
      %v3768 = vpop.f32.mrf.mxu0
      %v3769 = vadd.f32 %v3701, %v3768
      %v3770 = vpop.f32.mrf.mxu0
      %v3771 = vadd.f32 %v3701, %v3770
      %3772 = vmatmul.bf16.gmra.mxu0 %v3731
      %v3773 = vpop.f32.mrf.mxu0
      %v3774 = vadd.f32 %v3701, %v3773
      %v3775 = vpop.f32.mrf.mxu0
      %v3776 = vadd.f32 %v3701, %v3775
      %3777 = vmatmul.bf16.gmra.mxu0 %v3734
      %v3778 = vpop.f32.mrf.mxu0
      %v3779 = vadd.f32 %v3701, %v3778
      %v3780 = vpop.f32.mrf.mxu0
      %v3781 = vadd.f32 %v3701, %v3780
      %3782 = vmatmul.bf16.gmra.mxu0 %v3737
      %v3783 = vpop.f32.mrf.mxu0
      %v3784 = vadd.f32 %v3701, %v3783
      %v3785 = vpop.f32.mrf.mxu0
      %v3786 = vadd.f32 %v3701, %v3785
      %3787 = vdwg.mxu0
      %v3788 = vmax.f32 %v3749, 0.0
      %v3789 = vmax.f32 %v3751, 0.0
      %v3790 = vmax.f32 %v3754, 0.0
      %v3791 = vmax.f32 %v3756, 0.0
      %v3792 = vmax.f32 %v3759, 0.0
      %v3793 = vmax.f32 %v3761, 0.0
      %v3794 = vmax.f32 %v3764, 0.0
      %v3795 = vmax.f32 %v3766, 0.0
      %v3796 = vmax.f32 %v3769, 0.0
      %v3797 = vmax.f32 %v3771, 0.0
      %v3798 = vmax.f32 %v3774, 0.0
      %v3799 = vmax.f32 %v3776, 0.0
      %v3800 = vmax.f32 %v3779, 0.0
      %v3801 = vmax.f32 %v3781, 0.0
      %v3802 = vmax.f32 %v3784, 0.0
      %v3803 = vmax.f32 %v3786, 0.0
      %v3804 = vpack.c.bf16 %v3789, %v3788
      %v3805 = vpack.c.bf16 %v3791, %v3790
      %v3806 = vpack.c.bf16 %v3793, %v3792
      %v3807 = vpack.c.bf16 %v3795, %v3794
      %v3808 = vpack.c.bf16 %v3797, %v3796
      %v3809 = vpack.c.bf16 %v3799, %v3798
      %v3810 = vpack.c.bf16 %v3801, %v3800
      %v3811 = vpack.c.bf16 %v3803, %v3802
      %v3813 = vperm.slane %v1194, 0
      %v3823 = vunpack.c.l.b16 %v1186
      %v3824 = vunpack.c.l.b16 %v1187
      %v3825 = vunpack.c.l.b16 %v1188
      %v3826 = vunpack.c.l.b16 %v1189
      %v3827 = vunpack.c.l.b16 %v1190
      %v3828 = vunpack.c.l.b16 %v1191
      %v3829 = vunpack.c.l.b16 %v1192
      %v3830 = vunpack.c.l.b16 %v1193
      %v3831 = vpack.c.b16 %v3824, %v3823
      %v3832 = vpack.c.b16 %v3826, %v3825
      %v3833 = vpack.c.b16 %v3828, %v3827
      %v3834 = vpack.c.b16 %v3830, %v3829
      %vm3839 = vcmask 523264
      %v3841 = vsel %vm3839, %v3804, 0
      %v3844 = vsel %vm3839, %v3805, 0
      %v3847 = vsel %vm3839, %v3806, 0
      %v3850 = vsel %vm3839, %v3807, 0
      %v3853 = vsel %vm3839, %v3808, 0
      %v3856 = vsel %vm3839, %v3809, 0
      %v3859 = vsel %vm3839, %v3810, 0
      %v3862 = vsel %vm3839, %v3811, 0
      %3864 = vmatpush.bf16.msra.mxu0 0
      %3865 = vmatpush.bf16.msra.mxu0 0
      %3866 = vmatpush.bf16.msra.mxu0 0
      %3867 = vmatpush.bf16.msra.mxu0 0
      %3868 = vmatpush.bf16.msra.mxu0 %v3834
      %3869 = vmatpush.bf16.msra.mxu0 %v3833
      %3870 = vmatpush.bf16.msra.mxu0 %v3832
      %3871 = vmatpush.bf16.msra.mxu0 %v3831
      %3872 = vmatmul.bf16.gmra.mxu0 %v3841
      %v3873 = vpop.f32.mrf.mxu0
      %v3874 = vadd.f32 %v3813, %v3873
      %v3875 = vpop.f32.mrf.mxu0
      %v3876 = vadd.f32 %v3813, %v3875
      %3877 = vmatmul.bf16.gmra.mxu0 %v3844
      %v3878 = vpop.f32.mrf.mxu0
      %v3879 = vadd.f32 %v3813, %v3878
      %v3880 = vpop.f32.mrf.mxu0
      %v3881 = vadd.f32 %v3813, %v3880
      %3882 = vmatmul.bf16.gmra.mxu0 %v3847
      %v3883 = vpop.f32.mrf.mxu0
      %v3884 = vadd.f32 %v3813, %v3883
      %v3885 = vpop.f32.mrf.mxu0
      %v3886 = vadd.f32 %v3813, %v3885
      %3887 = vmatmul.bf16.gmra.mxu0 %v3850
      %v3888 = vpop.f32.mrf.mxu0
      %v3889 = vadd.f32 %v3813, %v3888
      %v3890 = vpop.f32.mrf.mxu0
      %v3891 = vadd.f32 %v3813, %v3890
      %3892 = vmatmul.bf16.gmra.mxu0 %v3853
      %v3893 = vpop.f32.mrf.mxu0
      %v3894 = vadd.f32 %v3813, %v3893
      %v3895 = vpop.f32.mrf.mxu0
      %v3896 = vadd.f32 %v3813, %v3895
      %3897 = vmatmul.bf16.gmra.mxu0 %v3856
      %v3898 = vpop.f32.mrf.mxu0
      %v3899 = vadd.f32 %v3813, %v3898
      %v3900 = vpop.f32.mrf.mxu0
      %v3901 = vadd.f32 %v3813, %v3900
      %3902 = vmatmul.bf16.gmra.mxu0 %v3859
      %v3903 = vpop.f32.mrf.mxu0
      %v3904 = vadd.f32 %v3813, %v3903
      %v3905 = vpop.f32.mrf.mxu0
      %v3906 = vadd.f32 %v3813, %v3905
      %3907 = vmatmul.bf16.gmra.mxu0 %v3862
      %v3908 = vpop.f32.mrf.mxu0
      %v3909 = vadd.f32 %v3813, %v3908
      %v3910 = vpop.f32.mrf.mxu0
      %v3911 = vadd.f32 %v3813, %v3910
      %3912 = vdwg.mxu0
      %v3913 = vadd.f32 %v3676, %v3874
      %v3914 = vadd.f32 %v3677, %v3876
      %v3915 = vadd.f32 %v3678, %v3879
      %v3916 = vadd.f32 %v3679, %v3881
      %v3917 = vadd.f32 %v3680, %v3884
      %v3918 = vadd.f32 %v3681, %v3886
      %v3919 = vadd.f32 %v3682, %v3889
      %v3920 = vadd.f32 %v3683, %v3891
      %v3921 = vadd.f32 %v3684, %v3894
      %v3922 = vadd.f32 %v3685, %v3896
      %v3923 = vadd.f32 %v3686, %v3899
      %v3924 = vadd.f32 %v3687, %v3901
      %v3925 = vadd.f32 %v3688, %v3904
      %v3926 = vadd.f32 %v3689, %v3906
      %v3927 = vadd.f32 %v3690, %v3909
      %v3928 = vadd.f32 %v3691, %v3911
      %v3929 = vsel %vm1269, %v3913, 0.0
      %3930 = vadd.xlane.f32.xlu0 %v3929
      %v3931 = vpop.xlane.xlu0 %3930
      %v3932 = vsel %vm1269, %v3914, 0.0
      %3933 = vadd.xlane.f32.xlu0 %v3932
      %v3934 = vpop.xlane.xlu0 %3933
      %v3935 = vsel %vm1269, %v3915, 0.0
      %3936 = vadd.xlane.f32.xlu0 %v3935
      %v3937 = vpop.xlane.xlu0 %3936
      %v3938 = vsel %vm1269, %v3916, 0.0
      %3939 = vadd.xlane.f32.xlu0 %v3938
      %v3940 = vpop.xlane.xlu0 %3939
      %v3941 = vsel %vm1269, %v3917, 0.0
      %3942 = vadd.xlane.f32.xlu0 %v3941
      %v3943 = vpop.xlane.xlu0 %3942
      %v3944 = vsel %vm1269, %v3918, 0.0
      %3945 = vadd.xlane.f32.xlu0 %v3944
      %v3946 = vpop.xlane.xlu0 %3945
      %v3947 = vsel %vm1269, %v3919, 0.0
      %3948 = vadd.xlane.f32.xlu0 %v3947
      %v3949 = vpop.xlane.xlu0 %3948
      %v3950 = vsel %vm1269, %v3920, 0.0
      %3951 = vadd.xlane.f32.xlu0 %v3950
      %v3952 = vpop.xlane.xlu0 %3951
      %v3953 = vsel %vm1269, %v3921, 0.0
      %3954 = vadd.xlane.f32.xlu0 %v3953
      %v3955 = vpop.xlane.xlu0 %3954
      %v3956 = vsel %vm1269, %v3922, 0.0
      %3957 = vadd.xlane.f32.xlu0 %v3956
      %v3958 = vpop.xlane.xlu0 %3957
      %v3959 = vsel %vm1269, %v3923, 0.0
      %3960 = vadd.xlane.f32.xlu0 %v3959
      %v3961 = vpop.xlane.xlu0 %3960
      %v3962 = vsel %vm1269, %v3924, 0.0
      %3963 = vadd.xlane.f32.xlu0 %v3962
      %v3964 = vpop.xlane.xlu0 %3963
      %v3965 = vsel %vm1269, %v3925, 0.0
      %3966 = vadd.xlane.f32.xlu0 %v3965
      %v3967 = vpop.xlane.xlu0 %3966
      %v3968 = vsel %vm1269, %v3926, 0.0
      %3969 = vadd.xlane.f32.xlu0 %v3968
      %v3970 = vpop.xlane.xlu0 %3969
      %v3971 = vsel %vm1269, %v3927, 0.0
      %3972 = vadd.xlane.f32.xlu0 %v3971
      %v3973 = vpop.xlane.xlu0 %3972
      %v3974 = vsel %vm1269, %v3928, 0.0
      %3975 = vadd.xlane.f32.xlu0 %v3974
      %v3976 = vpop.xlane.xlu0 %3975
      %v3977 = vmul.f32 %v3931, %v3349
      %v3978 = vmul.f32 %v3934, %v3349
      %v3979 = vmul.f32 %v3937, %v3349
      %v3980 = vmul.f32 %v3940, %v3349
      %v3981 = vmul.f32 %v3943, %v3349
      %v3982 = vmul.f32 %v3946, %v3349
      %v3983 = vmul.f32 %v3949, %v3349
      %v3984 = vmul.f32 %v3952, %v3349
      %v3985 = vmul.f32 %v3955, %v3349
      %v3986 = vmul.f32 %v3958, %v3349
      %v3987 = vmul.f32 %v3961, %v3349
      %v3988 = vmul.f32 %v3964, %v3349
      %v3989 = vmul.f32 %v3967, %v3349
      %v3990 = vmul.f32 %v3970, %v3349
      %v3991 = vmul.f32 %v3973, %v3349
      %v3992 = vmul.f32 %v3976, %v3349
      %v3993 = vsub.f32 %v3913, %v3977
      %v3994 = vsub.f32 %v3914, %v3978
      %v3995 = vsub.f32 %v3915, %v3979
      %v3996 = vsub.f32 %v3916, %v3980
      %v3997 = vsub.f32 %v3917, %v3981
      %v3998 = vsub.f32 %v3918, %v3982
      %v3999 = vsub.f32 %v3919, %v3983
      %v4000 = vsub.f32 %v3920, %v3984
      %v4001 = vsub.f32 %v3921, %v3985
      %v4002 = vsub.f32 %v3922, %v3986
      %v4003 = vsub.f32 %v3923, %v3987
      %v4004 = vsub.f32 %v3924, %v3988
      %v4005 = vsub.f32 %v3925, %v3989
      %v4006 = vsub.f32 %v3926, %v3990
      %v4007 = vsub.f32 %v3927, %v3991
      %v4008 = vsub.f32 %v3928, %v3992
      %v4009 = vmul.f32 %v3993, %v3993
      %v4010 = vmul.f32 %v3994, %v3994
      %v4011 = vmul.f32 %v3995, %v3995
      %v4012 = vmul.f32 %v3996, %v3996
      %v4013 = vmul.f32 %v3997, %v3997
      %v4014 = vmul.f32 %v3998, %v3998
      %v4015 = vmul.f32 %v3999, %v3999
      %v4016 = vmul.f32 %v4000, %v4000
      %v4017 = vmul.f32 %v4001, %v4001
      %v4018 = vmul.f32 %v4002, %v4002
      %v4019 = vmul.f32 %v4003, %v4003
      %v4020 = vmul.f32 %v4004, %v4004
      %v4021 = vmul.f32 %v4005, %v4005
      %v4022 = vmul.f32 %v4006, %v4006
      %v4023 = vmul.f32 %v4007, %v4007
      %v4024 = vmul.f32 %v4008, %v4008
      %v4025 = vsel %vm1269, %v4009, 0.0
      %4026 = vadd.xlane.f32.xlu0 %v4025
      %v4027 = vpop.xlane.xlu0 %4026
      %v4028 = vsel %vm1269, %v4010, 0.0
      %4029 = vadd.xlane.f32.xlu0 %v4028
      %v4030 = vpop.xlane.xlu0 %4029
      %v4031 = vsel %vm1269, %v4011, 0.0
      %4032 = vadd.xlane.f32.xlu0 %v4031
      %v4033 = vpop.xlane.xlu0 %4032
      %v4034 = vsel %vm1269, %v4012, 0.0
      %4035 = vadd.xlane.f32.xlu0 %v4034
      %v4036 = vpop.xlane.xlu0 %4035
      %v4037 = vsel %vm1269, %v4013, 0.0
      %4038 = vadd.xlane.f32.xlu0 %v4037
      %v4039 = vpop.xlane.xlu0 %4038
      %v4040 = vsel %vm1269, %v4014, 0.0
      %4041 = vadd.xlane.f32.xlu0 %v4040
      %v4042 = vpop.xlane.xlu0 %4041
      %v4043 = vsel %vm1269, %v4015, 0.0
      %4044 = vadd.xlane.f32.xlu0 %v4043
      %v4045 = vpop.xlane.xlu0 %4044
      %v4046 = vsel %vm1269, %v4016, 0.0
      %4047 = vadd.xlane.f32.xlu0 %v4046
      %v4048 = vpop.xlane.xlu0 %4047
      %v4049 = vsel %vm1269, %v4017, 0.0
      %4050 = vadd.xlane.f32.xlu0 %v4049
      %v4051 = vpop.xlane.xlu0 %4050
      %v4052 = vsel %vm1269, %v4018, 0.0
      %4053 = vadd.xlane.f32.xlu0 %v4052
      %v4054 = vpop.xlane.xlu0 %4053
      %v4055 = vsel %vm1269, %v4019, 0.0
      %4056 = vadd.xlane.f32.xlu0 %v4055
      %v4057 = vpop.xlane.xlu0 %4056
      %v4058 = vsel %vm1269, %v4020, 0.0
      %4059 = vadd.xlane.f32.xlu0 %v4058
      %v4060 = vpop.xlane.xlu0 %4059
      %v4061 = vsel %vm1269, %v4021, 0.0
      %4062 = vadd.xlane.f32.xlu0 %v4061
      %v4063 = vpop.xlane.xlu0 %4062
      %v4064 = vsel %vm1269, %v4022, 0.0
      %4065 = vadd.xlane.f32.xlu0 %v4064
      %v4066 = vpop.xlane.xlu0 %4065
      %v4067 = vsel %vm1269, %v4023, 0.0
      %4068 = vadd.xlane.f32.xlu0 %v4067
      %v4069 = vpop.xlane.xlu0 %4068
      %v4070 = vsel %vm1269, %v4024, 0.0
      %4071 = vadd.xlane.f32.xlu0 %v4070
      %v4072 = vpop.xlane.xlu0 %4071
      %v4073 = vmul.f32 %v4027, %v3349
      %v4074 = vmul.f32 %v4030, %v3349
      %v4075 = vmul.f32 %v4033, %v3349
      %v4076 = vmul.f32 %v4036, %v3349
      %v4077 = vmul.f32 %v4039, %v3349
      %v4078 = vmul.f32 %v4042, %v3349
      %v4079 = vmul.f32 %v4045, %v3349
      %v4080 = vmul.f32 %v4048, %v3349
      %v4081 = vmul.f32 %v4051, %v3349
      %v4082 = vmul.f32 %v4054, %v3349
      %v4083 = vmul.f32 %v4057, %v3349
      %v4084 = vmul.f32 %v4060, %v3349
      %v4085 = vmul.f32 %v4063, %v3349
      %v4086 = vmul.f32 %v4066, %v3349
      %v4087 = vmul.f32 %v4069, %v3349
      %v4088 = vmul.f32 %v4072, %v3349
      %v4089 = vadd.f32 %v4073, 1e-05
      %v4090 = vadd.f32 %v4074, 1e-05
      %v4091 = vadd.f32 %v4075, 1e-05
      %v4092 = vadd.f32 %v4076, 1e-05
      %v4093 = vadd.f32 %v4077, 1e-05
      %v4094 = vadd.f32 %v4078, 1e-05
      %v4095 = vadd.f32 %v4079, 1e-05
      %v4096 = vadd.f32 %v4080, 1e-05
      %v4097 = vadd.f32 %v4081, 1e-05
      %v4098 = vadd.f32 %v4082, 1e-05
      %v4099 = vadd.f32 %v4083, 1e-05
      %v4100 = vadd.f32 %v4084, 1e-05
      %v4101 = vadd.f32 %v4085, 1e-05
      %v4102 = vadd.f32 %v4086, 1e-05
      %v4103 = vadd.f32 %v4087, 1e-05
      %v4104 = vadd.f32 %v4088, 1e-05
      %v4105 = vrsqrt.pop %v4089
      %v4106 = vmul.f32 %v4105, %v4089
      %v4107 = vmul.f32 %v4106, %v4105
      %v4108 = vmul.f32 0.5, %v4107
      %v4109 = vsub.f32 1.5, %v4108
      %v4110 = vmul.f32 %v4105, %v4109
      %vm4111 = vweird.f32 %v4089
      %vm4112 = vweird.f32 %v4105
      %vm4113 = vmor %vm4111, %vm4112
      %v4114 = vsel %vm4113, %v4105, %v4110
      %v4115 = vrsqrt.pop %v4090
      %v4116 = vmul.f32 %v4115, %v4090
      %v4117 = vmul.f32 %v4116, %v4115
      %v4118 = vmul.f32 0.5, %v4117
      %v4119 = vsub.f32 1.5, %v4118
      %v4120 = vmul.f32 %v4115, %v4119
      %vm4121 = vweird.f32 %v4090
      %vm4122 = vweird.f32 %v4115
      %vm4123 = vmor %vm4121, %vm4122
      %v4124 = vsel %vm4123, %v4115, %v4120
      %v4125 = vrsqrt.pop %v4091
      %v4126 = vmul.f32 %v4125, %v4091
      %v4127 = vmul.f32 %v4126, %v4125
      %v4128 = vmul.f32 0.5, %v4127
      %v4129 = vsub.f32 1.5, %v4128
      %v4130 = vmul.f32 %v4125, %v4129
      %vm4131 = vweird.f32 %v4091
      %vm4132 = vweird.f32 %v4125
      %vm4133 = vmor %vm4131, %vm4132
      %v4134 = vsel %vm4133, %v4125, %v4130
      %v4135 = vrsqrt.pop %v4092
      %v4136 = vmul.f32 %v4135, %v4092
      %v4137 = vmul.f32 %v4136, %v4135
      %v4138 = vmul.f32 0.5, %v4137
      %v4139 = vsub.f32 1.5, %v4138
      %v4140 = vmul.f32 %v4135, %v4139
      %vm4141 = vweird.f32 %v4092
      %vm4142 = vweird.f32 %v4135
      %vm4143 = vmor %vm4141, %vm4142
      %v4144 = vsel %vm4143, %v4135, %v4140
      %v4145 = vrsqrt.pop %v4093
      %v4146 = vmul.f32 %v4145, %v4093
      %v4147 = vmul.f32 %v4146, %v4145
      %v4148 = vmul.f32 0.5, %v4147
      %v4149 = vsub.f32 1.5, %v4148
      %v4150 = vmul.f32 %v4145, %v4149
      %vm4151 = vweird.f32 %v4093
      %vm4152 = vweird.f32 %v4145
      %vm4153 = vmor %vm4151, %vm4152
      %v4154 = vsel %vm4153, %v4145, %v4150
      %v4155 = vrsqrt.pop %v4094
      %v4156 = vmul.f32 %v4155, %v4094
      %v4157 = vmul.f32 %v4156, %v4155
      %v4158 = vmul.f32 0.5, %v4157
      %v4159 = vsub.f32 1.5, %v4158
      %v4160 = vmul.f32 %v4155, %v4159
      %vm4161 = vweird.f32 %v4094
      %vm4162 = vweird.f32 %v4155
      %vm4163 = vmor %vm4161, %vm4162
      %v4164 = vsel %vm4163, %v4155, %v4160
      %v4165 = vrsqrt.pop %v4095
      %v4166 = vmul.f32 %v4165, %v4095
      %v4167 = vmul.f32 %v4166, %v4165
      %v4168 = vmul.f32 0.5, %v4167
      %v4169 = vsub.f32 1.5, %v4168
      %v4170 = vmul.f32 %v4165, %v4169
      %vm4171 = vweird.f32 %v4095
      %vm4172 = vweird.f32 %v4165
      %vm4173 = vmor %vm4171, %vm4172
      %v4174 = vsel %vm4173, %v4165, %v4170
      %v4175 = vrsqrt.pop %v4096
      %v4176 = vmul.f32 %v4175, %v4096
      %v4177 = vmul.f32 %v4176, %v4175
      %v4178 = vmul.f32 0.5, %v4177
      %v4179 = vsub.f32 1.5, %v4178
      %v4180 = vmul.f32 %v4175, %v4179
      %vm4181 = vweird.f32 %v4096
      %vm4182 = vweird.f32 %v4175
      %vm4183 = vmor %vm4181, %vm4182
      %v4184 = vsel %vm4183, %v4175, %v4180
      %v4185 = vrsqrt.pop %v4097
      %v4186 = vmul.f32 %v4185, %v4097
      %v4187 = vmul.f32 %v4186, %v4185
      %v4188 = vmul.f32 0.5, %v4187
      %v4189 = vsub.f32 1.5, %v4188
      %v4190 = vmul.f32 %v4185, %v4189
      %vm4191 = vweird.f32 %v4097
      %vm4192 = vweird.f32 %v4185
      %vm4193 = vmor %vm4191, %vm4192
      %v4194 = vsel %vm4193, %v4185, %v4190
      %v4195 = vrsqrt.pop %v4098
      %v4196 = vmul.f32 %v4195, %v4098
      %v4197 = vmul.f32 %v4196, %v4195
      %v4198 = vmul.f32 0.5, %v4197
      %v4199 = vsub.f32 1.5, %v4198
      %v4200 = vmul.f32 %v4195, %v4199
      %vm4201 = vweird.f32 %v4098
      %vm4202 = vweird.f32 %v4195
      %vm4203 = vmor %vm4201, %vm4202
      %v4204 = vsel %vm4203, %v4195, %v4200
      %v4205 = vrsqrt.pop %v4099
      %v4206 = vmul.f32 %v4205, %v4099
      %v4207 = vmul.f32 %v4206, %v4205
      %v4208 = vmul.f32 0.5, %v4207
      %v4209 = vsub.f32 1.5, %v4208
      %v4210 = vmul.f32 %v4205, %v4209
      %vm4211 = vweird.f32 %v4099
      %vm4212 = vweird.f32 %v4205
      %vm4213 = vmor %vm4211, %vm4212
      %v4214 = vsel %vm4213, %v4205, %v4210
      %v4215 = vrsqrt.pop %v4100
      %v4216 = vmul.f32 %v4215, %v4100
      %v4217 = vmul.f32 %v4216, %v4215
      %v4218 = vmul.f32 0.5, %v4217
      %v4219 = vsub.f32 1.5, %v4218
      %v4220 = vmul.f32 %v4215, %v4219
      %vm4221 = vweird.f32 %v4100
      %vm4222 = vweird.f32 %v4215
      %vm4223 = vmor %vm4221, %vm4222
      %v4224 = vsel %vm4223, %v4215, %v4220
      %v4225 = vrsqrt.pop %v4101
      %v4226 = vmul.f32 %v4225, %v4101
      %v4227 = vmul.f32 %v4226, %v4225
      %v4228 = vmul.f32 0.5, %v4227
      %v4229 = vsub.f32 1.5, %v4228
      %v4230 = vmul.f32 %v4225, %v4229
      %vm4231 = vweird.f32 %v4101
      %vm4232 = vweird.f32 %v4225
      %vm4233 = vmor %vm4231, %vm4232
      %v4234 = vsel %vm4233, %v4225, %v4230
      %v4235 = vrsqrt.pop %v4102
      %v4236 = vmul.f32 %v4235, %v4102
      %v4237 = vmul.f32 %v4236, %v4235
      %v4238 = vmul.f32 0.5, %v4237
      %v4239 = vsub.f32 1.5, %v4238
      %v4240 = vmul.f32 %v4235, %v4239
      %vm4241 = vweird.f32 %v4102
      %vm4242 = vweird.f32 %v4235
      %vm4243 = vmor %vm4241, %vm4242
      %v4244 = vsel %vm4243, %v4235, %v4240
      %v4245 = vrsqrt.pop %v4103
      %v4246 = vmul.f32 %v4245, %v4103
      %v4247 = vmul.f32 %v4246, %v4245
      %v4248 = vmul.f32 0.5, %v4247
      %v4249 = vsub.f32 1.5, %v4248
      %v4250 = vmul.f32 %v4245, %v4249
      %vm4251 = vweird.f32 %v4103
      %vm4252 = vweird.f32 %v4245
      %vm4253 = vmor %vm4251, %vm4252
      %v4254 = vsel %vm4253, %v4245, %v4250
      %v4255 = vrsqrt.pop %v4104
      %v4256 = vmul.f32 %v4255, %v4104
      %v4257 = vmul.f32 %v4256, %v4255
      %v4258 = vmul.f32 0.5, %v4257
      %v4259 = vsub.f32 1.5, %v4258
      %v4260 = vmul.f32 %v4255, %v4259
      %vm4261 = vweird.f32 %v4104
      %vm4262 = vweird.f32 %v4255
      %vm4263 = vmor %vm4261, %vm4262
      %v4264 = vsel %vm4263, %v4255, %v4260
      %v4265 = vmul.f32 %v3993, %v4114
      %v4266 = vmul.f32 %v3994, %v4124
      %v4267 = vmul.f32 %v3995, %v4134
      %v4268 = vmul.f32 %v3996, %v4144
      %v4269 = vmul.f32 %v3997, %v4154
      %v4270 = vmul.f32 %v3998, %v4164
      %v4271 = vmul.f32 %v3999, %v4174
      %v4272 = vmul.f32 %v4000, %v4184
      %v4273 = vmul.f32 %v4001, %v4194
      %v4274 = vmul.f32 %v4002, %v4204
      %v4275 = vmul.f32 %v4003, %v4214
      %v4276 = vmul.f32 %v4004, %v4224
      %v4277 = vmul.f32 %v4005, %v4234
      %v4278 = vmul.f32 %v4006, %v4244
      %v4279 = vmul.f32 %v4007, %v4254
      %v4280 = vmul.f32 %v4008, %v4264
      %v4282 = vperm.slane %v1195, 0
      %v4284 = vmul.f32 %v4265, %v4282
      %v4285 = vmul.f32 %v4266, %v4282
      %v4286 = vmul.f32 %v4267, %v4282
      %v4287 = vmul.f32 %v4268, %v4282
      %v4288 = vmul.f32 %v4269, %v4282
      %v4289 = vmul.f32 %v4270, %v4282
      %v4290 = vmul.f32 %v4271, %v4282
      %v4291 = vmul.f32 %v4272, %v4282
      %v4292 = vmul.f32 %v4273, %v4282
      %v4293 = vmul.f32 %v4274, %v4282
      %v4294 = vmul.f32 %v4275, %v4282
      %v4295 = vmul.f32 %v4276, %v4282
      %v4296 = vmul.f32 %v4277, %v4282
      %v4297 = vmul.f32 %v4278, %v4282
      %v4298 = vmul.f32 %v4279, %v4282
      %v4299 = vmul.f32 %v4280, %v4282
      %v4301 = vperm.slane %v1196, 0
      %v4303 = vadd.f32 %v4284, %v4301
      %v4304 = vadd.f32 %v4285, %v4301
      %v4305 = vadd.f32 %v4286, %v4301
      %v4306 = vadd.f32 %v4287, %v4301
      %v4307 = vadd.f32 %v4288, %v4301
      %v4308 = vadd.f32 %v4289, %v4301
      %v4309 = vadd.f32 %v4290, %v4301
      %v4310 = vadd.f32 %v4291, %v4301
      %v4311 = vadd.f32 %v4292, %v4301
      %v4312 = vadd.f32 %v4293, %v4301
      %v4313 = vadd.f32 %v4294, %v4301
      %v4314 = vadd.f32 %v4295, %v4301
      %v4315 = vadd.f32 %v4296, %v4301
      %v4316 = vadd.f32 %v4297, %v4301
      %v4317 = vadd.f32 %v4298, %v4301
      %v4318 = vadd.f32 %v4299, %v4301
      %4319 = vst.msk [vmem:[#allocation2] sm:$0xff] %vm1269, %v4303
      %4320 = vst.msk [vmem:[#allocation2 + $0x8] sm:$0xff] %vm1269, %v4304
      %4321 = vst.msk [vmem:[#allocation2 + $0x10] sm:$0xff] %vm1269, %v4305
      %4322 = vst.msk [vmem:[#allocation2 + $0x18] sm:$0xff] %vm1269, %v4306
      %4323 = vst.msk [vmem:[#allocation2 + $0x20] sm:$0xff] %vm1269, %v4307
      %4324 = vst.msk [vmem:[#allocation2 + $0x28] sm:$0xff] %vm1269, %v4308
      %4325 = vst.msk [vmem:[#allocation2 + $0x30] sm:$0xff] %vm1269, %v4309
      %4326 = vst.msk [vmem:[#allocation2 + $0x38] sm:$0xff] %vm1269, %v4310
      %4327 = vst.msk [vmem:[#allocation2 + $0x40] sm:$0xff] %vm1269, %v4311
      %4328 = vst.msk [vmem:[#allocation2 + $0x48] sm:$0xff] %vm1269, %v4312
      %4329 = vst.msk [vmem:[#allocation2 + $0x50] sm:$0xff] %vm1269, %v4313
      %4330 = vst.msk [vmem:[#allocation2 + $0x58] sm:$0xff] %vm1269, %v4314
      %4331 = vst.msk [vmem:[#allocation2 + $0x60] sm:$0xff] %vm1269, %v4315
      %4332 = vst.msk [vmem:[#allocation2 + $0x68] sm:$0xff] %vm1269, %v4316
      %4333 = vst.msk [vmem:[#allocation2 + $0x70] sm:$0xff] %vm1269, %v4317
      %4334 = vst.msk [vmem:[#allocation2 + $0x78] sm:$0xff] %vm1269, %v4318
      %s4335 = scalar_lea.vmem [#allocation2], 128
      %v4336 = vld [vmem:[%s4335] sm:$0xff]
      %v4337 = vld [vmem:[%s4335 + $0x8] sm:$0xff]
      %v4338 = vld [vmem:[%s4335 + $0x10] sm:$0xff]
      %v4339 = vld [vmem:[%s4335 + $0x18] sm:$0xff]
      %v4340 = vld [vmem:[%s4335 + $0x20] sm:$0xff]
      %v4341 = vld [vmem:[%s4335 + $0x28] sm:$0xff]
      %v4342 = vld [vmem:[%s4335 + $0x30] sm:$0xff]
      %v4343 = vld [vmem:[%s4335 + $0x38] sm:$0xff]
      %v4344 = vld [vmem:[%s4335 + $0x40] sm:$0xff]
      %v4345 = vld [vmem:[%s4335 + $0x48] sm:$0xff]
      %v4346 = vld [vmem:[%s4335 + $0x50] sm:$0xff]
      %v4347 = vld [vmem:[%s4335 + $0x58] sm:$0xff]
      %v4348 = vld [vmem:[%s4335 + $0x60] sm:$0xff]
      %v4349 = vld [vmem:[%s4335 + $0x68] sm:$0xff]
      %v4350 = vld [vmem:[%s4335 + $0x70] sm:$0xff]
      %v4351 = vld [vmem:[%s4335 + $0x78] sm:$0xff]
      %s4352 = scalar_lea.vmem %s1015, 128
      %v4353 = vld [vmem:[%s4352] sm:$0xff]
      %v4354 = vld [vmem:[%s4352 + $0x8] sm:$0xff]
      %v4355 = vld [vmem:[%s4352 + $0x10] sm:$0xff]
      %v4356 = vld [vmem:[%s4352 + $0x18] sm:$0xff]
      %v4357 = vld [vmem:[%s4352 + $0x20] sm:$0xff]
      %v4358 = vld [vmem:[%s4352 + $0x28] sm:$0xff]
      %v4359 = vld [vmem:[%s4352 + $0x30] sm:$0xff]
      %v4360 = vld [vmem:[%s4352 + $0x38] sm:$0xff]
      %v4361 = vld [vmem:[%s4352 + $0x40] sm:$0xff]
      %v4362 = vld [vmem:[%s4352 + $0x48] sm:$0xff]
      %v4363 = vld [vmem:[%s4352 + $0x50] sm:$0xff]
      %v4364 = vld [vmem:[%s4352 + $0x58] sm:$0xff]
      %v4365 = vld [vmem:[%s4352 + $0x60] sm:$0xff]
      %v4366 = vld [vmem:[%s4352 + $0x68] sm:$0xff]
      %v4367 = vld [vmem:[%s4352 + $0x70] sm:$0xff]
      %v4368 = vld [vmem:[%s4352 + $0x78] sm:$0xff]
      %s4369 = scalar_lea.vmem %s1020, 1
      %v4370 = vld [vmem:[%s4369] sm:$0x1]
      %v4371 = vadd.f32 %v4336, %v4353
      %v4372 = vadd.f32 %v4337, %v4354
      %v4373 = vadd.f32 %v4338, %v4355
      %v4374 = vadd.f32 %v4339, %v4356
      %v4375 = vadd.f32 %v4340, %v4357
      %v4376 = vadd.f32 %v4341, %v4358
      %v4377 = vadd.f32 %v4342, %v4359
      %v4378 = vadd.f32 %v4343, %v4360
      %v4379 = vadd.f32 %v4344, %v4361
      %v4380 = vadd.f32 %v4345, %v4362
      %v4381 = vadd.f32 %v4346, %v4363
      %v4382 = vadd.f32 %v4347, %v4364
      %v4383 = vadd.f32 %v4348, %v4365
      %v4384 = vadd.f32 %v4349, %v4366
      %v4385 = vadd.f32 %v4350, %v4367
      %v4386 = vadd.f32 %v4351, %v4368
      %v4387 = vpack.c.bf16 %v4372, %v4371
      %v4388 = vpack.c.bf16 %v4374, %v4373
      %v4389 = vpack.c.bf16 %v4376, %v4375
      %v4390 = vpack.c.bf16 %v4378, %v4377
      %v4391 = vpack.c.bf16 %v4380, %v4379
      %v4392 = vpack.c.bf16 %v4382, %v4381
      %v4393 = vpack.c.bf16 %v4384, %v4383
      %v4394 = vpack.c.bf16 %v4386, %v4385
      %v4396 = vsel %vm1269, %v4387, 0
      %v4399 = vsel %vm1269, %v4388, 0
      %v4402 = vsel %vm1269, %v4389, 0
      %v4405 = vsel %vm1269, %v4390, 0
      %v4408 = vsel %vm1269, %v4391, 0
      %v4411 = vsel %vm1269, %v4392, 0
      %v4414 = vsel %vm1269, %v4393, 0
      %v4417 = vsel %vm1269, %v4394, 0
      %4419 = vmatpush.bf16.msra.mxu0 0
      %4420 = vmatpush.bf16.msra.mxu0 0
      %4421 = vmatpush.bf16.msra.mxu0 0
      %4422 = vmatpush.bf16.msra.mxu0 0
      %4423 = vmatpush.bf16.msra.mxu0 0
      %4424 = vmatpush.bf16.msra.mxu0 0
      %4425 = vmatpush.bf16.msra.mxu0 %v1266
      %4426 = vmatpush.bf16.msra.mxu0 %v1265
      %4427 = vmatmul.bf16.gmra.mxu0 %v4396
      %v4428 = vpop.f32.mrf.mxu0
      %v4429 = vadd.f32 %v1255, %v4428
      %v4430 = vpop.f32.mrf.mxu0
      %v4431 = vadd.f32 %v1255, %v4430
      %4432 = vmatmul.bf16.gmra.mxu0 %v4399
      %v4433 = vpop.f32.mrf.mxu0
      %v4434 = vadd.f32 %v1255, %v4433
      %v4435 = vpop.f32.mrf.mxu0
      %v4436 = vadd.f32 %v1255, %v4435
      %4437 = vmatmul.bf16.gmra.mxu0 %v4402
      %v4438 = vpop.f32.mrf.mxu0
      %v4439 = vadd.f32 %v1255, %v4438
      %v4440 = vpop.f32.mrf.mxu0
      %v4441 = vadd.f32 %v1255, %v4440
      %4442 = vmatmul.bf16.gmra.mxu0 %v4405
      %v4443 = vpop.f32.mrf.mxu0
      %v4444 = vadd.f32 %v1255, %v4443
      %v4445 = vpop.f32.mrf.mxu0
      %v4446 = vadd.f32 %v1255, %v4445
      %4447 = vmatmul.bf16.gmra.mxu0 %v4408
      %v4448 = vpop.f32.mrf.mxu0
      %v4449 = vadd.f32 %v1255, %v4448
      %v4450 = vpop.f32.mrf.mxu0
      %v4451 = vadd.f32 %v1255, %v4450
      %4452 = vmatmul.bf16.gmra.mxu0 %v4411
      %v4453 = vpop.f32.mrf.mxu0
      %v4454 = vadd.f32 %v1255, %v4453
      %v4455 = vpop.f32.mrf.mxu0
      %v4456 = vadd.f32 %v1255, %v4455
      %4457 = vmatmul.bf16.gmra.mxu0 %v4414
      %v4458 = vpop.f32.mrf.mxu0
      %v4459 = vadd.f32 %v1255, %v4458
      %v4460 = vpop.f32.mrf.mxu0
      %v4461 = vadd.f32 %v1255, %v4460
      %4462 = vmatmul.bf16.gmra.mxu0 %v4417
      %v4463 = vpop.f32.mrf.mxu0
      %v4464 = vadd.f32 %v1255, %v4463
      %v4465 = vpop.f32.mrf.mxu0
      %v4466 = vadd.f32 %v1255, %v4465
      %4467 = vdwg.mxu0
      %v4468 = vpack.c.bf16 %v4337, %v4336
      %v4469 = vpack.c.bf16 %v4339, %v4338
      %v4470 = vpack.c.bf16 %v4341, %v4340
      %v4471 = vpack.c.bf16 %v4343, %v4342
      %v4472 = vpack.c.bf16 %v4345, %v4344
      %v4473 = vpack.c.bf16 %v4347, %v4346
      %v4474 = vpack.c.bf16 %v4349, %v4348
      %v4475 = vpack.c.bf16 %v4351, %v4350
      %v4477 = vsel %vm1269, %v4468, 0
      %v4480 = vsel %vm1269, %v4469, 0
      %v4483 = vsel %vm1269, %v4470, 0
      %v4486 = vsel %vm1269, %v4471, 0
      %v4489 = vsel %vm1269, %v4472, 0
      %v4492 = vsel %vm1269, %v4473, 0
      %v4495 = vsel %vm1269, %v4474, 0
      %v4498 = vsel %vm1269, %v4475, 0
      %4500 = vmatpush.bf16.msra.mxu0 0
      %4501 = vmatpush.bf16.msra.mxu0 0
      %4502 = vmatpush.bf16.msra.mxu0 0
      %4503 = vmatpush.bf16.msra.mxu0 0
      %4504 = vmatpush.bf16.msra.mxu0 0
      %4505 = vmatpush.bf16.msra.mxu0 0
      %4506 = vmatpush.bf16.msra.mxu0 %v1363
      %4507 = vmatpush.bf16.msra.mxu0 %v1362
      %4508 = vmatmul.bf16.gmra.mxu0 %v4477
      %v4509 = vpop.f32.mrf.mxu0
      %v4510 = vadd.f32 %v1352, %v4509
      %v4511 = vpop.f32.mrf.mxu0
      %v4512 = vadd.f32 %v1352, %v4511
      %4513 = vmatmul.bf16.gmra.mxu0 %v4480
      %v4514 = vpop.f32.mrf.mxu0
      %v4515 = vadd.f32 %v1352, %v4514
      %v4516 = vpop.f32.mrf.mxu0
      %v4517 = vadd.f32 %v1352, %v4516
      %4518 = vmatmul.bf16.gmra.mxu0 %v4483
      %v4519 = vpop.f32.mrf.mxu0
      %v4520 = vadd.f32 %v1352, %v4519
      %v4521 = vpop.f32.mrf.mxu0
      %v4522 = vadd.f32 %v1352, %v4521
      %4523 = vmatmul.bf16.gmra.mxu0 %v4486
      %v4524 = vpop.f32.mrf.mxu0
      %v4525 = vadd.f32 %v1352, %v4524
      %v4526 = vpop.f32.mrf.mxu0
      %v4527 = vadd.f32 %v1352, %v4526
      %4528 = vmatmul.bf16.gmra.mxu0 %v4489
      %v4529 = vpop.f32.mrf.mxu0
      %v4530 = vadd.f32 %v1352, %v4529
      %v4531 = vpop.f32.mrf.mxu0
      %v4532 = vadd.f32 %v1352, %v4531
      %4533 = vmatmul.bf16.gmra.mxu0 %v4492
      %v4534 = vpop.f32.mrf.mxu0
      %v4535 = vadd.f32 %v1352, %v4534
      %v4536 = vpop.f32.mrf.mxu0
      %v4537 = vadd.f32 %v1352, %v4536
      %4538 = vmatmul.bf16.gmra.mxu0 %v4495
      %v4539 = vpop.f32.mrf.mxu0
      %v4540 = vadd.f32 %v1352, %v4539
      %v4541 = vpop.f32.mrf.mxu0
      %v4542 = vadd.f32 %v1352, %v4541
      %4543 = vmatmul.bf16.gmra.mxu0 %v4498
      %v4544 = vpop.f32.mrf.mxu0
      %v4545 = vadd.f32 %v1352, %v4544
      %v4546 = vpop.f32.mrf.mxu0
      %v4547 = vadd.f32 %v1352, %v4546
      %4548 = vdwg.mxu0
      %v4549 = vpack.c.bf16 %v4429, %v4429
      %v4550 = vpack.c.bf16 %v4431, %v4431
      %v4551 = vpack.c.bf16 %v4434, %v4434
      %v4552 = vpack.c.bf16 %v4436, %v4436
      %v4553 = vpack.c.bf16 %v4439, %v4439
      %v4554 = vpack.c.bf16 %v4441, %v4441
      %v4555 = vpack.c.bf16 %v4444, %v4444
      %v4556 = vpack.c.bf16 %v4446, %v4446
      %v4557 = vpack.c.bf16 %v4449, %v4449
      %v4558 = vpack.c.bf16 %v4451, %v4451
      %v4559 = vpack.c.bf16 %v4454, %v4454
      %v4560 = vpack.c.bf16 %v4456, %v4456
      %v4561 = vpack.c.bf16 %v4459, %v4459
      %v4562 = vpack.c.bf16 %v4461, %v4461
      %v4563 = vpack.c.bf16 %v4464, %v4464
      %v4564 = vpack.c.bf16 %v4466, %v4466
      %4581 = vrot.lane.b32.xlu0 %v4429, 96
      %v4582 = vpop.permute.xlu0 %4581
      %4583 = vrot.lane.b32.xlu0 %v4431, 96
      %v4584 = vpop.permute.xlu0 %4583
      %4585 = vrot.lane.b32.xlu0 %v4434, 96
      %v4586 = vpop.permute.xlu0 %4585
      %4587 = vrot.lane.b32.xlu0 %v4436, 96
      %v4588 = vpop.permute.xlu0 %4587
      %4589 = vrot.lane.b32.xlu0 %v4439, 96
      %v4590 = vpop.permute.xlu0 %4589
      %4591 = vrot.lane.b32.xlu0 %v4441, 96
      %v4592 = vpop.permute.xlu0 %4591
      %4593 = vrot.lane.b32.xlu0 %v4444, 96
      %v4594 = vpop.permute.xlu0 %4593
      %4595 = vrot.lane.b32.xlu0 %v4446, 96
      %v4596 = vpop.permute.xlu0 %4595
      %4597 = vrot.lane.b32.xlu0 %v4449, 96
      %v4598 = vpop.permute.xlu0 %4597
      %4599 = vrot.lane.b32.xlu0 %v4451, 96
      %v4600 = vpop.permute.xlu0 %4599
      %4601 = vrot.lane.b32.xlu0 %v4454, 96
      %v4602 = vpop.permute.xlu0 %4601
      %4603 = vrot.lane.b32.xlu0 %v4456, 96
      %v4604 = vpop.permute.xlu0 %4603
      %4605 = vrot.lane.b32.xlu0 %v4459, 96
      %v4606 = vpop.permute.xlu0 %4605
      %4607 = vrot.lane.b32.xlu0 %v4461, 96
      %v4608 = vpop.permute.xlu0 %4607
      %4609 = vrot.lane.b32.xlu0 %v4464, 96
      %v4610 = vpop.permute.xlu0 %4609
      %4611 = vrot.lane.b32.xlu0 %v4466, 96
      %v4612 = vpop.permute.xlu0 %4611
      %4629 = vxpose.xlu0.b32.start [1/16] %v4582, 128
      %4630 = vxpose.xlu0.b32.cont [2/16] %v4584, 128
      %4631 = vxpose.xlu0.b32.cont [3/16] %v4586, 128
      %4632 = vxpose.xlu0.b32.cont [4/16] %v4588, 128
      %4633 = vxpose.xlu0.b32.cont [5/16] %v4590, 128
      %4634 = vxpose.xlu0.b32.cont [6/16] %v4592, 128
      %4635 = vxpose.xlu0.b32.cont [7/16] %v4594, 128
      %4636 = vxpose.xlu0.b32.cont [8/16] %v4596, 128
      %4637 = vxpose.xlu0.b32.cont [9/16] %v4598, 128
      %4638 = vxpose.xlu0.b32.cont [10/16] %v4600, 128
      %4639 = vxpose.xlu0.b32.cont [11/16] %v4602, 128
      %4640 = vxpose.xlu0.b32.cont [12/16] %v4604, 128
      %4641 = vxpose.xlu0.b32.cont [13/16] %v4606, 128
      %4642 = vxpose.xlu0.b32.cont [14/16] %v4608, 128
      %4643 = vxpose.xlu0.b32.cont [15/16] %v4610, 128
      %4644 = vxpose.xlu0.b32.end [16/16] %v4612, 128
      %v4645 = vpop.trf.xlu0
      %v4646 = vpop.trf.xlu0
      %v4647 = vpop.trf.xlu0
      %v4648 = vpop.trf.xlu0
      %v4649 = vpop.trf.xlu0
      %v4650 = vpop.trf.xlu0
      %v4651 = vpop.trf.xlu0
      %v4652 = vpop.trf.xlu0
      %v4653 = vpop.trf.xlu0
      %v4654 = vpop.trf.xlu0
      %v4655 = vpop.trf.xlu0
      %v4656 = vpop.trf.xlu0
      %v4657 = vpop.trf.xlu0
      %v4658 = vpop.trf.xlu0
      %v4659 = vpop.trf.xlu0
      %v4660 = vpop.trf.xlu0
      %v4661 = vpack.c.bf16 %v4645, %v4645
      %v4662 = vpack.c.bf16 %v4646, %v4646
      %v4663 = vpack.c.bf16 %v4647, %v4647
      %v4664 = vpack.c.bf16 %v4648, %v4648
      %v4665 = vpack.c.bf16 %v4510, %v4510
      %v4666 = vpack.c.bf16 %v4512, %v4512
      %v4667 = vpack.c.bf16 %v4515, %v4515
      %v4668 = vpack.c.bf16 %v4517, %v4517
      %v4669 = vpack.c.bf16 %v4520, %v4520
      %v4670 = vpack.c.bf16 %v4522, %v4522
      %v4671 = vpack.c.bf16 %v4525, %v4525
      %v4672 = vpack.c.bf16 %v4527, %v4527
      %v4673 = vpack.c.bf16 %v4530, %v4530
      %v4674 = vpack.c.bf16 %v4532, %v4532
      %v4675 = vpack.c.bf16 %v4535, %v4535
      %v4676 = vpack.c.bf16 %v4537, %v4537
      %v4677 = vpack.c.bf16 %v4540, %v4540
      %v4678 = vpack.c.bf16 %v4542, %v4542
      %v4679 = vpack.c.bf16 %v4545, %v4545
      %v4680 = vpack.c.bf16 %v4547, %v4547
      %v4682 = vperm.slane %v4370, 0
      %v4700 = vunpack.c.l.b16 %v4549
      %v4701 = vunpack.c.l.b16 %v4550
      %v4702 = vunpack.c.l.b16 %v4551
      %v4703 = vunpack.c.l.b16 %v4552
      %v4704 = vunpack.c.l.b16 %v4553
      %v4705 = vunpack.c.l.b16 %v4554
      %v4706 = vunpack.c.l.b16 %v4555
      %v4707 = vunpack.c.l.b16 %v4556
      %v4708 = vunpack.c.l.b16 %v4557
      %v4709 = vunpack.c.l.b16 %v4558
      %v4710 = vunpack.c.l.b16 %v4559
      %v4711 = vunpack.c.l.b16 %v4560
      %v4712 = vunpack.c.l.b16 %v4561
      %v4713 = vunpack.c.l.b16 %v4562
      %v4714 = vunpack.c.l.b16 %v4563
      %v4715 = vunpack.c.l.b16 %v4564
      %v4716 = vpack.c.b16 %v4701, %v4700
      %v4717 = vpack.c.b16 %v4703, %v4702
      %v4718 = vpack.c.b16 %v4705, %v4704
      %v4719 = vpack.c.b16 %v4707, %v4706
      %v4720 = vpack.c.b16 %v4709, %v4708
      %v4721 = vpack.c.b16 %v4711, %v4710
      %v4722 = vpack.c.b16 %v4713, %v4712
      %v4723 = vpack.c.b16 %v4715, %v4714
      %v4725 = vsel %vm1614, %v4716, 0
      %v4728 = vsel %vm1614, %v4717, 0
      %v4731 = vsel %vm1614, %v4718, 0
      %v4734 = vsel %vm1614, %v4719, 0
      %v4737 = vsel %vm1614, %v4720, 0
      %v4740 = vsel %vm1614, %v4721, 0
      %v4743 = vsel %vm1614, %v4722, 0
      %v4746 = vsel %vm1614, %v4723, 0
      %v4749 = vsel %vm1639, %v4661, 0
      %4751 = vmatpush.bf16.msra.mxu0 0
      %4752 = vmatpush.bf16.msra.mxu0 0
      %4753 = vmatpush.bf16.msra.mxu0 0
      %4754 = vmatpush.bf16.msra.mxu0 0
      %4755 = vmatpush.bf16.msra.mxu0 0
      %4756 = vmatpush.bf16.msra.mxu0 0
      %4757 = vmatpush.bf16.msra.mxu0 0
      %4758 = vmatpush.bf16.msra.mxu0 %v4749
      %4759 = vmatmul.bf16.gmra.mxu0 %v4725
      %v4760 = vpop.f32.mrf.mxu0
      %v4761 = vadd.f32 %v4682, %v4760
      %v4762 = vpop.f32.mrf.mxu0
      %v4763 = vadd.f32 %v4682, %v4762
      %4764 = vmatmul.bf16.gmra.mxu0 %v4728
      %v4765 = vpop.f32.mrf.mxu0
      %v4766 = vadd.f32 %v4682, %v4765
      %v4767 = vpop.f32.mrf.mxu0
      %v4768 = vadd.f32 %v4682, %v4767
      %4769 = vmatmul.bf16.gmra.mxu0 %v4731
      %v4770 = vpop.f32.mrf.mxu0
      %v4771 = vadd.f32 %v4682, %v4770
      %v4772 = vpop.f32.mrf.mxu0
      %v4773 = vadd.f32 %v4682, %v4772
      %4774 = vmatmul.bf16.gmra.mxu0 %v4734
      %v4775 = vpop.f32.mrf.mxu0
      %v4776 = vadd.f32 %v4682, %v4775
      %v4777 = vpop.f32.mrf.mxu0
      %v4778 = vadd.f32 %v4682, %v4777
      %4779 = vmatmul.bf16.gmra.mxu0 %v4737
      %v4780 = vpop.f32.mrf.mxu0
      %v4781 = vadd.f32 %v4682, %v4780
      %v4782 = vpop.f32.mrf.mxu0
      %v4783 = vadd.f32 %v4682, %v4782
      %4784 = vmatmul.bf16.gmra.mxu0 %v4740
      %v4785 = vpop.f32.mrf.mxu0
      %v4786 = vadd.f32 %v4682, %v4785
      %v4787 = vpop.f32.mrf.mxu0
      %v4788 = vadd.f32 %v4682, %v4787
      %4789 = vmatmul.bf16.gmra.mxu0 %v4743
      %v4790 = vpop.f32.mrf.mxu0
      %v4791 = vadd.f32 %v4682, %v4790
      %v4792 = vpop.f32.mrf.mxu0
      %v4793 = vadd.f32 %v4682, %v4792
      %4794 = vmatmul.bf16.gmra.mxu0 %v4746
      %v4795 = vpop.f32.mrf.mxu0
      %v4796 = vadd.f32 %v4682, %v4795
      %v4797 = vpop.f32.mrf.mxu0
      %v4798 = vadd.f32 %v4682, %v4797
      %4799 = vdwg.mxu0
      %4800 = vmax.xlane.f32.xlu0 %v4761
      %v4801 = vpop.xlane.xlu0 %4800
      %4802 = vmax.xlane.f32.xlu0 %v4763
      %v4803 = vpop.xlane.xlu0 %4802
      %4804 = vmax.xlane.f32.xlu0 %v4766
      %v4805 = vpop.xlane.xlu0 %4804
      %4806 = vmax.xlane.f32.xlu0 %v4768
      %v4807 = vpop.xlane.xlu0 %4806
      %4808 = vmax.xlane.f32.xlu0 %v4771
      %v4809 = vpop.xlane.xlu0 %4808
      %4810 = vmax.xlane.f32.xlu0 %v4773
      %v4811 = vpop.xlane.xlu0 %4810
      %4812 = vmax.xlane.f32.xlu0 %v4776
      %v4813 = vpop.xlane.xlu0 %4812
      %4814 = vmax.xlane.f32.xlu0 %v4778
      %v4815 = vpop.xlane.xlu0 %4814
      %4816 = vmax.xlane.f32.xlu0 %v4781
      %v4817 = vpop.xlane.xlu0 %4816
      %4818 = vmax.xlane.f32.xlu0 %v4783
      %v4819 = vpop.xlane.xlu0 %4818
      %4820 = vmax.xlane.f32.xlu0 %v4786
      %v4821 = vpop.xlane.xlu0 %4820
      %4822 = vmax.xlane.f32.xlu0 %v4788
      %v4823 = vpop.xlane.xlu0 %4822
      %4824 = vmax.xlane.f32.xlu0 %v4791
      %v4825 = vpop.xlane.xlu0 %4824
      %4826 = vmax.xlane.f32.xlu0 %v4793
      %v4827 = vpop.xlane.xlu0 %4826
      %4828 = vmax.xlane.f32.xlu0 %v4796
      %v4829 = vpop.xlane.xlu0 %4828
      %4830 = vmax.xlane.f32.xlu0 %v4798
      %v4831 = vpop.xlane.xlu0 %4830
      %v4832 = vsub.f32 %v4761, %v4801
      %v4833 = vsub.f32 %v4763, %v4803
      %v4834 = vsub.f32 %v4766, %v4805
      %v4835 = vsub.f32 %v4768, %v4807
      %v4836 = vsub.f32 %v4771, %v4809
      %v4837 = vsub.f32 %v4773, %v4811
      %v4838 = vsub.f32 %v4776, %v4813
      %v4839 = vsub.f32 %v4778, %v4815
      %v4840 = vsub.f32 %v4781, %v4817
      %v4841 = vsub.f32 %v4783, %v4819
      %v4842 = vsub.f32 %v4786, %v4821
      %v4843 = vsub.f32 %v4788, %v4823
      %v4844 = vsub.f32 %v4791, %v4825
      %v4845 = vsub.f32 %v4793, %v4827
      %v4846 = vsub.f32 %v4796, %v4829
      %v4847 = vsub.f32 %v4798, %v4831
      %v4848 = vmul.f32 %v4832, 1.442695
      %v4849 = vpow.pop %v4848
      %v4850 = vmul.f32 %v4833, 1.442695
      %v4851 = vpow.pop %v4850
      %v4852 = vmul.f32 %v4834, 1.442695
      %v4853 = vpow.pop %v4852
      %v4854 = vmul.f32 %v4835, 1.442695
      %v4855 = vpow.pop %v4854
      %v4856 = vmul.f32 %v4836, 1.442695
      %v4857 = vpow.pop %v4856
      %v4858 = vmul.f32 %v4837, 1.442695
      %v4859 = vpow.pop %v4858
      %v4860 = vmul.f32 %v4838, 1.442695
      %v4861 = vpow.pop %v4860
      %v4862 = vmul.f32 %v4839, 1.442695
      %v4863 = vpow.pop %v4862
      %v4864 = vmul.f32 %v4840, 1.442695
      %v4865 = vpow.pop %v4864
      %v4866 = vmul.f32 %v4841, 1.442695
      %v4867 = vpow.pop %v4866
      %v4868 = vmul.f32 %v4842, 1.442695
      %v4869 = vpow.pop %v4868
      %v4870 = vmul.f32 %v4843, 1.442695
      %v4871 = vpow.pop %v4870
      %v4872 = vmul.f32 %v4844, 1.442695
      %v4873 = vpow.pop %v4872
      %v4874 = vmul.f32 %v4845, 1.442695
      %v4875 = vpow.pop %v4874
      %v4876 = vmul.f32 %v4846, 1.442695
      %v4877 = vpow.pop %v4876
      %v4878 = vmul.f32 %v4847, 1.442695
      %v4879 = vpow.pop %v4878
      %4880 = vadd.xlane.f32.xlu0 %v4849
      %v4881 = vpop.xlane.xlu0 %4880
      %4882 = vadd.xlane.f32.xlu0 %v4851
      %v4883 = vpop.xlane.xlu0 %4882
      %4884 = vadd.xlane.f32.xlu0 %v4853
      %v4885 = vpop.xlane.xlu0 %4884
      %4886 = vadd.xlane.f32.xlu0 %v4855
      %v4887 = vpop.xlane.xlu0 %4886
      %4888 = vadd.xlane.f32.xlu0 %v4857
      %v4889 = vpop.xlane.xlu0 %4888
      %4890 = vadd.xlane.f32.xlu0 %v4859
      %v4891 = vpop.xlane.xlu0 %4890
      %4892 = vadd.xlane.f32.xlu0 %v4861
      %v4893 = vpop.xlane.xlu0 %4892
      %4894 = vadd.xlane.f32.xlu0 %v4863
      %v4895 = vpop.xlane.xlu0 %4894
      %4896 = vadd.xlane.f32.xlu0 %v4865
      %v4897 = vpop.xlane.xlu0 %4896
      %4898 = vadd.xlane.f32.xlu0 %v4867
      %v4899 = vpop.xlane.xlu0 %4898
      %4900 = vadd.xlane.f32.xlu0 %v4869
      %v4901 = vpop.xlane.xlu0 %4900
      %4902 = vadd.xlane.f32.xlu0 %v4871
      %v4903 = vpop.xlane.xlu0 %4902
      %4904 = vadd.xlane.f32.xlu0 %v4873
      %v4905 = vpop.xlane.xlu0 %4904
      %4906 = vadd.xlane.f32.xlu0 %v4875
      %v4907 = vpop.xlane.xlu0 %4906
      %4908 = vadd.xlane.f32.xlu0 %v4877
      %v4909 = vpop.xlane.xlu0 %4908
      %4910 = vadd.xlane.f32.xlu0 %v4879
      %v4911 = vpop.xlane.xlu0 %4910
      %v4912 = vrcp.pop %v4881
      %v4913 = vrcp.pop %v4883
      %v4914 = vrcp.pop %v4885
      %v4915 = vrcp.pop %v4887
      %v4916 = vrcp.pop %v4889
      %v4917 = vrcp.pop %v4891
      %v4918 = vrcp.pop %v4893
      %v4919 = vrcp.pop %v4895
      %v4920 = vrcp.pop %v4897
      %v4921 = vrcp.pop %v4899
      %v4922 = vrcp.pop %v4901
      %v4923 = vrcp.pop %v4903
      %v4924 = vrcp.pop %v4905
      %v4925 = vrcp.pop %v4907
      %v4926 = vrcp.pop %v4909
      %v4927 = vrcp.pop %v4911
      %v4928 = vmul.f32 %v4849, %v4912
      %v4929 = vmul.f32 %v4851, %v4913
      %v4930 = vmul.f32 %v4853, %v4914
      %v4931 = vmul.f32 %v4855, %v4915
      %v4932 = vmul.f32 %v4857, %v4916
      %v4933 = vmul.f32 %v4859, %v4917
      %v4934 = vmul.f32 %v4861, %v4918
      %v4935 = vmul.f32 %v4863, %v4919
      %v4936 = vmul.f32 %v4865, %v4920
      %v4937 = vmul.f32 %v4867, %v4921
      %v4938 = vmul.f32 %v4869, %v4922
      %v4939 = vmul.f32 %v4871, %v4923
      %v4940 = vmul.f32 %v4873, %v4924
      %v4941 = vmul.f32 %v4875, %v4925
      %v4942 = vmul.f32 %v4877, %v4926
      %v4943 = vmul.f32 %v4879, %v4927
      %v4944 = vpack.c.bf16 %v4929, %v4928
      %v4945 = vpack.c.bf16 %v4931, %v4930
      %v4946 = vpack.c.bf16 %v4933, %v4932
      %v4947 = vpack.c.bf16 %v4935, %v4934
      %v4948 = vpack.c.bf16 %v4937, %v4936
      %v4949 = vpack.c.bf16 %v4939, %v4938
      %v4950 = vpack.c.bf16 %v4941, %v4940
      %v4951 = vpack.c.bf16 %v4943, %v4942
      %v4968 = vunpack.c.l.b16 %v4665
      %v4969 = vunpack.c.l.b16 %v4666
      %v4970 = vunpack.c.l.b16 %v4667
      %v4971 = vunpack.c.l.b16 %v4668
      %v4972 = vunpack.c.l.b16 %v4669
      %v4973 = vunpack.c.l.b16 %v4670
      %v4974 = vunpack.c.l.b16 %v4671
      %v4975 = vunpack.c.l.b16 %v4672
      %v4976 = vunpack.c.l.b16 %v4673
      %v4977 = vunpack.c.l.b16 %v4674
      %v4978 = vunpack.c.l.b16 %v4675
      %v4979 = vunpack.c.l.b16 %v4676
      %v4980 = vunpack.c.l.b16 %v4677
      %v4981 = vunpack.c.l.b16 %v4678
      %v4982 = vunpack.c.l.b16 %v4679
      %v4983 = vunpack.c.l.b16 %v4680
      %v4984 = vpack.c.b16 %v4969, %v4968
      %v4985 = vpack.c.b16 %v4971, %v4970
      %v4986 = vpack.c.b16 %v4973, %v4972
      %v4987 = vpack.c.b16 %v4975, %v4974
      %v4988 = vpack.c.b16 %v4977, %v4976
      %v4989 = vpack.c.b16 %v4979, %v4978
      %v4990 = vpack.c.b16 %v4981, %v4980
      %v4991 = vpack.c.b16 %v4983, %v4982
      %5000 = vmatpush.bf16.msra.mxu0 %v4991
      %5001 = vmatpush.bf16.msra.mxu0 %v4990
      %5002 = vmatpush.bf16.msra.mxu0 %v4989
      %5003 = vmatpush.bf16.msra.mxu0 %v4988
      %5004 = vmatpush.bf16.msra.mxu0 %v4987
      %5005 = vmatpush.bf16.msra.mxu0 %v4986
      %5006 = vmatpush.bf16.msra.mxu0 %v4985
      %5007 = vmatpush.bf16.msra.mxu0 %v4984
      %5008 = vmatmul.bf16.gmra.mxu0 %v4944
      %v5009 = vpop.f32.mrf.mxu0
      %v5010 = vadd.f32 0.0, %v5009
      %v5011 = vpop.f32.mrf.mxu0
      %v5012 = vadd.f32 0.0, %v5011
      %5013 = vmatmul.bf16.gmra.mxu0 %v4945
      %v5014 = vpop.f32.mrf.mxu0
      %v5015 = vadd.f32 0.0, %v5014
      %v5016 = vpop.f32.mrf.mxu0
      %v5017 = vadd.f32 0.0, %v5016
      %5018 = vmatmul.bf16.gmra.mxu0 %v4946
      %v5019 = vpop.f32.mrf.mxu0
      %v5020 = vadd.f32 0.0, %v5019
      %v5021 = vpop.f32.mrf.mxu0
      %v5022 = vadd.f32 0.0, %v5021
      %5023 = vmatmul.bf16.gmra.mxu0 %v4947
      %v5024 = vpop.f32.mrf.mxu0
      %v5025 = vadd.f32 0.0, %v5024
      %v5026 = vpop.f32.mrf.mxu0
      %v5027 = vadd.f32 0.0, %v5026
      %5028 = vmatmul.bf16.gmra.mxu0 %v4948
      %v5029 = vpop.f32.mrf.mxu0
      %v5030 = vadd.f32 0.0, %v5029
      %v5031 = vpop.f32.mrf.mxu0
      %v5032 = vadd.f32 0.0, %v5031
      %5033 = vmatmul.bf16.gmra.mxu0 %v4949
      %v5034 = vpop.f32.mrf.mxu0
      %v5035 = vadd.f32 0.0, %v5034
      %v5036 = vpop.f32.mrf.mxu0
      %v5037 = vadd.f32 0.0, %v5036
      %5038 = vmatmul.bf16.gmra.mxu0 %v4950
      %v5039 = vpop.f32.mrf.mxu0
      %v5040 = vadd.f32 0.0, %v5039
      %v5041 = vpop.f32.mrf.mxu0
      %v5042 = vadd.f32 0.0, %v5041
      %5043 = vmatmul.bf16.gmra.mxu0 %v4951
      %v5044 = vpop.f32.mrf.mxu0
      %v5045 = vadd.f32 0.0, %v5044
      %v5046 = vpop.f32.mrf.mxu0
      %v5047 = vadd.f32 0.0, %v5046
      %5048 = vdwg.mxu0
      %v5049 = vpack.c.bf16 %v5012, %v5010
      %v5050 = vpack.c.bf16 %v5017, %v5015
      %v5051 = vpack.c.bf16 %v5022, %v5020
      %v5052 = vpack.c.bf16 %v5027, %v5025
      %v5053 = vpack.c.bf16 %v5032, %v5030
      %v5054 = vpack.c.bf16 %v5037, %v5035
      %v5055 = vpack.c.bf16 %v5042, %v5040
      %v5056 = vpack.c.bf16 %v5047, %v5045
      %5057 = vrot.lane.b32.xlu0 %v4716, 120
      %v5058 = vpop.permute.xlu0 %5057
      %5059 = vrot.lane.b32.xlu0 %v4717, 120
      %v5060 = vpop.permute.xlu0 %5059
      %5061 = vrot.lane.b32.xlu0 %v4718, 120
      %v5062 = vpop.permute.xlu0 %5061
      %5063 = vrot.lane.b32.xlu0 %v4719, 120
      %v5064 = vpop.permute.xlu0 %5063
      %5065 = vrot.lane.b32.xlu0 %v4720, 120
      %v5066 = vpop.permute.xlu0 %5065
      %5067 = vrot.lane.b32.xlu0 %v4721, 120
      %v5068 = vpop.permute.xlu0 %5067
      %5069 = vrot.lane.b32.xlu0 %v4722, 120
      %v5070 = vpop.permute.xlu0 %5069
      %5071 = vrot.lane.b32.xlu0 %v4723, 120
      %v5072 = vpop.permute.xlu0 %5071
      %v5074 = vsel %vm1614, %v5058, 0
      %v5077 = vsel %vm1614, %v5060, 0
      %v5080 = vsel %vm1614, %v5062, 0
      %v5083 = vsel %vm1614, %v5064, 0
      %v5086 = vsel %vm1614, %v5066, 0
      %v5089 = vsel %vm1614, %v5068, 0
      %v5092 = vsel %vm1614, %v5070, 0
      %v5095 = vsel %vm1614, %v5072, 0
      %v5098 = vsel %vm1639, %v4662, 0
      %5100 = vmatpush.bf16.msra.mxu0 0
      %5101 = vmatpush.bf16.msra.mxu0 0
      %5102 = vmatpush.bf16.msra.mxu0 0
      %5103 = vmatpush.bf16.msra.mxu0 0
      %5104 = vmatpush.bf16.msra.mxu0 0
      %5105 = vmatpush.bf16.msra.mxu0 0
      %5106 = vmatpush.bf16.msra.mxu0 0
      %5107 = vmatpush.bf16.msra.mxu0 %v5098
      %5108 = vmatmul.bf16.gmra.mxu0 %v5074
      %v5109 = vpop.f32.mrf.mxu0
      %v5110 = vadd.f32 %v4682, %v5109
      %v5111 = vpop.f32.mrf.mxu0
      %v5112 = vadd.f32 %v4682, %v5111
      %5113 = vmatmul.bf16.gmra.mxu0 %v5077
      %v5114 = vpop.f32.mrf.mxu0
      %v5115 = vadd.f32 %v4682, %v5114
      %v5116 = vpop.f32.mrf.mxu0
      %v5117 = vadd.f32 %v4682, %v5116
      %5118 = vmatmul.bf16.gmra.mxu0 %v5080
      %v5119 = vpop.f32.mrf.mxu0
      %v5120 = vadd.f32 %v4682, %v5119
      %v5121 = vpop.f32.mrf.mxu0
      %v5122 = vadd.f32 %v4682, %v5121
      %5123 = vmatmul.bf16.gmra.mxu0 %v5083
      %v5124 = vpop.f32.mrf.mxu0
      %v5125 = vadd.f32 %v4682, %v5124
      %v5126 = vpop.f32.mrf.mxu0
      %v5127 = vadd.f32 %v4682, %v5126
      %5128 = vmatmul.bf16.gmra.mxu0 %v5086
      %v5129 = vpop.f32.mrf.mxu0
      %v5130 = vadd.f32 %v4682, %v5129
      %v5131 = vpop.f32.mrf.mxu0
      %v5132 = vadd.f32 %v4682, %v5131
      %5133 = vmatmul.bf16.gmra.mxu0 %v5089
      %v5134 = vpop.f32.mrf.mxu0
      %v5135 = vadd.f32 %v4682, %v5134
      %v5136 = vpop.f32.mrf.mxu0
      %v5137 = vadd.f32 %v4682, %v5136
      %5138 = vmatmul.bf16.gmra.mxu0 %v5092
      %v5139 = vpop.f32.mrf.mxu0
      %v5140 = vadd.f32 %v4682, %v5139
      %v5141 = vpop.f32.mrf.mxu0
      %v5142 = vadd.f32 %v4682, %v5141
      %5143 = vmatmul.bf16.gmra.mxu0 %v5095
      %v5144 = vpop.f32.mrf.mxu0
      %v5145 = vadd.f32 %v4682, %v5144
      %v5146 = vpop.f32.mrf.mxu0
      %v5147 = vadd.f32 %v4682, %v5146
      %5148 = vdwg.mxu0
      %5149 = vmax.xlane.f32.xlu0 %v5110
      %v5150 = vpop.xlane.xlu0 %5149
      %5151 = vmax.xlane.f32.xlu0 %v5112
      %v5152 = vpop.xlane.xlu0 %5151
      %5153 = vmax.xlane.f32.xlu0 %v5115
      %v5154 = vpop.xlane.xlu0 %5153
      %5155 = vmax.xlane.f32.xlu0 %v5117
      %v5156 = vpop.xlane.xlu0 %5155
      %5157 = vmax.xlane.f32.xlu0 %v5120
      %v5158 = vpop.xlane.xlu0 %5157
      %5159 = vmax.xlane.f32.xlu0 %v5122
      %v5160 = vpop.xlane.xlu0 %5159
      %5161 = vmax.xlane.f32.xlu0 %v5125
      %v5162 = vpop.xlane.xlu0 %5161
      %5163 = vmax.xlane.f32.xlu0 %v5127
      %v5164 = vpop.xlane.xlu0 %5163
      %5165 = vmax.xlane.f32.xlu0 %v5130
      %v5166 = vpop.xlane.xlu0 %5165
      %5167 = vmax.xlane.f32.xlu0 %v5132
      %v5168 = vpop.xlane.xlu0 %5167
      %5169 = vmax.xlane.f32.xlu0 %v5135
      %v5170 = vpop.xlane.xlu0 %5169
      %5171 = vmax.xlane.f32.xlu0 %v5137
      %v5172 = vpop.xlane.xlu0 %5171
      %5173 = vmax.xlane.f32.xlu0 %v5140
      %v5174 = vpop.xlane.xlu0 %5173
      %5175 = vmax.xlane.f32.xlu0 %v5142
      %v5176 = vpop.xlane.xlu0 %5175
      %5177 = vmax.xlane.f32.xlu0 %v5145
      %v5178 = vpop.xlane.xlu0 %5177
      %5179 = vmax.xlane.f32.xlu0 %v5147
      %v5180 = vpop.xlane.xlu0 %5179
      %v5181 = vsub.f32 %v5110, %v5150
      %v5182 = vsub.f32 %v5112, %v5152
      %v5183 = vsub.f32 %v5115, %v5154
      %v5184 = vsub.f32 %v5117, %v5156
      %v5185 = vsub.f32 %v5120, %v5158
      %v5186 = vsub.f32 %v5122, %v5160
      %v5187 = vsub.f32 %v5125, %v5162
      %v5188 = vsub.f32 %v5127, %v5164
      %v5189 = vsub.f32 %v5130, %v5166
      %v5190 = vsub.f32 %v5132, %v5168
      %v5191 = vsub.f32 %v5135, %v5170
      %v5192 = vsub.f32 %v5137, %v5172
      %v5193 = vsub.f32 %v5140, %v5174
      %v5194 = vsub.f32 %v5142, %v5176
      %v5195 = vsub.f32 %v5145, %v5178
      %v5196 = vsub.f32 %v5147, %v5180
      %v5197 = vmul.f32 %v5181, 1.442695
      %v5198 = vpow.pop %v5197
      %v5199 = vmul.f32 %v5182, 1.442695
      %v5200 = vpow.pop %v5199
      %v5201 = vmul.f32 %v5183, 1.442695
      %v5202 = vpow.pop %v5201
      %v5203 = vmul.f32 %v5184, 1.442695
      %v5204 = vpow.pop %v5203
      %v5205 = vmul.f32 %v5185, 1.442695
      %v5206 = vpow.pop %v5205
      %v5207 = vmul.f32 %v5186, 1.442695
      %v5208 = vpow.pop %v5207
      %v5209 = vmul.f32 %v5187, 1.442695
      %v5210 = vpow.pop %v5209
      %v5211 = vmul.f32 %v5188, 1.442695
      %v5212 = vpow.pop %v5211
      %v5213 = vmul.f32 %v5189, 1.442695
      %v5214 = vpow.pop %v5213
      %v5215 = vmul.f32 %v5190, 1.442695
      %v5216 = vpow.pop %v5215
      %v5217 = vmul.f32 %v5191, 1.442695
      %v5218 = vpow.pop %v5217
      %v5219 = vmul.f32 %v5192, 1.442695
      %v5220 = vpow.pop %v5219
      %v5221 = vmul.f32 %v5193, 1.442695
      %v5222 = vpow.pop %v5221
      %v5223 = vmul.f32 %v5194, 1.442695
      %v5224 = vpow.pop %v5223
      %v5225 = vmul.f32 %v5195, 1.442695
      %v5226 = vpow.pop %v5225
      %v5227 = vmul.f32 %v5196, 1.442695
      %v5228 = vpow.pop %v5227
      %5229 = vadd.xlane.f32.xlu0 %v5198
      %v5230 = vpop.xlane.xlu0 %5229
      %5231 = vadd.xlane.f32.xlu0 %v5200
      %v5232 = vpop.xlane.xlu0 %5231
      %5233 = vadd.xlane.f32.xlu0 %v5202
      %v5234 = vpop.xlane.xlu0 %5233
      %5235 = vadd.xlane.f32.xlu0 %v5204
      %v5236 = vpop.xlane.xlu0 %5235
      %5237 = vadd.xlane.f32.xlu0 %v5206
      %v5238 = vpop.xlane.xlu0 %5237
      %5239 = vadd.xlane.f32.xlu0 %v5208
      %v5240 = vpop.xlane.xlu0 %5239
      %5241 = vadd.xlane.f32.xlu0 %v5210
      %v5242 = vpop.xlane.xlu0 %5241
      %5243 = vadd.xlane.f32.xlu0 %v5212
      %v5244 = vpop.xlane.xlu0 %5243
      %5245 = vadd.xlane.f32.xlu0 %v5214
      %v5246 = vpop.xlane.xlu0 %5245
      %5247 = vadd.xlane.f32.xlu0 %v5216
      %v5248 = vpop.xlane.xlu0 %5247
      %5249 = vadd.xlane.f32.xlu0 %v5218
      %v5250 = vpop.xlane.xlu0 %5249
      %5251 = vadd.xlane.f32.xlu0 %v5220
      %v5252 = vpop.xlane.xlu0 %5251
      %5253 = vadd.xlane.f32.xlu0 %v5222
      %v5254 = vpop.xlane.xlu0 %5253
      %5255 = vadd.xlane.f32.xlu0 %v5224
      %v5256 = vpop.xlane.xlu0 %5255
      %5257 = vadd.xlane.f32.xlu0 %v5226
      %v5258 = vpop.xlane.xlu0 %5257
      %5259 = vadd.xlane.f32.xlu0 %v5228
      %v5260 = vpop.xlane.xlu0 %5259
      %v5261 = vrcp.pop %v5230
      %v5262 = vrcp.pop %v5232
      %v5263 = vrcp.pop %v5234
      %v5264 = vrcp.pop %v5236
      %v5265 = vrcp.pop %v5238
      %v5266 = vrcp.pop %v5240
      %v5267 = vrcp.pop %v5242
      %v5268 = vrcp.pop %v5244
      %v5269 = vrcp.pop %v5246
      %v5270 = vrcp.pop %v5248
      %v5271 = vrcp.pop %v5250
      %v5272 = vrcp.pop %v5252
      %v5273 = vrcp.pop %v5254
      %v5274 = vrcp.pop %v5256
      %v5275 = vrcp.pop %v5258
      %v5276 = vrcp.pop %v5260
      %v5277 = vmul.f32 %v5198, %v5261
      %v5278 = vmul.f32 %v5200, %v5262
      %v5279 = vmul.f32 %v5202, %v5263
      %v5280 = vmul.f32 %v5204, %v5264
      %v5281 = vmul.f32 %v5206, %v5265
      %v5282 = vmul.f32 %v5208, %v5266
      %v5283 = vmul.f32 %v5210, %v5267
      %v5284 = vmul.f32 %v5212, %v5268
      %v5285 = vmul.f32 %v5214, %v5269
      %v5286 = vmul.f32 %v5216, %v5270
      %v5287 = vmul.f32 %v5218, %v5271
      %v5288 = vmul.f32 %v5220, %v5272
      %v5289 = vmul.f32 %v5222, %v5273
      %v5290 = vmul.f32 %v5224, %v5274
      %v5291 = vmul.f32 %v5226, %v5275
      %v5292 = vmul.f32 %v5228, %v5276
      %v5293 = vpack.c.bf16 %v5278, %v5277
      %v5294 = vpack.c.bf16 %v5280, %v5279
      %v5295 = vpack.c.bf16 %v5282, %v5281
      %v5296 = vpack.c.bf16 %v5284, %v5283
      %v5297 = vpack.c.bf16 %v5286, %v5285
      %v5298 = vpack.c.bf16 %v5288, %v5287
      %v5299 = vpack.c.bf16 %v5290, %v5289
      %v5300 = vpack.c.bf16 %v5292, %v5291
      %5301 = vrot.lane.b32.xlu0 %v4984, 120
      %v5302 = vpop.permute.xlu0 %5301
      %5303 = vrot.lane.b32.xlu0 %v4985, 120
      %v5304 = vpop.permute.xlu0 %5303
      %5305 = vrot.lane.b32.xlu0 %v4986, 120
      %v5306 = vpop.permute.xlu0 %5305
      %5307 = vrot.lane.b32.xlu0 %v4987, 120
      %v5308 = vpop.permute.xlu0 %5307
      %5309 = vrot.lane.b32.xlu0 %v4988, 120
      %v5310 = vpop.permute.xlu0 %5309
      %5311 = vrot.lane.b32.xlu0 %v4989, 120
      %v5312 = vpop.permute.xlu0 %5311
      %5313 = vrot.lane.b32.xlu0 %v4990, 120
      %v5314 = vpop.permute.xlu0 %5313
      %5315 = vrot.lane.b32.xlu0 %v4991, 120
      %v5316 = vpop.permute.xlu0 %5315
      %5325 = vmatpush.bf16.msra.mxu0 %v5316
      %5326 = vmatpush.bf16.msra.mxu0 %v5314
      %5327 = vmatpush.bf16.msra.mxu0 %v5312
      %5328 = vmatpush.bf16.msra.mxu0 %v5310
      %5329 = vmatpush.bf16.msra.mxu0 %v5308
      %5330 = vmatpush.bf16.msra.mxu0 %v5306
      %5331 = vmatpush.bf16.msra.mxu0 %v5304
      %5332 = vmatpush.bf16.msra.mxu0 %v5302
      %5333 = vmatmul.bf16.gmra.mxu0 %v5293
      %v5334 = vpop.f32.mrf.mxu0
      %v5335 = vadd.f32 0.0, %v5334
      %v5336 = vpop.f32.mrf.mxu0
      %v5337 = vadd.f32 0.0, %v5336
      %5338 = vmatmul.bf16.gmra.mxu0 %v5294
      %v5339 = vpop.f32.mrf.mxu0
      %v5340 = vadd.f32 0.0, %v5339
      %v5341 = vpop.f32.mrf.mxu0
      %v5342 = vadd.f32 0.0, %v5341
      %5343 = vmatmul.bf16.gmra.mxu0 %v5295
      %v5344 = vpop.f32.mrf.mxu0
      %v5345 = vadd.f32 0.0, %v5344
      %v5346 = vpop.f32.mrf.mxu0
      %v5347 = vadd.f32 0.0, %v5346
      %5348 = vmatmul.bf16.gmra.mxu0 %v5296
      %v5349 = vpop.f32.mrf.mxu0
      %v5350 = vadd.f32 0.0, %v5349
      %v5351 = vpop.f32.mrf.mxu0
      %v5352 = vadd.f32 0.0, %v5351
      %5353 = vmatmul.bf16.gmra.mxu0 %v5297
      %v5354 = vpop.f32.mrf.mxu0
      %v5355 = vadd.f32 0.0, %v5354
      %v5356 = vpop.f32.mrf.mxu0
      %v5357 = vadd.f32 0.0, %v5356
      %5358 = vmatmul.bf16.gmra.mxu0 %v5298
      %v5359 = vpop.f32.mrf.mxu0
      %v5360 = vadd.f32 0.0, %v5359
      %v5361 = vpop.f32.mrf.mxu0
      %v5362 = vadd.f32 0.0, %v5361
      %5363 = vmatmul.bf16.gmra.mxu0 %v5299
      %v5364 = vpop.f32.mrf.mxu0
      %v5365 = vadd.f32 0.0, %v5364
      %v5366 = vpop.f32.mrf.mxu0
      %v5367 = vadd.f32 0.0, %v5366
      %5368 = vmatmul.bf16.gmra.mxu0 %v5300
      %v5369 = vpop.f32.mrf.mxu0
      %v5370 = vadd.f32 0.0, %v5369
      %v5371 = vpop.f32.mrf.mxu0
      %v5372 = vadd.f32 0.0, %v5371
      %5373 = vdwg.mxu0
      %v5374 = vpack.c.bf16 %v5337, %v5335
      %v5375 = vpack.c.bf16 %v5342, %v5340
      %v5376 = vpack.c.bf16 %v5347, %v5345
      %v5377 = vpack.c.bf16 %v5352, %v5350
      %v5378 = vpack.c.bf16 %v5357, %v5355
      %v5379 = vpack.c.bf16 %v5362, %v5360
      %v5380 = vpack.c.bf16 %v5367, %v5365
      %v5381 = vpack.c.bf16 %v5372, %v5370
      %v5383 = vsel %vm1614, %v5374, 0
      %v5386 = vsel %vm1614, %v5375, 0
      %v5389 = vsel %vm1614, %v5376, 0
      %v5392 = vsel %vm1614, %v5377, 0
      %v5395 = vsel %vm1614, %v5378, 0
      %v5398 = vsel %vm1614, %v5379, 0
      %v5401 = vsel %vm1614, %v5380, 0
      %v5404 = vsel %vm1614, %v5381, 0
      %5406 = vmatpush.bf16.msra.mxu0 0
      %5407 = vmatpush.bf16.msra.mxu0 0
      %5408 = vmatpush.bf16.msra.mxu0 0
      %5409 = vmatpush.bf16.msra.mxu0 0
      %5410 = vmatpush.bf16.msra.mxu0 0
      %5411 = vmatpush.bf16.msra.mxu0 0
      %5412 = vmatpush.bf16.msra.mxu0 0
      %5413 = vmatpush.bf16.msra.mxu0 %v2299
      %5414 = vmatmul.bf16.gmra.mxu0 %v5383
      %v5415 = vpop.f32.mrf.mxu0
      %v5416 = vadd.f32 0.0, %v5415
      %v5417 = vpop.f32.mrf.mxu0
      %v5418 = vadd.f32 0.0, %v5417
      %5419 = vmatmul.bf16.gmra.mxu0 %v5386
      %v5420 = vpop.f32.mrf.mxu0
      %v5421 = vadd.f32 0.0, %v5420
      %v5422 = vpop.f32.mrf.mxu0
      %v5423 = vadd.f32 0.0, %v5422
      %5424 = vmatmul.bf16.gmra.mxu0 %v5389
      %v5425 = vpop.f32.mrf.mxu0
      %v5426 = vadd.f32 0.0, %v5425
      %v5427 = vpop.f32.mrf.mxu0
      %v5428 = vadd.f32 0.0, %v5427
      %5429 = vmatmul.bf16.gmra.mxu0 %v5392
      %v5430 = vpop.f32.mrf.mxu0
      %v5431 = vadd.f32 0.0, %v5430
      %v5432 = vpop.f32.mrf.mxu0
      %v5433 = vadd.f32 0.0, %v5432
      %5434 = vmatmul.bf16.gmra.mxu0 %v5395
      %v5435 = vpop.f32.mrf.mxu0
      %v5436 = vadd.f32 0.0, %v5435
      %v5437 = vpop.f32.mrf.mxu0
      %v5438 = vadd.f32 0.0, %v5437
      %5439 = vmatmul.bf16.gmra.mxu0 %v5398
      %v5440 = vpop.f32.mrf.mxu0
      %v5441 = vadd.f32 0.0, %v5440
      %v5442 = vpop.f32.mrf.mxu0
      %v5443 = vadd.f32 0.0, %v5442
      %5444 = vmatmul.bf16.gmra.mxu0 %v5401
      %v5445 = vpop.f32.mrf.mxu0
      %v5446 = vadd.f32 0.0, %v5445
      %v5447 = vpop.f32.mrf.mxu0
      %v5448 = vadd.f32 0.0, %v5447
      %5449 = vmatmul.bf16.gmra.mxu0 %v5404
      %v5450 = vpop.f32.mrf.mxu0
      %v5451 = vadd.f32 0.0, %v5450
      %v5452 = vpop.f32.mrf.mxu0
      %v5453 = vadd.f32 0.0, %v5452
      %5454 = vdwg.mxu0
      %v5456 = vsel %vm1614, %v5049, 0
      %v5459 = vsel %vm1614, %v5050, 0
      %v5462 = vsel %vm1614, %v5051, 0
      %v5465 = vsel %vm1614, %v5052, 0
      %v5468 = vsel %vm1614, %v5053, 0
      %v5471 = vsel %vm1614, %v5054, 0
      %v5474 = vsel %vm1614, %v5055, 0
      %v5477 = vsel %vm1614, %v5056, 0
      %5479 = vmatpush.bf16.msra.mxu0 0
      %5480 = vmatpush.bf16.msra.mxu0 0
      %5481 = vmatpush.bf16.msra.mxu0 0
      %5482 = vmatpush.bf16.msra.mxu0 0
      %5483 = vmatpush.bf16.msra.mxu0 0
      %5484 = vmatpush.bf16.msra.mxu0 0
      %5485 = vmatpush.bf16.msra.mxu0 0
      %5486 = vmatpush.bf16.msra.mxu0 %v2375
      %5487 = vmatmul.bf16.gmra.mxu0 %v5456
      %v5488 = vpop.f32.mrf.mxu0
      %v5489 = vadd.f32 %v5416, %v5488
      %v5490 = vpop.f32.mrf.mxu0
      %v5491 = vadd.f32 %v5418, %v5490
      %5492 = vmatmul.bf16.gmra.mxu0 %v5459
      %v5493 = vpop.f32.mrf.mxu0
      %v5494 = vadd.f32 %v5421, %v5493
      %v5495 = vpop.f32.mrf.mxu0
      %v5496 = vadd.f32 %v5423, %v5495
      %5497 = vmatmul.bf16.gmra.mxu0 %v5462
      %v5498 = vpop.f32.mrf.mxu0
      %v5499 = vadd.f32 %v5426, %v5498
      %v5500 = vpop.f32.mrf.mxu0
      %v5501 = vadd.f32 %v5428, %v5500
      %5502 = vmatmul.bf16.gmra.mxu0 %v5465
      %v5503 = vpop.f32.mrf.mxu0
      %v5504 = vadd.f32 %v5431, %v5503
      %v5505 = vpop.f32.mrf.mxu0
      %v5506 = vadd.f32 %v5433, %v5505
      %5507 = vmatmul.bf16.gmra.mxu0 %v5468
      %v5508 = vpop.f32.mrf.mxu0
      %v5509 = vadd.f32 %v5436, %v5508
      %v5510 = vpop.f32.mrf.mxu0
      %v5511 = vadd.f32 %v5438, %v5510
      %5512 = vmatmul.bf16.gmra.mxu0 %v5471
      %v5513 = vpop.f32.mrf.mxu0
      %v5514 = vadd.f32 %v5441, %v5513
      %v5515 = vpop.f32.mrf.mxu0
      %v5516 = vadd.f32 %v5443, %v5515
      %5517 = vmatmul.bf16.gmra.mxu0 %v5474
      %v5518 = vpop.f32.mrf.mxu0
      %v5519 = vadd.f32 %v5446, %v5518
      %v5520 = vpop.f32.mrf.mxu0
      %v5521 = vadd.f32 %v5448, %v5520
      %5522 = vmatmul.bf16.gmra.mxu0 %v5477
      %v5523 = vpop.f32.mrf.mxu0
      %v5524 = vadd.f32 %v5451, %v5523
      %v5525 = vpop.f32.mrf.mxu0
      %v5526 = vadd.f32 %v5453, %v5525
      %5527 = vdwg.mxu0
      %5528 = vrot.lane.b32.xlu0 %v4716, 112
      %v5529 = vpop.permute.xlu0 %5528
      %5530 = vrot.lane.b32.xlu0 %v4717, 112
      %v5531 = vpop.permute.xlu0 %5530
      %5532 = vrot.lane.b32.xlu0 %v4718, 112
      %v5533 = vpop.permute.xlu0 %5532
      %5534 = vrot.lane.b32.xlu0 %v4719, 112
      %v5535 = vpop.permute.xlu0 %5534
      %5536 = vrot.lane.b32.xlu0 %v4720, 112
      %v5537 = vpop.permute.xlu0 %5536
      %5538 = vrot.lane.b32.xlu0 %v4721, 112
      %v5539 = vpop.permute.xlu0 %5538
      %5540 = vrot.lane.b32.xlu0 %v4722, 112
      %v5541 = vpop.permute.xlu0 %5540
      %5542 = vrot.lane.b32.xlu0 %v4723, 112
      %v5543 = vpop.permute.xlu0 %5542
      %v5545 = vsel %vm1614, %v5529, 0
      %v5548 = vsel %vm1614, %v5531, 0
      %v5551 = vsel %vm1614, %v5533, 0
      %v5554 = vsel %vm1614, %v5535, 0
      %v5557 = vsel %vm1614, %v5537, 0
      %v5560 = vsel %vm1614, %v5539, 0
      %v5563 = vsel %vm1614, %v5541, 0
      %v5566 = vsel %vm1614, %v5543, 0
      %v5569 = vsel %vm1639, %v4663, 0
      %5571 = vmatpush.bf16.msra.mxu0 0
      %5572 = vmatpush.bf16.msra.mxu0 0
      %5573 = vmatpush.bf16.msra.mxu0 0
      %5574 = vmatpush.bf16.msra.mxu0 0
      %5575 = vmatpush.bf16.msra.mxu0 0
      %5576 = vmatpush.bf16.msra.mxu0 0
      %5577 = vmatpush.bf16.msra.mxu0 0
      %5578 = vmatpush.bf16.msra.mxu0 %v5569
      %5579 = vmatmul.bf16.gmra.mxu0 %v5545
      %v5580 = vpop.f32.mrf.mxu0
      %v5581 = vadd.f32 %v4682, %v5580
      %v5582 = vpop.f32.mrf.mxu0
      %v5583 = vadd.f32 %v4682, %v5582
      %5584 = vmatmul.bf16.gmra.mxu0 %v5548
      %v5585 = vpop.f32.mrf.mxu0
      %v5586 = vadd.f32 %v4682, %v5585
      %v5587 = vpop.f32.mrf.mxu0
      %v5588 = vadd.f32 %v4682, %v5587
      %5589 = vmatmul.bf16.gmra.mxu0 %v5551
      %v5590 = vpop.f32.mrf.mxu0
      %v5591 = vadd.f32 %v4682, %v5590
      %v5592 = vpop.f32.mrf.mxu0
      %v5593 = vadd.f32 %v4682, %v5592
      %5594 = vmatmul.bf16.gmra.mxu0 %v5554
      %v5595 = vpop.f32.mrf.mxu0
      %v5596 = vadd.f32 %v4682, %v5595
      %v5597 = vpop.f32.mrf.mxu0
      %v5598 = vadd.f32 %v4682, %v5597
      %5599 = vmatmul.bf16.gmra.mxu0 %v5557
      %v5600 = vpop.f32.mrf.mxu0
      %v5601 = vadd.f32 %v4682, %v5600
      %v5602 = vpop.f32.mrf.mxu0
      %v5603 = vadd.f32 %v4682, %v5602
      %5604 = vmatmul.bf16.gmra.mxu0 %v5560
      %v5605 = vpop.f32.mrf.mxu0
      %v5606 = vadd.f32 %v4682, %v5605
      %v5607 = vpop.f32.mrf.mxu0
      %v5608 = vadd.f32 %v4682, %v5607
      %5609 = vmatmul.bf16.gmra.mxu0 %v5563
      %v5610 = vpop.f32.mrf.mxu0
      %v5611 = vadd.f32 %v4682, %v5610
      %v5612 = vpop.f32.mrf.mxu0
      %v5613 = vadd.f32 %v4682, %v5612
      %5614 = vmatmul.bf16.gmra.mxu0 %v5566
      %v5615 = vpop.f32.mrf.mxu0
      %v5616 = vadd.f32 %v4682, %v5615
      %v5617 = vpop.f32.mrf.mxu0
      %v5618 = vadd.f32 %v4682, %v5617
      %5619 = vdwg.mxu0
      %5620 = vmax.xlane.f32.xlu0 %v5581
      %v5621 = vpop.xlane.xlu0 %5620
      %5622 = vmax.xlane.f32.xlu0 %v5583
      %v5623 = vpop.xlane.xlu0 %5622
      %5624 = vmax.xlane.f32.xlu0 %v5586
      %v5625 = vpop.xlane.xlu0 %5624
      %5626 = vmax.xlane.f32.xlu0 %v5588
      %v5627 = vpop.xlane.xlu0 %5626
      %5628 = vmax.xlane.f32.xlu0 %v5591
      %v5629 = vpop.xlane.xlu0 %5628
      %5630 = vmax.xlane.f32.xlu0 %v5593
      %v5631 = vpop.xlane.xlu0 %5630
      %5632 = vmax.xlane.f32.xlu0 %v5596
      %v5633 = vpop.xlane.xlu0 %5632
      %5634 = vmax.xlane.f32.xlu0 %v5598
      %v5635 = vpop.xlane.xlu0 %5634
      %5636 = vmax.xlane.f32.xlu0 %v5601
      %v5637 = vpop.xlane.xlu0 %5636
      %5638 = vmax.xlane.f32.xlu0 %v5603
      %v5639 = vpop.xlane.xlu0 %5638
      %5640 = vmax.xlane.f32.xlu0 %v5606
      %v5641 = vpop.xlane.xlu0 %5640
      %5642 = vmax.xlane.f32.xlu0 %v5608
      %v5643 = vpop.xlane.xlu0 %5642
      %5644 = vmax.xlane.f32.xlu0 %v5611
      %v5645 = vpop.xlane.xlu0 %5644
      %5646 = vmax.xlane.f32.xlu0 %v5613
      %v5647 = vpop.xlane.xlu0 %5646
      %5648 = vmax.xlane.f32.xlu0 %v5616
      %v5649 = vpop.xlane.xlu0 %5648
      %5650 = vmax.xlane.f32.xlu0 %v5618
      %v5651 = vpop.xlane.xlu0 %5650
      %v5652 = vsub.f32 %v5581, %v5621
      %v5653 = vsub.f32 %v5583, %v5623
      %v5654 = vsub.f32 %v5586, %v5625
      %v5655 = vsub.f32 %v5588, %v5627
      %v5656 = vsub.f32 %v5591, %v5629
      %v5657 = vsub.f32 %v5593, %v5631
      %v5658 = vsub.f32 %v5596, %v5633
      %v5659 = vsub.f32 %v5598, %v5635
      %v5660 = vsub.f32 %v5601, %v5637
      %v5661 = vsub.f32 %v5603, %v5639
      %v5662 = vsub.f32 %v5606, %v5641
      %v5663 = vsub.f32 %v5608, %v5643
      %v5664 = vsub.f32 %v5611, %v5645
      %v5665 = vsub.f32 %v5613, %v5647
      %v5666 = vsub.f32 %v5616, %v5649
      %v5667 = vsub.f32 %v5618, %v5651
      %v5668 = vmul.f32 %v5652, 1.442695
      %v5669 = vpow.pop %v5668
      %v5670 = vmul.f32 %v5653, 1.442695
      %v5671 = vpow.pop %v5670
      %v5672 = vmul.f32 %v5654, 1.442695
      %v5673 = vpow.pop %v5672
      %v5674 = vmul.f32 %v5655, 1.442695
      %v5675 = vpow.pop %v5674
      %v5676 = vmul.f32 %v5656, 1.442695
      %v5677 = vpow.pop %v5676
      %v5678 = vmul.f32 %v5657, 1.442695
      %v5679 = vpow.pop %v5678
      %v5680 = vmul.f32 %v5658, 1.442695
      %v5681 = vpow.pop %v5680
      %v5682 = vmul.f32 %v5659, 1.442695
      %v5683 = vpow.pop %v5682
      %v5684 = vmul.f32 %v5660, 1.442695
      %v5685 = vpow.pop %v5684
      %v5686 = vmul.f32 %v5661, 1.442695
      %v5687 = vpow.pop %v5686
      %v5688 = vmul.f32 %v5662, 1.442695
      %v5689 = vpow.pop %v5688
      %v5690 = vmul.f32 %v5663, 1.442695
      %v5691 = vpow.pop %v5690
      %v5692 = vmul.f32 %v5664, 1.442695
      %v5693 = vpow.pop %v5692
      %v5694 = vmul.f32 %v5665, 1.442695
      %v5695 = vpow.pop %v5694
      %v5696 = vmul.f32 %v5666, 1.442695
      %v5697 = vpow.pop %v5696
      %v5698 = vmul.f32 %v5667, 1.442695
      %v5699 = vpow.pop %v5698
      %5700 = vadd.xlane.f32.xlu0 %v5669
      %v5701 = vpop.xlane.xlu0 %5700
      %5702 = vadd.xlane.f32.xlu0 %v5671
      %v5703 = vpop.xlane.xlu0 %5702
      %5704 = vadd.xlane.f32.xlu0 %v5673
      %v5705 = vpop.xlane.xlu0 %5704
      %5706 = vadd.xlane.f32.xlu0 %v5675
      %v5707 = vpop.xlane.xlu0 %5706
      %5708 = vadd.xlane.f32.xlu0 %v5677
      %v5709 = vpop.xlane.xlu0 %5708
      %5710 = vadd.xlane.f32.xlu0 %v5679
      %v5711 = vpop.xlane.xlu0 %5710
      %5712 = vadd.xlane.f32.xlu0 %v5681
      %v5713 = vpop.xlane.xlu0 %5712
      %5714 = vadd.xlane.f32.xlu0 %v5683
      %v5715 = vpop.xlane.xlu0 %5714
      %5716 = vadd.xlane.f32.xlu0 %v5685
      %v5717 = vpop.xlane.xlu0 %5716
      %5718 = vadd.xlane.f32.xlu0 %v5687
      %v5719 = vpop.xlane.xlu0 %5718
      %5720 = vadd.xlane.f32.xlu0 %v5689
      %v5721 = vpop.xlane.xlu0 %5720
      %5722 = vadd.xlane.f32.xlu0 %v5691
      %v5723 = vpop.xlane.xlu0 %5722
      %5724 = vadd.xlane.f32.xlu0 %v5693
      %v5725 = vpop.xlane.xlu0 %5724
      %5726 = vadd.xlane.f32.xlu0 %v5695
      %v5727 = vpop.xlane.xlu0 %5726
      %5728 = vadd.xlane.f32.xlu0 %v5697
      %v5729 = vpop.xlane.xlu0 %5728
      %5730 = vadd.xlane.f32.xlu0 %v5699
      %v5731 = vpop.xlane.xlu0 %5730
      %v5732 = vrcp.pop %v5701
      %v5733 = vrcp.pop %v5703
      %v5734 = vrcp.pop %v5705
      %v5735 = vrcp.pop %v5707
      %v5736 = vrcp.pop %v5709
      %v5737 = vrcp.pop %v5711
      %v5738 = vrcp.pop %v5713
      %v5739 = vrcp.pop %v5715
      %v5740 = vrcp.pop %v5717
      %v5741 = vrcp.pop %v5719
      %v5742 = vrcp.pop %v5721
      %v5743 = vrcp.pop %v5723
      %v5744 = vrcp.pop %v5725
      %v5745 = vrcp.pop %v5727
      %v5746 = vrcp.pop %v5729
      %v5747 = vrcp.pop %v5731
      %v5748 = vmul.f32 %v5669, %v5732
      %v5749 = vmul.f32 %v5671, %v5733
      %v5750 = vmul.f32 %v5673, %v5734
      %v5751 = vmul.f32 %v5675, %v5735
      %v5752 = vmul.f32 %v5677, %v5736
      %v5753 = vmul.f32 %v5679, %v5737
      %v5754 = vmul.f32 %v5681, %v5738
      %v5755 = vmul.f32 %v5683, %v5739
      %v5756 = vmul.f32 %v5685, %v5740
      %v5757 = vmul.f32 %v5687, %v5741
      %v5758 = vmul.f32 %v5689, %v5742
      %v5759 = vmul.f32 %v5691, %v5743
      %v5760 = vmul.f32 %v5693, %v5744
      %v5761 = vmul.f32 %v5695, %v5745
      %v5762 = vmul.f32 %v5697, %v5746
      %v5763 = vmul.f32 %v5699, %v5747
      %v5764 = vpack.c.bf16 %v5749, %v5748
      %v5765 = vpack.c.bf16 %v5751, %v5750
      %v5766 = vpack.c.bf16 %v5753, %v5752
      %v5767 = vpack.c.bf16 %v5755, %v5754
      %v5768 = vpack.c.bf16 %v5757, %v5756
      %v5769 = vpack.c.bf16 %v5759, %v5758
      %v5770 = vpack.c.bf16 %v5761, %v5760
      %v5771 = vpack.c.bf16 %v5763, %v5762
      %5772 = vrot.lane.b32.xlu0 %v4984, 112
      %v5773 = vpop.permute.xlu0 %5772
      %5774 = vrot.lane.b32.xlu0 %v4985, 112
      %v5775 = vpop.permute.xlu0 %5774
      %5776 = vrot.lane.b32.xlu0 %v4986, 112
      %v5777 = vpop.permute.xlu0 %5776
      %5778 = vrot.lane.b32.xlu0 %v4987, 112
      %v5779 = vpop.permute.xlu0 %5778
      %5780 = vrot.lane.b32.xlu0 %v4988, 112
      %v5781 = vpop.permute.xlu0 %5780
      %5782 = vrot.lane.b32.xlu0 %v4989, 112
      %v5783 = vpop.permute.xlu0 %5782
      %5784 = vrot.lane.b32.xlu0 %v4990, 112
      %v5785 = vpop.permute.xlu0 %5784
      %5786 = vrot.lane.b32.xlu0 %v4991, 112
      %v5787 = vpop.permute.xlu0 %5786
      %5796 = vmatpush.bf16.msra.mxu0 %v5787
      %5797 = vmatpush.bf16.msra.mxu0 %v5785
      %5798 = vmatpush.bf16.msra.mxu0 %v5783
      %5799 = vmatpush.bf16.msra.mxu0 %v5781
      %5800 = vmatpush.bf16.msra.mxu0 %v5779
      %5801 = vmatpush.bf16.msra.mxu0 %v5777
      %5802 = vmatpush.bf16.msra.mxu0 %v5775
      %5803 = vmatpush.bf16.msra.mxu0 %v5773
      %5804 = vmatmul.bf16.gmra.mxu0 %v5764
      %v5805 = vpop.f32.mrf.mxu0
      %v5806 = vadd.f32 0.0, %v5805
      %v5807 = vpop.f32.mrf.mxu0
      %v5808 = vadd.f32 0.0, %v5807
      %5809 = vmatmul.bf16.gmra.mxu0 %v5765
      %v5810 = vpop.f32.mrf.mxu0
      %v5811 = vadd.f32 0.0, %v5810
      %v5812 = vpop.f32.mrf.mxu0
      %v5813 = vadd.f32 0.0, %v5812
      %5814 = vmatmul.bf16.gmra.mxu0 %v5766
      %v5815 = vpop.f32.mrf.mxu0
      %v5816 = vadd.f32 0.0, %v5815
      %v5817 = vpop.f32.mrf.mxu0
      %v5818 = vadd.f32 0.0, %v5817
      %5819 = vmatmul.bf16.gmra.mxu0 %v5767
      %v5820 = vpop.f32.mrf.mxu0
      %v5821 = vadd.f32 0.0, %v5820
      %v5822 = vpop.f32.mrf.mxu0
      %v5823 = vadd.f32 0.0, %v5822
      %5824 = vmatmul.bf16.gmra.mxu0 %v5768
      %v5825 = vpop.f32.mrf.mxu0
      %v5826 = vadd.f32 0.0, %v5825
      %v5827 = vpop.f32.mrf.mxu0
      %v5828 = vadd.f32 0.0, %v5827
      %5829 = vmatmul.bf16.gmra.mxu0 %v5769
      %v5830 = vpop.f32.mrf.mxu0
      %v5831 = vadd.f32 0.0, %v5830
      %v5832 = vpop.f32.mrf.mxu0
      %v5833 = vadd.f32 0.0, %v5832
      %5834 = vmatmul.bf16.gmra.mxu0 %v5770
      %v5835 = vpop.f32.mrf.mxu0
      %v5836 = vadd.f32 0.0, %v5835
      %v5837 = vpop.f32.mrf.mxu0
      %v5838 = vadd.f32 0.0, %v5837
      %5839 = vmatmul.bf16.gmra.mxu0 %v5771
      %v5840 = vpop.f32.mrf.mxu0
      %v5841 = vadd.f32 0.0, %v5840
      %v5842 = vpop.f32.mrf.mxu0
      %v5843 = vadd.f32 0.0, %v5842
      %5844 = vdwg.mxu0
      %v5845 = vpack.c.bf16 %v5808, %v5806
      %v5846 = vpack.c.bf16 %v5813, %v5811
      %v5847 = vpack.c.bf16 %v5818, %v5816
      %v5848 = vpack.c.bf16 %v5823, %v5821
      %v5849 = vpack.c.bf16 %v5828, %v5826
      %v5850 = vpack.c.bf16 %v5833, %v5831
      %v5851 = vpack.c.bf16 %v5838, %v5836
      %v5852 = vpack.c.bf16 %v5843, %v5841
      %v5854 = vsel %vm1614, %v5845, 0
      %v5857 = vsel %vm1614, %v5846, 0
      %v5860 = vsel %vm1614, %v5847, 0
      %v5863 = vsel %vm1614, %v5848, 0
      %v5866 = vsel %vm1614, %v5849, 0
      %v5869 = vsel %vm1614, %v5850, 0
      %v5872 = vsel %vm1614, %v5851, 0
      %v5875 = vsel %vm1614, %v5852, 0
      %5877 = vmatpush.bf16.msra.mxu0 0
      %5878 = vmatpush.bf16.msra.mxu0 0
      %5879 = vmatpush.bf16.msra.mxu0 0
      %5880 = vmatpush.bf16.msra.mxu0 0
      %5881 = vmatpush.bf16.msra.mxu0 0
      %5882 = vmatpush.bf16.msra.mxu0 0
      %5883 = vmatpush.bf16.msra.mxu0 0
      %5884 = vmatpush.bf16.msra.mxu0 %v2776
      %5885 = vmatmul.bf16.gmra.mxu0 %v5854
      %v5886 = vpop.f32.mrf.mxu0
      %v5887 = vadd.f32 0.0, %v5886
      %v5888 = vpop.f32.mrf.mxu0
      %v5889 = vadd.f32 0.0, %v5888
      %5890 = vmatmul.bf16.gmra.mxu0 %v5857
      %v5891 = vpop.f32.mrf.mxu0
      %v5892 = vadd.f32 0.0, %v5891
      %v5893 = vpop.f32.mrf.mxu0
      %v5894 = vadd.f32 0.0, %v5893
      %5895 = vmatmul.bf16.gmra.mxu0 %v5860
      %v5896 = vpop.f32.mrf.mxu0
      %v5897 = vadd.f32 0.0, %v5896
      %v5898 = vpop.f32.mrf.mxu0
      %v5899 = vadd.f32 0.0, %v5898
      %5900 = vmatmul.bf16.gmra.mxu0 %v5863
      %v5901 = vpop.f32.mrf.mxu0
      %v5902 = vadd.f32 0.0, %v5901
      %v5903 = vpop.f32.mrf.mxu0
      %v5904 = vadd.f32 0.0, %v5903
      %5905 = vmatmul.bf16.gmra.mxu0 %v5866
      %v5906 = vpop.f32.mrf.mxu0
      %v5907 = vadd.f32 0.0, %v5906
      %v5908 = vpop.f32.mrf.mxu0
      %v5909 = vadd.f32 0.0, %v5908
      %5910 = vmatmul.bf16.gmra.mxu0 %v5869
      %v5911 = vpop.f32.mrf.mxu0
      %v5912 = vadd.f32 0.0, %v5911
      %v5913 = vpop.f32.mrf.mxu0
      %v5914 = vadd.f32 0.0, %v5913
      %5915 = vmatmul.bf16.gmra.mxu0 %v5872
      %v5916 = vpop.f32.mrf.mxu0
      %v5917 = vadd.f32 0.0, %v5916
      %v5918 = vpop.f32.mrf.mxu0
      %v5919 = vadd.f32 0.0, %v5918
      %5920 = vmatmul.bf16.gmra.mxu0 %v5875
      %v5921 = vpop.f32.mrf.mxu0
      %v5922 = vadd.f32 0.0, %v5921
      %v5923 = vpop.f32.mrf.mxu0
      %v5924 = vadd.f32 0.0, %v5923
      %5925 = vdwg.mxu0
      %v5926 = vadd.f32 %v5489, %v5887
      %v5927 = vadd.f32 %v5491, %v5889
      %v5928 = vadd.f32 %v5494, %v5892
      %v5929 = vadd.f32 %v5496, %v5894
      %v5930 = vadd.f32 %v5499, %v5897
      %v5931 = vadd.f32 %v5501, %v5899
      %v5932 = vadd.f32 %v5504, %v5902
      %v5933 = vadd.f32 %v5506, %v5904
      %v5934 = vadd.f32 %v5509, %v5907
      %v5935 = vadd.f32 %v5511, %v5909
      %v5936 = vadd.f32 %v5514, %v5912
      %v5937 = vadd.f32 %v5516, %v5914
      %v5938 = vadd.f32 %v5519, %v5917
      %v5939 = vadd.f32 %v5521, %v5919
      %v5940 = vadd.f32 %v5524, %v5922
      %v5941 = vadd.f32 %v5526, %v5924
      %5942 = vrot.lane.b32.xlu0 %v4716, 104
      %v5943 = vpop.permute.xlu0 %5942
      %5944 = vrot.lane.b32.xlu0 %v4717, 104
      %v5945 = vpop.permute.xlu0 %5944
      %5946 = vrot.lane.b32.xlu0 %v4718, 104
      %v5947 = vpop.permute.xlu0 %5946
      %5948 = vrot.lane.b32.xlu0 %v4719, 104
      %v5949 = vpop.permute.xlu0 %5948
      %5950 = vrot.lane.b32.xlu0 %v4720, 104
      %v5951 = vpop.permute.xlu0 %5950
      %5952 = vrot.lane.b32.xlu0 %v4721, 104
      %v5953 = vpop.permute.xlu0 %5952
      %5954 = vrot.lane.b32.xlu0 %v4722, 104
      %v5955 = vpop.permute.xlu0 %5954
      %5956 = vrot.lane.b32.xlu0 %v4723, 104
      %v5957 = vpop.permute.xlu0 %5956
      %v5959 = vsel %vm1614, %v5943, 0
      %v5962 = vsel %vm1614, %v5945, 0
      %v5965 = vsel %vm1614, %v5947, 0
      %v5968 = vsel %vm1614, %v5949, 0
      %v5971 = vsel %vm1614, %v5951, 0
      %v5974 = vsel %vm1614, %v5953, 0
      %v5977 = vsel %vm1614, %v5955, 0
      %v5980 = vsel %vm1614, %v5957, 0
      %v5983 = vsel %vm1639, %v4664, 0
      %5985 = vmatpush.bf16.msra.mxu0 0
      %5986 = vmatpush.bf16.msra.mxu0 0
      %5987 = vmatpush.bf16.msra.mxu0 0
      %5988 = vmatpush.bf16.msra.mxu0 0
      %5989 = vmatpush.bf16.msra.mxu0 0
      %5990 = vmatpush.bf16.msra.mxu0 0
      %5991 = vmatpush.bf16.msra.mxu0 0
      %5992 = vmatpush.bf16.msra.mxu0 %v5983
      %5993 = vmatmul.bf16.gmra.mxu0 %v5959
      %v5994 = vpop.f32.mrf.mxu0
      %v5995 = vadd.f32 %v4682, %v5994
      %v5996 = vpop.f32.mrf.mxu0
      %v5997 = vadd.f32 %v4682, %v5996
      %5998 = vmatmul.bf16.gmra.mxu0 %v5962
      %v5999 = vpop.f32.mrf.mxu0
      %v6000 = vadd.f32 %v4682, %v5999
      %v6001 = vpop.f32.mrf.mxu0
      %v6002 = vadd.f32 %v4682, %v6001
      %6003 = vmatmul.bf16.gmra.mxu0 %v5965
      %v6004 = vpop.f32.mrf.mxu0
      %v6005 = vadd.f32 %v4682, %v6004
      %v6006 = vpop.f32.mrf.mxu0
      %v6007 = vadd.f32 %v4682, %v6006
      %6008 = vmatmul.bf16.gmra.mxu0 %v5968
      %v6009 = vpop.f32.mrf.mxu0
      %v6010 = vadd.f32 %v4682, %v6009
      %v6011 = vpop.f32.mrf.mxu0
      %v6012 = vadd.f32 %v4682, %v6011
      %6013 = vmatmul.bf16.gmra.mxu0 %v5971
      %v6014 = vpop.f32.mrf.mxu0
      %v6015 = vadd.f32 %v4682, %v6014
      %v6016 = vpop.f32.mrf.mxu0
      %v6017 = vadd.f32 %v4682, %v6016
      %6018 = vmatmul.bf16.gmra.mxu0 %v5974
      %v6019 = vpop.f32.mrf.mxu0
      %v6020 = vadd.f32 %v4682, %v6019
      %v6021 = vpop.f32.mrf.mxu0
      %v6022 = vadd.f32 %v4682, %v6021
      %6023 = vmatmul.bf16.gmra.mxu0 %v5977
      %v6024 = vpop.f32.mrf.mxu0
      %v6025 = vadd.f32 %v4682, %v6024
      %v6026 = vpop.f32.mrf.mxu0
      %v6027 = vadd.f32 %v4682, %v6026
      %6028 = vmatmul.bf16.gmra.mxu0 %v5980
      %v6029 = vpop.f32.mrf.mxu0
      %v6030 = vadd.f32 %v4682, %v6029
      %v6031 = vpop.f32.mrf.mxu0
      %v6032 = vadd.f32 %v4682, %v6031
      %6033 = vdwg.mxu0
      %6034 = vmax.xlane.f32.xlu0 %v5995
      %v6035 = vpop.xlane.xlu0 %6034
      %6036 = vmax.xlane.f32.xlu0 %v5997
      %v6037 = vpop.xlane.xlu0 %6036
      %6038 = vmax.xlane.f32.xlu0 %v6000
      %v6039 = vpop.xlane.xlu0 %6038
      %6040 = vmax.xlane.f32.xlu0 %v6002
      %v6041 = vpop.xlane.xlu0 %6040
      %6042 = vmax.xlane.f32.xlu0 %v6005
      %v6043 = vpop.xlane.xlu0 %6042
      %6044 = vmax.xlane.f32.xlu0 %v6007
      %v6045 = vpop.xlane.xlu0 %6044
      %6046 = vmax.xlane.f32.xlu0 %v6010
      %v6047 = vpop.xlane.xlu0 %6046
      %6048 = vmax.xlane.f32.xlu0 %v6012
      %v6049 = vpop.xlane.xlu0 %6048
      %6050 = vmax.xlane.f32.xlu0 %v6015
      %v6051 = vpop.xlane.xlu0 %6050
      %6052 = vmax.xlane.f32.xlu0 %v6017
      %v6053 = vpop.xlane.xlu0 %6052
      %6054 = vmax.xlane.f32.xlu0 %v6020
      %v6055 = vpop.xlane.xlu0 %6054
      %6056 = vmax.xlane.f32.xlu0 %v6022
      %v6057 = vpop.xlane.xlu0 %6056
      %6058 = vmax.xlane.f32.xlu0 %v6025
      %v6059 = vpop.xlane.xlu0 %6058
      %6060 = vmax.xlane.f32.xlu0 %v6027
      %v6061 = vpop.xlane.xlu0 %6060
      %6062 = vmax.xlane.f32.xlu0 %v6030
      %v6063 = vpop.xlane.xlu0 %6062
      %6064 = vmax.xlane.f32.xlu0 %v6032
      %v6065 = vpop.xlane.xlu0 %6064
      %v6066 = vsub.f32 %v5995, %v6035
      %v6067 = vsub.f32 %v5997, %v6037
      %v6068 = vsub.f32 %v6000, %v6039
      %v6069 = vsub.f32 %v6002, %v6041
      %v6070 = vsub.f32 %v6005, %v6043
      %v6071 = vsub.f32 %v6007, %v6045
      %v6072 = vsub.f32 %v6010, %v6047
      %v6073 = vsub.f32 %v6012, %v6049
      %v6074 = vsub.f32 %v6015, %v6051
      %v6075 = vsub.f32 %v6017, %v6053
      %v6076 = vsub.f32 %v6020, %v6055
      %v6077 = vsub.f32 %v6022, %v6057
      %v6078 = vsub.f32 %v6025, %v6059
      %v6079 = vsub.f32 %v6027, %v6061
      %v6080 = vsub.f32 %v6030, %v6063
      %v6081 = vsub.f32 %v6032, %v6065
      %v6082 = vmul.f32 %v6066, 1.442695
      %v6083 = vpow.pop %v6082
      %v6084 = vmul.f32 %v6067, 1.442695
      %v6085 = vpow.pop %v6084
      %v6086 = vmul.f32 %v6068, 1.442695
      %v6087 = vpow.pop %v6086
      %v6088 = vmul.f32 %v6069, 1.442695
      %v6089 = vpow.pop %v6088
      %v6090 = vmul.f32 %v6070, 1.442695
      %v6091 = vpow.pop %v6090
      %v6092 = vmul.f32 %v6071, 1.442695
      %v6093 = vpow.pop %v6092
      %v6094 = vmul.f32 %v6072, 1.442695
      %v6095 = vpow.pop %v6094
      %v6096 = vmul.f32 %v6073, 1.442695
      %v6097 = vpow.pop %v6096
      %v6098 = vmul.f32 %v6074, 1.442695
      %v6099 = vpow.pop %v6098
      %v6100 = vmul.f32 %v6075, 1.442695
      %v6101 = vpow.pop %v6100
      %v6102 = vmul.f32 %v6076, 1.442695
      %v6103 = vpow.pop %v6102
      %v6104 = vmul.f32 %v6077, 1.442695
      %v6105 = vpow.pop %v6104
      %v6106 = vmul.f32 %v6078, 1.442695
      %v6107 = vpow.pop %v6106
      %v6108 = vmul.f32 %v6079, 1.442695
      %v6109 = vpow.pop %v6108
      %v6110 = vmul.f32 %v6080, 1.442695
      %v6111 = vpow.pop %v6110
      %v6112 = vmul.f32 %v6081, 1.442695
      %v6113 = vpow.pop %v6112
      %6114 = vadd.xlane.f32.xlu0 %v6083
      %v6115 = vpop.xlane.xlu0 %6114
      %6116 = vadd.xlane.f32.xlu0 %v6085
      %v6117 = vpop.xlane.xlu0 %6116
      %6118 = vadd.xlane.f32.xlu0 %v6087
      %v6119 = vpop.xlane.xlu0 %6118
      %6120 = vadd.xlane.f32.xlu0 %v6089
      %v6121 = vpop.xlane.xlu0 %6120
      %6122 = vadd.xlane.f32.xlu0 %v6091
      %v6123 = vpop.xlane.xlu0 %6122
      %6124 = vadd.xlane.f32.xlu0 %v6093
      %v6125 = vpop.xlane.xlu0 %6124
      %6126 = vadd.xlane.f32.xlu0 %v6095
      %v6127 = vpop.xlane.xlu0 %6126
      %6128 = vadd.xlane.f32.xlu0 %v6097
      %v6129 = vpop.xlane.xlu0 %6128
      %6130 = vadd.xlane.f32.xlu0 %v6099
      %v6131 = vpop.xlane.xlu0 %6130
      %6132 = vadd.xlane.f32.xlu0 %v6101
      %v6133 = vpop.xlane.xlu0 %6132
      %6134 = vadd.xlane.f32.xlu0 %v6103
      %v6135 = vpop.xlane.xlu0 %6134
      %6136 = vadd.xlane.f32.xlu0 %v6105
      %v6137 = vpop.xlane.xlu0 %6136
      %6138 = vadd.xlane.f32.xlu0 %v6107
      %v6139 = vpop.xlane.xlu0 %6138
      %6140 = vadd.xlane.f32.xlu0 %v6109
      %v6141 = vpop.xlane.xlu0 %6140
      %6142 = vadd.xlane.f32.xlu0 %v6111
      %v6143 = vpop.xlane.xlu0 %6142
      %6144 = vadd.xlane.f32.xlu0 %v6113
      %v6145 = vpop.xlane.xlu0 %6144
      %v6146 = vrcp.pop %v6115
      %v6147 = vrcp.pop %v6117
      %v6148 = vrcp.pop %v6119
      %v6149 = vrcp.pop %v6121
      %v6150 = vrcp.pop %v6123
      %v6151 = vrcp.pop %v6125
      %v6152 = vrcp.pop %v6127
      %v6153 = vrcp.pop %v6129
      %v6154 = vrcp.pop %v6131
      %v6155 = vrcp.pop %v6133
      %v6156 = vrcp.pop %v6135
      %v6157 = vrcp.pop %v6137
      %v6158 = vrcp.pop %v6139
      %v6159 = vrcp.pop %v6141
      %v6160 = vrcp.pop %v6143
      %v6161 = vrcp.pop %v6145
      %v6162 = vmul.f32 %v6083, %v6146
      %v6163 = vmul.f32 %v6085, %v6147
      %v6164 = vmul.f32 %v6087, %v6148
      %v6165 = vmul.f32 %v6089, %v6149
      %v6166 = vmul.f32 %v6091, %v6150
      %v6167 = vmul.f32 %v6093, %v6151
      %v6168 = vmul.f32 %v6095, %v6152
      %v6169 = vmul.f32 %v6097, %v6153
      %v6170 = vmul.f32 %v6099, %v6154
      %v6171 = vmul.f32 %v6101, %v6155
      %v6172 = vmul.f32 %v6103, %v6156
      %v6173 = vmul.f32 %v6105, %v6157
      %v6174 = vmul.f32 %v6107, %v6158
      %v6175 = vmul.f32 %v6109, %v6159
      %v6176 = vmul.f32 %v6111, %v6160
      %v6177 = vmul.f32 %v6113, %v6161
      %v6178 = vpack.c.bf16 %v6163, %v6162
      %v6179 = vpack.c.bf16 %v6165, %v6164
      %v6180 = vpack.c.bf16 %v6167, %v6166
      %v6181 = vpack.c.bf16 %v6169, %v6168
      %v6182 = vpack.c.bf16 %v6171, %v6170
      %v6183 = vpack.c.bf16 %v6173, %v6172
      %v6184 = vpack.c.bf16 %v6175, %v6174
      %v6185 = vpack.c.bf16 %v6177, %v6176
      %6186 = vrot.lane.b32.xlu0 %v4984, 104
      %v6187 = vpop.permute.xlu0 %6186
      %6188 = vrot.lane.b32.xlu0 %v4985, 104
      %v6189 = vpop.permute.xlu0 %6188
      %6190 = vrot.lane.b32.xlu0 %v4986, 104
      %v6191 = vpop.permute.xlu0 %6190
      %6192 = vrot.lane.b32.xlu0 %v4987, 104
      %v6193 = vpop.permute.xlu0 %6192
      %6194 = vrot.lane.b32.xlu0 %v4988, 104
      %v6195 = vpop.permute.xlu0 %6194
      %6196 = vrot.lane.b32.xlu0 %v4989, 104
      %v6197 = vpop.permute.xlu0 %6196
      %6198 = vrot.lane.b32.xlu0 %v4990, 104
      %v6199 = vpop.permute.xlu0 %6198
      %6200 = vrot.lane.b32.xlu0 %v4991, 104
      %v6201 = vpop.permute.xlu0 %6200
      %6210 = vmatpush.bf16.msra.mxu0 %v6201
      %6211 = vmatpush.bf16.msra.mxu0 %v6199
      %6212 = vmatpush.bf16.msra.mxu0 %v6197
      %6213 = vmatpush.bf16.msra.mxu0 %v6195
      %6214 = vmatpush.bf16.msra.mxu0 %v6193
      %6215 = vmatpush.bf16.msra.mxu0 %v6191
      %6216 = vmatpush.bf16.msra.mxu0 %v6189
      %6217 = vmatpush.bf16.msra.mxu0 %v6187
      %6218 = vmatmul.bf16.gmra.mxu0 %v6178
      %v6219 = vpop.f32.mrf.mxu0
      %v6220 = vadd.f32 0.0, %v6219
      %v6221 = vpop.f32.mrf.mxu0
      %v6222 = vadd.f32 0.0, %v6221
      %6223 = vmatmul.bf16.gmra.mxu0 %v6179
      %v6224 = vpop.f32.mrf.mxu0
      %v6225 = vadd.f32 0.0, %v6224
      %v6226 = vpop.f32.mrf.mxu0
      %v6227 = vadd.f32 0.0, %v6226
      %6228 = vmatmul.bf16.gmra.mxu0 %v6180
      %v6229 = vpop.f32.mrf.mxu0
      %v6230 = vadd.f32 0.0, %v6229
      %v6231 = vpop.f32.mrf.mxu0
      %v6232 = vadd.f32 0.0, %v6231
      %6233 = vmatmul.bf16.gmra.mxu0 %v6181
      %v6234 = vpop.f32.mrf.mxu0
      %v6235 = vadd.f32 0.0, %v6234
      %v6236 = vpop.f32.mrf.mxu0
      %v6237 = vadd.f32 0.0, %v6236
      %6238 = vmatmul.bf16.gmra.mxu0 %v6182
      %v6239 = vpop.f32.mrf.mxu0
      %v6240 = vadd.f32 0.0, %v6239
      %v6241 = vpop.f32.mrf.mxu0
      %v6242 = vadd.f32 0.0, %v6241
      %6243 = vmatmul.bf16.gmra.mxu0 %v6183
      %v6244 = vpop.f32.mrf.mxu0
      %v6245 = vadd.f32 0.0, %v6244
      %v6246 = vpop.f32.mrf.mxu0
      %v6247 = vadd.f32 0.0, %v6246
      %6248 = vmatmul.bf16.gmra.mxu0 %v6184
      %v6249 = vpop.f32.mrf.mxu0
      %v6250 = vadd.f32 0.0, %v6249
      %v6251 = vpop.f32.mrf.mxu0
      %v6252 = vadd.f32 0.0, %v6251
      %6253 = vmatmul.bf16.gmra.mxu0 %v6185
      %v6254 = vpop.f32.mrf.mxu0
      %v6255 = vadd.f32 0.0, %v6254
      %v6256 = vpop.f32.mrf.mxu0
      %v6257 = vadd.f32 0.0, %v6256
      %6258 = vdwg.mxu0
      %v6259 = vpack.c.bf16 %v6222, %v6220
      %v6260 = vpack.c.bf16 %v6227, %v6225
      %v6261 = vpack.c.bf16 %v6232, %v6230
      %v6262 = vpack.c.bf16 %v6237, %v6235
      %v6263 = vpack.c.bf16 %v6242, %v6240
      %v6264 = vpack.c.bf16 %v6247, %v6245
      %v6265 = vpack.c.bf16 %v6252, %v6250
      %v6266 = vpack.c.bf16 %v6257, %v6255
      %v6268 = vsel %vm1614, %v6259, 0
      %v6271 = vsel %vm1614, %v6260, 0
      %v6274 = vsel %vm1614, %v6261, 0
      %v6277 = vsel %vm1614, %v6262, 0
      %v6280 = vsel %vm1614, %v6263, 0
      %v6283 = vsel %vm1614, %v6264, 0
      %v6286 = vsel %vm1614, %v6265, 0
      %v6289 = vsel %vm1614, %v6266, 0
      %6291 = vmatpush.bf16.msra.mxu0 0
      %6292 = vmatpush.bf16.msra.mxu0 0
      %6293 = vmatpush.bf16.msra.mxu0 0
      %6294 = vmatpush.bf16.msra.mxu0 0
      %6295 = vmatpush.bf16.msra.mxu0 0
      %6296 = vmatpush.bf16.msra.mxu0 0
      %6297 = vmatpush.bf16.msra.mxu0 0
      %6298 = vmatpush.bf16.msra.mxu0 %v3193
      %6299 = vmatmul.bf16.gmra.mxu0 %v6268
      %v6300 = vpop.f32.mrf.mxu0
      %v6301 = vadd.f32 0.0, %v6300
      %v6302 = vpop.f32.mrf.mxu0
      %v6303 = vadd.f32 0.0, %v6302
      %6304 = vmatmul.bf16.gmra.mxu0 %v6271
      %v6305 = vpop.f32.mrf.mxu0
      %v6306 = vadd.f32 0.0, %v6305
      %v6307 = vpop.f32.mrf.mxu0
      %v6308 = vadd.f32 0.0, %v6307
      %6309 = vmatmul.bf16.gmra.mxu0 %v6274
      %v6310 = vpop.f32.mrf.mxu0
      %v6311 = vadd.f32 0.0, %v6310
      %v6312 = vpop.f32.mrf.mxu0
      %v6313 = vadd.f32 0.0, %v6312
      %6314 = vmatmul.bf16.gmra.mxu0 %v6277
      %v6315 = vpop.f32.mrf.mxu0
      %v6316 = vadd.f32 0.0, %v6315
      %v6317 = vpop.f32.mrf.mxu0
      %v6318 = vadd.f32 0.0, %v6317
      %6319 = vmatmul.bf16.gmra.mxu0 %v6280
      %v6320 = vpop.f32.mrf.mxu0
      %v6321 = vadd.f32 0.0, %v6320
      %v6322 = vpop.f32.mrf.mxu0
      %v6323 = vadd.f32 0.0, %v6322
      %6324 = vmatmul.bf16.gmra.mxu0 %v6283
      %v6325 = vpop.f32.mrf.mxu0
      %v6326 = vadd.f32 0.0, %v6325
      %v6327 = vpop.f32.mrf.mxu0
      %v6328 = vadd.f32 0.0, %v6327
      %6329 = vmatmul.bf16.gmra.mxu0 %v6286
      %v6330 = vpop.f32.mrf.mxu0
      %v6331 = vadd.f32 0.0, %v6330
      %v6332 = vpop.f32.mrf.mxu0
      %v6333 = vadd.f32 0.0, %v6332
      %6334 = vmatmul.bf16.gmra.mxu0 %v6289
      %v6335 = vpop.f32.mrf.mxu0
      %v6336 = vadd.f32 0.0, %v6335
      %v6337 = vpop.f32.mrf.mxu0
      %v6338 = vadd.f32 0.0, %v6337
      %6339 = vdwg.mxu0
      %v6340 = vadd.f32 %v5926, %v6301
      %v6341 = vadd.f32 %v5927, %v6303
      %v6342 = vadd.f32 %v5928, %v6306
      %v6343 = vadd.f32 %v5929, %v6308
      %v6344 = vadd.f32 %v5930, %v6311
      %v6345 = vadd.f32 %v5931, %v6313
      %v6346 = vadd.f32 %v5932, %v6316
      %v6347 = vadd.f32 %v5933, %v6318
      %v6348 = vadd.f32 %v5934, %v6321
      %v6349 = vadd.f32 %v5935, %v6323
      %v6350 = vadd.f32 %v5936, %v6326
      %v6351 = vadd.f32 %v5937, %v6328
      %v6352 = vadd.f32 %v5938, %v6331
      %v6353 = vadd.f32 %v5939, %v6333
      %v6354 = vadd.f32 %v5940, %v6336
      %v6355 = vadd.f32 %v5941, %v6338
      %v6356 = vadd.f32 %v6340, %v3261
      %v6357 = vadd.f32 %v6341, %v3261
      %v6358 = vadd.f32 %v6342, %v3261
      %v6359 = vadd.f32 %v6343, %v3261
      %v6360 = vadd.f32 %v6344, %v3261
      %v6361 = vadd.f32 %v6345, %v3261
      %v6362 = vadd.f32 %v6346, %v3261
      %v6363 = vadd.f32 %v6347, %v3261
      %v6364 = vadd.f32 %v6348, %v3261
      %v6365 = vadd.f32 %v6349, %v3261
      %v6366 = vadd.f32 %v6350, %v3261
      %v6367 = vadd.f32 %v6351, %v3261
      %v6368 = vadd.f32 %v6352, %v3261
      %v6369 = vadd.f32 %v6353, %v3261
      %v6370 = vadd.f32 %v6354, %v3261
      %v6371 = vadd.f32 %v6355, %v3261
      %v6372 = vadd.f32 %v4336, %v6356
      %v6373 = vadd.f32 %v4337, %v6357
      %v6374 = vadd.f32 %v4338, %v6358
      %v6375 = vadd.f32 %v4339, %v6359
      %v6376 = vadd.f32 %v4340, %v6360
      %v6377 = vadd.f32 %v4341, %v6361
      %v6378 = vadd.f32 %v4342, %v6362
      %v6379 = vadd.f32 %v4343, %v6363
      %v6380 = vadd.f32 %v4344, %v6364
      %v6381 = vadd.f32 %v4345, %v6365
      %v6382 = vadd.f32 %v4346, %v6366
      %v6383 = vadd.f32 %v4347, %v6367
      %v6384 = vadd.f32 %v4348, %v6368
      %v6385 = vadd.f32 %v4349, %v6369
      %v6386 = vadd.f32 %v4350, %v6370
      %v6387 = vadd.f32 %v4351, %v6371
      %v6388 = vsel %vm1269, %v6372, 0.0
      %6389 = vadd.xlane.f32.xlu0 %v6388
      %v6390 = vpop.xlane.xlu0 %6389
      %v6391 = vsel %vm1269, %v6373, 0.0
      %6392 = vadd.xlane.f32.xlu0 %v6391
      %v6393 = vpop.xlane.xlu0 %6392
      %v6394 = vsel %vm1269, %v6374, 0.0
      %6395 = vadd.xlane.f32.xlu0 %v6394
      %v6396 = vpop.xlane.xlu0 %6395
      %v6397 = vsel %vm1269, %v6375, 0.0
      %6398 = vadd.xlane.f32.xlu0 %v6397
      %v6399 = vpop.xlane.xlu0 %6398
      %v6400 = vsel %vm1269, %v6376, 0.0
      %6401 = vadd.xlane.f32.xlu0 %v6400
      %v6402 = vpop.xlane.xlu0 %6401
      %v6403 = vsel %vm1269, %v6377, 0.0
      %6404 = vadd.xlane.f32.xlu0 %v6403
      %v6405 = vpop.xlane.xlu0 %6404
      %v6406 = vsel %vm1269, %v6378, 0.0
      %6407 = vadd.xlane.f32.xlu0 %v6406
      %v6408 = vpop.xlane.xlu0 %6407
      %v6409 = vsel %vm1269, %v6379, 0.0
      %6410 = vadd.xlane.f32.xlu0 %v6409
      %v6411 = vpop.xlane.xlu0 %6410
      %v6412 = vsel %vm1269, %v6380, 0.0
      %6413 = vadd.xlane.f32.xlu0 %v6412
      %v6414 = vpop.xlane.xlu0 %6413
      %v6415 = vsel %vm1269, %v6381, 0.0
      %6416 = vadd.xlane.f32.xlu0 %v6415
      %v6417 = vpop.xlane.xlu0 %6416
      %v6418 = vsel %vm1269, %v6382, 0.0
      %6419 = vadd.xlane.f32.xlu0 %v6418
      %v6420 = vpop.xlane.xlu0 %6419
      %v6421 = vsel %vm1269, %v6383, 0.0
      %6422 = vadd.xlane.f32.xlu0 %v6421
      %v6423 = vpop.xlane.xlu0 %6422
      %v6424 = vsel %vm1269, %v6384, 0.0
      %6425 = vadd.xlane.f32.xlu0 %v6424
      %v6426 = vpop.xlane.xlu0 %6425
      %v6427 = vsel %vm1269, %v6385, 0.0
      %6428 = vadd.xlane.f32.xlu0 %v6427
      %v6429 = vpop.xlane.xlu0 %6428
      %v6430 = vsel %vm1269, %v6386, 0.0
      %6431 = vadd.xlane.f32.xlu0 %v6430
      %v6432 = vpop.xlane.xlu0 %6431
      %v6433 = vsel %vm1269, %v6387, 0.0
      %6434 = vadd.xlane.f32.xlu0 %v6433
      %v6435 = vpop.xlane.xlu0 %6434
      %v6436 = vmul.f32 %v6390, %v3349
      %v6437 = vmul.f32 %v6393, %v3349
      %v6438 = vmul.f32 %v6396, %v3349
      %v6439 = vmul.f32 %v6399, %v3349
      %v6440 = vmul.f32 %v6402, %v3349
      %v6441 = vmul.f32 %v6405, %v3349
      %v6442 = vmul.f32 %v6408, %v3349
      %v6443 = vmul.f32 %v6411, %v3349
      %v6444 = vmul.f32 %v6414, %v3349
      %v6445 = vmul.f32 %v6417, %v3349
      %v6446 = vmul.f32 %v6420, %v3349
      %v6447 = vmul.f32 %v6423, %v3349
      %v6448 = vmul.f32 %v6426, %v3349
      %v6449 = vmul.f32 %v6429, %v3349
      %v6450 = vmul.f32 %v6432, %v3349
      %v6451 = vmul.f32 %v6435, %v3349
      %v6452 = vsub.f32 %v6372, %v6436
      %v6453 = vsub.f32 %v6373, %v6437
      %v6454 = vsub.f32 %v6374, %v6438
      %v6455 = vsub.f32 %v6375, %v6439
      %v6456 = vsub.f32 %v6376, %v6440
      %v6457 = vsub.f32 %v6377, %v6441
      %v6458 = vsub.f32 %v6378, %v6442
      %v6459 = vsub.f32 %v6379, %v6443
      %v6460 = vsub.f32 %v6380, %v6444
      %v6461 = vsub.f32 %v6381, %v6445
      %v6462 = vsub.f32 %v6382, %v6446
      %v6463 = vsub.f32 %v6383, %v6447
      %v6464 = vsub.f32 %v6384, %v6448
      %v6465 = vsub.f32 %v6385, %v6449
      %v6466 = vsub.f32 %v6386, %v6450
      %v6467 = vsub.f32 %v6387, %v6451
      %v6468 = vmul.f32 %v6452, %v6452
      %v6469 = vmul.f32 %v6453, %v6453
      %v6470 = vmul.f32 %v6454, %v6454
      %v6471 = vmul.f32 %v6455, %v6455
      %v6472 = vmul.f32 %v6456, %v6456
      %v6473 = vmul.f32 %v6457, %v6457
      %v6474 = vmul.f32 %v6458, %v6458
      %v6475 = vmul.f32 %v6459, %v6459
      %v6476 = vmul.f32 %v6460, %v6460
      %v6477 = vmul.f32 %v6461, %v6461
      %v6478 = vmul.f32 %v6462, %v6462
      %v6479 = vmul.f32 %v6463, %v6463
      %v6480 = vmul.f32 %v6464, %v6464
      %v6481 = vmul.f32 %v6465, %v6465
      %v6482 = vmul.f32 %v6466, %v6466
      %v6483 = vmul.f32 %v6467, %v6467
      %v6484 = vsel %vm1269, %v6468, 0.0
      %6485 = vadd.xlane.f32.xlu0 %v6484
      %v6486 = vpop.xlane.xlu0 %6485
      %v6487 = vsel %vm1269, %v6469, 0.0
      %6488 = vadd.xlane.f32.xlu0 %v6487
      %v6489 = vpop.xlane.xlu0 %6488
      %v6490 = vsel %vm1269, %v6470, 0.0
      %6491 = vadd.xlane.f32.xlu0 %v6490
      %v6492 = vpop.xlane.xlu0 %6491
      %v6493 = vsel %vm1269, %v6471, 0.0
      %6494 = vadd.xlane.f32.xlu0 %v6493
      %v6495 = vpop.xlane.xlu0 %6494
      %v6496 = vsel %vm1269, %v6472, 0.0
      %6497 = vadd.xlane.f32.xlu0 %v6496
      %v6498 = vpop.xlane.xlu0 %6497
      %v6499 = vsel %vm1269, %v6473, 0.0
      %6500 = vadd.xlane.f32.xlu0 %v6499
      %v6501 = vpop.xlane.xlu0 %6500
      %v6502 = vsel %vm1269, %v6474, 0.0
      %6503 = vadd.xlane.f32.xlu0 %v6502
      %v6504 = vpop.xlane.xlu0 %6503
      %v6505 = vsel %vm1269, %v6475, 0.0
      %6506 = vadd.xlane.f32.xlu0 %v6505
      %v6507 = vpop.xlane.xlu0 %6506
      %v6508 = vsel %vm1269, %v6476, 0.0
      %6509 = vadd.xlane.f32.xlu0 %v6508
      %v6510 = vpop.xlane.xlu0 %6509
      %v6511 = vsel %vm1269, %v6477, 0.0
      %6512 = vadd.xlane.f32.xlu0 %v6511
      %v6513 = vpop.xlane.xlu0 %6512
      %v6514 = vsel %vm1269, %v6478, 0.0
      %6515 = vadd.xlane.f32.xlu0 %v6514
      %v6516 = vpop.xlane.xlu0 %6515
      %v6517 = vsel %vm1269, %v6479, 0.0
      %6518 = vadd.xlane.f32.xlu0 %v6517
      %v6519 = vpop.xlane.xlu0 %6518
      %v6520 = vsel %vm1269, %v6480, 0.0
      %6521 = vadd.xlane.f32.xlu0 %v6520
      %v6522 = vpop.xlane.xlu0 %6521
      %v6523 = vsel %vm1269, %v6481, 0.0
      %6524 = vadd.xlane.f32.xlu0 %v6523
      %v6525 = vpop.xlane.xlu0 %6524
      %v6526 = vsel %vm1269, %v6482, 0.0
      %6527 = vadd.xlane.f32.xlu0 %v6526
      %v6528 = vpop.xlane.xlu0 %6527
      %v6529 = vsel %vm1269, %v6483, 0.0
      %6530 = vadd.xlane.f32.xlu0 %v6529
      %v6531 = vpop.xlane.xlu0 %6530
      %v6532 = vmul.f32 %v6486, %v3349
      %v6533 = vmul.f32 %v6489, %v3349
      %v6534 = vmul.f32 %v6492, %v3349
      %v6535 = vmul.f32 %v6495, %v3349
      %v6536 = vmul.f32 %v6498, %v3349
      %v6537 = vmul.f32 %v6501, %v3349
      %v6538 = vmul.f32 %v6504, %v3349
      %v6539 = vmul.f32 %v6507, %v3349
      %v6540 = vmul.f32 %v6510, %v3349
      %v6541 = vmul.f32 %v6513, %v3349
      %v6542 = vmul.f32 %v6516, %v3349
      %v6543 = vmul.f32 %v6519, %v3349
      %v6544 = vmul.f32 %v6522, %v3349
      %v6545 = vmul.f32 %v6525, %v3349
      %v6546 = vmul.f32 %v6528, %v3349
      %v6547 = vmul.f32 %v6531, %v3349
      %v6548 = vadd.f32 %v6532, 1e-05
      %v6549 = vadd.f32 %v6533, 1e-05
      %v6550 = vadd.f32 %v6534, 1e-05
      %v6551 = vadd.f32 %v6535, 1e-05
      %v6552 = vadd.f32 %v6536, 1e-05
      %v6553 = vadd.f32 %v6537, 1e-05
      %v6554 = vadd.f32 %v6538, 1e-05
      %v6555 = vadd.f32 %v6539, 1e-05
      %v6556 = vadd.f32 %v6540, 1e-05
      %v6557 = vadd.f32 %v6541, 1e-05
      %v6558 = vadd.f32 %v6542, 1e-05
      %v6559 = vadd.f32 %v6543, 1e-05
      %v6560 = vadd.f32 %v6544, 1e-05
      %v6561 = vadd.f32 %v6545, 1e-05
      %v6562 = vadd.f32 %v6546, 1e-05
      %v6563 = vadd.f32 %v6547, 1e-05
      %v6564 = vrsqrt.pop %v6548
      %v6565 = vmul.f32 %v6564, %v6548
      %v6566 = vmul.f32 %v6565, %v6564
      %v6567 = vmul.f32 0.5, %v6566
      %v6568 = vsub.f32 1.5, %v6567
      %v6569 = vmul.f32 %v6564, %v6568
      %vm6570 = vweird.f32 %v6548
      %vm6571 = vweird.f32 %v6564
      %vm6572 = vmor %vm6570, %vm6571
      %v6573 = vsel %vm6572, %v6564, %v6569
      %v6574 = vrsqrt.pop %v6549
      %v6575 = vmul.f32 %v6574, %v6549
      %v6576 = vmul.f32 %v6575, %v6574
      %v6577 = vmul.f32 0.5, %v6576
      %v6578 = vsub.f32 1.5, %v6577
      %v6579 = vmul.f32 %v6574, %v6578
      %vm6580 = vweird.f32 %v6549
      %vm6581 = vweird.f32 %v6574
      %vm6582 = vmor %vm6580, %vm6581
      %v6583 = vsel %vm6582, %v6574, %v6579
      %v6584 = vrsqrt.pop %v6550
      %v6585 = vmul.f32 %v6584, %v6550
      %v6586 = vmul.f32 %v6585, %v6584
      %v6587 = vmul.f32 0.5, %v6586
      %v6588 = vsub.f32 1.5, %v6587
      %v6589 = vmul.f32 %v6584, %v6588
      %vm6590 = vweird.f32 %v6550
      %vm6591 = vweird.f32 %v6584
      %vm6592 = vmor %vm6590, %vm6591
      %v6593 = vsel %vm6592, %v6584, %v6589
      %v6594 = vrsqrt.pop %v6551
      %v6595 = vmul.f32 %v6594, %v6551
      %v6596 = vmul.f32 %v6595, %v6594
      %v6597 = vmul.f32 0.5, %v6596
      %v6598 = vsub.f32 1.5, %v6597
      %v6599 = vmul.f32 %v6594, %v6598
      %vm6600 = vweird.f32 %v6551
      %vm6601 = vweird.f32 %v6594
      %vm6602 = vmor %vm6600, %vm6601
      %v6603 = vsel %vm6602, %v6594, %v6599
      %v6604 = vrsqrt.pop %v6552
      %v6605 = vmul.f32 %v6604, %v6552
      %v6606 = vmul.f32 %v6605, %v6604
      %v6607 = vmul.f32 0.5, %v6606
      %v6608 = vsub.f32 1.5, %v6607
      %v6609 = vmul.f32 %v6604, %v6608
      %vm6610 = vweird.f32 %v6552
      %vm6611 = vweird.f32 %v6604
      %vm6612 = vmor %vm6610, %vm6611
      %v6613 = vsel %vm6612, %v6604, %v6609
      %v6614 = vrsqrt.pop %v6553
      %v6615 = vmul.f32 %v6614, %v6553
      %v6616 = vmul.f32 %v6615, %v6614
      %v6617 = vmul.f32 0.5, %v6616
      %v6618 = vsub.f32 1.5, %v6617
      %v6619 = vmul.f32 %v6614, %v6618
      %vm6620 = vweird.f32 %v6553
      %vm6621 = vweird.f32 %v6614
      %vm6622 = vmor %vm6620, %vm6621
      %v6623 = vsel %vm6622, %v6614, %v6619
      %v6624 = vrsqrt.pop %v6554
      %v6625 = vmul.f32 %v6624, %v6554
      %v6626 = vmul.f32 %v6625, %v6624
      %v6627 = vmul.f32 0.5, %v6626
      %v6628 = vsub.f32 1.5, %v6627
      %v6629 = vmul.f32 %v6624, %v6628
      %vm6630 = vweird.f32 %v6554
      %vm6631 = vweird.f32 %v6624
      %vm6632 = vmor %vm6630, %vm6631
      %v6633 = vsel %vm6632, %v6624, %v6629
      %v6634 = vrsqrt.pop %v6555
      %v6635 = vmul.f32 %v6634, %v6555
      %v6636 = vmul.f32 %v6635, %v6634
      %v6637 = vmul.f32 0.5, %v6636
      %v6638 = vsub.f32 1.5, %v6637
      %v6639 = vmul.f32 %v6634, %v6638
      %vm6640 = vweird.f32 %v6555
      %vm6641 = vweird.f32 %v6634
      %vm6642 = vmor %vm6640, %vm6641
      %v6643 = vsel %vm6642, %v6634, %v6639
      %v6644 = vrsqrt.pop %v6556
      %v6645 = vmul.f32 %v6644, %v6556
      %v6646 = vmul.f32 %v6645, %v6644
      %v6647 = vmul.f32 0.5, %v6646
      %v6648 = vsub.f32 1.5, %v6647
      %v6649 = vmul.f32 %v6644, %v6648
      %vm6650 = vweird.f32 %v6556
      %vm6651 = vweird.f32 %v6644
      %vm6652 = vmor %vm6650, %vm6651
      %v6653 = vsel %vm6652, %v6644, %v6649
      %v6654 = vrsqrt.pop %v6557
      %v6655 = vmul.f32 %v6654, %v6557
      %v6656 = vmul.f32 %v6655, %v6654
      %v6657 = vmul.f32 0.5, %v6656
      %v6658 = vsub.f32 1.5, %v6657
      %v6659 = vmul.f32 %v6654, %v6658
      %vm6660 = vweird.f32 %v6557
      %vm6661 = vweird.f32 %v6654
      %vm6662 = vmor %vm6660, %vm6661
      %v6663 = vsel %vm6662, %v6654, %v6659
      %v6664 = vrsqrt.pop %v6558
      %v6665 = vmul.f32 %v6664, %v6558
      %v6666 = vmul.f32 %v6665, %v6664
      %v6667 = vmul.f32 0.5, %v6666
      %v6668 = vsub.f32 1.5, %v6667
      %v6669 = vmul.f32 %v6664, %v6668
      %vm6670 = vweird.f32 %v6558
      %vm6671 = vweird.f32 %v6664
      %vm6672 = vmor %vm6670, %vm6671
      %v6673 = vsel %vm6672, %v6664, %v6669
      %v6674 = vrsqrt.pop %v6559
      %v6675 = vmul.f32 %v6674, %v6559
      %v6676 = vmul.f32 %v6675, %v6674
      %v6677 = vmul.f32 0.5, %v6676
      %v6678 = vsub.f32 1.5, %v6677
      %v6679 = vmul.f32 %v6674, %v6678
      %vm6680 = vweird.f32 %v6559
      %vm6681 = vweird.f32 %v6674
      %vm6682 = vmor %vm6680, %vm6681
      %v6683 = vsel %vm6682, %v6674, %v6679
      %v6684 = vrsqrt.pop %v6560
      %v6685 = vmul.f32 %v6684, %v6560
      %v6686 = vmul.f32 %v6685, %v6684
      %v6687 = vmul.f32 0.5, %v6686
      %v6688 = vsub.f32 1.5, %v6687
      %v6689 = vmul.f32 %v6684, %v6688
      %vm6690 = vweird.f32 %v6560
      %vm6691 = vweird.f32 %v6684
      %vm6692 = vmor %vm6690, %vm6691
      %v6693 = vsel %vm6692, %v6684, %v6689
      %v6694 = vrsqrt.pop %v6561
      %v6695 = vmul.f32 %v6694, %v6561
      %v6696 = vmul.f32 %v6695, %v6694
      %v6697 = vmul.f32 0.5, %v6696
      %v6698 = vsub.f32 1.5, %v6697
      %v6699 = vmul.f32 %v6694, %v6698
      %vm6700 = vweird.f32 %v6561
      %vm6701 = vweird.f32 %v6694
      %vm6702 = vmor %vm6700, %vm6701
      %v6703 = vsel %vm6702, %v6694, %v6699
      %v6704 = vrsqrt.pop %v6562
      %v6705 = vmul.f32 %v6704, %v6562
      %v6706 = vmul.f32 %v6705, %v6704
      %v6707 = vmul.f32 0.5, %v6706
      %v6708 = vsub.f32 1.5, %v6707
      %v6709 = vmul.f32 %v6704, %v6708
      %vm6710 = vweird.f32 %v6562
      %vm6711 = vweird.f32 %v6704
      %vm6712 = vmor %vm6710, %vm6711
      %v6713 = vsel %vm6712, %v6704, %v6709
      %v6714 = vrsqrt.pop %v6563
      %v6715 = vmul.f32 %v6714, %v6563
      %v6716 = vmul.f32 %v6715, %v6714
      %v6717 = vmul.f32 0.5, %v6716
      %v6718 = vsub.f32 1.5, %v6717
      %v6719 = vmul.f32 %v6714, %v6718
      %vm6720 = vweird.f32 %v6563
      %vm6721 = vweird.f32 %v6714
      %vm6722 = vmor %vm6720, %vm6721
      %v6723 = vsel %vm6722, %v6714, %v6719
      %v6724 = vmul.f32 %v6452, %v6573
      %v6725 = vmul.f32 %v6453, %v6583
      %v6726 = vmul.f32 %v6454, %v6593
      %v6727 = vmul.f32 %v6455, %v6603
      %v6728 = vmul.f32 %v6456, %v6613
      %v6729 = vmul.f32 %v6457, %v6623
      %v6730 = vmul.f32 %v6458, %v6633
      %v6731 = vmul.f32 %v6459, %v6643
      %v6732 = vmul.f32 %v6460, %v6653
      %v6733 = vmul.f32 %v6461, %v6663
      %v6734 = vmul.f32 %v6462, %v6673
      %v6735 = vmul.f32 %v6463, %v6683
      %v6736 = vmul.f32 %v6464, %v6693
      %v6737 = vmul.f32 %v6465, %v6703
      %v6738 = vmul.f32 %v6466, %v6713
      %v6739 = vmul.f32 %v6467, %v6723
      %v6740 = vmul.f32 %v6724, %v3655
      %v6741 = vmul.f32 %v6725, %v3655
      %v6742 = vmul.f32 %v6726, %v3655
      %v6743 = vmul.f32 %v6727, %v3655
      %v6744 = vmul.f32 %v6728, %v3655
      %v6745 = vmul.f32 %v6729, %v3655
      %v6746 = vmul.f32 %v6730, %v3655
      %v6747 = vmul.f32 %v6731, %v3655
      %v6748 = vmul.f32 %v6732, %v3655
      %v6749 = vmul.f32 %v6733, %v3655
      %v6750 = vmul.f32 %v6734, %v3655
      %v6751 = vmul.f32 %v6735, %v3655
      %v6752 = vmul.f32 %v6736, %v3655
      %v6753 = vmul.f32 %v6737, %v3655
      %v6754 = vmul.f32 %v6738, %v3655
      %v6755 = vmul.f32 %v6739, %v3655
      %v6756 = vadd.f32 %v6740, %v3674
      %v6757 = vadd.f32 %v6741, %v3674
      %v6758 = vadd.f32 %v6742, %v3674
      %v6759 = vadd.f32 %v6743, %v3674
      %v6760 = vadd.f32 %v6744, %v3674
      %v6761 = vadd.f32 %v6745, %v3674
      %v6762 = vadd.f32 %v6746, %v3674
      %v6763 = vadd.f32 %v6747, %v3674
      %v6764 = vadd.f32 %v6748, %v3674
      %v6765 = vadd.f32 %v6749, %v3674
      %v6766 = vadd.f32 %v6750, %v3674
      %v6767 = vadd.f32 %v6751, %v3674
      %v6768 = vadd.f32 %v6752, %v3674
      %v6769 = vadd.f32 %v6753, %v3674
      %v6770 = vadd.f32 %v6754, %v3674
      %v6771 = vadd.f32 %v6755, %v3674
      %v6772 = vpack.c.bf16 %v6757, %v6756
      %v6773 = vpack.c.bf16 %v6759, %v6758
      %v6774 = vpack.c.bf16 %v6761, %v6760
      %v6775 = vpack.c.bf16 %v6763, %v6762
      %v6776 = vpack.c.bf16 %v6765, %v6764
      %v6777 = vpack.c.bf16 %v6767, %v6766
      %v6778 = vpack.c.bf16 %v6769, %v6768
      %v6779 = vpack.c.bf16 %v6771, %v6770
      %v6781 = vsel %vm1269, %v6772, 0
      %v6784 = vsel %vm1269, %v6773, 0
      %v6787 = vsel %vm1269, %v6774, 0
      %v6790 = vsel %vm1269, %v6775, 0
      %v6793 = vsel %vm1269, %v6776, 0
      %v6796 = vsel %vm1269, %v6777, 0
      %v6799 = vsel %vm1269, %v6778, 0
      %v6802 = vsel %vm1269, %v6779, 0
      %6804 = vmatpush.bf16.msra.mxu0 0
      %6805 = vmatpush.bf16.msra.mxu0 0
      %6806 = vmatpush.bf16.msra.mxu0 0
      %6807 = vmatpush.bf16.msra.mxu0 0
      %6808 = vmatpush.bf16.msra.mxu0 0
      %6809 = vmatpush.bf16.msra.mxu0 0
      %6810 = vmatpush.bf16.msra.mxu0 %v3712
      %6811 = vmatpush.bf16.msra.mxu0 %v3711
      %6812 = vmatmul.bf16.gmra.mxu0 %v6781
      %v6813 = vpop.f32.mrf.mxu0
      %v6814 = vadd.f32 %v3701, %v6813
      %v6815 = vpop.f32.mrf.mxu0
      %v6816 = vadd.f32 %v3701, %v6815
      %6817 = vmatmul.bf16.gmra.mxu0 %v6784
      %v6818 = vpop.f32.mrf.mxu0
      %v6819 = vadd.f32 %v3701, %v6818
      %v6820 = vpop.f32.mrf.mxu0
      %v6821 = vadd.f32 %v3701, %v6820
      %6822 = vmatmul.bf16.gmra.mxu0 %v6787
      %v6823 = vpop.f32.mrf.mxu0
      %v6824 = vadd.f32 %v3701, %v6823
      %v6825 = vpop.f32.mrf.mxu0
      %v6826 = vadd.f32 %v3701, %v6825
      %6827 = vmatmul.bf16.gmra.mxu0 %v6790
      %v6828 = vpop.f32.mrf.mxu0
      %v6829 = vadd.f32 %v3701, %v6828
      %v6830 = vpop.f32.mrf.mxu0
      %v6831 = vadd.f32 %v3701, %v6830
      %6832 = vmatmul.bf16.gmra.mxu0 %v6793
      %v6833 = vpop.f32.mrf.mxu0
      %v6834 = vadd.f32 %v3701, %v6833
      %v6835 = vpop.f32.mrf.mxu0
      %v6836 = vadd.f32 %v3701, %v6835
      %6837 = vmatmul.bf16.gmra.mxu0 %v6796
      %v6838 = vpop.f32.mrf.mxu0
      %v6839 = vadd.f32 %v3701, %v6838
      %v6840 = vpop.f32.mrf.mxu0
      %v6841 = vadd.f32 %v3701, %v6840
      %6842 = vmatmul.bf16.gmra.mxu0 %v6799
      %v6843 = vpop.f32.mrf.mxu0
      %v6844 = vadd.f32 %v3701, %v6843
      %v6845 = vpop.f32.mrf.mxu0
      %v6846 = vadd.f32 %v3701, %v6845
      %6847 = vmatmul.bf16.gmra.mxu0 %v6802
      %v6848 = vpop.f32.mrf.mxu0
      %v6849 = vadd.f32 %v3701, %v6848
      %v6850 = vpop.f32.mrf.mxu0
      %v6851 = vadd.f32 %v3701, %v6850
      %6852 = vdwg.mxu0
      %v6853 = vmax.f32 %v6814, 0.0
      %v6854 = vmax.f32 %v6816, 0.0
      %v6855 = vmax.f32 %v6819, 0.0
      %v6856 = vmax.f32 %v6821, 0.0
      %v6857 = vmax.f32 %v6824, 0.0
      %v6858 = vmax.f32 %v6826, 0.0
      %v6859 = vmax.f32 %v6829, 0.0
      %v6860 = vmax.f32 %v6831, 0.0
      %v6861 = vmax.f32 %v6834, 0.0
      %v6862 = vmax.f32 %v6836, 0.0
      %v6863 = vmax.f32 %v6839, 0.0
      %v6864 = vmax.f32 %v6841, 0.0
      %v6865 = vmax.f32 %v6844, 0.0
      %v6866 = vmax.f32 %v6846, 0.0
      %v6867 = vmax.f32 %v6849, 0.0
      %v6868 = vmax.f32 %v6851, 0.0
      %v6869 = vpack.c.bf16 %v6854, %v6853
      %v6870 = vpack.c.bf16 %v6856, %v6855
      %v6871 = vpack.c.bf16 %v6858, %v6857
      %v6872 = vpack.c.bf16 %v6860, %v6859
      %v6873 = vpack.c.bf16 %v6862, %v6861
      %v6874 = vpack.c.bf16 %v6864, %v6863
      %v6875 = vpack.c.bf16 %v6866, %v6865
      %v6876 = vpack.c.bf16 %v6868, %v6867
      %v6878 = vsel %vm3839, %v6869, 0
      %v6881 = vsel %vm3839, %v6870, 0
      %v6884 = vsel %vm3839, %v6871, 0
      %v6887 = vsel %vm3839, %v6872, 0
      %v6890 = vsel %vm3839, %v6873, 0
      %v6893 = vsel %vm3839, %v6874, 0
      %v6896 = vsel %vm3839, %v6875, 0
      %v6899 = vsel %vm3839, %v6876, 0
      %6901 = vmatpush.bf16.msra.mxu0 0
      %6902 = vmatpush.bf16.msra.mxu0 0
      %6903 = vmatpush.bf16.msra.mxu0 0
      %6904 = vmatpush.bf16.msra.mxu0 0
      %6905 = vmatpush.bf16.msra.mxu0 %v3834
      %6906 = vmatpush.bf16.msra.mxu0 %v3833
      %6907 = vmatpush.bf16.msra.mxu0 %v3832
      %6908 = vmatpush.bf16.msra.mxu0 %v3831
      %6909 = vmatmul.bf16.gmra.mxu0 %v6878
      %v6910 = vpop.f32.mrf.mxu0
      %v6911 = vadd.f32 %v3813, %v6910
      %v6912 = vpop.f32.mrf.mxu0
      %v6913 = vadd.f32 %v3813, %v6912
      %6914 = vmatmul.bf16.gmra.mxu0 %v6881
      %v6915 = vpop.f32.mrf.mxu0
      %v6916 = vadd.f32 %v3813, %v6915
      %v6917 = vpop.f32.mrf.mxu0
      %v6918 = vadd.f32 %v3813, %v6917
      %6919 = vmatmul.bf16.gmra.mxu0 %v6884
      %v6920 = vpop.f32.mrf.mxu0
      %v6921 = vadd.f32 %v3813, %v6920
      %v6922 = vpop.f32.mrf.mxu0
      %v6923 = vadd.f32 %v3813, %v6922
      %6924 = vmatmul.bf16.gmra.mxu0 %v6887
      %v6925 = vpop.f32.mrf.mxu0
      %v6926 = vadd.f32 %v3813, %v6925
      %v6927 = vpop.f32.mrf.mxu0
      %v6928 = vadd.f32 %v3813, %v6927
      %6929 = vmatmul.bf16.gmra.mxu0 %v6890
      %v6930 = vpop.f32.mrf.mxu0
      %v6931 = vadd.f32 %v3813, %v6930
      %v6932 = vpop.f32.mrf.mxu0
      %v6933 = vadd.f32 %v3813, %v6932
      %6934 = vmatmul.bf16.gmra.mxu0 %v6893
      %v6935 = vpop.f32.mrf.mxu0
      %v6936 = vadd.f32 %v3813, %v6935
      %v6937 = vpop.f32.mrf.mxu0
      %v6938 = vadd.f32 %v3813, %v6937
      %6939 = vmatmul.bf16.gmra.mxu0 %v6896
      %v6940 = vpop.f32.mrf.mxu0
      %v6941 = vadd.f32 %v3813, %v6940
      %v6942 = vpop.f32.mrf.mxu0
      %v6943 = vadd.f32 %v3813, %v6942
      %6944 = vmatmul.bf16.gmra.mxu0 %v6899
      %v6945 = vpop.f32.mrf.mxu0
      %v6946 = vadd.f32 %v3813, %v6945
      %v6947 = vpop.f32.mrf.mxu0
      %v6948 = vadd.f32 %v3813, %v6947
      %6949 = vdwg.mxu0
      %v6950 = vadd.f32 %v6756, %v6911
      %v6951 = vadd.f32 %v6757, %v6913
      %v6952 = vadd.f32 %v6758, %v6916
      %v6953 = vadd.f32 %v6759, %v6918
      %v6954 = vadd.f32 %v6760, %v6921
      %v6955 = vadd.f32 %v6761, %v6923
      %v6956 = vadd.f32 %v6762, %v6926
      %v6957 = vadd.f32 %v6763, %v6928
      %v6958 = vadd.f32 %v6764, %v6931
      %v6959 = vadd.f32 %v6765, %v6933
      %v6960 = vadd.f32 %v6766, %v6936
      %v6961 = vadd.f32 %v6767, %v6938
      %v6962 = vadd.f32 %v6768, %v6941
      %v6963 = vadd.f32 %v6769, %v6943
      %v6964 = vadd.f32 %v6770, %v6946
      %v6965 = vadd.f32 %v6771, %v6948
      %v6966 = vsel %vm1269, %v6950, 0.0
      %6967 = vadd.xlane.f32.xlu0 %v6966
      %v6968 = vpop.xlane.xlu0 %6967
      %v6969 = vsel %vm1269, %v6951, 0.0
      %6970 = vadd.xlane.f32.xlu0 %v6969
      %v6971 = vpop.xlane.xlu0 %6970
      %v6972 = vsel %vm1269, %v6952, 0.0
      %6973 = vadd.xlane.f32.xlu0 %v6972
      %v6974 = vpop.xlane.xlu0 %6973
      %v6975 = vsel %vm1269, %v6953, 0.0
      %6976 = vadd.xlane.f32.xlu0 %v6975
      %v6977 = vpop.xlane.xlu0 %6976
      %v6978 = vsel %vm1269, %v6954, 0.0
      %6979 = vadd.xlane.f32.xlu0 %v6978
      %v6980 = vpop.xlane.xlu0 %6979
      %v6981 = vsel %vm1269, %v6955, 0.0
      %6982 = vadd.xlane.f32.xlu0 %v6981
      %v6983 = vpop.xlane.xlu0 %6982
      %v6984 = vsel %vm1269, %v6956, 0.0
      %6985 = vadd.xlane.f32.xlu0 %v6984
      %v6986 = vpop.xlane.xlu0 %6985
      %v6987 = vsel %vm1269, %v6957, 0.0
      %6988 = vadd.xlane.f32.xlu0 %v6987
      %v6989 = vpop.xlane.xlu0 %6988
      %v6990 = vsel %vm1269, %v6958, 0.0
      %6991 = vadd.xlane.f32.xlu0 %v6990
      %v6992 = vpop.xlane.xlu0 %6991
      %v6993 = vsel %vm1269, %v6959, 0.0
      %6994 = vadd.xlane.f32.xlu0 %v6993
      %v6995 = vpop.xlane.xlu0 %6994
      %v6996 = vsel %vm1269, %v6960, 0.0
      %6997 = vadd.xlane.f32.xlu0 %v6996
      %v6998 = vpop.xlane.xlu0 %6997
      %v6999 = vsel %vm1269, %v6961, 0.0
      %7000 = vadd.xlane.f32.xlu0 %v6999
      %v7001 = vpop.xlane.xlu0 %7000
      %v7002 = vsel %vm1269, %v6962, 0.0
      %7003 = vadd.xlane.f32.xlu0 %v7002
      %v7004 = vpop.xlane.xlu0 %7003
      %v7005 = vsel %vm1269, %v6963, 0.0
      %7006 = vadd.xlane.f32.xlu0 %v7005
      %v7007 = vpop.xlane.xlu0 %7006
      %v7008 = vsel %vm1269, %v6964, 0.0
      %7009 = vadd.xlane.f32.xlu0 %v7008
      %v7010 = vpop.xlane.xlu0 %7009
      %v7011 = vsel %vm1269, %v6965, 0.0
      %7012 = vadd.xlane.f32.xlu0 %v7011
      %v7013 = vpop.xlane.xlu0 %7012
      %v7014 = vmul.f32 %v6968, %v3349
      %v7015 = vmul.f32 %v6971, %v3349
      %v7016 = vmul.f32 %v6974, %v3349
      %v7017 = vmul.f32 %v6977, %v3349
      %v7018 = vmul.f32 %v6980, %v3349
      %v7019 = vmul.f32 %v6983, %v3349
      %v7020 = vmul.f32 %v6986, %v3349
      %v7021 = vmul.f32 %v6989, %v3349
      %v7022 = vmul.f32 %v6992, %v3349
      %v7023 = vmul.f32 %v6995, %v3349
      %v7024 = vmul.f32 %v6998, %v3349
      %v7025 = vmul.f32 %v7001, %v3349
      %v7026 = vmul.f32 %v7004, %v3349
      %v7027 = vmul.f32 %v7007, %v3349
      %v7028 = vmul.f32 %v7010, %v3349
      %v7029 = vmul.f32 %v7013, %v3349
      %v7030 = vsub.f32 %v6950, %v7014
      %v7031 = vsub.f32 %v6951, %v7015
      %v7032 = vsub.f32 %v6952, %v7016
      %v7033 = vsub.f32 %v6953, %v7017
      %v7034 = vsub.f32 %v6954, %v7018
      %v7035 = vsub.f32 %v6955, %v7019
      %v7036 = vsub.f32 %v6956, %v7020
      %v7037 = vsub.f32 %v6957, %v7021
      %v7038 = vsub.f32 %v6958, %v7022
      %v7039 = vsub.f32 %v6959, %v7023
      %v7040 = vsub.f32 %v6960, %v7024
      %v7041 = vsub.f32 %v6961, %v7025
      %v7042 = vsub.f32 %v6962, %v7026
      %v7043 = vsub.f32 %v6963, %v7027
      %v7044 = vsub.f32 %v6964, %v7028
      %v7045 = vsub.f32 %v6965, %v7029
      %v7046 = vmul.f32 %v7030, %v7030
      %v7047 = vmul.f32 %v7031, %v7031
      %v7048 = vmul.f32 %v7032, %v7032
      %v7049 = vmul.f32 %v7033, %v7033
      %v7050 = vmul.f32 %v7034, %v7034
      %v7051 = vmul.f32 %v7035, %v7035
      %v7052 = vmul.f32 %v7036, %v7036
      %v7053 = vmul.f32 %v7037, %v7037
      %v7054 = vmul.f32 %v7038, %v7038
      %v7055 = vmul.f32 %v7039, %v7039
      %v7056 = vmul.f32 %v7040, %v7040
      %v7057 = vmul.f32 %v7041, %v7041
      %v7058 = vmul.f32 %v7042, %v7042
      %v7059 = vmul.f32 %v7043, %v7043
      %v7060 = vmul.f32 %v7044, %v7044
      %v7061 = vmul.f32 %v7045, %v7045
      %v7062 = vsel %vm1269, %v7046, 0.0
      %7063 = vadd.xlane.f32.xlu0 %v7062
      %v7064 = vpop.xlane.xlu0 %7063
      %v7065 = vsel %vm1269, %v7047, 0.0
      %7066 = vadd.xlane.f32.xlu0 %v7065
      %v7067 = vpop.xlane.xlu0 %7066
      %v7068 = vsel %vm1269, %v7048, 0.0
      %7069 = vadd.xlane.f32.xlu0 %v7068
      %v7070 = vpop.xlane.xlu0 %7069
      %v7071 = vsel %vm1269, %v7049, 0.0
      %7072 = vadd.xlane.f32.xlu0 %v7071
      %v7073 = vpop.xlane.xlu0 %7072
      %v7074 = vsel %vm1269, %v7050, 0.0
      %7075 = vadd.xlane.f32.xlu0 %v7074
      %v7076 = vpop.xlane.xlu0 %7075
      %v7077 = vsel %vm1269, %v7051, 0.0
      %7078 = vadd.xlane.f32.xlu0 %v7077
      %v7079 = vpop.xlane.xlu0 %7078
      %v7080 = vsel %vm1269, %v7052, 0.0
      %7081 = vadd.xlane.f32.xlu0 %v7080
      %v7082 = vpop.xlane.xlu0 %7081
      %v7083 = vsel %vm1269, %v7053, 0.0
      %7084 = vadd.xlane.f32.xlu0 %v7083
      %v7085 = vpop.xlane.xlu0 %7084
      %v7086 = vsel %vm1269, %v7054, 0.0
      %7087 = vadd.xlane.f32.xlu0 %v7086
      %v7088 = vpop.xlane.xlu0 %7087
      %v7089 = vsel %vm1269, %v7055, 0.0
      %7090 = vadd.xlane.f32.xlu0 %v7089
      %v7091 = vpop.xlane.xlu0 %7090
      %v7092 = vsel %vm1269, %v7056, 0.0
      %7093 = vadd.xlane.f32.xlu0 %v7092
      %v7094 = vpop.xlane.xlu0 %7093
      %v7095 = vsel %vm1269, %v7057, 0.0
      %7096 = vadd.xlane.f32.xlu0 %v7095
      %v7097 = vpop.xlane.xlu0 %7096
      %v7098 = vsel %vm1269, %v7058, 0.0
      %7099 = vadd.xlane.f32.xlu0 %v7098
      %v7100 = vpop.xlane.xlu0 %7099
      %v7101 = vsel %vm1269, %v7059, 0.0
      %7102 = vadd.xlane.f32.xlu0 %v7101
      %v7103 = vpop.xlane.xlu0 %7102
      %v7104 = vsel %vm1269, %v7060, 0.0
      %7105 = vadd.xlane.f32.xlu0 %v7104
      %v7106 = vpop.xlane.xlu0 %7105
      %v7107 = vsel %vm1269, %v7061, 0.0
      %7108 = vadd.xlane.f32.xlu0 %v7107
      %v7109 = vpop.xlane.xlu0 %7108
      %v7110 = vmul.f32 %v7064, %v3349
      %v7111 = vmul.f32 %v7067, %v3349
      %v7112 = vmul.f32 %v7070, %v3349
      %v7113 = vmul.f32 %v7073, %v3349
      %v7114 = vmul.f32 %v7076, %v3349
      %v7115 = vmul.f32 %v7079, %v3349
      %v7116 = vmul.f32 %v7082, %v3349
      %v7117 = vmul.f32 %v7085, %v3349
      %v7118 = vmul.f32 %v7088, %v3349
      %v7119 = vmul.f32 %v7091, %v3349
      %v7120 = vmul.f32 %v7094, %v3349
      %v7121 = vmul.f32 %v7097, %v3349
      %v7122 = vmul.f32 %v7100, %v3349
      %v7123 = vmul.f32 %v7103, %v3349
      %v7124 = vmul.f32 %v7106, %v3349
      %v7125 = vmul.f32 %v7109, %v3349
      %v7126 = vadd.f32 %v7110, 1e-05
      %v7127 = vadd.f32 %v7111, 1e-05
      %v7128 = vadd.f32 %v7112, 1e-05
      %v7129 = vadd.f32 %v7113, 1e-05
      %v7130 = vadd.f32 %v7114, 1e-05
      %v7131 = vadd.f32 %v7115, 1e-05
      %v7132 = vadd.f32 %v7116, 1e-05
      %v7133 = vadd.f32 %v7117, 1e-05
      %v7134 = vadd.f32 %v7118, 1e-05
      %v7135 = vadd.f32 %v7119, 1e-05
      %v7136 = vadd.f32 %v7120, 1e-05
      %v7137 = vadd.f32 %v7121, 1e-05
      %v7138 = vadd.f32 %v7122, 1e-05
      %v7139 = vadd.f32 %v7123, 1e-05
      %v7140 = vadd.f32 %v7124, 1e-05
      %v7141 = vadd.f32 %v7125, 1e-05
      %v7142 = vrsqrt.pop %v7126
      %v7143 = vmul.f32 %v7142, %v7126
      %v7144 = vmul.f32 %v7143, %v7142
      %v7145 = vmul.f32 0.5, %v7144
      %v7146 = vsub.f32 1.5, %v7145
      %v7147 = vmul.f32 %v7142, %v7146
      %vm7148 = vweird.f32 %v7126
      %vm7149 = vweird.f32 %v7142
      %vm7150 = vmor %vm7148, %vm7149
      %v7151 = vsel %vm7150, %v7142, %v7147
      %v7152 = vrsqrt.pop %v7127
      %v7153 = vmul.f32 %v7152, %v7127
      %v7154 = vmul.f32 %v7153, %v7152
      %v7155 = vmul.f32 0.5, %v7154
      %v7156 = vsub.f32 1.5, %v7155
      %v7157 = vmul.f32 %v7152, %v7156
      %vm7158 = vweird.f32 %v7127
      %vm7159 = vweird.f32 %v7152
      %vm7160 = vmor %vm7158, %vm7159
      %v7161 = vsel %vm7160, %v7152, %v7157
      %v7162 = vrsqrt.pop %v7128
      %v7163 = vmul.f32 %v7162, %v7128
      %v7164 = vmul.f32 %v7163, %v7162
      %v7165 = vmul.f32 0.5, %v7164
      %v7166 = vsub.f32 1.5, %v7165
      %v7167 = vmul.f32 %v7162, %v7166
      %vm7168 = vweird.f32 %v7128
      %vm7169 = vweird.f32 %v7162
      %vm7170 = vmor %vm7168, %vm7169
      %v7171 = vsel %vm7170, %v7162, %v7167
      %v7172 = vrsqrt.pop %v7129
      %v7173 = vmul.f32 %v7172, %v7129
      %v7174 = vmul.f32 %v7173, %v7172
      %v7175 = vmul.f32 0.5, %v7174
      %v7176 = vsub.f32 1.5, %v7175
      %v7177 = vmul.f32 %v7172, %v7176
      %vm7178 = vweird.f32 %v7129
      %vm7179 = vweird.f32 %v7172
      %vm7180 = vmor %vm7178, %vm7179
      %v7181 = vsel %vm7180, %v7172, %v7177
      %v7182 = vrsqrt.pop %v7130
      %v7183 = vmul.f32 %v7182, %v7130
      %v7184 = vmul.f32 %v7183, %v7182
      %v7185 = vmul.f32 0.5, %v7184
      %v7186 = vsub.f32 1.5, %v7185
      %v7187 = vmul.f32 %v7182, %v7186
      %vm7188 = vweird.f32 %v7130
      %vm7189 = vweird.f32 %v7182
      %vm7190 = vmor %vm7188, %vm7189
      %v7191 = vsel %vm7190, %v7182, %v7187
      %v7192 = vrsqrt.pop %v7131
      %v7193 = vmul.f32 %v7192, %v7131
      %v7194 = vmul.f32 %v7193, %v7192
      %v7195 = vmul.f32 0.5, %v7194
      %v7196 = vsub.f32 1.5, %v7195
      %v7197 = vmul.f32 %v7192, %v7196
      %vm7198 = vweird.f32 %v7131
      %vm7199 = vweird.f32 %v7192
      %vm7200 = vmor %vm7198, %vm7199
      %v7201 = vsel %vm7200, %v7192, %v7197
      %v7202 = vrsqrt.pop %v7132
      %v7203 = vmul.f32 %v7202, %v7132
      %v7204 = vmul.f32 %v7203, %v7202
      %v7205 = vmul.f32 0.5, %v7204
      %v7206 = vsub.f32 1.5, %v7205
      %v7207 = vmul.f32 %v7202, %v7206
      %vm7208 = vweird.f32 %v7132
      %vm7209 = vweird.f32 %v7202
      %vm7210 = vmor %vm7208, %vm7209
      %v7211 = vsel %vm7210, %v7202, %v7207
      %v7212 = vrsqrt.pop %v7133
      %v7213 = vmul.f32 %v7212, %v7133
      %v7214 = vmul.f32 %v7213, %v7212
      %v7215 = vmul.f32 0.5, %v7214
      %v7216 = vsub.f32 1.5, %v7215
      %v7217 = vmul.f32 %v7212, %v7216
      %vm7218 = vweird.f32 %v7133
      %vm7219 = vweird.f32 %v7212
      %vm7220 = vmor %vm7218, %vm7219
      %v7221 = vsel %vm7220, %v7212, %v7217
      %v7222 = vrsqrt.pop %v7134
      %v7223 = vmul.f32 %v7222, %v7134
      %v7224 = vmul.f32 %v7223, %v7222
      %v7225 = vmul.f32 0.5, %v7224
      %v7226 = vsub.f32 1.5, %v7225
      %v7227 = vmul.f32 %v7222, %v7226
      %vm7228 = vweird.f32 %v7134
      %vm7229 = vweird.f32 %v7222
      %vm7230 = vmor %vm7228, %vm7229
      %v7231 = vsel %vm7230, %v7222, %v7227
      %v7232 = vrsqrt.pop %v7135
      %v7233 = vmul.f32 %v7232, %v7135
      %v7234 = vmul.f32 %v7233, %v7232
      %v7235 = vmul.f32 0.5, %v7234
      %v7236 = vsub.f32 1.5, %v7235
      %v7237 = vmul.f32 %v7232, %v7236
      %vm7238 = vweird.f32 %v7135
      %vm7239 = vweird.f32 %v7232
      %vm7240 = vmor %vm7238, %vm7239
      %v7241 = vsel %vm7240, %v7232, %v7237
      %v7242 = vrsqrt.pop %v7136
      %v7243 = vmul.f32 %v7242, %v7136
      %v7244 = vmul.f32 %v7243, %v7242
      %v7245 = vmul.f32 0.5, %v7244
      %v7246 = vsub.f32 1.5, %v7245
      %v7247 = vmul.f32 %v7242, %v7246
      %vm7248 = vweird.f32 %v7136
      %vm7249 = vweird.f32 %v7242
      %vm7250 = vmor %vm7248, %vm7249
      %v7251 = vsel %vm7250, %v7242, %v7247
      %v7252 = vrsqrt.pop %v7137
      %v7253 = vmul.f32 %v7252, %v7137
      %v7254 = vmul.f32 %v7253, %v7252
      %v7255 = vmul.f32 0.5, %v7254
      %v7256 = vsub.f32 1.5, %v7255
      %v7257 = vmul.f32 %v7252, %v7256
      %vm7258 = vweird.f32 %v7137
      %vm7259 = vweird.f32 %v7252
      %vm7260 = vmor %vm7258, %vm7259
      %v7261 = vsel %vm7260, %v7252, %v7257
      %v7262 = vrsqrt.pop %v7138
      %v7263 = vmul.f32 %v7262, %v7138
      %v7264 = vmul.f32 %v7263, %v7262
      %v7265 = vmul.f32 0.5, %v7264
      %v7266 = vsub.f32 1.5, %v7265
      %v7267 = vmul.f32 %v7262, %v7266
      %vm7268 = vweird.f32 %v7138
      %vm7269 = vweird.f32 %v7262
      %vm7270 = vmor %vm7268, %vm7269
      %v7271 = vsel %vm7270, %v7262, %v7267
      %v7272 = vrsqrt.pop %v7139
      %v7273 = vmul.f32 %v7272, %v7139
      %v7274 = vmul.f32 %v7273, %v7272
      %v7275 = vmul.f32 0.5, %v7274
      %v7276 = vsub.f32 1.5, %v7275
      %v7277 = vmul.f32 %v7272, %v7276
      %vm7278 = vweird.f32 %v7139
      %vm7279 = vweird.f32 %v7272
      %vm7280 = vmor %vm7278, %vm7279
      %v7281 = vsel %vm7280, %v7272, %v7277
      %v7282 = vrsqrt.pop %v7140
      %v7283 = vmul.f32 %v7282, %v7140
      %v7284 = vmul.f32 %v7283, %v7282
      %v7285 = vmul.f32 0.5, %v7284
      %v7286 = vsub.f32 1.5, %v7285
      %v7287 = vmul.f32 %v7282, %v7286
      %vm7288 = vweird.f32 %v7140
      %vm7289 = vweird.f32 %v7282
      %vm7290 = vmor %vm7288, %vm7289
      %v7291 = vsel %vm7290, %v7282, %v7287
      %v7292 = vrsqrt.pop %v7141
      %v7293 = vmul.f32 %v7292, %v7141
      %v7294 = vmul.f32 %v7293, %v7292
      %v7295 = vmul.f32 0.5, %v7294
      %v7296 = vsub.f32 1.5, %v7295
      %v7297 = vmul.f32 %v7292, %v7296
      %vm7298 = vweird.f32 %v7141
      %vm7299 = vweird.f32 %v7292
      %vm7300 = vmor %vm7298, %vm7299
      %v7301 = vsel %vm7300, %v7292, %v7297
      %v7302 = vmul.f32 %v7030, %v7151
      %v7303 = vmul.f32 %v7031, %v7161
      %v7304 = vmul.f32 %v7032, %v7171
      %v7305 = vmul.f32 %v7033, %v7181
      %v7306 = vmul.f32 %v7034, %v7191
      %v7307 = vmul.f32 %v7035, %v7201
      %v7308 = vmul.f32 %v7036, %v7211
      %v7309 = vmul.f32 %v7037, %v7221
      %v7310 = vmul.f32 %v7038, %v7231
      %v7311 = vmul.f32 %v7039, %v7241
      %v7312 = vmul.f32 %v7040, %v7251
      %v7313 = vmul.f32 %v7041, %v7261
      %v7314 = vmul.f32 %v7042, %v7271
      %v7315 = vmul.f32 %v7043, %v7281
      %v7316 = vmul.f32 %v7044, %v7291
      %v7317 = vmul.f32 %v7045, %v7301
      %v7318 = vmul.f32 %v7302, %v4282
      %v7319 = vmul.f32 %v7303, %v4282
      %v7320 = vmul.f32 %v7304, %v4282
      %v7321 = vmul.f32 %v7305, %v4282
      %v7322 = vmul.f32 %v7306, %v4282
      %v7323 = vmul.f32 %v7307, %v4282
      %v7324 = vmul.f32 %v7308, %v4282
      %v7325 = vmul.f32 %v7309, %v4282
      %v7326 = vmul.f32 %v7310, %v4282
      %v7327 = vmul.f32 %v7311, %v4282
      %v7328 = vmul.f32 %v7312, %v4282
      %v7329 = vmul.f32 %v7313, %v4282
      %v7330 = vmul.f32 %v7314, %v4282
      %v7331 = vmul.f32 %v7315, %v4282
      %v7332 = vmul.f32 %v7316, %v4282
      %v7333 = vmul.f32 %v7317, %v4282
      %v7334 = vadd.f32 %v7318, %v4301
      %v7335 = vadd.f32 %v7319, %v4301
      %v7336 = vadd.f32 %v7320, %v4301
      %v7337 = vadd.f32 %v7321, %v4301
      %v7338 = vadd.f32 %v7322, %v4301
      %v7339 = vadd.f32 %v7323, %v4301
      %v7340 = vadd.f32 %v7324, %v4301
      %v7341 = vadd.f32 %v7325, %v4301
      %v7342 = vadd.f32 %v7326, %v4301
      %v7343 = vadd.f32 %v7327, %v4301
      %v7344 = vadd.f32 %v7328, %v4301
      %v7345 = vadd.f32 %v7329, %v4301
      %v7346 = vadd.f32 %v7330, %v4301
      %v7347 = vadd.f32 %v7331, %v4301
      %v7348 = vadd.f32 %v7332, %v4301
      %v7349 = vadd.f32 %v7333, %v4301
      %7350 = vst.msk [vmem:[%s4335] sm:$0xff] %vm1269, %v7334
      %7351 = vst.msk [vmem:[%s4335 + $0x8] sm:$0xff] %vm1269, %v7335
      %7352 = vst.msk [vmem:[%s4335 + $0x10] sm:$0xff] %vm1269, %v7336
      %7353 = vst.msk [vmem:[%s4335 + $0x18] sm:$0xff] %vm1269, %v7337
      %7354 = vst.msk [vmem:[%s4335 + $0x20] sm:$0xff] %vm1269, %v7338
      %7355 = vst.msk [vmem:[%s4335 + $0x28] sm:$0xff] %vm1269, %v7339
      %7356 = vst.msk [vmem:[%s4335 + $0x30] sm:$0xff] %vm1269, %v7340
      %7357 = vst.msk [vmem:[%s4335 + $0x38] sm:$0xff] %vm1269, %v7341
      %7358 = vst.msk [vmem:[%s4335 + $0x40] sm:$0xff] %vm1269, %v7342
      %7359 = vst.msk [vmem:[%s4335 + $0x48] sm:$0xff] %vm1269, %v7343
      %7360 = vst.msk [vmem:[%s4335 + $0x50] sm:$0xff] %vm1269, %v7344
      %7361 = vst.msk [vmem:[%s4335 + $0x58] sm:$0xff] %vm1269, %v7345
      %7362 = vst.msk [vmem:[%s4335 + $0x60] sm:$0xff] %vm1269, %v7346
      %7363 = vst.msk [vmem:[%s4335 + $0x68] sm:$0xff] %vm1269, %v7347
      %7364 = vst.msk [vmem:[%s4335 + $0x70] sm:$0xff] %vm1269, %v7348
      %7365 = vst.msk [vmem:[%s4335 + $0x78] sm:$0xff] %vm1269, %v7349
      %p7366 = scmp.eq.s32.totalorder %s42, 1
      // Predicated region
      $region121: #{box_transformer_encoder_forward.2} parent=115 // pred_check
        %p7367 = pneg %p7366
      $region122: #{box_transformer_encoder_forward.2} parent=115 // pred_check_branch
        %7369 = sbr.rel (%p7367) target = $region124
      $region123: #{box_transformer_encoder_forward.2} parent=115 // pred_region
        %v7370 = vld [vmem:[%s18] sm:$0xf]
        %v7371 = vld [vmem:[%s18 + $0x4] sm:$0xf]
        %v7372 = vld [vmem:[%s18 + $0x8] sm:$0xf]
        %v7373 = vld [vmem:[%s18 + $0xc] sm:$0xf]
        %v7374 = vld [vmem:[%s18 + $0x10] sm:$0x3]
        %v7375 = vld [vmem:[%s19] sm:$0xff]
        %v7376 = vld [vmem:[%s19 + $0x8] sm:$0xff]
        %v7377 = vld [vmem:[%s19 + $0x10] sm:$0xff]
        %v7378 = vld [vmem:[%s19 + $0x18] sm:$0xff]
        %v7379 = vld [vmem:[%s19 + $0x20] sm:$0xf]
        %v7380 = vld [vmem:[%s20] sm:$0xf]
        %v7381 = vld [vmem:[%s20 + $0x4] sm:$0xf]
        %v7382 = vld [vmem:[%s20 + $0x8] sm:$0xf]
        %v7383 = vld [vmem:[%s20 + $0xc] sm:$0xf]
        %v7384 = vld [vmem:[%s21] sm:$0xff]
        %v7385 = vld [vmem:[%s21 + $0x8] sm:$0xff]
        %v7386 = vld [vmem:[%s21 + $0x10] sm:$0xff]
        %v7387 = vld [vmem:[%s21 + $0x18] sm:$0xff]
        %v7388 = vld [vmem:[%s22] sm:$0x3]
        %v7389 = vld [vmem:[%s23] sm:$0xf]
        %v7390 = vld [vmem:[%s1027] sm:$0xff]
        %v7391 = vld [vmem:[%s1027 + $0x8] sm:$0xff]
        %v7392 = vld [vmem:[%s1027 + $0x10] sm:$0xff]
        %v7393 = vld [vmem:[%s1027 + $0x18] sm:$0xff]
        %v7394 = vld [vmem:[%s1027 + $0x20] sm:$0xff]
        %v7395 = vld [vmem:[%s1027 + $0x28] sm:$0xff]
        %v7396 = vld [vmem:[%s1027 + $0x30] sm:$0xff]
        %v7397 = vld [vmem:[%s1027 + $0x38] sm:$0xff]
        %v7398 = vld [vmem:[%s1027 + $0x40] sm:$0xff]
        %v7399 = vld [vmem:[%s1027 + $0x48] sm:$0xff]
        %v7400 = vld [vmem:[%s1027 + $0x50] sm:$0xff]
        %v7401 = vld [vmem:[%s1027 + $0x58] sm:$0xff]
        %v7402 = vld [vmem:[%s1027 + $0x60] sm:$0xff]
        %v7403 = vld [vmem:[%s1027 + $0x68] sm:$0xff]
        %v7404 = vld [vmem:[%s1027 + $0x70] sm:$0xff]
        %v7405 = vld [vmem:[%s1027 + $0x78] sm:$0xff]
        %v7406 = vld [vmem:[#allocation2] sm:$0xff]
        %v7407 = vld [vmem:[#allocation2 + $0x8] sm:$0xff]
        %v7408 = vld [vmem:[#allocation2 + $0x10] sm:$0xff]
        %v7409 = vld [vmem:[#allocation2 + $0x18] sm:$0xff]
        %v7410 = vld [vmem:[#allocation2 + $0x20] sm:$0xff]
        %v7411 = vld [vmem:[#allocation2 + $0x28] sm:$0xff]
        %v7412 = vld [vmem:[#allocation2 + $0x30] sm:$0xff]
        %v7413 = vld [vmem:[#allocation2 + $0x38] sm:$0xff]
        %v7414 = vld [vmem:[#allocation2 + $0x40] sm:$0xff]
        %v7415 = vld [vmem:[#allocation2 + $0x48] sm:$0xff]
        %v7416 = vld [vmem:[#allocation2 + $0x50] sm:$0xff]
        %v7417 = vld [vmem:[#allocation2 + $0x58] sm:$0xff]
        %v7418 = vld [vmem:[#allocation2 + $0x60] sm:$0xff]
        %v7419 = vld [vmem:[#allocation2 + $0x68] sm:$0xff]
        %v7420 = vld [vmem:[#allocation2 + $0x70] sm:$0xff]
        %v7421 = vld [vmem:[#allocation2 + $0x78] sm:$0xff]
        %7423 = vset.pattern.permute.xlu0 0
        %7424 = vperm.xlu0 %7423, %v7390
        %v7425 = vpop.permute.xlu0 %7424
        %7428 = vset.pattern.permute.xlu0 0
        %7429 = vperm.xlu0 %7428, %v7391
        %v7430 = vpop.permute.xlu0 %7429
        %7433 = vset.pattern.permute.xlu0 0
        %7434 = vperm.xlu0 %7433, %v7392
        %v7435 = vpop.permute.xlu0 %7434
        %7438 = vset.pattern.permute.xlu0 0
        %7439 = vperm.xlu0 %7438, %v7393
        %v7440 = vpop.permute.xlu0 %7439
        %7443 = vset.pattern.permute.xlu0 0
        %7444 = vperm.xlu0 %7443, %v7394
        %v7445 = vpop.permute.xlu0 %7444
        %7448 = vset.pattern.permute.xlu0 0
        %7449 = vperm.xlu0 %7448, %v7395
        %v7450 = vpop.permute.xlu0 %7449
        %7453 = vset.pattern.permute.xlu0 0
        %7454 = vperm.xlu0 %7453, %v7396
        %v7455 = vpop.permute.xlu0 %7454
        %7458 = vset.pattern.permute.xlu0 0
        %7459 = vperm.xlu0 %7458, %v7397
        %v7460 = vpop.permute.xlu0 %7459
        %7463 = vset.pattern.permute.xlu0 0
        %7464 = vperm.xlu0 %7463, %v7398
        %v7465 = vpop.permute.xlu0 %7464
        %7468 = vset.pattern.permute.xlu0 0
        %7469 = vperm.xlu0 %7468, %v7399
        %v7470 = vpop.permute.xlu0 %7469
        %7473 = vset.pattern.permute.xlu0 0
        %7474 = vperm.xlu0 %7473, %v7400
        %v7475 = vpop.permute.xlu0 %7474
        %7478 = vset.pattern.permute.xlu0 0
        %7479 = vperm.xlu0 %7478, %v7401
        %v7480 = vpop.permute.xlu0 %7479
        %7483 = vset.pattern.permute.xlu0 0
        %7484 = vperm.xlu0 %7483, %v7402
        %v7485 = vpop.permute.xlu0 %7484
        %7488 = vset.pattern.permute.xlu0 0
        %7489 = vperm.xlu0 %7488, %v7403
        %v7490 = vpop.permute.xlu0 %7489
        %7493 = vset.pattern.permute.xlu0 0
        %7494 = vperm.xlu0 %7493, %v7404
        %v7495 = vpop.permute.xlu0 %7494
        %7498 = vset.pattern.permute.xlu0 0
        %7499 = vperm.xlu0 %7498, %v7405
        %v7500 = vpop.permute.xlu0 %7499
        %v7502 = vmul.f32 %v7406, %v7425
        %v7503 = vmul.f32 %v7407, %v7430
        %v7504 = vmul.f32 %v7408, %v7435
        %v7505 = vmul.f32 %v7409, %v7440
        %v7506 = vmul.f32 %v7410, %v7445
        %v7507 = vmul.f32 %v7411, %v7450
        %v7508 = vmul.f32 %v7412, %v7455
        %v7509 = vmul.f32 %v7413, %v7460
        %v7510 = vmul.f32 %v7414, %v7465
        %v7511 = vmul.f32 %v7415, %v7470
        %v7512 = vmul.f32 %v7416, %v7475
        %v7513 = vmul.f32 %v7417, %v7480
        %v7514 = vmul.f32 %v7418, %v7485
        %v7515 = vmul.f32 %v7419, %v7490
        %v7516 = vmul.f32 %v7420, %v7495
        %v7517 = vmul.f32 %v7421, %v7500
        %7518 = vst.msk [vmem:[%s1086] sm:$0xff] %vm1269, %v7502
        %7519 = vst.msk [vmem:[%s1086 + $0x8] sm:$0xff] %vm1269, %v7503
        %7520 = vst.msk [vmem:[%s1086 + $0x10] sm:$0xff] %vm1269, %v7504
        %7521 = vst.msk [vmem:[%s1086 + $0x18] sm:$0xff] %vm1269, %v7505
        %7522 = vst.msk [vmem:[%s1086 + $0x20] sm:$0xff] %vm1269, %v7506
        %7523 = vst.msk [vmem:[%s1086 + $0x28] sm:$0xff] %vm1269, %v7507
        %7524 = vst.msk [vmem:[%s1086 + $0x30] sm:$0xff] %vm1269, %v7508
        %7525 = vst.msk [vmem:[%s1086 + $0x38] sm:$0xff] %vm1269, %v7509
        %7526 = vst.msk [vmem:[%s1086 + $0x40] sm:$0xff] %vm1269, %v7510
        %7527 = vst.msk [vmem:[%s1086 + $0x48] sm:$0xff] %vm1269, %v7511
        %7528 = vst.msk [vmem:[%s1086 + $0x50] sm:$0xff] %vm1269, %v7512
        %7529 = vst.msk [vmem:[%s1086 + $0x58] sm:$0xff] %vm1269, %v7513
        %7530 = vst.msk [vmem:[%s1086 + $0x60] sm:$0xff] %vm1269, %v7514
        %7531 = vst.msk [vmem:[%s1086 + $0x68] sm:$0xff] %vm1269, %v7515
        %7532 = vst.msk [vmem:[%s1086 + $0x70] sm:$0xff] %vm1269, %v7516
        %7533 = vst.msk [vmem:[%s1086 + $0x78] sm:$0xff] %vm1269, %v7517
        %7534 = vxpose.xlu0.b32.start [1/16] %v7502, 128
        %7535 = vxpose.xlu0.b32.cont [2/16] %v7503, 128
        %7536 = vxpose.xlu0.b32.cont [3/16] %v7504, 128
        %7537 = vxpose.xlu0.b32.cont [4/16] %v7505, 128
        %7538 = vxpose.xlu0.b32.cont [5/16] %v7506, 128
        %7539 = vxpose.xlu0.b32.cont [6/16] %v7507, 128
        %7540 = vxpose.xlu0.b32.cont [7/16] %v7508, 128
        %7541 = vxpose.xlu0.b32.cont [8/16] %v7509, 128
        %7542 = vxpose.xlu0.b32.cont [9/16] %v7510, 128
        %7543 = vxpose.xlu0.b32.cont [10/16] %v7511, 128
        %7544 = vxpose.xlu0.b32.cont [11/16] %v7512, 128
        %7545 = vxpose.xlu0.b32.cont [12/16] %v7513, 128
        %7546 = vxpose.xlu0.b32.cont [13/16] %v7514, 128
        %7547 = vxpose.xlu0.b32.cont [14/16] %v7515, 128
        %7548 = vxpose.xlu0.b32.cont [15/16] %v7516, 128
        %7549 = vxpose.xlu0.b32.end [16/16] %v7517, 128
        %v7550 = vpop.trf.xlu0
        %v7551 = vpop.trf.xlu0
        %v7552 = vpop.trf.xlu0
        %v7553 = vpop.trf.xlu0
        %v7554 = vpop.trf.xlu0
        %v7555 = vpop.trf.xlu0
        %v7556 = vpop.trf.xlu0
        %v7557 = vpop.trf.xlu0
        %v7558 = vpop.trf.xlu0
        %v7559 = vpop.trf.xlu0
        %v7560 = vpop.trf.xlu0
        %v7561 = vpop.trf.xlu0
        %v7562 = vpop.trf.xlu0
        %v7563 = vpop.trf.xlu0
        %v7564 = vpop.trf.xlu0
        %v7565 = vpop.trf.xlu0
        %v7566 = vpack.c.bf16 %v7551, %v7550
        %v7567 = vpack.c.bf16 %v7553, %v7552
        %7569 = vset.pattern.permute.xlu0 0
        %7570 = vperm.xlu0 %7569, %v7375
        %v7571 = vpop.permute.xlu0 %7570
        %7574 = vset.pattern.permute.xlu0 0
        %7575 = vperm.xlu0 %7574, %v7376
        %v7576 = vpop.permute.xlu0 %7575
        %7579 = vset.pattern.permute.xlu0 0
        %7580 = vperm.xlu0 %7579, %v7377
        %v7581 = vpop.permute.xlu0 %7580
        %7584 = vset.pattern.permute.xlu0 0
        %7585 = vperm.xlu0 %7584, %v7378
        %v7586 = vpop.permute.xlu0 %7585
        %7589 = vset.pattern.permute.xlu0 0
        %7590 = vperm.xlu0 %7589, %v7379
        %v7591 = vpop.permute.xlu0 %7590
        %v7598 = vunpack.c.l.b16 %v7370
        %v7599 = vunpack.c.l.b16 %v7371
        %v7600 = vunpack.c.l.b16 %v7372
        %v7601 = vunpack.c.l.b16 %v7373
        %v7602 = vunpack.c.l.b16 %v7374
        %v7603 = vpack.c.b16 %v7599, %v7598
        %v7604 = vpack.c.b16 %v7601, %v7600
        %v7605 = vpack.c.b16 %v7602, %v7602
        %v7607 = vsel %vm1269, %v7603, 0
        %v7610 = vsel %vm1269, %v7604, 0
        %v7613 = vsel %vm1269, %v7605, 0
        %7615 = vmatpush.bf16.msra.mxu0 0
        %7616 = vmatpush.bf16.msra.mxu0 0
        %7617 = vmatpush.bf16.msra.mxu0 0
        %7618 = vmatpush.bf16.msra.mxu0 0
        %7619 = vmatpush.bf16.msra.mxu0 0
        %7620 = vmatpush.bf16.msra.mxu0 0
        %7621 = vmatpush.bf16.msra.mxu0 %v7567
        %7622 = vmatpush.bf16.msra.mxu0 %v7566
        %7623 = vmatmul.bf16.gmra.mxu0 %v7607
        %v7624 = vpop.f32.mrf.mxu0
        %v7625 = vadd.f32 %v7571, %v7624
        %v7626 = vpop.f32.mrf.mxu0
        %v7627 = vadd.f32 %v7576, %v7626
        %7628 = vmatmul.bf16.gmra.mxu0 %v7610
        %v7629 = vpop.f32.mrf.mxu0
        %v7630 = vadd.f32 %v7581, %v7629
        %v7631 = vpop.f32.mrf.mxu0
        %v7632 = vadd.f32 %v7586, %v7631
        %7633 = vmatmul.bf16.gmra.mxu0 %v7613
        %v7634 = vpop.f32.mrf.mxu0
        %v7635 = vadd.f32 %v7591, %v7634
        %v7636 = vpop.f32.mrf.mxu0
        %7637 = vdwg.mxu0
        %v7638 = vmax.f32 %v7625, 0.0
        %v7639 = vmax.f32 %v7627, 0.0
        %v7640 = vmax.f32 %v7630, 0.0
        %v7641 = vmax.f32 %v7632, 0.0
        %v7642 = vpack.c.bf16 %v7639, %v7638
        %v7643 = vpack.c.bf16 %v7641, %v7640
        %7645 = vset.pattern.permute.xlu0 0
        %7646 = vperm.xlu0 %7645, %v7384
        %v7647 = vpop.permute.xlu0 %7646
        %7650 = vset.pattern.permute.xlu0 0
        %7651 = vperm.xlu0 %7650, %v7385
        %v7652 = vpop.permute.xlu0 %7651
        %7655 = vset.pattern.permute.xlu0 0
        %7656 = vperm.xlu0 %7655, %v7386
        %v7657 = vpop.permute.xlu0 %7656
        %7660 = vset.pattern.permute.xlu0 0
        %7661 = vperm.xlu0 %7660, %v7387
        %v7662 = vpop.permute.xlu0 %7661
        %v7668 = vunpack.c.l.b16 %v7380
        %v7669 = vunpack.c.l.b16 %v7381
        %v7670 = vunpack.c.l.b16 %v7382
        %v7671 = vunpack.c.l.b16 %v7383
        %v7672 = vpack.c.b16 %v7669, %v7668
        %v7673 = vpack.c.b16 %v7671, %v7670
        %v7675 = vsel %vm1269, %v7672, 0
        %v7678 = vsel %vm1269, %v7673, 0
        %7680 = vmatpush.bf16.msra.mxu0 0
        %7681 = vmatpush.bf16.msra.mxu0 0
        %7682 = vmatpush.bf16.msra.mxu0 0
        %7683 = vmatpush.bf16.msra.mxu0 0
        %7684 = vmatpush.bf16.msra.mxu0 0
        %7685 = vmatpush.bf16.msra.mxu0 0
        %7686 = vmatpush.bf16.msra.mxu0 %v7643
        %7687 = vmatpush.bf16.msra.mxu0 %v7642
        %7688 = vmatmul.bf16.gmra.mxu0 %v7675
        %v7689 = vpop.f32.mrf.mxu0
        %v7690 = vadd.f32 %v7647, %v7689
        %v7691 = vpop.f32.mrf.mxu0
        %v7692 = vadd.f32 %v7652, %v7691
        %7693 = vmatmul.bf16.gmra.mxu0 %v7678
        %v7694 = vpop.f32.mrf.mxu0
        %v7695 = vadd.f32 %v7657, %v7694
        %v7696 = vpop.f32.mrf.mxu0
        %v7697 = vadd.f32 %v7662, %v7696
        %7698 = vdwg.mxu0
        %v7699 = vmax.f32 %v7690, 0.0
        %v7700 = vmax.f32 %v7692, 0.0
        %v7701 = vmax.f32 %v7695, 0.0
        %v7702 = vmax.f32 %v7697, 0.0
        %v7703 = vpack.c.bf16 %v7700, %v7699
        %v7704 = vpack.c.bf16 %v7702, %v7701
        %7706 = vset.pattern.permute.xlu0 0
        %7707 = vperm.xlu0 %7706, %v7389
        %v7708 = vpop.permute.xlu0 %7707
        %v7711 = vsel %vm1269, %v7388, 0
        %7713 = vmatpush.bf16.msra.mxu0 0
        %7714 = vmatpush.bf16.msra.mxu0 0
        %7715 = vmatpush.bf16.msra.mxu0 0
        %7716 = vmatpush.bf16.msra.mxu0 0
        %7717 = vmatpush.bf16.msra.mxu0 0
        %7718 = vmatpush.bf16.msra.mxu0 0
        %7719 = vmatpush.bf16.msra.mxu0 %v7704
        %7720 = vmatpush.bf16.msra.mxu0 %v7703
        %7721 = vmatmul.bf16.gmra.mxu0 %v7711
        %v7722 = vpop.f32.mrf.mxu0
        %v7723 = vadd.f32 %v7708, %v7722
        %v7724 = vpop.f32.mrf.mxu0
        %7725 = vdwg.mxu0
        %v7727 = vrot.slane %v7723, 4
        %v7729 = vsel %vm1639, %v7635, %v7727
        %7730 = vst [vmem:[%s1092] sm:$0xff] %v7729
        %s7731 = scalar_lea.vmem %s1027, 128
        %v7732 = vld [vmem:[%s7731] sm:$0xff]
        %v7733 = vld [vmem:[%s7731 + $0x8] sm:$0xff]
        %v7734 = vld [vmem:[%s7731 + $0x10] sm:$0xff]
        %v7735 = vld [vmem:[%s7731 + $0x18] sm:$0xff]
        %v7736 = vld [vmem:[%s7731 + $0x20] sm:$0xff]
        %v7737 = vld [vmem:[%s7731 + $0x28] sm:$0xff]
        %v7738 = vld [vmem:[%s7731 + $0x30] sm:$0xff]
        %v7739 = vld [vmem:[%s7731 + $0x38] sm:$0xff]
        %v7740 = vld [vmem:[%s7731 + $0x40] sm:$0xff]
        %v7741 = vld [vmem:[%s7731 + $0x48] sm:$0xff]
        %v7742 = vld [vmem:[%s7731 + $0x50] sm:$0xff]
        %v7743 = vld [vmem:[%s7731 + $0x58] sm:$0xff]
        %v7744 = vld [vmem:[%s7731 + $0x60] sm:$0xff]
        %v7745 = vld [vmem:[%s7731 + $0x68] sm:$0xff]
        %v7746 = vld [vmem:[%s7731 + $0x70] sm:$0xff]
        %v7747 = vld [vmem:[%s7731 + $0x78] sm:$0xff]
        %v7748 = vld [vmem:[%s4335] sm:$0xff]
        %v7749 = vld [vmem:[%s4335 + $0x8] sm:$0xff]
        %v7750 = vld [vmem:[%s4335 + $0x10] sm:$0xff]
        %v7751 = vld [vmem:[%s4335 + $0x18] sm:$0xff]
        %v7752 = vld [vmem:[%s4335 + $0x20] sm:$0xff]
        %v7753 = vld [vmem:[%s4335 + $0x28] sm:$0xff]
        %v7754 = vld [vmem:[%s4335 + $0x30] sm:$0xff]
        %v7755 = vld [vmem:[%s4335 + $0x38] sm:$0xff]
        %v7756 = vld [vmem:[%s4335 + $0x40] sm:$0xff]
        %v7757 = vld [vmem:[%s4335 + $0x48] sm:$0xff]
        %v7758 = vld [vmem:[%s4335 + $0x50] sm:$0xff]
        %v7759 = vld [vmem:[%s4335 + $0x58] sm:$0xff]
        %v7760 = vld [vmem:[%s4335 + $0x60] sm:$0xff]
        %v7761 = vld [vmem:[%s4335 + $0x68] sm:$0xff]
        %v7762 = vld [vmem:[%s4335 + $0x70] sm:$0xff]
        %v7763 = vld [vmem:[%s4335 + $0x78] sm:$0xff]
        %7765 = vset.pattern.permute.xlu0 0
        %7766 = vperm.xlu0 %7765, %v7732
        %v7767 = vpop.permute.xlu0 %7766
        %7770 = vset.pattern.permute.xlu0 0
        %7771 = vperm.xlu0 %7770, %v7733
        %v7772 = vpop.permute.xlu0 %7771
        %7775 = vset.pattern.permute.xlu0 0
        %7776 = vperm.xlu0 %7775, %v7734
        %v7777 = vpop.permute.xlu0 %7776
        %7780 = vset.pattern.permute.xlu0 0
        %7781 = vperm.xlu0 %7780, %v7735
        %v7782 = vpop.permute.xlu0 %7781
        %7785 = vset.pattern.permute.xlu0 0
        %7786 = vperm.xlu0 %7785, %v7736
        %v7787 = vpop.permute.xlu0 %7786
        %7790 = vset.pattern.permute.xlu0 0
        %7791 = vperm.xlu0 %7790, %v7737
        %v7792 = vpop.permute.xlu0 %7791
        %7795 = vset.pattern.permute.xlu0 0
        %7796 = vperm.xlu0 %7795, %v7738
        %v7797 = vpop.permute.xlu0 %7796
        %7800 = vset.pattern.permute.xlu0 0
        %7801 = vperm.xlu0 %7800, %v7739
        %v7802 = vpop.permute.xlu0 %7801
        %7805 = vset.pattern.permute.xlu0 0
        %7806 = vperm.xlu0 %7805, %v7740
        %v7807 = vpop.permute.xlu0 %7806
        %7810 = vset.pattern.permute.xlu0 0
        %7811 = vperm.xlu0 %7810, %v7741
        %v7812 = vpop.permute.xlu0 %7811
        %7815 = vset.pattern.permute.xlu0 0
        %7816 = vperm.xlu0 %7815, %v7742
        %v7817 = vpop.permute.xlu0 %7816
        %7820 = vset.pattern.permute.xlu0 0
        %7821 = vperm.xlu0 %7820, %v7743
        %v7822 = vpop.permute.xlu0 %7821
        %7825 = vset.pattern.permute.xlu0 0
        %7826 = vperm.xlu0 %7825, %v7744
        %v7827 = vpop.permute.xlu0 %7826
        %7830 = vset.pattern.permute.xlu0 0
        %7831 = vperm.xlu0 %7830, %v7745
        %v7832 = vpop.permute.xlu0 %7831
        %7835 = vset.pattern.permute.xlu0 0
        %7836 = vperm.xlu0 %7835, %v7746
        %v7837 = vpop.permute.xlu0 %7836
        %7840 = vset.pattern.permute.xlu0 0
        %7841 = vperm.xlu0 %7840, %v7747
        %v7842 = vpop.permute.xlu0 %7841
        %v7844 = vmul.f32 %v7748, %v7767
        %v7845 = vmul.f32 %v7749, %v7772
        %v7846 = vmul.f32 %v7750, %v7777
        %v7847 = vmul.f32 %v7751, %v7782
        %v7848 = vmul.f32 %v7752, %v7787
        %v7849 = vmul.f32 %v7753, %v7792
        %v7850 = vmul.f32 %v7754, %v7797
        %v7851 = vmul.f32 %v7755, %v7802
        %v7852 = vmul.f32 %v7756, %v7807
        %v7853 = vmul.f32 %v7757, %v7812
        %v7854 = vmul.f32 %v7758, %v7817
        %v7855 = vmul.f32 %v7759, %v7822
        %v7856 = vmul.f32 %v7760, %v7827
        %v7857 = vmul.f32 %v7761, %v7832
        %v7858 = vmul.f32 %v7762, %v7837
        %v7859 = vmul.f32 %v7763, %v7842
        %s7860 = scalar_lea.vmem %s1086, 128
        %7861 = vst.msk [vmem:[%s7860] sm:$0xff] %vm1269, %v7844
        %7862 = vst.msk [vmem:[%s7860 + $0x8] sm:$0xff] %vm1269, %v7845
        %7863 = vst.msk [vmem:[%s7860 + $0x10] sm:$0xff] %vm1269, %v7846
        %7864 = vst.msk [vmem:[%s7860 + $0x18] sm:$0xff] %vm1269, %v7847
        %7865 = vst.msk [vmem:[%s7860 + $0x20] sm:$0xff] %vm1269, %v7848
        %7866 = vst.msk [vmem:[%s7860 + $0x28] sm:$0xff] %vm1269, %v7849
        %7867 = vst.msk [vmem:[%s7860 + $0x30] sm:$0xff] %vm1269, %v7850
        %7868 = vst.msk [vmem:[%s7860 + $0x38] sm:$0xff] %vm1269, %v7851
        %7869 = vst.msk [vmem:[%s7860 + $0x40] sm:$0xff] %vm1269, %v7852
        %7870 = vst.msk [vmem:[%s7860 + $0x48] sm:$0xff] %vm1269, %v7853
        %7871 = vst.msk [vmem:[%s7860 + $0x50] sm:$0xff] %vm1269, %v7854
        %7872 = vst.msk [vmem:[%s7860 + $0x58] sm:$0xff] %vm1269, %v7855
        %7873 = vst.msk [vmem:[%s7860 + $0x60] sm:$0xff] %vm1269, %v7856
        %7874 = vst.msk [vmem:[%s7860 + $0x68] sm:$0xff] %vm1269, %v7857
        %7875 = vst.msk [vmem:[%s7860 + $0x70] sm:$0xff] %vm1269, %v7858
        %7876 = vst.msk [vmem:[%s7860 + $0x78] sm:$0xff] %vm1269, %v7859
        %7877 = vxpose.xlu0.b32.start [1/16] %v7844, 128
        %7878 = vxpose.xlu0.b32.cont [2/16] %v7845, 128
        %7879 = vxpose.xlu0.b32.cont [3/16] %v7846, 128
        %7880 = vxpose.xlu0.b32.cont [4/16] %v7847, 128
        %7881 = vxpose.xlu0.b32.cont [5/16] %v7848, 128
        %7882 = vxpose.xlu0.b32.cont [6/16] %v7849, 128
        %7883 = vxpose.xlu0.b32.cont [7/16] %v7850, 128
        %7884 = vxpose.xlu0.b32.cont [8/16] %v7851, 128
        %7885 = vxpose.xlu0.b32.cont [9/16] %v7852, 128
        %7886 = vxpose.xlu0.b32.cont [10/16] %v7853, 128
        %7887 = vxpose.xlu0.b32.cont [11/16] %v7854, 128
        %7888 = vxpose.xlu0.b32.cont [12/16] %v7855, 128
        %7889 = vxpose.xlu0.b32.cont [13/16] %v7856, 128
        %7890 = vxpose.xlu0.b32.cont [14/16] %v7857, 128
        %7891 = vxpose.xlu0.b32.cont [15/16] %v7858, 128
        %7892 = vxpose.xlu0.b32.end [16/16] %v7859, 128
        %v7893 = vpop.trf.xlu0
        %v7894 = vpop.trf.xlu0
        %v7895 = vpop.trf.xlu0
        %v7896 = vpop.trf.xlu0
        %v7897 = vpop.trf.xlu0
        %v7898 = vpop.trf.xlu0
        %v7899 = vpop.trf.xlu0
        %v7900 = vpop.trf.xlu0
        %v7901 = vpop.trf.xlu0
        %v7902 = vpop.trf.xlu0
        %v7903 = vpop.trf.xlu0
        %v7904 = vpop.trf.xlu0
        %v7905 = vpop.trf.xlu0
        %v7906 = vpop.trf.xlu0
        %v7907 = vpop.trf.xlu0
        %v7908 = vpop.trf.xlu0
        %v7909 = vpack.c.bf16 %v7894, %v7893
        %v7910 = vpack.c.bf16 %v7896, %v7895
        %7911 = vmatpush.bf16.msra.mxu0 0
        %7912 = vmatpush.bf16.msra.mxu0 0
        %7913 = vmatpush.bf16.msra.mxu0 0
        %7914 = vmatpush.bf16.msra.mxu0 0
        %7915 = vmatpush.bf16.msra.mxu0 0
        %7916 = vmatpush.bf16.msra.mxu0 0
        %7917 = vmatpush.bf16.msra.mxu0 %v7910
        %7918 = vmatpush.bf16.msra.mxu0 %v7909
        %7919 = vmatmul.bf16.gmra.mxu0 %v7607
        %v7920 = vpop.f32.mrf.mxu0
        %v7921 = vadd.f32 %v7571, %v7920
        %v7922 = vpop.f32.mrf.mxu0
        %v7923 = vadd.f32 %v7576, %v7922
        %7924 = vmatmul.bf16.gmra.mxu0 %v7610
        %v7925 = vpop.f32.mrf.mxu0
        %v7926 = vadd.f32 %v7581, %v7925
        %v7927 = vpop.f32.mrf.mxu0
        %v7928 = vadd.f32 %v7586, %v7927
        %7929 = vmatmul.bf16.gmra.mxu0 %v7613
        %v7930 = vpop.f32.mrf.mxu0
        %v7931 = vadd.f32 %v7591, %v7930
        %v7932 = vpop.f32.mrf.mxu0
        %7933 = vdwg.mxu0
        %v7934 = vmax.f32 %v7921, 0.0
        %v7935 = vmax.f32 %v7923, 0.0
        %v7936 = vmax.f32 %v7926, 0.0
        %v7937 = vmax.f32 %v7928, 0.0
        %v7938 = vpack.c.bf16 %v7935, %v7934
        %v7939 = vpack.c.bf16 %v7937, %v7936
        %7940 = vmatpush.bf16.msra.mxu0 0
        %7941 = vmatpush.bf16.msra.mxu0 0
        %7942 = vmatpush.bf16.msra.mxu0 0
        %7943 = vmatpush.bf16.msra.mxu0 0
        %7944 = vmatpush.bf16.msra.mxu0 0
        %7945 = vmatpush.bf16.msra.mxu0 0
        %7946 = vmatpush.bf16.msra.mxu0 %v7939
        %7947 = vmatpush.bf16.msra.mxu0 %v7938
        %7948 = vmatmul.bf16.gmra.mxu0 %v7675
        %v7949 = vpop.f32.mrf.mxu0
        %v7950 = vadd.f32 %v7647, %v7949
        %v7951 = vpop.f32.mrf.mxu0
        %v7952 = vadd.f32 %v7652, %v7951
        %7953 = vmatmul.bf16.gmra.mxu0 %v7678
        %v7954 = vpop.f32.mrf.mxu0
        %v7955 = vadd.f32 %v7657, %v7954
        %v7956 = vpop.f32.mrf.mxu0
        %v7957 = vadd.f32 %v7662, %v7956
        %7958 = vdwg.mxu0
        %v7959 = vmax.f32 %v7950, 0.0
        %v7960 = vmax.f32 %v7952, 0.0
        %v7961 = vmax.f32 %v7955, 0.0
        %v7962 = vmax.f32 %v7957, 0.0
        %v7963 = vpack.c.bf16 %v7960, %v7959
        %v7964 = vpack.c.bf16 %v7962, %v7961
        %7965 = vmatpush.bf16.msra.mxu0 0
        %7966 = vmatpush.bf16.msra.mxu0 0
        %7967 = vmatpush.bf16.msra.mxu0 0
        %7968 = vmatpush.bf16.msra.mxu0 0
        %7969 = vmatpush.bf16.msra.mxu0 0
        %7970 = vmatpush.bf16.msra.mxu0 0
        %7971 = vmatpush.bf16.msra.mxu0 %v7964
        %7972 = vmatpush.bf16.msra.mxu0 %v7963
        %7973 = vmatmul.bf16.gmra.mxu0 %v7711
        %v7974 = vpop.f32.mrf.mxu0
        %v7975 = vadd.f32 %v7708, %v7974
        %v7976 = vpop.f32.mrf.mxu0
        %7977 = vdwg.mxu0
        %v7979 = vrot.slane %v7975, 4
        %v7981 = vsel %vm1639, %v7931, %v7979
        %s7982 = scalar_lea.vmem %s1092, 8
        %7983 = vst [vmem:[%s7982] sm:$0xff] %v7981
      $region124: #{box_transformer_encoder_forward.2} parent=115 // pred_fallthru
        _
      %s7984 = smul.u32 2, %s41
      %p7985 = scmp.lt.s32.totalorder %s7984, 1
      %s7986 = scalar_select %p7985, %s7984, 1
      %s7987 = smul.addr %s7986, 16
      %s7988 = smul.addr %s7987, 8
      %s7989 = scalar_lea.vmem %s24, %s7988
      %s7990 = smul.u32 2, %s41
      %p7991 = scmp.lt.s32.totalorder %s7990, 1
      %s7992 = scalar_select %p7991, %s7990, 1
      %s7993 = smul.addr %s7992, 8
      %s7994 = scalar_lea.vmem %s25, %s7993
      // Predicated region
      $region125: #{box_transformer_encoder_forward.2} parent=115 // pred_check
        %p7995 = pneg %p661
      $region126: #{box_transformer_encoder_forward.2} parent=115 // pred_check_branch
        %7997 = sbr.rel (%p7995) target = $region128
      $region127: #{box_transformer_encoder_forward.2} parent=115 // pred_region
        %s7998 = smul.u32 2, %s41
      $region128: #{box_transformer_encoder_forward.2} parent=115 // pred_fallthru
        _
      // Predicated region
      $region129: #{box_transformer_encoder_forward.2} parent=115 // pred_check
        %p7999 = pneg %p687
      $region130: #{box_transformer_encoder_forward.2} parent=115 // pred_check_branch
        %8001 = sbr.rel (%p7999) target = $region132
      $region131: #{box_transformer_encoder_forward.2} parent=115 // pred_region
        %s8002 = smul.u32 2, %s41
      $region132: #{box_transformer_encoder_forward.2} parent=115 // pred_fallthru
        _
      // Predicated region
      $region133: #{box_transformer_encoder_forward.2} parent=115 // pred_check
        %p8003 = pneg %p661
      $region134: #{box_transformer_encoder_forward.2} parent=115 // pred_check_branch
        %8005 = sbr.rel (%p8003) target = $region136
      $region135: #{box_transformer_encoder_forward.2} parent=115 // pred_region
        %s8006 = smul.u32 2, %s41
        %p8007 = scmp.lt.s32.totalorder %s8006, 1
        %s8008 = scalar_select %p8007, %s8006, 1
        %s8009 = smul.addr %s8008, 16
        %s8010 = smul.addr %s8009, 8
        %s8011 = scalar_lea.vmem %s24, %s8010
      $region136: #{box_transformer_encoder_forward.2} parent=115 // pred_fallthru
        _
      // Predicated region
      $region137: #{box_transformer_encoder_forward.2} parent=115 // pred_check
        %p8012 = pneg %p687
      $region138: #{box_transformer_encoder_forward.2} parent=115 // pred_check_branch
        %8014 = sbr.rel (%p8012) target = $region140
      $region139: #{box_transformer_encoder_forward.2} parent=115 // pred_region
        %s8015 = smul.u32 2, %s41
        %p8016 = scmp.lt.s32.totalorder %s8015, 1
        %s8017 = scalar_select %p8016, %s8015, 1
        %s8018 = smul.addr %s8017, 8
        %s8019 = scalar_lea.vmem %s25, %s8018
      $region140: #{box_transformer_encoder_forward.2} parent=115 // pred_fallthru
        _
    $region116: #{box_transformer_encoder_forward.2} parent=5 // pred_fallthru
      _
    %p8020 = scmp.le.s32.totalorder 2, %s32
    // Predicated region
    $region141: #{box_transformer_encoder_forward.2} parent=5 // pred_check
      %p8021 = pneg %p8020
    $region142: #{box_transformer_encoder_forward.2} parent=5 // pred_check_branch
      %8023 = sbr.rel (%p8021) target = $region144
    $region143: #{box_transformer_encoder_forward.2} parent=5 // pred_region
      %s8024 = ssub.s32 %s32, 2
    $region144: #{box_transformer_encoder_forward.2} parent=5 // pred_fallthru
      _
  $region6: #{box_transformer_encoder_forward.2} parent=0 // loop_footer
    %s36 = sadd.s32 1, %s32
  $region7: #{box_transformer_encoder_forward.2} parent=0 // loop_footer_branch
    %31 = sbr.rel target = $region3
  $region8: #{box_transformer_encoder_forward.2} parent=0 // loop_exit
    _

</llo_original>
